<compile_context>
chip_gen: v6e
topology: v6e:2x2x1
jax: 0.10.0
libtpu: 0.0.40
codegen_flags: <defaults>
</compile_context>

<pallas_src>
import functools

import jax
import jax.numpy as jnp
from jax.experimental import pallas as pl
from jax.experimental.pallas import tpu as pltpu

HID = 512             # hidden width of the GMVAENet MLPs (reference implementation)
LANE = 128            # TPU lane width
DEF_ROW_TILE = 1024   # default rows per grid step


def _round_up(n, m):
    return ((n + m - 1) // m) * m


def _param_shapes(F, Z, K, H=HID):
    # (name, shape); Linear weights stored (in, out) so the kernel uses x @ W + b.
    return [
        ("qyx_w1", (F, H)), ("qyx_b1", (1, H)),
        ("qyx_w2", (H, H)), ("qyx_b2", (1, H)),
        ("qyx_w3", (H, K)), ("qyx_b3", (1, K)),
        ("qz_wx", (F, H)), ("qz_wy", (K, H)), ("qz_b1", (1, H)),
        ("qz_w2", (H, H)), ("qz_b2", (1, H)),
        ("mu_w", (H, Z)), ("mu_b", (1, Z)),
        ("var_w", (H, Z)), ("var_b", (1, Z)),
        ("ymu_w", (K, Z)), ("ymu_b", (1, Z)),
        ("yvar_w", (K, Z)), ("yvar_b", (1, Z)),
        ("px_w1", (Z, H)), ("px_b1", (1, H)),
        ("px_w2", (H, H)), ("px_b2", (1, H)),
        ("px_w3", (H, F)), ("px_b3", (1, F)),
    ]


def init_params(key, x_dim, z_dim, num_classes, hid=HID):
    """Deterministic synthetic parameter init (scaled normal weights, zero biases)."""
    shapes = _param_shapes(x_dim, z_dim, num_classes, hid)
    keys = jax.random.split(key, len(shapes))
    params = {}
    for (name, shape), k in zip(shapes, keys):
        if shape[0] == 1:   # bias rows (1, out)
            params[name] = jnp.zeros(shape, jnp.float32)
        else:
            fan_in = shape[0]
            params[name] = (jax.random.normal(k, shape, jnp.float32)
                            / jnp.sqrt(jnp.float32(fan_in)))
    return params


def _bias_layout(F, Z, K, H=HID):
    """Lane-tile-aligned offsets of every bias inside the packed (1, BTOT) slab."""
    entries = [("qyx_b1", H), ("qz_b1", H), ("qyx_b2", H), ("qyx_b3", K),
               ("ymu_b", Z), ("yvar_b", Z), ("qz_b2", H), ("mu_b", Z),
               ("var_b", Z), ("px_b1", H), ("px_b2", H), ("px_b3", F)]
    layout, off = {}, 0
    for name, width in entries:
        layout[name] = (off, width)
        off += _round_up(width, LANE)
    return layout, off


def _pack_params(params, F, Z, K, H=HID):
    """Fuse/pad/pack the 25 parameter tensors into 7 bf16 weight slabs + 1 f32 bias slab."""
    # The packed ymu/yvar/mu/var segments are padded to one lane tile each.
    assert Z <= LANE, f"z_dim must be <= {LANE} for the packed weight layout (got {Z})"
    assert K <= LANE, f"num_classes must be <= {LANE} for the packed weight layout (got {K})"
    bf16 = jnp.bfloat16

    def pad_cols(a, width):
        return jnp.pad(a, ((0, 0), (0, width - a.shape[1])))

    w_xin = jnp.concatenate([params["qyx_w1"], params["qz_wx"]], axis=1)      # (F, 2H)
    w_big = jnp.stack([params["qyx_w2"], params["qz_w2"], params["px_w2"]])   # (3, H, H)
    w_qyx3 = params["qyx_w3"]                                                 # (H, K)
    w_y = jnp.concatenate([params["qz_wy"],
                           pad_cols(params["ymu_w"], LANE),
                           pad_cols(params["yvar_w"], LANE)], axis=1)         # (K, H+2*LANE)
    w_muvar = jnp.concatenate([pad_cols(params["mu_w"], LANE),
                               pad_cols(params["var_w"], LANE)], axis=1)      # (H, 2*LANE)
    w_px1 = params["px_w1"]                                                   # (Z, H)
    w_px3 = params["px_w3"]                                                   # (H, F)
    weights = [w.astype(bf16) for w in
               (w_xin, w_big, w_qyx3, w_y, w_muvar, w_px1, w_px3)]

    layout, btot = _bias_layout(F, Z, K, H)
    bias = jnp.zeros((1, btot), jnp.float32)
    for name, (off, width) in layout.items():
        bias = bias.at[0, off:off + width].set(params[name][0])
    return weights, bias, layout


def _pick_vmem_limit():
    """96 MiB on 128-MiB-VMEM parts (v5e/v6e); 48 MiB otherwise (v7x has 64 MiB)."""
    try:
        cap = int(pltpu.get_tpu_info().vmem_capacity_bytes)
    except Exception:   # query unavailable -> value that is legal on every chip
        cap = 0
    if cap >= 100 * 1024 * 1024:
        return 96 * 1024 * 1024
    return 48 * 1024 * 1024


def _gmvae_kernel(N, F, Z, K, H, TN, off_u, off_e, gumbel_temp, layout, *refs):
    (data_ref,
     wxin_ref, wbig_ref, wqyx3_ref, wy_ref, wmv_ref, wpx1_ref, wpx3_ref,
     bias_ref, loss_ref, pred_ref) = refs

    f32, bf16 = jnp.float32, jnp.bfloat16

    def bias(name):
        off, width = layout[name]
        return bias_ref[:, off:off + width]                 # (1, width) f32

    def mm(act_bf16, w):                                    # bf16 MXU matmul, f32 accumulate
        return jnp.dot(act_bf16, w, preferred_element_type=f32)

    # ---- unpack the single lane-aligned input slab --------------------------
    x = data_ref[:, 0:F]                                    # (TN, F) f32
    u = data_ref[:, off_u:off_u + K]                        # (TN, K) f32  gumbel base noise
    eps = data_ref[:, off_e:off_e + Z]                      # (TN, Z) f32  gaussian noise

    # ---- fused first layers: [q(y|x) layer1 | x-part of q(z|x,y) layer1] -----
    pre = mm(x.astype(bf16), wxin_ref[...])                 # (TN, 2H) f32
    h1 = jnp.maximum(pre[:, :H] + bias("qyx_b1"), 0.0).astype(bf16)
    pre_qz_x = pre[:, H:2 * H] + bias("qz_b1")              # stays f32 until the ReLU

    # ---- inference q(y|x): Linear-ReLU-Linear-ReLU-Linear + gumbel-softmax ----
    h1 = jnp.maximum(mm(h1, wbig_ref[0]) + bias("qyx_b2"), 0.0).astype(bf16)
    logits = mm(h1, wqyx3_ref[...]) + bias("qyx_b3")        # (TN, K) f32

    lmax = jnp.max(logits, axis=-1, keepdims=True)
    lexp = jnp.exp(logits - lmax)
    lsum = jnp.sum(lexp, axis=-1, keepdims=True)
    prob_cat = lexp * pl.reciprocal(lsum, approx=True)
    log_softmax = (logits - lmax) - jnp.log(lsum)

    eps20 = 1e-20
    g = -jnp.log(-jnp.log(u + eps20) + eps20)               # gumbel noise
    gl = (logits + g) * (1.0 / gumbel_temp)
    gmax = jnp.max(gl, axis=-1, keepdims=True)
    gexp = jnp.exp(gl - gmax)
    y = gexp * pl.reciprocal(jnp.sum(gexp, axis=-1, keepdims=True), approx=True)

    # ---- fused y-matmuls: [y-part of q(z|.) layer1 | p(z|y) mean | p(z|y) var] ----
    yout = mm(y.astype(bf16), wy_ref[...])                  # (TN, H + 2*LANE) f32
    y_mu = yout[:, H:H + Z] + bias("ymu_b")
    y_var = jax.nn.softplus(yout[:, H + LANE:H + LANE + Z] + bias("yvar_b"))

    # ---- inference q(z|x,y) -> gaussian reparameterization ----
    h2 = jnp.maximum(pre_qz_x + yout[:, :H], 0.0).astype(bf16)
    h2 = jnp.maximum(mm(h2, wbig_ref[1]) + bias("qz_b2"), 0.0).astype(bf16)
    mv = mm(h2, wmv_ref[...])                               # (TN, 2*LANE) f32
    mu = mv[:, :Z] + bias("mu_b")
    var = jax.nn.softplus(mv[:, LANE:LANE + Z] + bias("var_b"))
    std = jnp.sqrt(var + 1e-10)
    z = mu + eps * std

    # ---- generative p(x|z): Linear-ReLU x2, Linear (sigmoid folded into BCE) ----
    d = jnp.maximum(mm(z.astype(bf16), wpx1_ref[...]) + bias("px_b1"), 0.0).astype(bf16)
    d = jnp.maximum(mm(d, wbig_ref[2]) + bias("px_b2"), 0.0).astype(bf16)
    x_logit = mm(d, wpx3_ref[...]) + bias("px_b3")          # (TN, F) f32

    # ---- per-row loss terms ----
    # BCE on sigmoid(x_logit) via a single softplus: log(1-p) = log(p) - x_logit.
    # The -100 clamp on both logs matches torch.binary_cross_entropy's log floor.
    log_sig = -jax.nn.softplus(-x_logit)
    log_p = jnp.maximum(log_sig, -100.0)
    log_1mp = jnp.maximum(log_sig - x_logit, -100.0)
    bce_rows = -jnp.sum(x * log_p + (1.0 - x) * log_1mp, axis=-1, keepdims=True)

    def log_normal_nc(v, m, s2):
        # log N(v; m, s2) without the -0.5*log(2*pi) constant: it cancels exactly
        # in log_normal(z,mu,var) - log_normal(z,y_mu,y_var).
        s2 = s2 + 1e-8
        return -0.5 * jnp.sum(jnp.log(s2)
                              + (v - m) ** 2 * pl.reciprocal(s2, approx=True),
                              axis=-1, keepdims=True)

    gauss_rows = log_normal_nc(z, mu, var) - log_normal_nc(z, y_mu, y_var)
    # entropy_rows = -sum(p * log p) = +H(prob_cat) per row (torch LossFunctions.entropy)
    entropy_rows = -jnp.sum(prob_cat * log_softmax, axis=-1, keepdims=True)

    # ---- mask padded rows, emit lane-dense per-tile partial sums ----
    row = pl.program_id(0) * TN + jax.lax.broadcasted_iota(jnp.int32, (TN, 1), 0)
    valid = row < N
    sum_bce = jnp.sum(jnp.where(valid, bce_rows, 0.0))
    sum_gauss = jnp.sum(jnp.where(valid, gauss_rows, 0.0))
    sum_ent = jnp.sum(jnp.where(valid, entropy_rows, 0.0))

    lane = jax.lax.broadcasted_iota(jnp.int32, (1, LANE), 1)
    loss_row = (jnp.where(lane == 0, sum_bce, 0.0)
                + jnp.where(lane == 1, sum_gauss, 0.0)
                + jnp.where(lane == 2, sum_ent, 0.0))
    loss_ref[...] = jnp.broadcast_to(loss_row, (8, LANE)).astype(f32)

    # ---- predicted labels: first argmax over classes (torch.max semantics) ----
    k_iota = jax.lax.broadcasted_iota(jnp.int32, logits.shape, 1)
    pred = jnp.min(jnp.where(logits == lmax, k_iota, K), axis=-1, keepdims=True)
    pred_ref[...] = pred.astype(jnp.int32)


def cond_gmvae_forward(cond, params, noise_key, num_classes, z_dim,
                       gumbel_temp=1.0, w_rec=1.0, w_gauss=1.0, w_cat=1.0,
                       row_tile=DEF_ROW_TILE):
    """Returns (loss_total, loss_rec, loss_gauss, loss_cat, predicted_labels)."""
    B, F, T = cond.shape
    K, Z, H = int(num_classes), int(z_dim), HID
    x = jnp.transpose(cond, (0, 2, 1)).reshape(B * T, F).astype(jnp.float32)
    N = B * T

    # Row tile: cap at row_tile, but split into >= 2 tiles whenever N allows it
    # so the "parallel" grid axis uses both v7x TensorCores.
    row_tile = _round_up(max(int(row_tile), LANE), LANE)
    TN = min(row_tile, _round_up(pl.cdiv(N, 2), LANE))
    num_tiles = pl.cdiv(N, TN)
    Npad = num_tiles * TN

    ku, ke = jax.random.split(noise_key)
    u = jax.random.uniform(ku, (Npad, K), jnp.float32)     # gumbel base noise
    eps = jax.random.normal(ke, (Npad, Z), jnp.float32)    # gaussian noise

    # Pack x / u / eps into one lane-tile-aligned f32 slab: one contiguous,
    # lane-dense DMA per row tile instead of three narrow copies.
    off_u = _round_up(F, LANE)
    off_e = off_u + _round_up(K, LANE)
    WPAD = off_e + _round_up(Z, LANE)

    def lane_pad(a, width):
        return jnp.pad(a, ((0, 0), (0, width - a.shape[1])))

    x_pad = jnp.pad(x, ((0, Npad - N), (0, 0)))
    data = jnp.concatenate([lane_pad(x_pad, off_u),
                            lane_pad(u, off_e - off_u),
                            lane_pad(eps, WPAD - off_e)], axis=1)   # (Npad, WPAD)

    weights, bias_slab, layout = _pack_params(params, F, Z, K, H)

    data_spec = pl.BlockSpec((TN, WPAD), lambda i: (i, 0))

    def const_spec(a):   # full-shape block, constant index map -> fetched once
        ndim = a.ndim
        return pl.BlockSpec(a.shape, lambda i, _n=ndim: (0,) * _n)

    param_specs = [const_spec(w) for w in weights] + [const_spec(bias_slab)]

    out_shape = (jax.ShapeDtypeStruct((num_tiles * 8, LANE), jnp.float32),
                 jax.ShapeDtypeStruct((Npad, 1), jnp.int32))
    out_specs = (pl.BlockSpec((8, LANE), lambda i: (i, 0)),
                 pl.BlockSpec((TN, 1), lambda i: (i, 0)))

    kernel = functools.partial(_gmvae_kernel, N, F, Z, K, H, TN,
                               off_u, off_e, float(gumbel_temp), layout)

    losses, pred = pl.pallas_call(
        kernel,
        out_shape=out_shape,
        grid=(num_tiles,),
        in_specs=[data_spec] + param_specs,
        out_specs=out_specs,
        compiler_params=pltpu.CompilerParams(
            dimension_semantics=("parallel",),          # independent row tiles (2 TCs on v7x)
            vmem_limit_bytes=_pick_vmem_limit()),
    )(data, *weights, bias_slab)

    partial = losses.reshape(num_tiles, 8, LANE)[:, 0, :]
    sums = jnp.sum(partial, axis=0)
    inv_n = 1.0 / float(N)
    loss_rec = sums[0] * inv_n
    loss_gauss = sums[1] * inv_n
    entropy_mean = sums[2] * inv_n                          # = losses.entropy(logits, prob_cat)
    loss_cat = -entropy_mean - jnp.log(1.0 / num_classes)   # matches the torch reference
    loss_total = w_rec * loss_rec + w_gauss * loss_gauss + w_cat * loss_cat
    return loss_total, loss_rec, loss_gauss, loss_cat, pred[:N, 0]


if __name__ == "__main__":
    # Small shapes consistent with CondGMVAE.forward: cond is (B, cond_channels, T)
    B, T = 2, 8
    cond_channels = 12   # nFeatures  (GMVAE x_dim / input_size)
    x_channels = 8       # gaussian_size (z_dim)
    num_classes = 10

    key = jax.random.PRNGKey(0)
    k_cond, k_param, k_noise = jax.random.split(key, 3)

    # rec_type default is 'bce' -> data in [0, 1)
    cond = jax.random.uniform(k_cond, (B, cond_channels, T), jnp.float32)
    params = init_params(k_param, cond_channels, x_channels, num_classes)

    total, rec, gauss, cat, pred = cond_gmvae_forward(
        cond, params, k_noise, num_classes, x_channels, gumbel_temp=1.0)

    total, rec, gauss, cat, pred = jax.block_until_ready((total, rec, gauss, cat, pred))

    assert pred.shape == (B * T,) and pred.dtype == jnp.int32
    assert bool(jnp.isfinite(total)) and bool(jnp.isfinite(rec))
    assert bool(jnp.isfinite(gauss)) and bool(jnp.isfinite(cat))
    print("KERNEL_OK")
</pallas_src>

<mosaic_0001>
module attributes {stable_mosaic.version = 11 : i64} {
  func.func @_gmvae_kernel(%arg0: i32, %arg1: memref<128x384xf32, #tpu.memory_space<vmem>>, %arg2: memref<12x1024xbf16, #tpu.memory_space<vmem>>, %arg3: memref<3x512x512xbf16, #tpu.memory_space<vmem>>, %arg4: memref<512x10xbf16, #tpu.memory_space<vmem>>, %arg5: memref<10x768xbf16, #tpu.memory_space<vmem>>, %arg6: memref<512x256xbf16, #tpu.memory_space<vmem>>, %arg7: memref<8x512xbf16, #tpu.memory_space<vmem>>, %arg8: memref<512x12xbf16, #tpu.memory_space<vmem>>, %arg9: memref<1x3840xf32, #tpu.memory_space<vmem>>, %arg10: memref<8x128xf32, #tpu.memory_space<vmem>>, %arg11: memref<128x1xi32, #tpu.memory_space<vmem>>) attributes {dimension_semantics = [#tpu.dimension_semantics<parallel>], iteration_bounds = array<i64: 1>, scalar_prefetch = 0 : i64, scratch_operands = 0 : i64, tpu.core_type = #tpu.core_type<tc>, window_params = [{transform_indices = @transform_0, window_bounds = array<i64: 128, 384>}, {pipeline_mode = #tpu.pipeline_mode<synchronous>, transform_indices = @transform_1, window_bounds = array<i64: 12, 1024>}, {pipeline_mode = #tpu.pipeline_mode<synchronous>, transform_indices = @transform_2, window_bounds = array<i64: 3, 512, 512>}, {pipeline_mode = #tpu.pipeline_mode<synchronous>, transform_indices = @transform_3, window_bounds = array<i64: 512, 10>}, {pipeline_mode = #tpu.pipeline_mode<synchronous>, transform_indices = @transform_4, window_bounds = array<i64: 10, 768>}, {pipeline_mode = #tpu.pipeline_mode<synchronous>, transform_indices = @transform_5, window_bounds = array<i64: 512, 256>}, {pipeline_mode = #tpu.pipeline_mode<synchronous>, transform_indices = @transform_6, window_bounds = array<i64: 8, 512>}, {pipeline_mode = #tpu.pipeline_mode<synchronous>, transform_indices = @transform_7, window_bounds = array<i64: 512, 12>}, {pipeline_mode = #tpu.pipeline_mode<synchronous>, transform_indices = @transform_8, window_bounds = array<i64: 1, 3840>}, {transform_indices = @transform_9, window_bounds = array<i64: 8, 128>}, {transform_indices = @transform_10, window_bounds = array<i64: 128, 1>}]} {
    %c0 = arith.constant 0 : index
    %c0_0 = arith.constant 0 : index
    %0 = vector.load %arg1[%c0, %c0_0] : memref<128x384xf32, #tpu.memory_space<vmem>>, vector<128x12xf32>
    %c0_1 = arith.constant 0 : index
    %c128 = arith.constant 128 : index
    %1 = vector.load %arg1[%c0_1, %c128] : memref<128x384xf32, #tpu.memory_space<vmem>>, vector<128x10xf32>
    %c0_2 = arith.constant 0 : index
    %c256 = arith.constant 256 : index
    %2 = vector.load %arg1[%c0_2, %c256] : memref<128x384xf32, #tpu.memory_space<vmem>>, vector<128x8xf32>
    %3 = arith.truncf %0 : vector<128x12xf32> to vector<128x12xbf16>
    %c0_3 = arith.constant 0 : index
    %c0_4 = arith.constant 0 : index
    %4 = vector.load %arg2[%c0_3, %c0_4] : memref<12x1024xbf16, #tpu.memory_space<vmem>>, vector<12x1024xbf16>
    %cst = arith.constant dense<0.000000e+00> : vector<128x1024xf32>
    %5 = tpu.matmul %3, %4, %cst {dimension_numbers = #tpu.dot_dimension_numbers<[1], [0], [0], [1], [0, 0, 1, 1], [], []>} : vector<128x12xbf16>, vector<12x1024xbf16>, vector<128x1024xf32> -> vector<128x1024xf32>
    %6 = vector.extract_strided_slice %5 {offsets = [0, 0], sizes = [128, 512], strides = [1, 1]} : vector<128x1024xf32> to vector<128x512xf32>
    %c0_5 = arith.constant 0 : index
    %c0_6 = arith.constant 0 : index
    %7 = vector.load %arg9[%c0_5, %c0_6] : memref<1x3840xf32, #tpu.memory_space<vmem>>, vector<1x512xf32>
    %8 = vector.broadcast %7 : vector<1x512xf32> to vector<128x512xf32>
    %9 = arith.addf %6, %8 : vector<128x512xf32>
    %cst_7 = arith.constant 0.000000e+00 : f32
    %10 = vector.broadcast %cst_7 : f32 to vector<128x512xf32>
    %11 = arith.maximumf %9, %10 : vector<128x512xf32>
    %12 = arith.truncf %11 : vector<128x512xf32> to vector<128x512xbf16>
    %13 = vector.extract_strided_slice %5 {offsets = [0, 512], sizes = [128, 512], strides = [1, 1]} : vector<128x1024xf32> to vector<128x512xf32>
    %c0_8 = arith.constant 0 : index
    %c512 = arith.constant 512 : index
    %14 = vector.load %arg9[%c0_8, %c512] : memref<1x3840xf32, #tpu.memory_space<vmem>>, vector<1x512xf32>
    %15 = vector.broadcast %14 : vector<1x512xf32> to vector<128x512xf32>
    %16 = arith.addf %13, %15 : vector<128x512xf32>
    %c0_9 = arith.constant 0 : index
    %c0_10 = arith.constant 0 : index
    %c0_11 = arith.constant 0 : index
    %17 = vector.load %arg3[%c0_9, %c0_10, %c0_11] : memref<3x512x512xbf16, #tpu.memory_space<vmem>>, vector<1x512x512xbf16>
    %18 = vector.shape_cast %17 : vector<1x512x512xbf16> to vector<512x512xbf16>
    %cst_12 = arith.constant dense<0.000000e+00> : vector<128x512xf32>
    %19 = tpu.matmul %12, %18, %cst_12 {dimension_numbers = #tpu.dot_dimension_numbers<[1], [0], [0], [1], [0, 0, 1, 1], [], []>} : vector<128x512xbf16>, vector<512x512xbf16>, vector<128x512xf32> -> vector<128x512xf32>
    %c0_13 = arith.constant 0 : index
    %c1024 = arith.constant 1024 : index
    %20 = vector.load %arg9[%c0_13, %c1024] : memref<1x3840xf32, #tpu.memory_space<vmem>>, vector<1x512xf32>
    %21 = vector.broadcast %20 : vector<1x512xf32> to vector<128x512xf32>
    %22 = arith.addf %19, %21 : vector<128x512xf32>
    %cst_14 = arith.constant 0.000000e+00 : f32
    %23 = vector.broadcast %cst_14 : f32 to vector<128x512xf32>
    %24 = arith.maximumf %22, %23 : vector<128x512xf32>
    %25 = arith.truncf %24 : vector<128x512xf32> to vector<128x512xbf16>
    %c0_15 = arith.constant 0 : index
    %c0_16 = arith.constant 0 : index
    %26 = vector.load %arg4[%c0_15, %c0_16] : memref<512x10xbf16, #tpu.memory_space<vmem>>, vector<512x10xbf16>
    %cst_17 = arith.constant dense<0.000000e+00> : vector<128x10xf32>
    %27 = tpu.matmul %25, %26, %cst_17 {dimension_numbers = #tpu.dot_dimension_numbers<[1], [0], [0], [1], [0, 0, 1, 1], [], []>} : vector<128x512xbf16>, vector<512x10xbf16>, vector<128x10xf32> -> vector<128x10xf32>
    %c0_18 = arith.constant 0 : index
    %c1536 = arith.constant 1536 : index
    %28 = vector.load %arg9[%c0_18, %c1536] : memref<1x3840xf32, #tpu.memory_space<vmem>>, vector<1x10xf32>
    %29 = vector.broadcast %28 : vector<1x10xf32> to vector<128x10xf32>
    %30 = arith.addf %27, %29 : vector<128x10xf32>
    %cst_19 = arith.constant dense<0xFF800000> : vector<128xf32>
    %31 = vector.multi_reduction <maximumf>, %30, %cst_19 [1] : vector<128x10xf32> to vector<128xf32>
    %32 = vector.shape_cast %31 : vector<128xf32> to vector<128x1xf32>
    %33 = vector.broadcast %32 : vector<128x1xf32> to vector<128x10xf32>
    %34 = arith.subf %30, %33 : vector<128x10xf32>
    %35 = math.exp %34 : vector<128x10xf32>
    %cst_20 = arith.constant dense<0.000000e+00> : vector<128xf32>
    %36 = vector.multi_reduction <add>, %35, %cst_20 [1] : vector<128x10xf32> to vector<128xf32>
    %37 = vector.shape_cast %36 : vector<128xf32> to vector<128x1xf32>
    %38 = tpu.reciprocal %37 {approx = true} : vector<128x1xf32> -> vector<128x1xf32>
    %39 = vector.broadcast %38 : vector<128x1xf32> to vector<128x10xf32>
    %40 = arith.mulf %35, %39 : vector<128x10xf32>
    %41 = vector.broadcast %32 : vector<128x1xf32> to vector<128x10xf32>
    %42 = arith.subf %30, %41 : vector<128x10xf32>
    %43 = math.log %37 : vector<128x1xf32>
    %44 = vector.broadcast %43 : vector<128x1xf32> to vector<128x10xf32>
    %45 = arith.subf %42, %44 : vector<128x10xf32>
    %cst_21 = arith.constant 9.99999968E-21 : f32
    %46 = vector.broadcast %cst_21 : f32 to vector<128x10xf32>
    %47 = arith.addf %1, %46 : vector<128x10xf32>
    %48 = math.log %47 : vector<128x10xf32>
    %cst_22 = arith.constant 0.000000e+00 : f32
    %49 = vector.broadcast %cst_22 : f32 to vector<128x10xf32>
    %50 = arith.subf %49, %48 : vector<128x10xf32>
    %cst_23 = arith.constant 9.99999968E-21 : f32
    %51 = vector.broadcast %cst_23 : f32 to vector<128x10xf32>
    %52 = arith.addf %50, %51 : vector<128x10xf32>
    %53 = math.log %52 : vector<128x10xf32>
    %cst_24 = arith.constant 0.000000e+00 : f32
    %54 = vector.broadcast %cst_24 : f32 to vector<128x10xf32>
    %55 = arith.subf %54, %53 : vector<128x10xf32>
    %56 = arith.addf %30, %55 : vector<128x10xf32>
    %cst_25 = arith.constant 1.000000e+00 : f32
    %57 = vector.broadcast %cst_25 : f32 to vector<128x10xf32>
    %58 = arith.mulf %56, %57 : vector<128x10xf32>
    %cst_26 = arith.constant dense<0xFF800000> : vector<128xf32>
    %59 = vector.multi_reduction <maximumf>, %58, %cst_26 [1] : vector<128x10xf32> to vector<128xf32>
    %60 = vector.shape_cast %59 : vector<128xf32> to vector<128x1xf32>
    %61 = vector.broadcast %60 : vector<128x1xf32> to vector<128x10xf32>
    %62 = arith.subf %58, %61 : vector<128x10xf32>
    %63 = math.exp %62 : vector<128x10xf32>
    %cst_27 = arith.constant dense<0.000000e+00> : vector<128xf32>
    %64 = vector.multi_reduction <add>, %63, %cst_27 [1] : vector<128x10xf32> to vector<128xf32>
    %65 = vector.shape_cast %64 : vector<128xf32> to vector<128x1xf32>
    %66 = tpu.reciprocal %65 {approx = true} : vector<128x1xf32> -> vector<128x1xf32>
    %67 = vector.broadcast %66 : vector<128x1xf32> to vector<128x10xf32>
    %68 = arith.mulf %63, %67 : vector<128x10xf32>
    %69 = arith.truncf %68 : vector<128x10xf32> to vector<128x10xbf16>
    %c0_28 = arith.constant 0 : index
    %c0_29 = arith.constant 0 : index
    %70 = vector.load %arg5[%c0_28, %c0_29] : memref<10x768xbf16, #tpu.memory_space<vmem>>, vector<10x768xbf16>
    %cst_30 = arith.constant dense<0.000000e+00> : vector<128x768xf32>
    %71 = tpu.matmul %69, %70, %cst_30 {dimension_numbers = #tpu.dot_dimension_numbers<[1], [0], [0], [1], [0, 0, 1, 1], [], []>} : vector<128x10xbf16>, vector<10x768xbf16>, vector<128x768xf32> -> vector<128x768xf32>
    %72 = vector.extract_strided_slice %71 {offsets = [0, 512], sizes = [128, 8], strides = [1, 1]} : vector<128x768xf32> to vector<128x8xf32>
    %c0_31 = arith.constant 0 : index
    %c1664 = arith.constant 1664 : index
    %73 = vector.load %arg9[%c0_31, %c1664] : memref<1x3840xf32, #tpu.memory_space<vmem>>, vector<1x8xf32>
    %74 = vector.broadcast %73 : vector<1x8xf32> to vector<128x8xf32>
    %75 = arith.addf %72, %74 : vector<128x8xf32>
    %76 = vector.extract_strided_slice %71 {offsets = [0, 640], sizes = [128, 8], strides = [1, 1]} : vector<128x768xf32> to vector<128x8xf32>
    %c0_32 = arith.constant 0 : index
    %c1792 = arith.constant 1792 : index
    %77 = vector.load %arg9[%c0_32, %c1792] : memref<1x3840xf32, #tpu.memory_space<vmem>>, vector<1x8xf32>
    %78 = vector.broadcast %77 : vector<1x8xf32> to vector<128x8xf32>
    %79 = arith.addf %76, %78 : vector<128x8xf32>
    %cst_33 = arith.constant 0.000000e+00 : f32
    %80 = vector.broadcast %cst_33 : f32 to vector<128x8xf32>
    %81 = arith.maximumf %79, %80 : vector<128x8xf32>
    %82 = vector.broadcast %cst_33 : f32 to vector<128x8xf32>
    %83 = arith.subf %79, %82 : vector<128x8xf32>
    %84 = arith.cmpf one, %83, %83 : vector<128x8xf32>
    %85 = vector.broadcast %cst_33 : f32 to vector<128x8xf32>
    %86 = arith.addf %79, %85 : vector<128x8xf32>
    %87 = math.absf %83 : vector<128x8xf32>
    %cst_34 = arith.constant 0.000000e+00 : f32
    %88 = vector.broadcast %cst_34 : f32 to vector<128x8xf32>
    %89 = arith.subf %88, %87 : vector<128x8xf32>
    %90 = math.exp %89 : vector<128x8xf32>
    %91 = math.log1p %90 : vector<128x8xf32>
    %92 = arith.addf %81, %91 : vector<128x8xf32>
    %93 = arith.select %84, %86, %92 : vector<128x8xi1>, vector<128x8xf32>
    %94 = vector.extract_strided_slice %71 {offsets = [0, 0], sizes = [128, 512], strides = [1, 1]} : vector<128x768xf32> to vector<128x512xf32>
    %95 = arith.addf %16, %94 : vector<128x512xf32>
    %cst_35 = arith.constant 0.000000e+00 : f32
    %96 = vector.broadcast %cst_35 : f32 to vector<128x512xf32>
    %97 = arith.maximumf %95, %96 : vector<128x512xf32>
    %98 = arith.truncf %97 : vector<128x512xf32> to vector<128x512xbf16>
    %c1 = arith.constant 1 : index
    %c0_36 = arith.constant 0 : index
    %c0_37 = arith.constant 0 : index
    %99 = vector.load %arg3[%c1, %c0_36, %c0_37] : memref<3x512x512xbf16, #tpu.memory_space<vmem>>, vector<1x512x512xbf16>
    %100 = vector.shape_cast %99 : vector<1x512x512xbf16> to vector<512x512xbf16>
    %cst_38 = arith.constant dense<0.000000e+00> : vector<128x512xf32>
    %101 = tpu.matmul %98, %100, %cst_38 {dimension_numbers = #tpu.dot_dimension_numbers<[1], [0], [0], [1], [0, 0, 1, 1], [], []>} : vector<128x512xbf16>, vector<512x512xbf16>, vector<128x512xf32> -> vector<128x512xf32>
    %c0_39 = arith.constant 0 : index
    %c1920 = arith.constant 1920 : index
    %102 = vector.load %arg9[%c0_39, %c1920] : memref<1x3840xf32, #tpu.memory_space<vmem>>, vector<1x512xf32>
    %103 = vector.broadcast %102 : vector<1x512xf32> to vector<128x512xf32>
    %104 = arith.addf %101, %103 : vector<128x512xf32>
    %cst_40 = arith.constant 0.000000e+00 : f32
    %105 = vector.broadcast %cst_40 : f32 to vector<128x512xf32>
    %106 = arith.maximumf %104, %105 : vector<128x512xf32>
    %107 = arith.truncf %106 : vector<128x512xf32> to vector<128x512xbf16>
    %c0_41 = arith.constant 0 : index
    %c0_42 = arith.constant 0 : index
    %108 = vector.load %arg6[%c0_41, %c0_42] : memref<512x256xbf16, #tpu.memory_space<vmem>>, vector<512x256xbf16>
    %cst_43 = arith.constant dense<0.000000e+00> : vector<128x256xf32>
    %109 = tpu.matmul %107, %108, %cst_43 {dimension_numbers = #tpu.dot_dimension_numbers<[1], [0], [0], [1], [0, 0, 1, 1], [], []>} : vector<128x512xbf16>, vector<512x256xbf16>, vector<128x256xf32> -> vector<128x256xf32>
    %110 = vector.extract_strided_slice %109 {offsets = [0, 0], sizes = [128, 8], strides = [1, 1]} : vector<128x256xf32> to vector<128x8xf32>
    %c0_44 = arith.constant 0 : index
    %c2432 = arith.constant 2432 : index
    %111 = vector.load %arg9[%c0_44, %c2432] : memref<1x3840xf32, #tpu.memory_space<vmem>>, vector<1x8xf32>
    %112 = vector.broadcast %111 : vector<1x8xf32> to vector<128x8xf32>
    %113 = arith.addf %110, %112 : vector<128x8xf32>
    %114 = vector.extract_strided_slice %109 {offsets = [0, 128], sizes = [128, 8], strides = [1, 1]} : vector<128x256xf32> to vector<128x8xf32>
    %c0_45 = arith.constant 0 : index
    %c2560 = arith.constant 2560 : index
    %115 = vector.load %arg9[%c0_45, %c2560] : memref<1x3840xf32, #tpu.memory_space<vmem>>, vector<1x8xf32>
    %116 = vector.broadcast %115 : vector<1x8xf32> to vector<128x8xf32>
    %117 = arith.addf %114, %116 : vector<128x8xf32>
    %cst_46 = arith.constant 0.000000e+00 : f32
    %118 = vector.broadcast %cst_46 : f32 to vector<128x8xf32>
    %119 = arith.maximumf %117, %118 : vector<128x8xf32>
    %120 = vector.broadcast %cst_46 : f32 to vector<128x8xf32>
    %121 = arith.subf %117, %120 : vector<128x8xf32>
    %122 = arith.cmpf one, %121, %121 : vector<128x8xf32>
    %123 = vector.broadcast %cst_46 : f32 to vector<128x8xf32>
    %124 = arith.addf %117, %123 : vector<128x8xf32>
    %125 = math.absf %121 : vector<128x8xf32>
    %cst_47 = arith.constant 0.000000e+00 : f32
    %126 = vector.broadcast %cst_47 : f32 to vector<128x8xf32>
    %127 = arith.subf %126, %125 : vector<128x8xf32>
    %128 = math.exp %127 : vector<128x8xf32>
    %129 = math.log1p %128 : vector<128x8xf32>
    %130 = arith.addf %119, %129 : vector<128x8xf32>
    %131 = arith.select %122, %124, %130 : vector<128x8xi1>, vector<128x8xf32>
    %cst_48 = arith.constant 1.000000e-10 : f32
    %132 = vector.broadcast %cst_48 : f32 to vector<128x8xf32>
    %133 = arith.addf %131, %132 : vector<128x8xf32>
    %134 = math.sqrt %133 : vector<128x8xf32>
    %135 = arith.mulf %2, %134 : vector<128x8xf32>
    %136 = arith.addf %113, %135 : vector<128x8xf32>
    %137 = arith.truncf %136 : vector<128x8xf32> to vector<128x8xbf16>
    %c0_49 = arith.constant 0 : index
    %c0_50 = arith.constant 0 : index
    %138 = vector.load %arg7[%c0_49, %c0_50] : memref<8x512xbf16, #tpu.memory_space<vmem>>, vector<8x512xbf16>
    %cst_51 = arith.constant dense<0.000000e+00> : vector<128x512xf32>
    %139 = tpu.matmul %137, %138, %cst_51 {dimension_numbers = #tpu.dot_dimension_numbers<[1], [0], [0], [1], [0, 0, 1, 1], [], []>} : vector<128x8xbf16>, vector<8x512xbf16>, vector<128x512xf32> -> vector<128x512xf32>
    %c0_52 = arith.constant 0 : index
    %c2688 = arith.constant 2688 : index
    %140 = vector.load %arg9[%c0_52, %c2688] : memref<1x3840xf32, #tpu.memory_space<vmem>>, vector<1x512xf32>
    %141 = vector.broadcast %140 : vector<1x512xf32> to vector<128x512xf32>
    %142 = arith.addf %139, %141 : vector<128x512xf32>
    %cst_53 = arith.constant 0.000000e+00 : f32
    %143 = vector.broadcast %cst_53 : f32 to vector<128x512xf32>
    %144 = arith.maximumf %142, %143 : vector<128x512xf32>
    %145 = arith.truncf %144 : vector<128x512xf32> to vector<128x512xbf16>
    %c2 = arith.constant 2 : index
    %c0_54 = arith.constant 0 : index
    %c0_55 = arith.constant 0 : index
    %146 = vector.load %arg3[%c2, %c0_54, %c0_55] : memref<3x512x512xbf16, #tpu.memory_space<vmem>>, vector<1x512x512xbf16>
    %147 = vector.shape_cast %146 : vector<1x512x512xbf16> to vector<512x512xbf16>
    %cst_56 = arith.constant dense<0.000000e+00> : vector<128x512xf32>
    %148 = tpu.matmul %145, %147, %cst_56 {dimension_numbers = #tpu.dot_dimension_numbers<[1], [0], [0], [1], [0, 0, 1, 1], [], []>} : vector<128x512xbf16>, vector<512x512xbf16>, vector<128x512xf32> -> vector<128x512xf32>
    %c0_57 = arith.constant 0 : index
    %c3200 = arith.constant 3200 : index
    %149 = vector.load %arg9[%c0_57, %c3200] : memref<1x3840xf32, #tpu.memory_space<vmem>>, vector<1x512xf32>
    %150 = vector.broadcast %149 : vector<1x512xf32> to vector<128x512xf32>
    %151 = arith.addf %148, %150 : vector<128x512xf32>
    %cst_58 = arith.constant 0.000000e+00 : f32
    %152 = vector.broadcast %cst_58 : f32 to vector<128x512xf32>
    %153 = arith.maximumf %151, %152 : vector<128x512xf32>
    %154 = arith.truncf %153 : vector<128x512xf32> to vector<128x512xbf16>
    %c0_59 = arith.constant 0 : index
    %c0_60 = arith.constant 0 : index
    %155 = vector.load %arg8[%c0_59, %c0_60] : memref<512x12xbf16, #tpu.memory_space<vmem>>, vector<512x12xbf16>
    %cst_61 = arith.constant dense<0.000000e+00> : vector<128x12xf32>
    %156 = tpu.matmul %154, %155, %cst_61 {dimension_numbers = #tpu.dot_dimension_numbers<[1], [0], [0], [1], [0, 0, 1, 1], [], []>} : vector<128x512xbf16>, vector<512x12xbf16>, vector<128x12xf32> -> vector<128x12xf32>
    %c0_62 = arith.constant 0 : index
    %c3712 = arith.constant 3712 : index
    %157 = vector.load %arg9[%c0_62, %c3712] : memref<1x3840xf32, #tpu.memory_space<vmem>>, vector<1x12xf32>
    %158 = vector.broadcast %157 : vector<1x12xf32> to vector<128x12xf32>
    %159 = arith.addf %156, %158 : vector<128x12xf32>
    %cst_63 = arith.constant 0.000000e+00 : f32
    %160 = vector.broadcast %cst_63 : f32 to vector<128x12xf32>
    %161 = arith.subf %160, %159 : vector<128x12xf32>
    %cst_64 = arith.constant 0.000000e+00 : f32
    %162 = vector.broadcast %cst_64 : f32 to vector<128x12xf32>
    %163 = arith.maximumf %161, %162 : vector<128x12xf32>
    %164 = vector.broadcast %cst_64 : f32 to vector<128x12xf32>
    %165 = arith.subf %161, %164 : vector<128x12xf32>
    %166 = arith.cmpf one, %165, %165 : vector<128x12xf32>
    %167 = vector.broadcast %cst_64 : f32 to vector<128x12xf32>
    %168 = arith.addf %161, %167 : vector<128x12xf32>
    %169 = math.absf %165 : vector<128x12xf32>
    %cst_65 = arith.constant 0.000000e+00 : f32
    %170 = vector.broadcast %cst_65 : f32 to vector<128x12xf32>
    %171 = arith.subf %170, %169 : vector<128x12xf32>
    %172 = math.exp %171 : vector<128x12xf32>
    %173 = math.log1p %172 : vector<128x12xf32>
    %174 = arith.addf %163, %173 : vector<128x12xf32>
    %175 = arith.select %166, %168, %174 : vector<128x12xi1>, vector<128x12xf32>
    %cst_66 = arith.constant 0.000000e+00 : f32
    %176 = vector.broadcast %cst_66 : f32 to vector<128x12xf32>
    %177 = arith.subf %176, %175 : vector<128x12xf32>
    %cst_67 = arith.constant -1.000000e+02 : f32
    %178 = vector.broadcast %cst_67 : f32 to vector<128x12xf32>
    %179 = arith.maximumf %177, %178 : vector<128x12xf32>
    %180 = arith.subf %177, %159 : vector<128x12xf32>
    %cst_68 = arith.constant -1.000000e+02 : f32
    %181 = vector.broadcast %cst_68 : f32 to vector<128x12xf32>
    %182 = arith.maximumf %180, %181 : vector<128x12xf32>
    %183 = arith.mulf %0, %179 : vector<128x12xf32>
    %cst_69 = arith.constant 1.000000e+00 : f32
    %184 = vector.broadcast %cst_69 : f32 to vector<128x12xf32>
    %185 = arith.subf %184, %0 : vector<128x12xf32>
    %186 = arith.mulf %185, %182 : vector<128x12xf32>
    %187 = arith.addf %183, %186 : vector<128x12xf32>
    %cst_70 = arith.constant dense<0.000000e+00> : vector<128xf32>
    %188 = vector.multi_reduction <add>, %187, %cst_70 [1] : vector<128x12xf32> to vector<128xf32>
    %189 = vector.shape_cast %188 : vector<128xf32> to vector<128x1xf32>
    %cst_71 = arith.constant 0.000000e+00 : f32
    %190 = vector.broadcast %cst_71 : f32 to vector<128x1xf32>
    %191 = arith.subf %190, %189 : vector<128x1xf32>
    %cst_72 = arith.constant 9.99999993E-9 : f32
    %192 = vector.broadcast %cst_72 : f32 to vector<128x8xf32>
    %193 = arith.addf %131, %192 : vector<128x8xf32>
    %194 = math.log %193 : vector<128x8xf32>
    %195 = arith.subf %136, %113 : vector<128x8xf32>
    %196 = arith.mulf %195, %195 : vector<128x8xf32>
    %197 = tpu.reciprocal %193 {approx = true} : vector<128x8xf32> -> vector<128x8xf32>
    %198 = arith.mulf %196, %197 : vector<128x8xf32>
    %199 = arith.addf %194, %198 : vector<128x8xf32>
    %cst_73 = arith.constant dense<0.000000e+00> : vector<128xf32>
    %200 = vector.multi_reduction <add>, %199, %cst_73 [1] : vector<128x8xf32> to vector<128xf32>
    %201 = vector.shape_cast %200 : vector<128xf32> to vector<128x1xf32>
    %cst_74 = arith.constant -5.000000e-01 : f32
    %202 = vector.broadcast %cst_74 : f32 to vector<128x1xf32>
    %203 = arith.mulf %202, %201 : vector<128x1xf32>
    %cst_75 = arith.constant 9.99999993E-9 : f32
    %204 = vector.broadcast %cst_75 : f32 to vector<128x8xf32>
    %205 = arith.addf %93, %204 : vector<128x8xf32>
    %206 = math.log %205 : vector<128x8xf32>
    %207 = arith.subf %136, %75 : vector<128x8xf32>
    %208 = arith.mulf %207, %207 : vector<128x8xf32>
    %209 = tpu.reciprocal %205 {approx = true} : vector<128x8xf32> -> vector<128x8xf32>
    %210 = arith.mulf %208, %209 : vector<128x8xf32>
    %211 = arith.addf %206, %210 : vector<128x8xf32>
    %cst_76 = arith.constant dense<0.000000e+00> : vector<128xf32>
    %212 = vector.multi_reduction <add>, %211, %cst_76 [1] : vector<128x8xf32> to vector<128xf32>
    %213 = vector.shape_cast %212 : vector<128xf32> to vector<128x1xf32>
    %cst_77 = arith.constant -5.000000e-01 : f32
    %214 = vector.broadcast %cst_77 : f32 to vector<128x1xf32>
    %215 = arith.mulf %214, %213 : vector<128x1xf32>
    %216 = arith.subf %203, %215 : vector<128x1xf32>
    %217 = arith.mulf %40, %45 : vector<128x10xf32>
    %cst_78 = arith.constant dense<0.000000e+00> : vector<128xf32>
    %218 = vector.multi_reduction <add>, %217, %cst_78 [1] : vector<128x10xf32> to vector<128xf32>
    %219 = vector.shape_cast %218 : vector<128xf32> to vector<128x1xf32>
    %cst_79 = arith.constant 0.000000e+00 : f32
    %220 = vector.broadcast %cst_79 : f32 to vector<128x1xf32>
    %221 = arith.subf %220, %219 : vector<128x1xf32>
    %c128_i32 = arith.constant 128 : i32
    %222 = arith.muli %arg0, %c128_i32 : i32
    %223 = tpu.iota {dimensions = array<i32: 0>} : vector<128x1xi32>
    %224 = vector.broadcast %222 : i32 to vector<128x1xi32>
    %225 = arith.addi %224, %223 : vector<128x1xi32>
    %c16_i32 = arith.constant 16 : i32
    %226 = vector.broadcast %c16_i32 : i32 to vector<128x1xi32>
    %227 = arith.cmpi slt, %225, %226 : vector<128x1xi32>
    %cst_80 = arith.constant 0.000000e+00 : f32
    %228 = vector.broadcast %cst_80 : f32 to vector<128x1xf32>
    %229 = arith.select %227, %191, %228 : vector<128x1xi1>, vector<128x1xf32>
    %230 = vector.shape_cast %229 : vector<128x1xf32> to vector<1x128x1xf32>
    %cst_81 = arith.constant dense<0.000000e+00> : vector<1xf32>
    %231 = vector.multi_reduction <add>, %230, %cst_81 [1, 2] : vector<1x128x1xf32> to vector<1xf32>
    %232 = vector.shape_cast %231 : vector<1xf32> to vector<1x1x1xf32>
    %233 = vector.extract %232[0, 0, 0] : f32 from vector<1x1x1xf32>
    %cst_82 = arith.constant 0.000000e+00 : f32
    %234 = vector.broadcast %cst_82 : f32 to vector<128x1xf32>
    %235 = arith.select %227, %216, %234 : vector<128x1xi1>, vector<128x1xf32>
    %236 = vector.shape_cast %235 : vector<128x1xf32> to vector<1x128x1xf32>
    %cst_83 = arith.constant dense<0.000000e+00> : vector<1xf32>
    %237 = vector.multi_reduction <add>, %236, %cst_83 [1, 2] : vector<1x128x1xf32> to vector<1xf32>
    %238 = vector.shape_cast %237 : vector<1xf32> to vector<1x1x1xf32>
    %239 = vector.extract %238[0, 0, 0] : f32 from vector<1x1x1xf32>
    %cst_84 = arith.constant 0.000000e+00 : f32
    %240 = vector.broadcast %cst_84 : f32 to vector<128x1xf32>
    %241 = arith.select %227, %221, %240 : vector<128x1xi1>, vector<128x1xf32>
    %242 = vector.shape_cast %241 : vector<128x1xf32> to vector<1x128x1xf32>
    %cst_85 = arith.constant dense<0.000000e+00> : vector<1xf32>
    %243 = vector.multi_reduction <add>, %242, %cst_85 [1, 2] : vector<1x128x1xf32> to vector<1xf32>
    %244 = vector.shape_cast %243 : vector<1xf32> to vector<1x1x1xf32>
    %245 = vector.extract %244[0, 0, 0] : f32 from vector<1x1x1xf32>
    %246 = tpu.iota {dimensions = array<i32: 1>} : vector<1x128xi32>
    %c0_i32 = arith.constant 0 : i32
    %247 = vector.broadcast %c0_i32 : i32 to vector<1x128xi32>
    %248 = arith.cmpi eq, %246, %247 : vector<1x128xi32>
    %cst_86 = arith.constant 0.000000e+00 : f32
    %249 = vector.broadcast %233 : f32 to vector<1x128xf32>
    %250 = vector.broadcast %cst_86 : f32 to vector<1x128xf32>
    %251 = arith.select %248, %249, %250 : vector<1x128xi1>, vector<1x128xf32>
    %c1_i32 = arith.constant 1 : i32
    %252 = vector.broadcast %c1_i32 : i32 to vector<1x128xi32>
    %253 = arith.cmpi eq, %246, %252 : vector<1x128xi32>
    %cst_87 = arith.constant 0.000000e+00 : f32
    %254 = vector.broadcast %239 : f32 to vector<1x128xf32>
    %255 = vector.broadcast %cst_87 : f32 to vector<1x128xf32>
    %256 = arith.select %253, %254, %255 : vector<1x128xi1>, vector<1x128xf32>
    %257 = arith.addf %251, %256 : vector<1x128xf32>
    %c2_i32 = arith.constant 2 : i32
    %258 = vector.broadcast %c2_i32 : i32 to vector<1x128xi32>
    %259 = arith.cmpi eq, %246, %258 : vector<1x128xi32>
    %cst_88 = arith.constant 0.000000e+00 : f32
    %260 = vector.broadcast %245 : f32 to vector<1x128xf32>
    %261 = vector.broadcast %cst_88 : f32 to vector<1x128xf32>
    %262 = arith.select %259, %260, %261 : vector<1x128xi1>, vector<1x128xf32>
    %263 = arith.addf %257, %262 : vector<1x128xf32>
    %264 = vector.shape_cast %263 : vector<1x128xf32> to vector<1x128xf32>
    %265 = vector.broadcast %264 : vector<1x128xf32> to vector<8x128xf32>
    %c0_89 = arith.constant 0 : index
    %c0_90 = arith.constant 0 : index
    %266 = vector.load %arg10[%c0_89, %c0_90] : memref<8x128xf32, #tpu.memory_space<vmem>>, vector<8x128xf32>
    tpu.vector_store %arg10[%c0_89, %c0_90], %265 {strides = array<i32>} : memref<8x128xf32, #tpu.memory_space<vmem>>, vector<8x128xf32>,
    %267 = tpu.iota {dimensions = array<i32: 1>} : vector<128x10xi32>
    %268 = vector.broadcast %32 : vector<128x1xf32> to vector<128x10xf32>
    %269 = arith.cmpf oeq, %30, %268 : vector<128x10xf32>
    %c10_i32 = arith.constant 10 : i32
    %270 = vector.broadcast %c10_i32 : i32 to vector<128x10xi32>
    %271 = arith.select %269, %267, %270 : vector<128x10xi1>, vector<128x10xi32>
    %cst_91 = arith.constant dense<2147483647> : vector<128xi32>
    %272 = vector.multi_reduction <minsi>, %271, %cst_91 [1] : vector<128x10xi32> to vector<128xi32>
    %273 = vector.shape_cast %272 : vector<128xi32> to vector<128x1xi32>
    %c0_92 = arith.constant 0 : index
    %c0_93 = arith.constant 0 : index
    %274 = vector.load %arg11[%c0_92, %c0_93] : memref<128x1xi32, #tpu.memory_space<vmem>>, vector<128x1xi32>
    tpu.vector_store %arg11[%c0_92, %c0_93], %273 {strides = array<i32>} : memref<128x1xi32, #tpu.memory_space<vmem>>, vector<128x1xi32>,
    return
  }
  func.func @transform_0(%arg0: i32) -> (i32, i32) {
    %c0_i32 = arith.constant 0 : i32
    %c0_i32_0 = arith.constant 0 : i32
    return %arg0, %c0_i32 : i32, i32
  }
  func.func @transform_1(%arg0: i32) -> (i32, i32) {
    %c0_i32 = arith.constant 0 : i32
    %c0_i32_0 = arith.constant 0 : i32
    %c0_i32_1 = arith.constant 0 : i32
    return %c0_i32, %c0_i32_0 : i32, i32
  }
  func.func @transform_2(%arg0: i32) -> (i32, i32, i32) {
    %c0_i32 = arith.constant 0 : i32
    %c0_i32_0 = arith.constant 0 : i32
    %c0_i32_1 = arith.constant 0 : i32
    %c0_i32_2 = arith.constant 0 : i32
    return %c0_i32, %c0_i32_0, %c0_i32_1 : i32, i32, i32
  }
  func.func @transform_3(%arg0: i32) -> (i32, i32) {
    %c0_i32 = arith.constant 0 : i32
    %c0_i32_0 = arith.constant 0 : i32
    %c0_i32_1 = arith.constant 0 : i32
    return %c0_i32, %c0_i32_0 : i32, i32
  }
  func.func @transform_4(%arg0: i32) -> (i32, i32) {
    %c0_i32 = arith.constant 0 : i32
    %c0_i32_0 = arith.constant 0 : i32
    %c0_i32_1 = arith.constant 0 : i32
    return %c0_i32, %c0_i32_0 : i32, i32
  }
  func.func @transform_5(%arg0: i32) -> (i32, i32) {
    %c0_i32 = arith.constant 0 : i32
    %c0_i32_0 = arith.constant 0 : i32
    %c0_i32_1 = arith.constant 0 : i32
    return %c0_i32, %c0_i32_0 : i32, i32
  }
  func.func @transform_6(%arg0: i32) -> (i32, i32) {
    %c0_i32 = arith.constant 0 : i32
    %c0_i32_0 = arith.constant 0 : i32
    %c0_i32_1 = arith.constant 0 : i32
    return %c0_i32, %c0_i32_0 : i32, i32
  }
  func.func @transform_7(%arg0: i32) -> (i32, i32) {
    %c0_i32 = arith.constant 0 : i32
    %c0_i32_0 = arith.constant 0 : i32
    %c0_i32_1 = arith.constant 0 : i32
    return %c0_i32, %c0_i32_0 : i32, i32
  }
  func.func @transform_8(%arg0: i32) -> (i32, i32) {
    %c0_i32 = arith.constant 0 : i32
    %c0_i32_0 = arith.constant 0 : i32
    %c0_i32_1 = arith.constant 0 : i32
    return %c0_i32, %c0_i32_0 : i32, i32
  }
  func.func @transform_9(%arg0: i32) -> (i32, i32) {
    %c0_i32 = arith.constant 0 : i32
    %c0_i32_0 = arith.constant 0 : i32
    return %arg0, %c0_i32 : i32, i32
  }
  func.func @transform_10(%arg0: i32) -> (i32, i32) {
    %c0_i32 = arith.constant 0 : i32
    %c0_i32_0 = arith.constant 0 : i32
    return %arg0, %c0_i32 : i32, i32
  }
}

</mosaic_0001>

<llo_original>
// kernel: tpu_custom_call.1
$region0: #{tpu_custom_call.1}
  #allocation0 [shape = 'u32[]', space=smem, size = 0x4, offset = 0x4, fixed_abs, tag = 'smem constant byte address 0x4 - core index']
  #allocation1 [shape = 'u32[144,128]{1,0:T(1,128)}', space=vmem, size = 0x12000, scoped, tag = 'internal scratch']
  %s0 = inlined_call_operand.hbm [shape: f32[128,384], index: 0, kind: input, shape index: {}]
  %s1 = inlined_call_operand.hbm [shape: bf16[12,1024], index: 1, kind: input, shape index: {}]
  %s2 = inlined_call_operand.hbm [shape: bf16[3,512,512], index: 2, kind: input, shape index: {}]
  %s3 = inlined_call_operand.vmem [shape: bf16[512,10], index: 3, kind: input, shape index: {}]
  %s4 = inlined_call_operand.hbm [shape: bf16[10,768], index: 4, kind: input, shape index: {}]
  %s5 = inlined_call_operand.hbm [shape: bf16[512,256], index: 5, kind: input, shape index: {}]
  %s6 = inlined_call_operand.hbm [shape: bf16[8,512], index: 6, kind: input, shape index: {}]
  %s7 = inlined_call_operand.vmem [shape: bf16[512,12], index: 7, kind: input, shape index: {}]
  %s8 = inlined_call_operand.hbm [shape: f32[1,3840], index: 8, kind: input, shape index: {}]
  %s9 = inlined_call_operand.hbm [shape: f32[8,128], index: 9, kind: output, shape index: {0}]
  %s10 = inlined_call_operand.vmem [shape: s32[128,1], index: 10, kind: output, shape index: {1}]
  %11 = xla_tuple %s9, %s10
  %s12 = sld [smem:[#allocation0]]
  $region82: #{tpu_custom_call.1} parent=0
    _
  %s14 = ssub.s32 1, %s12
  %s15 = scalar_select 0, %s14, %s12
  $region1: #{tpu_custom_call.1} parent=0
    #allocation2 [shape = 'u8[196608]{0}', space=vmem, size = 0x30000, scoped, tag = 'input window, operand 0, single buffered']
    #allocation3 [shape = 's32[1]{0}', space=sflag, size = 0x4, scoped, tag = 'scoped memory for tpu_custom_call.1']
    #allocation4 [shape = 's32[1]{0}', space=sflag, size = 0x4, scoped, tag = 'scoped memory for tpu_custom_call.1']
    #allocation5 [shape = 'u8[32768]{0}', space=vmem, size = 0x8000, scoped, tag = 'input window, operand 1, single buffered']
    #allocation6 [shape = 's32[1]{0}', space=sflag, size = 0x4, scoped, tag = 'scoped memory for tpu_custom_call.1']
    #allocation7 [shape = 'u8[1572864]{0}', space=vmem, size = 0x180000, scoped, tag = 'input window, operand 2, single buffered']
    #allocation8 [shape = 'u8[24576]{0}', space=vmem, size = 0x6000, scoped, tag = 'input window, operand 4, single buffered']
    #allocation9 [shape = 's32[1]{0}', space=sflag, size = 0x4, scoped, tag = 'scoped memory for tpu_custom_call.1']
    #allocation10 [shape = 'u8[262144]{0}', space=vmem, size = 0x40000, scoped, tag = 'input window, operand 5, single buffered']
    #allocation11 [shape = 'u8[8192]{0}', space=vmem, size = 0x2000, scoped, tag = 'input window, operand 6, single buffered']
    #allocation12 [shape = 's32[1]{0}', space=sflag, size = 0x4, scoped, tag = 'scoped memory for tpu_custom_call.1']
    #allocation13 [shape = 'u8[15360]{0}', space=vmem, size = 0x3c00, scoped, tag = 'input window, operand 8, single buffered']
    #allocation14 [shape = 'u8[4096]{0}', space=vmem, size = 0x1000, scoped, tag = 'output window, operand 0, single buffered']
    %16 = vsyncpa [#allocation3], 0
    %17 = vsyncpa [#allocation6], 0
    %18 = vsyncpa [#allocation9], 0
    %19 = vsyncpa [#allocation12], 0
    %20 = vsyncpa [#allocation4], 0
    // Predicated region
    $region2: #{tpu_custom_call.1} parent=1 // pred_check
      _
    $region3: #{tpu_custom_call.1} parent=1 // pred_check_branch
      %22 = sbr.rel (0) target = $region5
    $region4: #{tpu_custom_call.1} parent=1 // pred_region
      %s24 = ssub.s32 6144, 6144
      %25 = vsyncadd [#allocation3], %s24
      %s26 = sshll.u32 [#allocation2], 4
      %s27 = int_to_ptr.vmem [resolvable:$true] %s26
      %32 = dma.hbm_to_vmem [thread:$0]  %s0, 6144, %s27, [#allocation3], 384, 384, 24
    $region5: #{tpu_custom_call.1} parent=1 // pred_fallthru
      _
    // Predicated region
    $region6: #{tpu_custom_call.1} parent=1 // pred_check
      _
    $region7: #{tpu_custom_call.1} parent=1 // pred_check_branch
      %34 = sbr.rel (0) target = $region9
    $region8: #{tpu_custom_call.1} parent=1 // pred_region
      %s36 = ssub.s32 1024, 1024
      %37 = vsyncadd [#allocation6], %s36
      %s38 = sshll.u32 [#allocation5], 4
      %s39 = int_to_ptr.vmem [resolvable:$true] %s38
      %44 = dma.hbm_to_vmem [thread:$0]  %s1, 1024, %s39, [#allocation6], 512, 512, 32
    $region9: #{tpu_custom_call.1} parent=1 // pred_fallthru
      _
    // Predicated region
    $region10: #{tpu_custom_call.1} parent=1 // pred_check
      _
    $region11: #{tpu_custom_call.1} parent=1 // pred_check_branch
      %46 = sbr.rel (0) target = $region13
    $region12: #{tpu_custom_call.1} parent=1 // pred_region
      %s48 = ssub.s32 49152, 49152
      %49 = vsyncadd [#allocation6], %s48
      %s50 = sshll.u32 [#allocation7], 4
      %s51 = int_to_ptr.vmem [resolvable:$true] %s50
      %56 = dma.hbm_to_vmem [thread:$0]  %s2, 49152, %s51, [#allocation6], 256, 256, 16
    $region13: #{tpu_custom_call.1} parent=1 // pred_fallthru
      _
    // Predicated region
    $region14: #{tpu_custom_call.1} parent=1 // pred_check
      _
    $region15: #{tpu_custom_call.1} parent=1 // pred_check_branch
      %58 = sbr.rel (0) target = $region17
    $region16: #{tpu_custom_call.1} parent=1 // pred_region
      _
    $region17: #{tpu_custom_call.1} parent=1 // pred_fallthru
      _
    // Predicated region
    $region18: #{tpu_custom_call.1} parent=1 // pred_check
      _
    $region19: #{tpu_custom_call.1} parent=1 // pred_check_branch
      %60 = sbr.rel (0) target = $region21
    $region20: #{tpu_custom_call.1} parent=1 // pred_region
      %s62 = ssub.s32 768, 768
      %63 = vsyncadd [#allocation9], %s62
      %s64 = sshll.u32 [#allocation8], 4
      %s65 = int_to_ptr.vmem [resolvable:$true] %s64
      %70 = dma.hbm_to_vmem [thread:$0]  %s4, 768, %s65, [#allocation9], 384, 384, 24
    $region21: #{tpu_custom_call.1} parent=1 // pred_fallthru
      _
    // Predicated region
    $region22: #{tpu_custom_call.1} parent=1 // pred_check
      _
    $region23: #{tpu_custom_call.1} parent=1 // pred_check_branch
      %72 = sbr.rel (0) target = $region25
    $region24: #{tpu_custom_call.1} parent=1 // pred_region
      %s74 = ssub.s32 8192, 8192
      %75 = vsyncadd [#allocation9], %s74
      %s76 = sshll.u32 [#allocation10], 4
      %s77 = int_to_ptr.vmem [resolvable:$true] %s76
      %82 = dma.hbm_to_vmem [thread:$0]  %s5, 8192, %s77, [#allocation9], 128, 128, 8
    $region25: #{tpu_custom_call.1} parent=1 // pred_fallthru
      _
    // Predicated region
    $region26: #{tpu_custom_call.1} parent=1 // pred_check
      _
    $region27: #{tpu_custom_call.1} parent=1 // pred_check_branch
      %84 = sbr.rel (0) target = $region29
    $region28: #{tpu_custom_call.1} parent=1 // pred_region
      %s86 = ssub.s32 256, 256
      %87 = vsyncadd [#allocation12], %s86
      %s89 = sshll.u32 [#allocation11], 4
      %s90 = int_to_ptr.vmem [resolvable:$true] %s89
      %92 = dma.hbm_to_vmem [thread:$0]  %s6, 256, %s90, [#allocation12]
    $region29: #{tpu_custom_call.1} parent=1 // pred_fallthru
      _
    // Predicated region
    $region30: #{tpu_custom_call.1} parent=1 // pred_check
      _
    $region31: #{tpu_custom_call.1} parent=1 // pred_check_branch
      %94 = sbr.rel (0) target = $region33
    $region32: #{tpu_custom_call.1} parent=1 // pred_region
      _
    $region33: #{tpu_custom_call.1} parent=1 // pred_fallthru
      _
    // Predicated region
    $region34: #{tpu_custom_call.1} parent=1 // pred_check
      _
    $region35: #{tpu_custom_call.1} parent=1 // pred_check_branch
      %96 = sbr.rel (0) target = $region37
    $region36: #{tpu_custom_call.1} parent=1 // pred_region
      %s98 = ssub.s32 480, 480
      %99 = vsyncadd [#allocation12], %s98
      %s101 = sshll.u32 [#allocation13], 4
      %s102 = int_to_ptr.vmem [resolvable:$true] %s101
      %104 = dma.hbm_to_vmem [thread:$0]  %s8, 480, %s102, [#allocation12]
    $region37: #{tpu_custom_call.1} parent=1 // pred_fallthru
      _
    // Predicated region
    $region38: #{tpu_custom_call.1} parent=1 // pred_check
      _
    $region39: #{tpu_custom_call.1} parent=1 // pred_check_branch
      %106 = sbr.rel (0) target = $region41
    $region40: #{tpu_custom_call.1} parent=1 // pred_region
      %107 = dma.done [#allocation3], 6144
    $region41: #{tpu_custom_call.1} parent=1 // pred_fallthru
      _
    // Predicated region
    $region42: #{tpu_custom_call.1} parent=1 // pred_check
      _
    $region43: #{tpu_custom_call.1} parent=1 // pred_check_branch
      %109 = sbr.rel (0) target = $region45
    $region44: #{tpu_custom_call.1} parent=1 // pred_region
      %110 = dma.done [#allocation6], 1024
    $region45: #{tpu_custom_call.1} parent=1 // pred_fallthru
      _
    // Predicated region
    $region46: #{tpu_custom_call.1} parent=1 // pred_check
      _
    $region47: #{tpu_custom_call.1} parent=1 // pred_check_branch
      %112 = sbr.rel (0) target = $region49
    $region48: #{tpu_custom_call.1} parent=1 // pred_region
      %113 = dma.done [#allocation6], 49152
    $region49: #{tpu_custom_call.1} parent=1 // pred_fallthru
      _
    // Predicated region
    $region50: #{tpu_custom_call.1} parent=1 // pred_check
      _
    $region51: #{tpu_custom_call.1} parent=1 // pred_check_branch
      %115 = sbr.rel (0) target = $region53
    $region52: #{tpu_custom_call.1} parent=1 // pred_region
      %116 = dma.done [#allocation9], 768
    $region53: #{tpu_custom_call.1} parent=1 // pred_fallthru
      _
    // Predicated region
    $region54: #{tpu_custom_call.1} parent=1 // pred_check
      _
    $region55: #{tpu_custom_call.1} parent=1 // pred_check_branch
      %118 = sbr.rel (0) target = $region57
    $region56: #{tpu_custom_call.1} parent=1 // pred_region
      %119 = dma.done [#allocation9], 8192
    $region57: #{tpu_custom_call.1} parent=1 // pred_fallthru
      _
    // Predicated region
    $region58: #{tpu_custom_call.1} parent=1 // pred_check
      _
    $region59: #{tpu_custom_call.1} parent=1 // pred_check_branch
      %121 = sbr.rel (0) target = $region61
    $region60: #{tpu_custom_call.1} parent=1 // pred_region
      %122 = dma.done [#allocation12], 256
    $region61: #{tpu_custom_call.1} parent=1 // pred_fallthru
      _
    // Predicated region
    $region62: #{tpu_custom_call.1} parent=1 // pred_check
      _
    $region63: #{tpu_custom_call.1} parent=1 // pred_check_branch
      %124 = sbr.rel (0) target = $region65
    $region64: #{tpu_custom_call.1} parent=1 // pred_region
      %125 = dma.done [#allocation12], 480
    $region65: #{tpu_custom_call.1} parent=1 // pred_fallthru
      _
    %v127 = vld [vmem:[#allocation2] sm:$0xff]
    %v128 = vld [vmem:[#allocation2 + $0x18] sm:$0xff]
    %v129 = vld [vmem:[#allocation2 + $0x30] sm:$0xff]
    %v130 = vld [vmem:[#allocation2 + $0x48] sm:$0xff]
    %v131 = vld [vmem:[#allocation2 + $0x60] sm:$0xff]
    %v132 = vld [vmem:[#allocation2 + $0x78] sm:$0xff]
    %v133 = vld [vmem:[#allocation2 + $0x90] sm:$0xff]
    %v134 = vld [vmem:[#allocation2 + $0xa8] sm:$0xff]
    %v135 = vld [vmem:[#allocation2 + $0xc0] sm:$0xff]
    %v136 = vld [vmem:[#allocation2 + $0xd8] sm:$0xff]
    %v137 = vld [vmem:[#allocation2 + $0xf0] sm:$0xff]
    %v138 = vld [vmem:[#allocation2 + $0x108] sm:$0xff]
    %v139 = vld [vmem:[#allocation2 + $0x120] sm:$0xff]
    %v140 = vld [vmem:[#allocation2 + $0x138] sm:$0xff]
    %v141 = vld [vmem:[#allocation2 + $0x150] sm:$0xff]
    %v142 = vld [vmem:[#allocation2 + $0x168] sm:$0xff]
    %v143 = vld [vmem:[#allocation2 + $0x8] sm:$0xff]
    %v144 = vld [vmem:[#allocation2 + $0x20] sm:$0xff]
    %v145 = vld [vmem:[#allocation2 + $0x38] sm:$0xff]
    %v146 = vld [vmem:[#allocation2 + $0x50] sm:$0xff]
    %v147 = vld [vmem:[#allocation2 + $0x68] sm:$0xff]
    %v148 = vld [vmem:[#allocation2 + $0x80] sm:$0xff]
    %v149 = vld [vmem:[#allocation2 + $0x98] sm:$0xff]
    %v150 = vld [vmem:[#allocation2 + $0xb0] sm:$0xff]
    %v151 = vld [vmem:[#allocation2 + $0xc8] sm:$0xff]
    %v152 = vld [vmem:[#allocation2 + $0xe0] sm:$0xff]
    %v153 = vld [vmem:[#allocation2 + $0xf8] sm:$0xff]
    %v154 = vld [vmem:[#allocation2 + $0x110] sm:$0xff]
    %v155 = vld [vmem:[#allocation2 + $0x128] sm:$0xff]
    %v156 = vld [vmem:[#allocation2 + $0x140] sm:$0xff]
    %v157 = vld [vmem:[#allocation2 + $0x158] sm:$0xff]
    %v158 = vld [vmem:[#allocation2 + $0x170] sm:$0xff]
    %v159 = vld [vmem:[#allocation2 + $0x10] sm:$0xff]
    %v160 = vld [vmem:[#allocation2 + $0x28] sm:$0xff]
    %v161 = vld [vmem:[#allocation2 + $0x40] sm:$0xff]
    %v162 = vld [vmem:[#allocation2 + $0x58] sm:$0xff]
    %v163 = vld [vmem:[#allocation2 + $0x70] sm:$0xff]
    %v164 = vld [vmem:[#allocation2 + $0x88] sm:$0xff]
    %v165 = vld [vmem:[#allocation2 + $0xa0] sm:$0xff]
    %v166 = vld [vmem:[#allocation2 + $0xb8] sm:$0xff]
    %v167 = vld [vmem:[#allocation2 + $0xd0] sm:$0xff]
    %v168 = vld [vmem:[#allocation2 + $0xe8] sm:$0xff]
    %v169 = vld [vmem:[#allocation2 + $0x100] sm:$0xff]
    %v170 = vld [vmem:[#allocation2 + $0x118] sm:$0xff]
    %v171 = vld [vmem:[#allocation2 + $0x130] sm:$0xff]
    %v172 = vld [vmem:[#allocation2 + $0x148] sm:$0xff]
    %v173 = vld [vmem:[#allocation2 + $0x160] sm:$0xff]
    %v174 = vld [vmem:[#allocation2 + $0x178] sm:$0xff]
    %v175 = vpack.c.bf16 %v128, %v127
    %v176 = vpack.c.bf16 %v130, %v129
    %v177 = vpack.c.bf16 %v132, %v131
    %v178 = vpack.c.bf16 %v134, %v133
    %v179 = vpack.c.bf16 %v136, %v135
    %v180 = vpack.c.bf16 %v138, %v137
    %v181 = vpack.c.bf16 %v140, %v139
    %v182 = vpack.c.bf16 %v142, %v141
    %v183 = vld [vmem:[#allocation5] sm:$0xff]
    %v184 = vld [vmem:[#allocation5 + $0x8] sm:$0xff]
    %v185 = vld [vmem:[#allocation5 + $0x10] sm:$0xff]
    %v186 = vld [vmem:[#allocation5 + $0x18] sm:$0xff]
    %v187 = vld [vmem:[#allocation5 + $0x20] sm:$0x33]
    %v188 = vld [vmem:[#allocation5 + $0x28] sm:$0x33]
    %v189 = vld [vmem:[#allocation5 + $0x30] sm:$0x33]
    %v190 = vld [vmem:[#allocation5 + $0x38] sm:$0x33]
    %v199 = vunpack.c.l.b16 %v183
    %v200 = vunpack.c.h.b16 %v183
    %v201 = vunpack.c.l.b16 %v184
    %v202 = vunpack.c.h.b16 %v184
    %v203 = vunpack.c.l.b16 %v185
    %v204 = vunpack.c.h.b16 %v185
    %v205 = vunpack.c.l.b16 %v186
    %v206 = vunpack.c.h.b16 %v186
    %v207 = vunpack.c.l.b16 %v187
    %v208 = vunpack.c.h.b16 %v187
    %v209 = vunpack.c.l.b16 %v188
    %v210 = vunpack.c.h.b16 %v188
    %v211 = vunpack.c.l.b16 %v189
    %v212 = vunpack.c.h.b16 %v189
    %v213 = vunpack.c.l.b16 %v190
    %v214 = vunpack.c.h.b16 %v190
    %v215 = vpack.c.b16 %v207, %v199
    %v216 = vpack.c.b16 %v208, %v200
    %v217 = vpack.c.b16 %v209, %v201
    %v218 = vpack.c.b16 %v210, %v202
    %v219 = vpack.c.b16 %v211, %v203
    %v220 = vpack.c.b16 %v212, %v204
    %v221 = vpack.c.b16 %v213, %v205
    %v222 = vpack.c.b16 %v214, %v206
    %vm223 = vcmask 97280
    %v225 = vsel %vm223, %v175, 0
    %v228 = vsel %vm223, %v176, 0
    %v231 = vsel %vm223, %v177, 0
    %v234 = vsel %vm223, %v178, 0
    %v237 = vsel %vm223, %v179, 0
    %v240 = vsel %vm223, %v180, 0
    %v243 = vsel %vm223, %v181, 0
    %v246 = vsel %vm223, %v182, 0
    %vm248 = vcmask 1045504
    %v250 = vsel %vm248, %v215, 0
    %v253 = vsel %vm248, %v216, 0
    %v256 = vsel %vm248, %v217, 0
    %v259 = vsel %vm248, %v218, 0
    %v262 = vsel %vm248, %v219, 0
    %v265 = vsel %vm248, %v220, 0
    %v268 = vsel %vm248, %v221, 0
    %v271 = vsel %vm248, %v222, 0
    %273 = vmatprep.subr.bf16.mxu0 0
    %274 = vmatpush1.bf16.msra.mxu0 0
    %275 = vmatprep.subr.bf16.mxu0 0
    %276 = vmatpush1.bf16.msra.mxu0 0
    %277 = vmatprep.subr.bf16.mxu0 0
    %278 = vmatpush1.bf16.msra.mxu0 0
    %279 = vmatprep.subr.bf16.mxu0 0
    %280 = vmatpush1.bf16.msra.mxu0 0
    %281 = vmatprep.subr.bf16.mxu0 0
    %282 = vmatpush1.bf16.msra.mxu0 0
    %283 = vmatprep.subr.bf16.mxu0 0
    %284 = vmatpush1.bf16.msra.mxu0 0
    %285 = vmatprep.subr.bf16.mxu0 0
    %286 = vmatpush1.bf16.msra.mxu0 0
    %287 = vmatprep.subr.bf16.mxu0 %v253
    %288 = vmatpush1.bf16.msra.mxu0 %v250
    %289 = vmatprep.subr.bf16.mxu0 0
    %290 = vmatpush2.bf16.msra.mxu0 0
    %291 = vmatprep.subr.bf16.mxu0 0
    %292 = vmatpush2.bf16.msra.mxu0 0
    %293 = vmatprep.subr.bf16.mxu0 0
    %294 = vmatpush2.bf16.msra.mxu0 0
    %295 = vmatprep.subr.bf16.mxu0 0
    %296 = vmatpush2.bf16.msra.mxu0 0
    %297 = vmatprep.subr.bf16.mxu0 0
    %298 = vmatpush2.bf16.msra.mxu0 0
    %299 = vmatprep.subr.bf16.mxu0 0
    %300 = vmatpush2.bf16.msra.mxu0 0
    %301 = vmatprep.subr.bf16.mxu0 0
    %302 = vmatpush2.bf16.msra.mxu0 0
    %303 = vmatprep.subr.bf16.mxu0 0
    %304 = vmatpush2.bf16.msra.mxu0 0
    %305 = vmatprep.mubr.bf16.mxu0 0
    %306 = vmatmul.mubr.bf16.gmra.mxu0 %v225
    %v307 = vpop.f32.mrf.mxu0
    %v308 = vadd.f32 0.0, %v307
    %v309 = vpop.f32.mrf.mxu0
    %v310 = vadd.f32 0.0, %v309
    %v311 = vpop.f32.mrf.mxu0
    %v312 = vadd.f32 0.0, %v311
    %v313 = vpop.f32.mrf.mxu0
    %v314 = vadd.f32 0.0, %v313
    %315 = vmatprep.mubr.bf16.mxu0 0
    %316 = vmatmul.mubr.bf16.gmra.mxu0 %v228
    %v317 = vpop.f32.mrf.mxu0
    %v318 = vadd.f32 0.0, %v317
    %v319 = vpop.f32.mrf.mxu0
    %v320 = vadd.f32 0.0, %v319
    %v321 = vpop.f32.mrf.mxu0
    %v322 = vadd.f32 0.0, %v321
    %v323 = vpop.f32.mrf.mxu0
    %v324 = vadd.f32 0.0, %v323
    %325 = vmatprep.mubr.bf16.mxu0 0
    %326 = vmatmul.mubr.bf16.gmra.mxu0 %v231
    %v327 = vpop.f32.mrf.mxu0
    %v328 = vadd.f32 0.0, %v327
    %v329 = vpop.f32.mrf.mxu0
    %v330 = vadd.f32 0.0, %v329
    %v331 = vpop.f32.mrf.mxu0
    %v332 = vadd.f32 0.0, %v331
    %v333 = vpop.f32.mrf.mxu0
    %v334 = vadd.f32 0.0, %v333
    %335 = vmatprep.mubr.bf16.mxu0 0
    %336 = vmatmul.mubr.bf16.gmra.mxu0 %v234
    %v337 = vpop.f32.mrf.mxu0
    %v338 = vadd.f32 0.0, %v337
    %v339 = vpop.f32.mrf.mxu0
    %v340 = vadd.f32 0.0, %v339
    %v341 = vpop.f32.mrf.mxu0
    %v342 = vadd.f32 0.0, %v341
    %v343 = vpop.f32.mrf.mxu0
    %v344 = vadd.f32 0.0, %v343
    %345 = vmatprep.mubr.bf16.mxu0 0
    %346 = vmatmul.mubr.bf16.gmra.mxu0 %v237
    %v347 = vpop.f32.mrf.mxu0
    %v348 = vadd.f32 0.0, %v347
    %v349 = vpop.f32.mrf.mxu0
    %v350 = vadd.f32 0.0, %v349
    %v351 = vpop.f32.mrf.mxu0
    %v352 = vadd.f32 0.0, %v351
    %v353 = vpop.f32.mrf.mxu0
    %v354 = vadd.f32 0.0, %v353
    %355 = vmatprep.mubr.bf16.mxu0 0
    %356 = vmatmul.mubr.bf16.gmra.mxu0 %v240
    %v357 = vpop.f32.mrf.mxu0
    %v358 = vadd.f32 0.0, %v357
    %v359 = vpop.f32.mrf.mxu0
    %v360 = vadd.f32 0.0, %v359
    %v361 = vpop.f32.mrf.mxu0
    %v362 = vadd.f32 0.0, %v361
    %v363 = vpop.f32.mrf.mxu0
    %v364 = vadd.f32 0.0, %v363
    %365 = vmatprep.mubr.bf16.mxu0 0
    %366 = vmatmul.mubr.bf16.gmra.mxu0 %v243
    %v367 = vpop.f32.mrf.mxu0
    %v368 = vadd.f32 0.0, %v367
    %v369 = vpop.f32.mrf.mxu0
    %v370 = vadd.f32 0.0, %v369
    %v371 = vpop.f32.mrf.mxu0
    %v372 = vadd.f32 0.0, %v371
    %v373 = vpop.f32.mrf.mxu0
    %v374 = vadd.f32 0.0, %v373
    %375 = vmatprep.mubr.bf16.mxu0 0
    %376 = vmatmul.mubr.bf16.gmra.mxu0 %v246
    %v377 = vpop.f32.mrf.mxu0
    %v378 = vadd.f32 0.0, %v377
    %v379 = vpop.f32.mrf.mxu0
    %v380 = vadd.f32 0.0, %v379
    %v381 = vpop.f32.mrf.mxu0
    %v382 = vadd.f32 0.0, %v381
    %v383 = vpop.f32.mrf.mxu0
    %v384 = vadd.f32 0.0, %v383
    %385 = vdwg.mxu0
    %386 = vmatprep.subr.bf16.mxu0 0
    %387 = vmatpush1.bf16.msra.mxu0 0
    %388 = vmatprep.subr.bf16.mxu0 0
    %389 = vmatpush1.bf16.msra.mxu0 0
    %390 = vmatprep.subr.bf16.mxu0 0
    %391 = vmatpush1.bf16.msra.mxu0 0
    %392 = vmatprep.subr.bf16.mxu0 0
    %393 = vmatpush1.bf16.msra.mxu0 0
    %394 = vmatprep.subr.bf16.mxu0 0
    %395 = vmatpush1.bf16.msra.mxu0 0
    %396 = vmatprep.subr.bf16.mxu0 0
    %397 = vmatpush1.bf16.msra.mxu0 0
    %398 = vmatprep.subr.bf16.mxu0 0
    %399 = vmatpush1.bf16.msra.mxu0 0
    %400 = vmatprep.subr.bf16.mxu0 %v259
    %401 = vmatpush1.bf16.msra.mxu0 %v256
    %402 = vmatprep.subr.bf16.mxu0 0
    %403 = vmatpush2.bf16.msra.mxu0 0
    %404 = vmatprep.subr.bf16.mxu0 0
    %405 = vmatpush2.bf16.msra.mxu0 0
    %406 = vmatprep.subr.bf16.mxu0 0
    %407 = vmatpush2.bf16.msra.mxu0 0
    %408 = vmatprep.subr.bf16.mxu0 0
    %409 = vmatpush2.bf16.msra.mxu0 0
    %410 = vmatprep.subr.bf16.mxu0 0
    %411 = vmatpush2.bf16.msra.mxu0 0
    %412 = vmatprep.subr.bf16.mxu0 0
    %413 = vmatpush2.bf16.msra.mxu0 0
    %414 = vmatprep.subr.bf16.mxu0 0
    %415 = vmatpush2.bf16.msra.mxu0 0
    %416 = vmatprep.subr.bf16.mxu0 0
    %417 = vmatpush2.bf16.msra.mxu0 0
    %418 = vmatprep.mubr.bf16.mxu0 0
    %419 = vmatmul.mubr.bf16.gmra.mxu0 %v225
    %v420 = vpop.f32.mrf.mxu0
    %v421 = vadd.f32 0.0, %v420
    %v422 = vpop.f32.mrf.mxu0
    %v423 = vadd.f32 0.0, %v422
    %v424 = vpop.f32.mrf.mxu0
    %v425 = vadd.f32 0.0, %v424
    %v426 = vpop.f32.mrf.mxu0
    %v427 = vadd.f32 0.0, %v426
    %428 = vmatprep.mubr.bf16.mxu0 0
    %429 = vmatmul.mubr.bf16.gmra.mxu0 %v228
    %v430 = vpop.f32.mrf.mxu0
    %v431 = vadd.f32 0.0, %v430
    %v432 = vpop.f32.mrf.mxu0
    %v433 = vadd.f32 0.0, %v432
    %v434 = vpop.f32.mrf.mxu0
    %v435 = vadd.f32 0.0, %v434
    %v436 = vpop.f32.mrf.mxu0
    %v437 = vadd.f32 0.0, %v436
    %438 = vmatprep.mubr.bf16.mxu0 0
    %439 = vmatmul.mubr.bf16.gmra.mxu0 %v231
    %v440 = vpop.f32.mrf.mxu0
    %v441 = vadd.f32 0.0, %v440
    %v442 = vpop.f32.mrf.mxu0
    %v443 = vadd.f32 0.0, %v442
    %v444 = vpop.f32.mrf.mxu0
    %v445 = vadd.f32 0.0, %v444
    %v446 = vpop.f32.mrf.mxu0
    %v447 = vadd.f32 0.0, %v446
    %448 = vmatprep.mubr.bf16.mxu0 0
    %449 = vmatmul.mubr.bf16.gmra.mxu0 %v234
    %v450 = vpop.f32.mrf.mxu0
    %v451 = vadd.f32 0.0, %v450
    %v452 = vpop.f32.mrf.mxu0
    %v453 = vadd.f32 0.0, %v452
    %v454 = vpop.f32.mrf.mxu0
    %v455 = vadd.f32 0.0, %v454
    %v456 = vpop.f32.mrf.mxu0
    %v457 = vadd.f32 0.0, %v456
    %458 = vmatprep.mubr.bf16.mxu0 0
    %459 = vmatmul.mubr.bf16.gmra.mxu0 %v237
    %v460 = vpop.f32.mrf.mxu0
    %v461 = vadd.f32 0.0, %v460
    %v462 = vpop.f32.mrf.mxu0
    %v463 = vadd.f32 0.0, %v462
    %v464 = vpop.f32.mrf.mxu0
    %v465 = vadd.f32 0.0, %v464
    %v466 = vpop.f32.mrf.mxu0
    %v467 = vadd.f32 0.0, %v466
    %468 = vmatprep.mubr.bf16.mxu0 0
    %469 = vmatmul.mubr.bf16.gmra.mxu0 %v240
    %v470 = vpop.f32.mrf.mxu0
    %v471 = vadd.f32 0.0, %v470
    %v472 = vpop.f32.mrf.mxu0
    %v473 = vadd.f32 0.0, %v472
    %v474 = vpop.f32.mrf.mxu0
    %v475 = vadd.f32 0.0, %v474
    %v476 = vpop.f32.mrf.mxu0
    %v477 = vadd.f32 0.0, %v476
    %478 = vmatprep.mubr.bf16.mxu0 0
    %479 = vmatmul.mubr.bf16.gmra.mxu0 %v243
    %v480 = vpop.f32.mrf.mxu0
    %v481 = vadd.f32 0.0, %v480
    %v482 = vpop.f32.mrf.mxu0
    %v483 = vadd.f32 0.0, %v482
    %v484 = vpop.f32.mrf.mxu0
    %v485 = vadd.f32 0.0, %v484
    %v486 = vpop.f32.mrf.mxu0
    %v487 = vadd.f32 0.0, %v486
    %488 = vmatprep.mubr.bf16.mxu0 0
    %489 = vmatmul.mubr.bf16.gmra.mxu0 %v246
    %v490 = vpop.f32.mrf.mxu0
    %v491 = vadd.f32 0.0, %v490
    %v492 = vpop.f32.mrf.mxu0
    %v493 = vadd.f32 0.0, %v492
    %v494 = vpop.f32.mrf.mxu0
    %v495 = vadd.f32 0.0, %v494
    %v496 = vpop.f32.mrf.mxu0
    %v497 = vadd.f32 0.0, %v496
    %498 = vdwg.mxu0
    %499 = vmatprep.subr.bf16.mxu0 0
    %500 = vmatpush1.bf16.msra.mxu0 0
    %501 = vmatprep.subr.bf16.mxu0 0
    %502 = vmatpush1.bf16.msra.mxu0 0
    %503 = vmatprep.subr.bf16.mxu0 0
    %504 = vmatpush1.bf16.msra.mxu0 0
    %505 = vmatprep.subr.bf16.mxu0 0
    %506 = vmatpush1.bf16.msra.mxu0 0
    %507 = vmatprep.subr.bf16.mxu0 0
    %508 = vmatpush1.bf16.msra.mxu0 0
    %509 = vmatprep.subr.bf16.mxu0 0
    %510 = vmatpush1.bf16.msra.mxu0 0
    %511 = vmatprep.subr.bf16.mxu0 0
    %512 = vmatpush1.bf16.msra.mxu0 0
    %513 = vmatprep.subr.bf16.mxu0 %v265
    %514 = vmatpush1.bf16.msra.mxu0 %v262
    %515 = vmatprep.subr.bf16.mxu0 0
    %516 = vmatpush2.bf16.msra.mxu0 0
    %517 = vmatprep.subr.bf16.mxu0 0
    %518 = vmatpush2.bf16.msra.mxu0 0
    %519 = vmatprep.subr.bf16.mxu0 0
    %520 = vmatpush2.bf16.msra.mxu0 0
    %521 = vmatprep.subr.bf16.mxu0 0
    %522 = vmatpush2.bf16.msra.mxu0 0
    %523 = vmatprep.subr.bf16.mxu0 0
    %524 = vmatpush2.bf16.msra.mxu0 0
    %525 = vmatprep.subr.bf16.mxu0 0
    %526 = vmatpush2.bf16.msra.mxu0 0
    %527 = vmatprep.subr.bf16.mxu0 0
    %528 = vmatpush2.bf16.msra.mxu0 0
    %529 = vmatprep.subr.bf16.mxu0 0
    %530 = vmatpush2.bf16.msra.mxu0 0
    %531 = vmatprep.mubr.bf16.mxu0 0
    %532 = vmatmul.mubr.bf16.gmra.mxu0 %v225
    %v533 = vpop.f32.mrf.mxu0
    %v534 = vadd.f32 0.0, %v533
    %v535 = vpop.f32.mrf.mxu0
    %v536 = vadd.f32 0.0, %v535
    %v537 = vpop.f32.mrf.mxu0
    %v538 = vadd.f32 0.0, %v537
    %v539 = vpop.f32.mrf.mxu0
    %v540 = vadd.f32 0.0, %v539
    %541 = vmatprep.mubr.bf16.mxu0 0
    %542 = vmatmul.mubr.bf16.gmra.mxu0 %v228
    %v543 = vpop.f32.mrf.mxu0
    %v544 = vadd.f32 0.0, %v543
    %v545 = vpop.f32.mrf.mxu0
    %v546 = vadd.f32 0.0, %v545
    %v547 = vpop.f32.mrf.mxu0
    %v548 = vadd.f32 0.0, %v547
    %v549 = vpop.f32.mrf.mxu0
    %v550 = vadd.f32 0.0, %v549
    %551 = vmatprep.mubr.bf16.mxu0 0
    %552 = vmatmul.mubr.bf16.gmra.mxu0 %v231
    %v553 = vpop.f32.mrf.mxu0
    %v554 = vadd.f32 0.0, %v553
    %v555 = vpop.f32.mrf.mxu0
    %v556 = vadd.f32 0.0, %v555
    %v557 = vpop.f32.mrf.mxu0
    %v558 = vadd.f32 0.0, %v557
    %v559 = vpop.f32.mrf.mxu0
    %v560 = vadd.f32 0.0, %v559
    %561 = vmatprep.mubr.bf16.mxu0 0
    %562 = vmatmul.mubr.bf16.gmra.mxu0 %v234
    %v563 = vpop.f32.mrf.mxu0
    %v564 = vadd.f32 0.0, %v563
    %v565 = vpop.f32.mrf.mxu0
    %v566 = vadd.f32 0.0, %v565
    %v567 = vpop.f32.mrf.mxu0
    %v568 = vadd.f32 0.0, %v567
    %v569 = vpop.f32.mrf.mxu0
    %v570 = vadd.f32 0.0, %v569
    %571 = vmatprep.mubr.bf16.mxu0 0
    %572 = vmatmul.mubr.bf16.gmra.mxu0 %v237
    %v573 = vpop.f32.mrf.mxu0
    %v574 = vadd.f32 0.0, %v573
    %v575 = vpop.f32.mrf.mxu0
    %v576 = vadd.f32 0.0, %v575
    %v577 = vpop.f32.mrf.mxu0
    %v578 = vadd.f32 0.0, %v577
    %v579 = vpop.f32.mrf.mxu0
    %v580 = vadd.f32 0.0, %v579
    %581 = vmatprep.mubr.bf16.mxu0 0
    %582 = vmatmul.mubr.bf16.gmra.mxu0 %v240
    %v583 = vpop.f32.mrf.mxu0
    %v584 = vadd.f32 0.0, %v583
    %v585 = vpop.f32.mrf.mxu0
    %v586 = vadd.f32 0.0, %v585
    %v587 = vpop.f32.mrf.mxu0
    %v588 = vadd.f32 0.0, %v587
    %v589 = vpop.f32.mrf.mxu0
    %v590 = vadd.f32 0.0, %v589
    %591 = vmatprep.mubr.bf16.mxu0 0
    %592 = vmatmul.mubr.bf16.gmra.mxu0 %v243
    %v593 = vpop.f32.mrf.mxu0
    %v594 = vadd.f32 0.0, %v593
    %v595 = vpop.f32.mrf.mxu0
    %v596 = vadd.f32 0.0, %v595
    %v597 = vpop.f32.mrf.mxu0
    %v598 = vadd.f32 0.0, %v597
    %v599 = vpop.f32.mrf.mxu0
    %v600 = vadd.f32 0.0, %v599
    %601 = vmatprep.mubr.bf16.mxu0 0
    %602 = vmatmul.mubr.bf16.gmra.mxu0 %v246
    %v603 = vpop.f32.mrf.mxu0
    %v604 = vadd.f32 0.0, %v603
    %v605 = vpop.f32.mrf.mxu0
    %v606 = vadd.f32 0.0, %v605
    %v607 = vpop.f32.mrf.mxu0
    %v608 = vadd.f32 0.0, %v607
    %v609 = vpop.f32.mrf.mxu0
    %v610 = vadd.f32 0.0, %v609
    %611 = vdwg.mxu0
    %612 = vmatprep.subr.bf16.mxu0 0
    %613 = vmatpush1.bf16.msra.mxu0 0
    %614 = vmatprep.subr.bf16.mxu0 0
    %615 = vmatpush1.bf16.msra.mxu0 0
    %616 = vmatprep.subr.bf16.mxu0 0
    %617 = vmatpush1.bf16.msra.mxu0 0
    %618 = vmatprep.subr.bf16.mxu0 0
    %619 = vmatpush1.bf16.msra.mxu0 0
    %620 = vmatprep.subr.bf16.mxu0 0
    %621 = vmatpush1.bf16.msra.mxu0 0
    %622 = vmatprep.subr.bf16.mxu0 0
    %623 = vmatpush1.bf16.msra.mxu0 0
    %624 = vmatprep.subr.bf16.mxu0 0
    %625 = vmatpush1.bf16.msra.mxu0 0
    %626 = vmatprep.subr.bf16.mxu0 %v271
    %627 = vmatpush1.bf16.msra.mxu0 %v268
    %628 = vmatprep.subr.bf16.mxu0 0
    %629 = vmatpush2.bf16.msra.mxu0 0
    %630 = vmatprep.subr.bf16.mxu0 0
    %631 = vmatpush2.bf16.msra.mxu0 0
    %632 = vmatprep.subr.bf16.mxu0 0
    %633 = vmatpush2.bf16.msra.mxu0 0
    %634 = vmatprep.subr.bf16.mxu0 0
    %635 = vmatpush2.bf16.msra.mxu0 0
    %636 = vmatprep.subr.bf16.mxu0 0
    %637 = vmatpush2.bf16.msra.mxu0 0
    %638 = vmatprep.subr.bf16.mxu0 0
    %639 = vmatpush2.bf16.msra.mxu0 0
    %640 = vmatprep.subr.bf16.mxu0 0
    %641 = vmatpush2.bf16.msra.mxu0 0
    %642 = vmatprep.subr.bf16.mxu0 0
    %643 = vmatpush2.bf16.msra.mxu0 0
    %644 = vmatprep.mubr.bf16.mxu0 0
    %645 = vmatmul.mubr.bf16.gmra.mxu0 %v225
    %v646 = vpop.f32.mrf.mxu0
    %v647 = vadd.f32 0.0, %v646
    %v648 = vpop.f32.mrf.mxu0
    %v649 = vadd.f32 0.0, %v648
    %v650 = vpop.f32.mrf.mxu0
    %v651 = vadd.f32 0.0, %v650
    %v652 = vpop.f32.mrf.mxu0
    %v653 = vadd.f32 0.0, %v652
    %654 = vmatprep.mubr.bf16.mxu0 0
    %655 = vmatmul.mubr.bf16.gmra.mxu0 %v228
    %v656 = vpop.f32.mrf.mxu0
    %v657 = vadd.f32 0.0, %v656
    %v658 = vpop.f32.mrf.mxu0
    %v659 = vadd.f32 0.0, %v658
    %v660 = vpop.f32.mrf.mxu0
    %v661 = vadd.f32 0.0, %v660
    %v662 = vpop.f32.mrf.mxu0
    %v663 = vadd.f32 0.0, %v662
    %664 = vmatprep.mubr.bf16.mxu0 0
    %665 = vmatmul.mubr.bf16.gmra.mxu0 %v231
    %v666 = vpop.f32.mrf.mxu0
    %v667 = vadd.f32 0.0, %v666
    %v668 = vpop.f32.mrf.mxu0
    %v669 = vadd.f32 0.0, %v668
    %v670 = vpop.f32.mrf.mxu0
    %v671 = vadd.f32 0.0, %v670
    %v672 = vpop.f32.mrf.mxu0
    %v673 = vadd.f32 0.0, %v672
    %674 = vmatprep.mubr.bf16.mxu0 0
    %675 = vmatmul.mubr.bf16.gmra.mxu0 %v234
    %v676 = vpop.f32.mrf.mxu0
    %v677 = vadd.f32 0.0, %v676
    %v678 = vpop.f32.mrf.mxu0
    %v679 = vadd.f32 0.0, %v678
    %v680 = vpop.f32.mrf.mxu0
    %v681 = vadd.f32 0.0, %v680
    %v682 = vpop.f32.mrf.mxu0
    %v683 = vadd.f32 0.0, %v682
    %684 = vmatprep.mubr.bf16.mxu0 0
    %685 = vmatmul.mubr.bf16.gmra.mxu0 %v237
    %v686 = vpop.f32.mrf.mxu0
    %v687 = vadd.f32 0.0, %v686
    %v688 = vpop.f32.mrf.mxu0
    %v689 = vadd.f32 0.0, %v688
    %v690 = vpop.f32.mrf.mxu0
    %v691 = vadd.f32 0.0, %v690
    %v692 = vpop.f32.mrf.mxu0
    %v693 = vadd.f32 0.0, %v692
    %694 = vmatprep.mubr.bf16.mxu0 0
    %695 = vmatmul.mubr.bf16.gmra.mxu0 %v240
    %v696 = vpop.f32.mrf.mxu0
    %v697 = vadd.f32 0.0, %v696
    %v698 = vpop.f32.mrf.mxu0
    %v699 = vadd.f32 0.0, %v698
    %v700 = vpop.f32.mrf.mxu0
    %v701 = vadd.f32 0.0, %v700
    %v702 = vpop.f32.mrf.mxu0
    %v703 = vadd.f32 0.0, %v702
    %704 = vmatprep.mubr.bf16.mxu0 0
    %705 = vmatmul.mubr.bf16.gmra.mxu0 %v243
    %v706 = vpop.f32.mrf.mxu0
    %v707 = vadd.f32 0.0, %v706
    %v708 = vpop.f32.mrf.mxu0
    %v709 = vadd.f32 0.0, %v708
    %v710 = vpop.f32.mrf.mxu0
    %v711 = vadd.f32 0.0, %v710
    %v712 = vpop.f32.mrf.mxu0
    %v713 = vadd.f32 0.0, %v712
    %714 = vmatprep.mubr.bf16.mxu0 0
    %715 = vmatmul.mubr.bf16.gmra.mxu0 %v246
    %v716 = vpop.f32.mrf.mxu0
    %v717 = vadd.f32 0.0, %v716
    %v718 = vpop.f32.mrf.mxu0
    %v719 = vadd.f32 0.0, %v718
    %v720 = vpop.f32.mrf.mxu0
    %v721 = vadd.f32 0.0, %v720
    %v722 = vpop.f32.mrf.mxu0
    %v723 = vadd.f32 0.0, %v722
    %724 = vdwg.mxu0
    %v725 = vld [vmem:[#allocation13] sm:$0xf]
    %v727 = vlaneseq
    %v728 = vshrl.u32 %v727, 7
    %v729 = vsub.s32 0, %v728
    %v730 = vrot.slane %v725, %v729
    %v731 = vlaneseq
    %v732 = vshrl.u32 %v731, 7
    %v733 = vsub.s32 1, %v732
    %v734 = vrot.slane %v725, %v733
    %v735 = vlaneseq
    %v736 = vshrl.u32 %v735, 7
    %v737 = vsub.s32 2, %v736
    %v738 = vrot.slane %v725, %v737
    %v739 = vlaneseq
    %v740 = vshrl.u32 %v739, 7
    %v741 = vsub.s32 3, %v740
    %v742 = vrot.slane %v725, %v741
    %v747 = vadd.f32 %v308, %v730
    %v748 = vadd.f32 %v310, %v734
    %v749 = vadd.f32 %v421, %v738
    %v750 = vadd.f32 %v423, %v742
    %v751 = vadd.f32 %v312, %v730
    %v752 = vadd.f32 %v314, %v734
    %v753 = vadd.f32 %v425, %v738
    %v754 = vadd.f32 %v427, %v742
    %v755 = vadd.f32 %v318, %v730
    %v756 = vadd.f32 %v320, %v734
    %v757 = vadd.f32 %v431, %v738
    %v758 = vadd.f32 %v433, %v742
    %v759 = vadd.f32 %v322, %v730
    %v760 = vadd.f32 %v324, %v734
    %v761 = vadd.f32 %v435, %v738
    %v762 = vadd.f32 %v437, %v742
    %v763 = vadd.f32 %v328, %v730
    %v764 = vadd.f32 %v330, %v734
    %v765 = vadd.f32 %v441, %v738
    %v766 = vadd.f32 %v443, %v742
    %v767 = vadd.f32 %v332, %v730
    %v768 = vadd.f32 %v334, %v734
    %v769 = vadd.f32 %v445, %v738
    %v770 = vadd.f32 %v447, %v742
    %v771 = vadd.f32 %v338, %v730
    %v772 = vadd.f32 %v340, %v734
    %v773 = vadd.f32 %v451, %v738
    %v774 = vadd.f32 %v453, %v742
    %v775 = vadd.f32 %v342, %v730
    %v776 = vadd.f32 %v344, %v734
    %v777 = vadd.f32 %v455, %v738
    %v778 = vadd.f32 %v457, %v742
    %v779 = vadd.f32 %v348, %v730
    %v780 = vadd.f32 %v350, %v734
    %v781 = vadd.f32 %v461, %v738
    %v782 = vadd.f32 %v463, %v742
    %v783 = vadd.f32 %v352, %v730
    %v784 = vadd.f32 %v354, %v734
    %v785 = vadd.f32 %v465, %v738
    %v786 = vadd.f32 %v467, %v742
    %v787 = vadd.f32 %v358, %v730
    %v788 = vadd.f32 %v360, %v734
    %v789 = vadd.f32 %v471, %v738
    %v790 = vadd.f32 %v473, %v742
    %v791 = vadd.f32 %v362, %v730
    %v792 = vadd.f32 %v364, %v734
    %v793 = vadd.f32 %v475, %v738
    %v794 = vadd.f32 %v477, %v742
    %v795 = vadd.f32 %v368, %v730
    %v796 = vadd.f32 %v370, %v734
    %v797 = vadd.f32 %v481, %v738
    %v798 = vadd.f32 %v483, %v742
    %v799 = vadd.f32 %v372, %v730
    %v800 = vadd.f32 %v374, %v734
    %v801 = vadd.f32 %v485, %v738
    %v802 = vadd.f32 %v487, %v742
    %v803 = vadd.f32 %v378, %v730
    %v804 = vadd.f32 %v380, %v734
    %v805 = vadd.f32 %v491, %v738
    %v806 = vadd.f32 %v493, %v742
    %v807 = vadd.f32 %v382, %v730
    %v808 = vadd.f32 %v384, %v734
    %v809 = vadd.f32 %v495, %v738
    %v810 = vadd.f32 %v497, %v742
    %v811 = vmax.f32 %v747, 0.0
    %v812 = vmax.f32 %v748, 0.0
    %v813 = vmax.f32 %v749, 0.0
    %v814 = vmax.f32 %v750, 0.0
    %v815 = vmax.f32 %v751, 0.0
    %v816 = vmax.f32 %v752, 0.0
    %v817 = vmax.f32 %v753, 0.0
    %v818 = vmax.f32 %v754, 0.0
    %v819 = vmax.f32 %v755, 0.0
    %v820 = vmax.f32 %v756, 0.0
    %v821 = vmax.f32 %v757, 0.0
    %v822 = vmax.f32 %v758, 0.0
    %v823 = vmax.f32 %v759, 0.0
    %v824 = vmax.f32 %v760, 0.0
    %v825 = vmax.f32 %v761, 0.0
    %v826 = vmax.f32 %v762, 0.0
    %v827 = vmax.f32 %v763, 0.0
    %v828 = vmax.f32 %v764, 0.0
    %v829 = vmax.f32 %v765, 0.0
    %v830 = vmax.f32 %v766, 0.0
    %v831 = vmax.f32 %v767, 0.0
    %v832 = vmax.f32 %v768, 0.0
    %v833 = vmax.f32 %v769, 0.0
    %v834 = vmax.f32 %v770, 0.0
    %v835 = vmax.f32 %v771, 0.0
    %v836 = vmax.f32 %v772, 0.0
    %v837 = vmax.f32 %v773, 0.0
    %v838 = vmax.f32 %v774, 0.0
    %v839 = vmax.f32 %v775, 0.0
    %v840 = vmax.f32 %v776, 0.0
    %v841 = vmax.f32 %v777, 0.0
    %v842 = vmax.f32 %v778, 0.0
    %v843 = vmax.f32 %v779, 0.0
    %v844 = vmax.f32 %v780, 0.0
    %v845 = vmax.f32 %v781, 0.0
    %v846 = vmax.f32 %v782, 0.0
    %v847 = vmax.f32 %v783, 0.0
    %v848 = vmax.f32 %v784, 0.0
    %v849 = vmax.f32 %v785, 0.0
    %v850 = vmax.f32 %v786, 0.0
    %v851 = vmax.f32 %v787, 0.0
    %v852 = vmax.f32 %v788, 0.0
    %v853 = vmax.f32 %v789, 0.0
    %v854 = vmax.f32 %v790, 0.0
    %v855 = vmax.f32 %v791, 0.0
    %v856 = vmax.f32 %v792, 0.0
    %v857 = vmax.f32 %v793, 0.0
    %v858 = vmax.f32 %v794, 0.0
    %v859 = vmax.f32 %v795, 0.0
    %v860 = vmax.f32 %v796, 0.0
    %v861 = vmax.f32 %v797, 0.0
    %v862 = vmax.f32 %v798, 0.0
    %v863 = vmax.f32 %v799, 0.0
    %v864 = vmax.f32 %v800, 0.0
    %v865 = vmax.f32 %v801, 0.0
    %v866 = vmax.f32 %v802, 0.0
    %v867 = vmax.f32 %v803, 0.0
    %v868 = vmax.f32 %v804, 0.0
    %v869 = vmax.f32 %v805, 0.0
    %v870 = vmax.f32 %v806, 0.0
    %v871 = vmax.f32 %v807, 0.0
    %v872 = vmax.f32 %v808, 0.0
    %v873 = vmax.f32 %v809, 0.0
    %v874 = vmax.f32 %v810, 0.0
    %v875 = vpack.c.bf16 %v815, %v811
    %v876 = vpack.c.bf16 %v816, %v812
    %v877 = vpack.c.bf16 %v817, %v813
    %v878 = vpack.c.bf16 %v818, %v814
    %v879 = vpack.c.bf16 %v823, %v819
    %v880 = vpack.c.bf16 %v824, %v820
    %v881 = vpack.c.bf16 %v825, %v821
    %v882 = vpack.c.bf16 %v826, %v822
    %v883 = vpack.c.bf16 %v831, %v827
    %v884 = vpack.c.bf16 %v832, %v828
    %v885 = vpack.c.bf16 %v833, %v829
    %v886 = vpack.c.bf16 %v834, %v830
    %v887 = vpack.c.bf16 %v839, %v835
    %v888 = vpack.c.bf16 %v840, %v836
    %v889 = vpack.c.bf16 %v841, %v837
    %v890 = vpack.c.bf16 %v842, %v838
    %v891 = vpack.c.bf16 %v847, %v843
    %v892 = vpack.c.bf16 %v848, %v844
    %v893 = vpack.c.bf16 %v849, %v845
    %v894 = vpack.c.bf16 %v850, %v846
    %v895 = vpack.c.bf16 %v855, %v851
    %v896 = vpack.c.bf16 %v856, %v852
    %v897 = vpack.c.bf16 %v857, %v853
    %v898 = vpack.c.bf16 %v858, %v854
    %v899 = vpack.c.bf16 %v863, %v859
    %v900 = vpack.c.bf16 %v864, %v860
    %v901 = vpack.c.bf16 %v865, %v861
    %v902 = vpack.c.bf16 %v866, %v862
    %v903 = vpack.c.bf16 %v871, %v867
    %v904 = vpack.c.bf16 %v872, %v868
    %v905 = vpack.c.bf16 %v873, %v869
    %v906 = vpack.c.bf16 %v874, %v870
    %v907 = vld [vmem:[#allocation13 + $0x4] sm:$0xf]
    %v909 = vlaneseq
    %v910 = vshrl.u32 %v909, 7
    %v911 = vsub.s32 0, %v910
    %v912 = vrot.slane %v907, %v911
    %v913 = vlaneseq
    %v914 = vshrl.u32 %v913, 7
    %v915 = vsub.s32 1, %v914
    %v916 = vrot.slane %v907, %v915
    %v917 = vlaneseq
    %v918 = vshrl.u32 %v917, 7
    %v919 = vsub.s32 2, %v918
    %v920 = vrot.slane %v907, %v919
    %v921 = vlaneseq
    %v922 = vshrl.u32 %v921, 7
    %v923 = vsub.s32 3, %v922
    %v924 = vrot.slane %v907, %v923
    %v929 = vadd.f32 %v534, %v912
    %v930 = vadd.f32 %v536, %v916
    %v931 = vadd.f32 %v647, %v920
    %v932 = vadd.f32 %v649, %v924
    %v933 = vadd.f32 %v538, %v912
    %v934 = vadd.f32 %v540, %v916
    %v935 = vadd.f32 %v651, %v920
    %v936 = vadd.f32 %v653, %v924
    %v937 = vadd.f32 %v544, %v912
    %v938 = vadd.f32 %v546, %v916
    %v939 = vadd.f32 %v657, %v920
    %v940 = vadd.f32 %v659, %v924
    %v941 = vadd.f32 %v548, %v912
    %v942 = vadd.f32 %v550, %v916
    %v943 = vadd.f32 %v661, %v920
    %v944 = vadd.f32 %v663, %v924
    %v945 = vadd.f32 %v554, %v912
    %v946 = vadd.f32 %v556, %v916
    %v947 = vadd.f32 %v667, %v920
    %v948 = vadd.f32 %v669, %v924
    %v949 = vadd.f32 %v558, %v912
    %v950 = vadd.f32 %v560, %v916
    %v951 = vadd.f32 %v671, %v920
    %v952 = vadd.f32 %v673, %v924
    %v953 = vadd.f32 %v564, %v912
    %v954 = vadd.f32 %v566, %v916
    %v955 = vadd.f32 %v677, %v920
    %v956 = vadd.f32 %v679, %v924
    %v957 = vadd.f32 %v568, %v912
    %v958 = vadd.f32 %v570, %v916
    %v959 = vadd.f32 %v681, %v920
    %v960 = vadd.f32 %v683, %v924
    %v961 = vadd.f32 %v574, %v912
    %v962 = vadd.f32 %v576, %v916
    %v963 = vadd.f32 %v687, %v920
    %v964 = vadd.f32 %v689, %v924
    %v965 = vadd.f32 %v578, %v912
    %v966 = vadd.f32 %v580, %v916
    %v967 = vadd.f32 %v691, %v920
    %v968 = vadd.f32 %v693, %v924
    %v969 = vadd.f32 %v584, %v912
    %v970 = vadd.f32 %v586, %v916
    %v971 = vadd.f32 %v697, %v920
    %v972 = vadd.f32 %v699, %v924
    %v973 = vadd.f32 %v588, %v912
    %v974 = vadd.f32 %v590, %v916
    %v975 = vadd.f32 %v701, %v920
    %v976 = vadd.f32 %v703, %v924
    %v977 = vadd.f32 %v594, %v912
    %v978 = vadd.f32 %v596, %v916
    %v979 = vadd.f32 %v707, %v920
    %v980 = vadd.f32 %v709, %v924
    %v981 = vadd.f32 %v598, %v912
    %v982 = vadd.f32 %v600, %v916
    %v983 = vadd.f32 %v711, %v920
    %v984 = vadd.f32 %v713, %v924
    %v985 = vadd.f32 %v604, %v912
    %v986 = vadd.f32 %v606, %v916
    %v987 = vadd.f32 %v717, %v920
    %v988 = vadd.f32 %v719, %v924
    %v989 = vadd.f32 %v608, %v912
    %v990 = vadd.f32 %v610, %v916
    %v991 = vadd.f32 %v721, %v920
    %v992 = vadd.f32 %v723, %v924
    %v993 = vld [vmem:[#allocation7] sm:$0xff]
    %v994 = vld [vmem:[#allocation7 + $0x8] sm:$0xff]
    %v995 = vld [vmem:[#allocation7 + $0x10] sm:$0xff]
    %v996 = vld [vmem:[#allocation7 + $0x18] sm:$0xff]
    %v997 = vld [vmem:[#allocation7 + $0x20] sm:$0xff]
    %v998 = vld [vmem:[#allocation7 + $0x28] sm:$0xff]
    %v999 = vld [vmem:[#allocation7 + $0x30] sm:$0xff]
    %v1000 = vld [vmem:[#allocation7 + $0x38] sm:$0xff]
    %v1001 = vld [vmem:[#allocation7 + $0x40] sm:$0xff]
    %v1002 = vld [vmem:[#allocation7 + $0x48] sm:$0xff]
    %v1003 = vld [vmem:[#allocation7 + $0x50] sm:$0xff]
    %v1004 = vld [vmem:[#allocation7 + $0x58] sm:$0xff]
    %v1005 = vld [vmem:[#allocation7 + $0x60] sm:$0xff]
    %v1006 = vld [vmem:[#allocation7 + $0x68] sm:$0xff]
    %v1007 = vld [vmem:[#allocation7 + $0x70] sm:$0xff]
    %v1008 = vld [vmem:[#allocation7 + $0x78] sm:$0xff]
    %v1009 = vld [vmem:[#allocation7 + $0x80] sm:$0xff]
    %v1010 = vld [vmem:[#allocation7 + $0x88] sm:$0xff]
    %v1011 = vld [vmem:[#allocation7 + $0x90] sm:$0xff]
    %v1012 = vld [vmem:[#allocation7 + $0x98] sm:$0xff]
    %v1013 = vld [vmem:[#allocation7 + $0xa0] sm:$0xff]
    %v1014 = vld [vmem:[#allocation7 + $0xa8] sm:$0xff]
    %v1015 = vld [vmem:[#allocation7 + $0xb0] sm:$0xff]
    %v1016 = vld [vmem:[#allocation7 + $0xb8] sm:$0xff]
    %v1017 = vld [vmem:[#allocation7 + $0xc0] sm:$0xff]
    %v1018 = vld [vmem:[#allocation7 + $0xc8] sm:$0xff]
    %v1019 = vld [vmem:[#allocation7 + $0xd0] sm:$0xff]
    %v1020 = vld [vmem:[#allocation7 + $0xd8] sm:$0xff]
    %v1021 = vld [vmem:[#allocation7 + $0xe0] sm:$0xff]
    %v1022 = vld [vmem:[#allocation7 + $0xe8] sm:$0xff]
    %v1023 = vld [vmem:[#allocation7 + $0xf0] sm:$0xff]
    %v1024 = vld [vmem:[#allocation7 + $0xf8] sm:$0xff]
    %v1025 = vld [vmem:[#allocation7 + $0x100] sm:$0xff]
    %v1026 = vld [vmem:[#allocation7 + $0x108] sm:$0xff]
    %v1027 = vld [vmem:[#allocation7 + $0x110] sm:$0xff]
    %v1028 = vld [vmem:[#allocation7 + $0x118] sm:$0xff]
    %v1029 = vld [vmem:[#allocation7 + $0x120] sm:$0xff]
    %v1030 = vld [vmem:[#allocation7 + $0x128] sm:$0xff]
    %v1031 = vld [vmem:[#allocation7 + $0x130] sm:$0xff]
    %v1032 = vld [vmem:[#allocation7 + $0x138] sm:$0xff]
    %v1033 = vld [vmem:[#allocation7 + $0x140] sm:$0xff]
    %v1034 = vld [vmem:[#allocation7 + $0x148] sm:$0xff]
    %v1035 = vld [vmem:[#allocation7 + $0x150] sm:$0xff]
    %v1036 = vld [vmem:[#allocation7 + $0x158] sm:$0xff]
    %v1037 = vld [vmem:[#allocation7 + $0x160] sm:$0xff]
    %v1038 = vld [vmem:[#allocation7 + $0x168] sm:$0xff]
    %v1039 = vld [vmem:[#allocation7 + $0x170] sm:$0xff]
    %v1040 = vld [vmem:[#allocation7 + $0x178] sm:$0xff]
    %v1041 = vld [vmem:[#allocation7 + $0x180] sm:$0xff]
    %v1042 = vld [vmem:[#allocation7 + $0x188] sm:$0xff]
    %v1043 = vld [vmem:[#allocation7 + $0x190] sm:$0xff]
    %v1044 = vld [vmem:[#allocation7 + $0x198] sm:$0xff]
    %v1045 = vld [vmem:[#allocation7 + $0x1a0] sm:$0xff]
    %v1046 = vld [vmem:[#allocation7 + $0x1a8] sm:$0xff]
    %v1047 = vld [vmem:[#allocation7 + $0x1b0] sm:$0xff]
    %v1048 = vld [vmem:[#allocation7 + $0x1b8] sm:$0xff]
    %v1049 = vld [vmem:[#allocation7 + $0x1c0] sm:$0xff]
    %v1050 = vld [vmem:[#allocation7 + $0x1c8] sm:$0xff]
    %v1051 = vld [vmem:[#allocation7 + $0x1d0] sm:$0xff]
    %v1052 = vld [vmem:[#allocation7 + $0x1d8] sm:$0xff]
    %v1053 = vld [vmem:[#allocation7 + $0x1e0] sm:$0xff]
    %v1054 = vld [vmem:[#allocation7 + $0x1e8] sm:$0xff]
    %v1055 = vld [vmem:[#allocation7 + $0x1f0] sm:$0xff]
    %v1056 = vld [vmem:[#allocation7 + $0x1f8] sm:$0xff]
    %v1057 = vld [vmem:[#allocation7 + $0x200] sm:$0xff]
    %v1058 = vld [vmem:[#allocation7 + $0x208] sm:$0xff]
    %v1059 = vld [vmem:[#allocation7 + $0x210] sm:$0xff]
    %v1060 = vld [vmem:[#allocation7 + $0x218] sm:$0xff]
    %v1061 = vld [vmem:[#allocation7 + $0x220] sm:$0xff]
    %v1062 = vld [vmem:[#allocation7 + $0x228] sm:$0xff]
    %v1063 = vld [vmem:[#allocation7 + $0x230] sm:$0xff]
    %v1064 = vld [vmem:[#allocation7 + $0x238] sm:$0xff]
    %v1065 = vld [vmem:[#allocation7 + $0x240] sm:$0xff]
    %v1066 = vld [vmem:[#allocation7 + $0x248] sm:$0xff]
    %v1067 = vld [vmem:[#allocation7 + $0x250] sm:$0xff]
    %v1068 = vld [vmem:[#allocation7 + $0x258] sm:$0xff]
    %v1069 = vld [vmem:[#allocation7 + $0x260] sm:$0xff]
    %v1070 = vld [vmem:[#allocation7 + $0x268] sm:$0xff]
    %v1071 = vld [vmem:[#allocation7 + $0x270] sm:$0xff]
    %v1072 = vld [vmem:[#allocation7 + $0x278] sm:$0xff]
    %v1073 = vld [vmem:[#allocation7 + $0x280] sm:$0xff]
    %v1074 = vld [vmem:[#allocation7 + $0x288] sm:$0xff]
    %v1075 = vld [vmem:[#allocation7 + $0x290] sm:$0xff]
    %v1076 = vld [vmem:[#allocation7 + $0x298] sm:$0xff]
    %v1077 = vld [vmem:[#allocation7 + $0x2a0] sm:$0xff]
    %v1078 = vld [vmem:[#allocation7 + $0x2a8] sm:$0xff]
    %v1079 = vld [vmem:[#allocation7 + $0x2b0] sm:$0xff]
    %v1080 = vld [vmem:[#allocation7 + $0x2b8] sm:$0xff]
    %v1081 = vld [vmem:[#allocation7 + $0x2c0] sm:$0xff]
    %v1082 = vld [vmem:[#allocation7 + $0x2c8] sm:$0xff]
    %v1083 = vld [vmem:[#allocation7 + $0x2d0] sm:$0xff]
    %v1084 = vld [vmem:[#allocation7 + $0x2d8] sm:$0xff]
    %v1085 = vld [vmem:[#allocation7 + $0x2e0] sm:$0xff]
    %v1086 = vld [vmem:[#allocation7 + $0x2e8] sm:$0xff]
    %v1087 = vld [vmem:[#allocation7 + $0x2f0] sm:$0xff]
    %v1088 = vld [vmem:[#allocation7 + $0x2f8] sm:$0xff]
    %v1089 = vld [vmem:[#allocation7 + $0x300] sm:$0xff]
    %v1090 = vld [vmem:[#allocation7 + $0x308] sm:$0xff]
    %v1091 = vld [vmem:[#allocation7 + $0x310] sm:$0xff]
    %v1092 = vld [vmem:[#allocation7 + $0x318] sm:$0xff]
    %v1093 = vld [vmem:[#allocation7 + $0x320] sm:$0xff]
    %v1094 = vld [vmem:[#allocation7 + $0x328] sm:$0xff]
    %v1095 = vld [vmem:[#allocation7 + $0x330] sm:$0xff]
    %v1096 = vld [vmem:[#allocation7 + $0x338] sm:$0xff]
    %v1097 = vld [vmem:[#allocation7 + $0x340] sm:$0xff]
    %v1098 = vld [vmem:[#allocation7 + $0x348] sm:$0xff]
    %v1099 = vld [vmem:[#allocation7 + $0x350] sm:$0xff]
    %v1100 = vld [vmem:[#allocation7 + $0x358] sm:$0xff]
    %v1101 = vld [vmem:[#allocation7 + $0x360] sm:$0xff]
    %v1102 = vld [vmem:[#allocation7 + $0x368] sm:$0xff]
    %v1103 = vld [vmem:[#allocation7 + $0x370] sm:$0xff]
    %v1104 = vld [vmem:[#allocation7 + $0x378] sm:$0xff]
    %v1105 = vld [vmem:[#allocation7 + $0x380] sm:$0xff]
    %v1106 = vld [vmem:[#allocation7 + $0x388] sm:$0xff]
    %v1107 = vld [vmem:[#allocation7 + $0x390] sm:$0xff]
    %v1108 = vld [vmem:[#allocation7 + $0x398] sm:$0xff]
    %v1109 = vld [vmem:[#allocation7 + $0x3a0] sm:$0xff]
    %v1110 = vld [vmem:[#allocation7 + $0x3a8] sm:$0xff]
    %v1111 = vld [vmem:[#allocation7 + $0x3b0] sm:$0xff]
    %v1112 = vld [vmem:[#allocation7 + $0x3b8] sm:$0xff]
    %v1113 = vld [vmem:[#allocation7 + $0x3c0] sm:$0xff]
    %v1114 = vld [vmem:[#allocation7 + $0x3c8] sm:$0xff]
    %v1115 = vld [vmem:[#allocation7 + $0x3d0] sm:$0xff]
    %v1116 = vld [vmem:[#allocation7 + $0x3d8] sm:$0xff]
    %v1117 = vld [vmem:[#allocation7 + $0x3e0] sm:$0xff]
    %v1118 = vld [vmem:[#allocation7 + $0x3e8] sm:$0xff]
    %v1119 = vld [vmem:[#allocation7 + $0x3f0] sm:$0xff]
    %v1120 = vld [vmem:[#allocation7 + $0x3f8] sm:$0xff]
    %v1121 = vld [vmem:[#allocation13 + $0x8] sm:$0xf]
    %v1123 = vlaneseq
    %v1124 = vshrl.u32 %v1123, 7
    %v1125 = vsub.s32 0, %v1124
    %v1126 = vrot.slane %v1121, %v1125
    %v1127 = vlaneseq
    %v1128 = vshrl.u32 %v1127, 7
    %v1129 = vsub.s32 1, %v1128
    %v1130 = vrot.slane %v1121, %v1129
    %v1131 = vlaneseq
    %v1132 = vshrl.u32 %v1131, 7
    %v1133 = vsub.s32 2, %v1132
    %v1134 = vrot.slane %v1121, %v1133
    %v1135 = vlaneseq
    %v1136 = vshrl.u32 %v1135, 7
    %v1137 = vsub.s32 3, %v1136
    %v1138 = vrot.slane %v1121, %v1137
    %v1271 = vunpack.c.l.b16 %v993
    %v1272 = vunpack.c.h.b16 %v993
    %v1273 = vunpack.c.l.b16 %v994
    %v1274 = vunpack.c.h.b16 %v994
    %v1275 = vunpack.c.l.b16 %v995
    %v1276 = vunpack.c.h.b16 %v995
    %v1277 = vunpack.c.l.b16 %v996
    %v1278 = vunpack.c.h.b16 %v996
    %v1279 = vunpack.c.l.b16 %v997
    %v1280 = vunpack.c.h.b16 %v997
    %v1281 = vunpack.c.l.b16 %v998
    %v1282 = vunpack.c.h.b16 %v998
    %v1283 = vunpack.c.l.b16 %v999
    %v1284 = vunpack.c.h.b16 %v999
    %v1285 = vunpack.c.l.b16 %v1000
    %v1286 = vunpack.c.h.b16 %v1000
    %v1287 = vunpack.c.l.b16 %v1001
    %v1288 = vunpack.c.h.b16 %v1001
    %v1289 = vunpack.c.l.b16 %v1002
    %v1290 = vunpack.c.h.b16 %v1002
    %v1291 = vunpack.c.l.b16 %v1003
    %v1292 = vunpack.c.h.b16 %v1003
    %v1293 = vunpack.c.l.b16 %v1004
    %v1294 = vunpack.c.h.b16 %v1004
    %v1295 = vunpack.c.l.b16 %v1005
    %v1296 = vunpack.c.h.b16 %v1005
    %v1297 = vunpack.c.l.b16 %v1006
    %v1298 = vunpack.c.h.b16 %v1006
    %v1299 = vunpack.c.l.b16 %v1007
    %v1300 = vunpack.c.h.b16 %v1007
    %v1301 = vunpack.c.l.b16 %v1008
    %v1302 = vunpack.c.h.b16 %v1008
    %v1303 = vunpack.c.l.b16 %v1009
    %v1304 = vunpack.c.h.b16 %v1009
    %v1305 = vunpack.c.l.b16 %v1010
    %v1306 = vunpack.c.h.b16 %v1010
    %v1307 = vunpack.c.l.b16 %v1011
    %v1308 = vunpack.c.h.b16 %v1011
    %v1309 = vunpack.c.l.b16 %v1012
    %v1310 = vunpack.c.h.b16 %v1012
    %v1311 = vunpack.c.l.b16 %v1013
    %v1312 = vunpack.c.h.b16 %v1013
    %v1313 = vunpack.c.l.b16 %v1014
    %v1314 = vunpack.c.h.b16 %v1014
    %v1315 = vunpack.c.l.b16 %v1015
    %v1316 = vunpack.c.h.b16 %v1015
    %v1317 = vunpack.c.l.b16 %v1016
    %v1318 = vunpack.c.h.b16 %v1016
    %v1319 = vunpack.c.l.b16 %v1017
    %v1320 = vunpack.c.h.b16 %v1017
    %v1321 = vunpack.c.l.b16 %v1018
    %v1322 = vunpack.c.h.b16 %v1018
    %v1323 = vunpack.c.l.b16 %v1019
    %v1324 = vunpack.c.h.b16 %v1019
    %v1325 = vunpack.c.l.b16 %v1020
    %v1326 = vunpack.c.h.b16 %v1020
    %v1327 = vunpack.c.l.b16 %v1021
    %v1328 = vunpack.c.h.b16 %v1021
    %v1329 = vunpack.c.l.b16 %v1022
    %v1330 = vunpack.c.h.b16 %v1022
    %v1331 = vunpack.c.l.b16 %v1023
    %v1332 = vunpack.c.h.b16 %v1023
    %v1333 = vunpack.c.l.b16 %v1024
    %v1334 = vunpack.c.h.b16 %v1024
    %v1335 = vunpack.c.l.b16 %v1025
    %v1336 = vunpack.c.h.b16 %v1025
    %v1337 = vunpack.c.l.b16 %v1026
    %v1338 = vunpack.c.h.b16 %v1026
    %v1339 = vunpack.c.l.b16 %v1027
    %v1340 = vunpack.c.h.b16 %v1027
    %v1341 = vunpack.c.l.b16 %v1028
    %v1342 = vunpack.c.h.b16 %v1028
    %v1343 = vunpack.c.l.b16 %v1029
    %v1344 = vunpack.c.h.b16 %v1029
    %v1345 = vunpack.c.l.b16 %v1030
    %v1346 = vunpack.c.h.b16 %v1030
    %v1347 = vunpack.c.l.b16 %v1031
    %v1348 = vunpack.c.h.b16 %v1031
    %v1349 = vunpack.c.l.b16 %v1032
    %v1350 = vunpack.c.h.b16 %v1032
    %v1351 = vunpack.c.l.b16 %v1033
    %v1352 = vunpack.c.h.b16 %v1033
    %v1353 = vunpack.c.l.b16 %v1034
    %v1354 = vunpack.c.h.b16 %v1034
    %v1355 = vunpack.c.l.b16 %v1035
    %v1356 = vunpack.c.h.b16 %v1035
    %v1357 = vunpack.c.l.b16 %v1036
    %v1358 = vunpack.c.h.b16 %v1036
    %v1359 = vunpack.c.l.b16 %v1037
    %v1360 = vunpack.c.h.b16 %v1037
    %v1361 = vunpack.c.l.b16 %v1038
    %v1362 = vunpack.c.h.b16 %v1038
    %v1363 = vunpack.c.l.b16 %v1039
    %v1364 = vunpack.c.h.b16 %v1039
    %v1365 = vunpack.c.l.b16 %v1040
    %v1366 = vunpack.c.h.b16 %v1040
    %v1367 = vunpack.c.l.b16 %v1041
    %v1368 = vunpack.c.h.b16 %v1041
    %v1369 = vunpack.c.l.b16 %v1042
    %v1370 = vunpack.c.h.b16 %v1042
    %v1371 = vunpack.c.l.b16 %v1043
    %v1372 = vunpack.c.h.b16 %v1043
    %v1373 = vunpack.c.l.b16 %v1044
    %v1374 = vunpack.c.h.b16 %v1044
    %v1375 = vunpack.c.l.b16 %v1045
    %v1376 = vunpack.c.h.b16 %v1045
    %v1377 = vunpack.c.l.b16 %v1046
    %v1378 = vunpack.c.h.b16 %v1046
    %v1379 = vunpack.c.l.b16 %v1047
    %v1380 = vunpack.c.h.b16 %v1047
    %v1381 = vunpack.c.l.b16 %v1048
    %v1382 = vunpack.c.h.b16 %v1048
    %v1383 = vunpack.c.l.b16 %v1049
    %v1384 = vunpack.c.h.b16 %v1049
    %v1385 = vunpack.c.l.b16 %v1050
    %v1386 = vunpack.c.h.b16 %v1050
    %v1387 = vunpack.c.l.b16 %v1051
    %v1388 = vunpack.c.h.b16 %v1051
    %v1389 = vunpack.c.l.b16 %v1052
    %v1390 = vunpack.c.h.b16 %v1052
    %v1391 = vunpack.c.l.b16 %v1053
    %v1392 = vunpack.c.h.b16 %v1053
    %v1393 = vunpack.c.l.b16 %v1054
    %v1394 = vunpack.c.h.b16 %v1054
    %v1395 = vunpack.c.l.b16 %v1055
    %v1396 = vunpack.c.h.b16 %v1055
    %v1397 = vunpack.c.l.b16 %v1056
    %v1398 = vunpack.c.h.b16 %v1056
    %v1399 = vunpack.c.l.b16 %v1057
    %v1400 = vunpack.c.h.b16 %v1057
    %v1401 = vunpack.c.l.b16 %v1058
    %v1402 = vunpack.c.h.b16 %v1058
    %v1403 = vunpack.c.l.b16 %v1059
    %v1404 = vunpack.c.h.b16 %v1059
    %v1405 = vunpack.c.l.b16 %v1060
    %v1406 = vunpack.c.h.b16 %v1060
    %v1407 = vunpack.c.l.b16 %v1061
    %v1408 = vunpack.c.h.b16 %v1061
    %v1409 = vunpack.c.l.b16 %v1062
    %v1410 = vunpack.c.h.b16 %v1062
    %v1411 = vunpack.c.l.b16 %v1063
    %v1412 = vunpack.c.h.b16 %v1063
    %v1413 = vunpack.c.l.b16 %v1064
    %v1414 = vunpack.c.h.b16 %v1064
    %v1415 = vunpack.c.l.b16 %v1065
    %v1416 = vunpack.c.h.b16 %v1065
    %v1417 = vunpack.c.l.b16 %v1066
    %v1418 = vunpack.c.h.b16 %v1066
    %v1419 = vunpack.c.l.b16 %v1067
    %v1420 = vunpack.c.h.b16 %v1067
    %v1421 = vunpack.c.l.b16 %v1068
    %v1422 = vunpack.c.h.b16 %v1068
    %v1423 = vunpack.c.l.b16 %v1069
    %v1424 = vunpack.c.h.b16 %v1069
    %v1425 = vunpack.c.l.b16 %v1070
    %v1426 = vunpack.c.h.b16 %v1070
    %v1427 = vunpack.c.l.b16 %v1071
    %v1428 = vunpack.c.h.b16 %v1071
    %v1429 = vunpack.c.l.b16 %v1072
    %v1430 = vunpack.c.h.b16 %v1072
    %v1431 = vunpack.c.l.b16 %v1073
    %v1432 = vunpack.c.h.b16 %v1073
    %v1433 = vunpack.c.l.b16 %v1074
    %v1434 = vunpack.c.h.b16 %v1074
    %v1435 = vunpack.c.l.b16 %v1075
    %v1436 = vunpack.c.h.b16 %v1075
    %v1437 = vunpack.c.l.b16 %v1076
    %v1438 = vunpack.c.h.b16 %v1076
    %v1439 = vunpack.c.l.b16 %v1077
    %v1440 = vunpack.c.h.b16 %v1077
    %v1441 = vunpack.c.l.b16 %v1078
    %v1442 = vunpack.c.h.b16 %v1078
    %v1443 = vunpack.c.l.b16 %v1079
    %v1444 = vunpack.c.h.b16 %v1079
    %v1445 = vunpack.c.l.b16 %v1080
    %v1446 = vunpack.c.h.b16 %v1080
    %v1447 = vunpack.c.l.b16 %v1081
    %v1448 = vunpack.c.h.b16 %v1081
    %v1449 = vunpack.c.l.b16 %v1082
    %v1450 = vunpack.c.h.b16 %v1082
    %v1451 = vunpack.c.l.b16 %v1083
    %v1452 = vunpack.c.h.b16 %v1083
    %v1453 = vunpack.c.l.b16 %v1084
    %v1454 = vunpack.c.h.b16 %v1084
    %v1455 = vunpack.c.l.b16 %v1085
    %v1456 = vunpack.c.h.b16 %v1085
    %v1457 = vunpack.c.l.b16 %v1086
    %v1458 = vunpack.c.h.b16 %v1086
    %v1459 = vunpack.c.l.b16 %v1087
    %v1460 = vunpack.c.h.b16 %v1087
    %v1461 = vunpack.c.l.b16 %v1088
    %v1462 = vunpack.c.h.b16 %v1088
    %v1463 = vunpack.c.l.b16 %v1089
    %v1464 = vunpack.c.h.b16 %v1089
    %v1465 = vunpack.c.l.b16 %v1090
    %v1466 = vunpack.c.h.b16 %v1090
    %v1467 = vunpack.c.l.b16 %v1091
    %v1468 = vunpack.c.h.b16 %v1091
    %v1469 = vunpack.c.l.b16 %v1092
    %v1470 = vunpack.c.h.b16 %v1092
    %v1471 = vunpack.c.l.b16 %v1093
    %v1472 = vunpack.c.h.b16 %v1093
    %v1473 = vunpack.c.l.b16 %v1094
    %v1474 = vunpack.c.h.b16 %v1094
    %v1475 = vunpack.c.l.b16 %v1095
    %v1476 = vunpack.c.h.b16 %v1095
    %v1477 = vunpack.c.l.b16 %v1096
    %v1478 = vunpack.c.h.b16 %v1096
    %v1479 = vunpack.c.l.b16 %v1097
    %v1480 = vunpack.c.h.b16 %v1097
    %v1481 = vunpack.c.l.b16 %v1098
    %v1482 = vunpack.c.h.b16 %v1098
    %v1483 = vunpack.c.l.b16 %v1099
    %v1484 = vunpack.c.h.b16 %v1099
    %v1485 = vunpack.c.l.b16 %v1100
    %v1486 = vunpack.c.h.b16 %v1100
    %v1487 = vunpack.c.l.b16 %v1101
    %v1488 = vunpack.c.h.b16 %v1101
    %v1489 = vunpack.c.l.b16 %v1102
    %v1490 = vunpack.c.h.b16 %v1102
    %v1491 = vunpack.c.l.b16 %v1103
    %v1492 = vunpack.c.h.b16 %v1103
    %v1493 = vunpack.c.l.b16 %v1104
    %v1494 = vunpack.c.h.b16 %v1104
    %v1495 = vunpack.c.l.b16 %v1105
    %v1496 = vunpack.c.h.b16 %v1105
    %v1497 = vunpack.c.l.b16 %v1106
    %v1498 = vunpack.c.h.b16 %v1106
    %v1499 = vunpack.c.l.b16 %v1107
    %v1500 = vunpack.c.h.b16 %v1107
    %v1501 = vunpack.c.l.b16 %v1108
    %v1502 = vunpack.c.h.b16 %v1108
    %v1503 = vunpack.c.l.b16 %v1109
    %v1504 = vunpack.c.h.b16 %v1109
    %v1505 = vunpack.c.l.b16 %v1110
    %v1506 = vunpack.c.h.b16 %v1110
    %v1507 = vunpack.c.l.b16 %v1111
    %v1508 = vunpack.c.h.b16 %v1111
    %v1509 = vunpack.c.l.b16 %v1112
    %v1510 = vunpack.c.h.b16 %v1112
    %v1511 = vunpack.c.l.b16 %v1113
    %v1512 = vunpack.c.h.b16 %v1113
    %v1513 = vunpack.c.l.b16 %v1114
    %v1514 = vunpack.c.h.b16 %v1114
    %v1515 = vunpack.c.l.b16 %v1115
    %v1516 = vunpack.c.h.b16 %v1115
    %v1517 = vunpack.c.l.b16 %v1116
    %v1518 = vunpack.c.h.b16 %v1116
    %v1519 = vunpack.c.l.b16 %v1117
    %v1520 = vunpack.c.h.b16 %v1117
    %v1521 = vunpack.c.l.b16 %v1118
    %v1522 = vunpack.c.h.b16 %v1118
    %v1523 = vunpack.c.l.b16 %v1119
    %v1524 = vunpack.c.h.b16 %v1119
    %v1525 = vunpack.c.l.b16 %v1120
    %v1526 = vunpack.c.h.b16 %v1120
    %v1527 = vpack.c.b16 %v1275, %v1271
    %v1528 = vpack.c.b16 %v1276, %v1272
    %v1529 = vpack.c.b16 %v1277, %v1273
    %v1530 = vpack.c.b16 %v1278, %v1274
    %v1531 = vpack.c.b16 %v1283, %v1279
    %v1532 = vpack.c.b16 %v1284, %v1280
    %v1533 = vpack.c.b16 %v1285, %v1281
    %v1534 = vpack.c.b16 %v1286, %v1282
    %v1535 = vpack.c.b16 %v1291, %v1287
    %v1536 = vpack.c.b16 %v1292, %v1288
    %v1537 = vpack.c.b16 %v1293, %v1289
    %v1538 = vpack.c.b16 %v1294, %v1290
    %v1539 = vpack.c.b16 %v1299, %v1295
    %v1540 = vpack.c.b16 %v1300, %v1296
    %v1541 = vpack.c.b16 %v1301, %v1297
    %v1542 = vpack.c.b16 %v1302, %v1298
    %v1543 = vpack.c.b16 %v1307, %v1303
    %v1544 = vpack.c.b16 %v1308, %v1304
    %v1545 = vpack.c.b16 %v1309, %v1305
    %v1546 = vpack.c.b16 %v1310, %v1306
    %v1547 = vpack.c.b16 %v1315, %v1311
    %v1548 = vpack.c.b16 %v1316, %v1312
    %v1549 = vpack.c.b16 %v1317, %v1313
    %v1550 = vpack.c.b16 %v1318, %v1314
    %v1551 = vpack.c.b16 %v1323, %v1319
    %v1552 = vpack.c.b16 %v1324, %v1320
    %v1553 = vpack.c.b16 %v1325, %v1321
    %v1554 = vpack.c.b16 %v1326, %v1322
    %v1555 = vpack.c.b16 %v1331, %v1327
    %v1556 = vpack.c.b16 %v1332, %v1328
    %v1557 = vpack.c.b16 %v1333, %v1329
    %v1558 = vpack.c.b16 %v1334, %v1330
    %v1559 = vpack.c.b16 %v1339, %v1335
    %v1560 = vpack.c.b16 %v1340, %v1336
    %v1561 = vpack.c.b16 %v1341, %v1337
    %v1562 = vpack.c.b16 %v1342, %v1338
    %v1563 = vpack.c.b16 %v1347, %v1343
    %v1564 = vpack.c.b16 %v1348, %v1344
    %v1565 = vpack.c.b16 %v1349, %v1345
    %v1566 = vpack.c.b16 %v1350, %v1346
    %v1567 = vpack.c.b16 %v1355, %v1351
    %v1568 = vpack.c.b16 %v1356, %v1352
    %v1569 = vpack.c.b16 %v1357, %v1353
    %v1570 = vpack.c.b16 %v1358, %v1354
    %v1571 = vpack.c.b16 %v1363, %v1359
    %v1572 = vpack.c.b16 %v1364, %v1360
    %v1573 = vpack.c.b16 %v1365, %v1361
    %v1574 = vpack.c.b16 %v1366, %v1362
    %v1575 = vpack.c.b16 %v1371, %v1367
    %v1576 = vpack.c.b16 %v1372, %v1368
    %v1577 = vpack.c.b16 %v1373, %v1369
    %v1578 = vpack.c.b16 %v1374, %v1370
    %v1579 = vpack.c.b16 %v1379, %v1375
    %v1580 = vpack.c.b16 %v1380, %v1376
    %v1581 = vpack.c.b16 %v1381, %v1377
    %v1582 = vpack.c.b16 %v1382, %v1378
    %v1583 = vpack.c.b16 %v1387, %v1383
    %v1584 = vpack.c.b16 %v1388, %v1384
    %v1585 = vpack.c.b16 %v1389, %v1385
    %v1586 = vpack.c.b16 %v1390, %v1386
    %v1587 = vpack.c.b16 %v1395, %v1391
    %v1588 = vpack.c.b16 %v1396, %v1392
    %v1589 = vpack.c.b16 %v1397, %v1393
    %v1590 = vpack.c.b16 %v1398, %v1394
    %v1591 = vpack.c.b16 %v1403, %v1399
    %v1592 = vpack.c.b16 %v1404, %v1400
    %v1593 = vpack.c.b16 %v1405, %v1401
    %v1594 = vpack.c.b16 %v1406, %v1402
    %v1595 = vpack.c.b16 %v1411, %v1407
    %v1596 = vpack.c.b16 %v1412, %v1408
    %v1597 = vpack.c.b16 %v1413, %v1409
    %v1598 = vpack.c.b16 %v1414, %v1410
    %v1599 = vpack.c.b16 %v1419, %v1415
    %v1600 = vpack.c.b16 %v1420, %v1416
    %v1601 = vpack.c.b16 %v1421, %v1417
    %v1602 = vpack.c.b16 %v1422, %v1418
    %v1603 = vpack.c.b16 %v1427, %v1423
    %v1604 = vpack.c.b16 %v1428, %v1424
    %v1605 = vpack.c.b16 %v1429, %v1425
    %v1606 = vpack.c.b16 %v1430, %v1426
    %v1607 = vpack.c.b16 %v1435, %v1431
    %v1608 = vpack.c.b16 %v1436, %v1432
    %v1609 = vpack.c.b16 %v1437, %v1433
    %v1610 = vpack.c.b16 %v1438, %v1434
    %v1611 = vpack.c.b16 %v1443, %v1439
    %v1612 = vpack.c.b16 %v1444, %v1440
    %v1613 = vpack.c.b16 %v1445, %v1441
    %v1614 = vpack.c.b16 %v1446, %v1442
    %v1615 = vpack.c.b16 %v1451, %v1447
    %v1616 = vpack.c.b16 %v1452, %v1448
    %v1617 = vpack.c.b16 %v1453, %v1449
    %v1618 = vpack.c.b16 %v1454, %v1450
    %v1619 = vpack.c.b16 %v1459, %v1455
    %v1620 = vpack.c.b16 %v1460, %v1456
    %v1621 = vpack.c.b16 %v1461, %v1457
    %v1622 = vpack.c.b16 %v1462, %v1458
    %v1623 = vpack.c.b16 %v1467, %v1463
    %v1624 = vpack.c.b16 %v1468, %v1464
    %v1625 = vpack.c.b16 %v1469, %v1465
    %v1626 = vpack.c.b16 %v1470, %v1466
    %v1627 = vpack.c.b16 %v1475, %v1471
    %v1628 = vpack.c.b16 %v1476, %v1472
    %v1629 = vpack.c.b16 %v1477, %v1473
    %v1630 = vpack.c.b16 %v1478, %v1474
    %v1631 = vpack.c.b16 %v1483, %v1479
    %v1632 = vpack.c.b16 %v1484, %v1480
    %v1633 = vpack.c.b16 %v1485, %v1481
    %v1634 = vpack.c.b16 %v1486, %v1482
    %v1635 = vpack.c.b16 %v1491, %v1487
    %v1636 = vpack.c.b16 %v1492, %v1488
    %v1637 = vpack.c.b16 %v1493, %v1489
    %v1638 = vpack.c.b16 %v1494, %v1490
    %v1639 = vpack.c.b16 %v1499, %v1495
    %v1640 = vpack.c.b16 %v1500, %v1496
    %v1641 = vpack.c.b16 %v1501, %v1497
    %v1642 = vpack.c.b16 %v1502, %v1498
    %v1643 = vpack.c.b16 %v1507, %v1503
    %v1644 = vpack.c.b16 %v1508, %v1504
    %v1645 = vpack.c.b16 %v1509, %v1505
    %v1646 = vpack.c.b16 %v1510, %v1506
    %v1647 = vpack.c.b16 %v1515, %v1511
    %v1648 = vpack.c.b16 %v1516, %v1512
    %v1649 = vpack.c.b16 %v1517, %v1513
    %v1650 = vpack.c.b16 %v1518, %v1514
    %v1651 = vpack.c.b16 %v1523, %v1519
    %v1652 = vpack.c.b16 %v1524, %v1520
    %v1653 = vpack.c.b16 %v1525, %v1521
    %v1654 = vpack.c.b16 %v1526, %v1522
    %1783 = vmatprep.subr.bf16.mxu0 %v1556
    %1784 = vmatpush1.bf16.msra.mxu0 %v1555
    %1785 = vmatprep.subr.bf16.mxu0 %v1552
    %1786 = vmatpush1.bf16.msra.mxu0 %v1551
    %1787 = vmatprep.subr.bf16.mxu0 %v1548
    %1788 = vmatpush1.bf16.msra.mxu0 %v1547
    %1789 = vmatprep.subr.bf16.mxu0 %v1544
    %1790 = vmatpush1.bf16.msra.mxu0 %v1543
    %1791 = vmatprep.subr.bf16.mxu0 %v1540
    %1792 = vmatpush1.bf16.msra.mxu0 %v1539
    %1793 = vmatprep.subr.bf16.mxu0 %v1536
    %1794 = vmatpush1.bf16.msra.mxu0 %v1535
    %1795 = vmatprep.subr.bf16.mxu0 %v1532
    %1796 = vmatpush1.bf16.msra.mxu0 %v1531
    %1797 = vmatprep.subr.bf16.mxu0 %v1528
    %1798 = vmatpush1.bf16.msra.mxu0 %v1527
    %1799 = vmatprep.subr.bf16.mxu0 %v1588
    %1800 = vmatpush2.bf16.msra.mxu0 %v1587
    %1801 = vmatprep.subr.bf16.mxu0 %v1584
    %1802 = vmatpush2.bf16.msra.mxu0 %v1583
    %1803 = vmatprep.subr.bf16.mxu0 %v1580
    %1804 = vmatpush2.bf16.msra.mxu0 %v1579
    %1805 = vmatprep.subr.bf16.mxu0 %v1576
    %1806 = vmatpush2.bf16.msra.mxu0 %v1575
    %1807 = vmatprep.subr.bf16.mxu0 %v1572
    %1808 = vmatpush2.bf16.msra.mxu0 %v1571
    %1809 = vmatprep.subr.bf16.mxu0 %v1568
    %1810 = vmatpush2.bf16.msra.mxu0 %v1567
    %1811 = vmatprep.subr.bf16.mxu0 %v1564
    %1812 = vmatpush2.bf16.msra.mxu0 %v1563
    %1813 = vmatprep.subr.bf16.mxu0 %v1560
    %1814 = vmatpush2.bf16.msra.mxu0 %v1559
    %1815 = vmatprep.mubr.bf16.mxu0 %v876
    %1816 = vmatmul.mubr.bf16.gmra.mxu0 %v875
    %v1817 = vpop.f32.mrf.mxu0
    %v1818 = vadd.f32 %v1126, %v1817
    %v1819 = vpop.f32.mrf.mxu0
    %v1820 = vadd.f32 %v1130, %v1819
    %v1821 = vpop.f32.mrf.mxu0
    %v1822 = vadd.f32 %v1126, %v1821
    %v1823 = vpop.f32.mrf.mxu0
    %v1824 = vadd.f32 %v1130, %v1823
    %1825 = vmatprep.mubr.bf16.mxu0 %v880
    %1826 = vmatmul.mubr.bf16.gmra.mxu0 %v879
    %v1827 = vpop.f32.mrf.mxu0
    %v1828 = vadd.f32 %v1126, %v1827
    %v1829 = vpop.f32.mrf.mxu0
    %v1830 = vadd.f32 %v1130, %v1829
    %v1831 = vpop.f32.mrf.mxu0
    %v1832 = vadd.f32 %v1126, %v1831
    %v1833 = vpop.f32.mrf.mxu0
    %v1834 = vadd.f32 %v1130, %v1833
    %1835 = vmatprep.mubr.bf16.mxu0 %v884
    %1836 = vmatmul.mubr.bf16.gmra.mxu0 %v883
    %v1837 = vpop.f32.mrf.mxu0
    %v1838 = vadd.f32 %v1126, %v1837
    %v1839 = vpop.f32.mrf.mxu0
    %v1840 = vadd.f32 %v1130, %v1839
    %v1841 = vpop.f32.mrf.mxu0
    %v1842 = vadd.f32 %v1126, %v1841
    %v1843 = vpop.f32.mrf.mxu0
    %v1844 = vadd.f32 %v1130, %v1843
    %1845 = vmatprep.mubr.bf16.mxu0 %v888
    %1846 = vmatmul.mubr.bf16.gmra.mxu0 %v887
    %v1847 = vpop.f32.mrf.mxu0
    %v1848 = vadd.f32 %v1126, %v1847
    %v1849 = vpop.f32.mrf.mxu0
    %v1850 = vadd.f32 %v1130, %v1849
    %v1851 = vpop.f32.mrf.mxu0
    %v1852 = vadd.f32 %v1126, %v1851
    %v1853 = vpop.f32.mrf.mxu0
    %v1854 = vadd.f32 %v1130, %v1853
    %1855 = vmatprep.mubr.bf16.mxu0 %v892
    %1856 = vmatmul.mubr.bf16.gmra.mxu0 %v891
    %v1857 = vpop.f32.mrf.mxu0
    %v1858 = vadd.f32 %v1126, %v1857
    %v1859 = vpop.f32.mrf.mxu0
    %v1860 = vadd.f32 %v1130, %v1859
    %v1861 = vpop.f32.mrf.mxu0
    %v1862 = vadd.f32 %v1126, %v1861
    %v1863 = vpop.f32.mrf.mxu0
    %v1864 = vadd.f32 %v1130, %v1863
    %1865 = vmatprep.mubr.bf16.mxu0 %v896
    %1866 = vmatmul.mubr.bf16.gmra.mxu0 %v895
    %v1867 = vpop.f32.mrf.mxu0
    %v1868 = vadd.f32 %v1126, %v1867
    %v1869 = vpop.f32.mrf.mxu0
    %v1870 = vadd.f32 %v1130, %v1869
    %v1871 = vpop.f32.mrf.mxu0
    %v1872 = vadd.f32 %v1126, %v1871
    %v1873 = vpop.f32.mrf.mxu0
    %v1874 = vadd.f32 %v1130, %v1873
    %1875 = vmatprep.mubr.bf16.mxu0 %v900
    %1876 = vmatmul.mubr.bf16.gmra.mxu0 %v899
    %v1877 = vpop.f32.mrf.mxu0
    %v1878 = vadd.f32 %v1126, %v1877
    %v1879 = vpop.f32.mrf.mxu0
    %v1880 = vadd.f32 %v1130, %v1879
    %v1881 = vpop.f32.mrf.mxu0
    %v1882 = vadd.f32 %v1126, %v1881
    %v1883 = vpop.f32.mrf.mxu0
    %v1884 = vadd.f32 %v1130, %v1883
    %1885 = vmatprep.mubr.bf16.mxu0 %v904
    %1886 = vmatmul.mubr.bf16.gmra.mxu0 %v903
    %v1887 = vpop.f32.mrf.mxu0
    %v1888 = vadd.f32 %v1126, %v1887
    %v1889 = vpop.f32.mrf.mxu0
    %v1890 = vadd.f32 %v1130, %v1889
    %v1891 = vpop.f32.mrf.mxu0
    %v1892 = vadd.f32 %v1126, %v1891
    %v1893 = vpop.f32.mrf.mxu0
    %v1894 = vadd.f32 %v1130, %v1893
    %1895 = vdwg.mxu0
    %1896 = vmatprep.subr.bf16.mxu0 %v1620
    %1897 = vmatpush1.bf16.msra.mxu0 %v1619
    %1898 = vmatprep.subr.bf16.mxu0 %v1616
    %1899 = vmatpush1.bf16.msra.mxu0 %v1615
    %1900 = vmatprep.subr.bf16.mxu0 %v1612
    %1901 = vmatpush1.bf16.msra.mxu0 %v1611
    %1902 = vmatprep.subr.bf16.mxu0 %v1608
    %1903 = vmatpush1.bf16.msra.mxu0 %v1607
    %1904 = vmatprep.subr.bf16.mxu0 %v1604
    %1905 = vmatpush1.bf16.msra.mxu0 %v1603
    %1906 = vmatprep.subr.bf16.mxu0 %v1600
    %1907 = vmatpush1.bf16.msra.mxu0 %v1599
    %1908 = vmatprep.subr.bf16.mxu0 %v1596
    %1909 = vmatpush1.bf16.msra.mxu0 %v1595
    %1910 = vmatprep.subr.bf16.mxu0 %v1592
    %1911 = vmatpush1.bf16.msra.mxu0 %v1591
    %1912 = vmatprep.subr.bf16.mxu0 %v1652
    %1913 = vmatpush2.bf16.msra.mxu0 %v1651
    %1914 = vmatprep.subr.bf16.mxu0 %v1648
    %1915 = vmatpush2.bf16.msra.mxu0 %v1647
    %1916 = vmatprep.subr.bf16.mxu0 %v1644
    %1917 = vmatpush2.bf16.msra.mxu0 %v1643
    %1918 = vmatprep.subr.bf16.mxu0 %v1640
    %1919 = vmatpush2.bf16.msra.mxu0 %v1639
    %1920 = vmatprep.subr.bf16.mxu0 %v1636
    %1921 = vmatpush2.bf16.msra.mxu0 %v1635
    %1922 = vmatprep.subr.bf16.mxu0 %v1632
    %1923 = vmatpush2.bf16.msra.mxu0 %v1631
    %1924 = vmatprep.subr.bf16.mxu0 %v1628
    %1925 = vmatpush2.bf16.msra.mxu0 %v1627
    %1926 = vmatprep.subr.bf16.mxu0 %v1624
    %1927 = vmatpush2.bf16.msra.mxu0 %v1623
    %1928 = vmatprep.mubr.bf16.mxu0 %v878
    %1929 = vmatmul.mubr.bf16.gmra.mxu0 %v877
    %v1930 = vpop.f32.mrf.mxu0
    %v1931 = vadd.f32 %v1818, %v1930
    %v1932 = vpop.f32.mrf.mxu0
    %v1933 = vadd.f32 %v1820, %v1932
    %v1934 = vpop.f32.mrf.mxu0
    %v1935 = vadd.f32 %v1822, %v1934
    %v1936 = vpop.f32.mrf.mxu0
    %v1937 = vadd.f32 %v1824, %v1936
    %1938 = vmatprep.mubr.bf16.mxu0 %v882
    %1939 = vmatmul.mubr.bf16.gmra.mxu0 %v881
    %v1940 = vpop.f32.mrf.mxu0
    %v1941 = vadd.f32 %v1828, %v1940
    %v1942 = vpop.f32.mrf.mxu0
    %v1943 = vadd.f32 %v1830, %v1942
    %v1944 = vpop.f32.mrf.mxu0
    %v1945 = vadd.f32 %v1832, %v1944
    %v1946 = vpop.f32.mrf.mxu0
    %v1947 = vadd.f32 %v1834, %v1946
    %1948 = vmatprep.mubr.bf16.mxu0 %v886
    %1949 = vmatmul.mubr.bf16.gmra.mxu0 %v885
    %v1950 = vpop.f32.mrf.mxu0
    %v1951 = vadd.f32 %v1838, %v1950
    %v1952 = vpop.f32.mrf.mxu0
    %v1953 = vadd.f32 %v1840, %v1952
    %v1954 = vpop.f32.mrf.mxu0
    %v1955 = vadd.f32 %v1842, %v1954
    %v1956 = vpop.f32.mrf.mxu0
    %v1957 = vadd.f32 %v1844, %v1956
    %1958 = vmatprep.mubr.bf16.mxu0 %v890
    %1959 = vmatmul.mubr.bf16.gmra.mxu0 %v889
    %v1960 = vpop.f32.mrf.mxu0
    %v1961 = vadd.f32 %v1848, %v1960
    %v1962 = vpop.f32.mrf.mxu0
    %v1963 = vadd.f32 %v1850, %v1962
    %v1964 = vpop.f32.mrf.mxu0
    %v1965 = vadd.f32 %v1852, %v1964
    %v1966 = vpop.f32.mrf.mxu0
    %v1967 = vadd.f32 %v1854, %v1966
    %1968 = vmatprep.mubr.bf16.mxu0 %v894
    %1969 = vmatmul.mubr.bf16.gmra.mxu0 %v893
    %v1970 = vpop.f32.mrf.mxu0
    %v1971 = vadd.f32 %v1858, %v1970
    %v1972 = vpop.f32.mrf.mxu0
    %v1973 = vadd.f32 %v1860, %v1972
    %v1974 = vpop.f32.mrf.mxu0
    %v1975 = vadd.f32 %v1862, %v1974
    %v1976 = vpop.f32.mrf.mxu0
    %v1977 = vadd.f32 %v1864, %v1976
    %1978 = vmatprep.mubr.bf16.mxu0 %v898
    %1979 = vmatmul.mubr.bf16.gmra.mxu0 %v897
    %v1980 = vpop.f32.mrf.mxu0
    %v1981 = vadd.f32 %v1868, %v1980
    %v1982 = vpop.f32.mrf.mxu0
    %v1983 = vadd.f32 %v1870, %v1982
    %v1984 = vpop.f32.mrf.mxu0
    %v1985 = vadd.f32 %v1872, %v1984
    %v1986 = vpop.f32.mrf.mxu0
    %v1987 = vadd.f32 %v1874, %v1986
    %1988 = vmatprep.mubr.bf16.mxu0 %v902
    %1989 = vmatmul.mubr.bf16.gmra.mxu0 %v901
    %v1990 = vpop.f32.mrf.mxu0
    %v1991 = vadd.f32 %v1878, %v1990
    %v1992 = vpop.f32.mrf.mxu0
    %v1993 = vadd.f32 %v1880, %v1992
    %v1994 = vpop.f32.mrf.mxu0
    %v1995 = vadd.f32 %v1882, %v1994
    %v1996 = vpop.f32.mrf.mxu0
    %v1997 = vadd.f32 %v1884, %v1996
    %1998 = vmatprep.mubr.bf16.mxu0 %v906
    %1999 = vmatmul.mubr.bf16.gmra.mxu0 %v905
    %v2000 = vpop.f32.mrf.mxu0
    %v2001 = vadd.f32 %v1888, %v2000
    %v2002 = vpop.f32.mrf.mxu0
    %v2003 = vadd.f32 %v1890, %v2002
    %v2004 = vpop.f32.mrf.mxu0
    %v2005 = vadd.f32 %v1892, %v2004
    %v2006 = vpop.f32.mrf.mxu0
    %v2007 = vadd.f32 %v1894, %v2006
    %2008 = vdwg.mxu0
    %2009 = vmatprep.subr.bf16.mxu0 %v1558
    %2010 = vmatpush1.bf16.msra.mxu0 %v1557
    %2011 = vmatprep.subr.bf16.mxu0 %v1554
    %2012 = vmatpush1.bf16.msra.mxu0 %v1553
    %2013 = vmatprep.subr.bf16.mxu0 %v1550
    %2014 = vmatpush1.bf16.msra.mxu0 %v1549
    %2015 = vmatprep.subr.bf16.mxu0 %v1546
    %2016 = vmatpush1.bf16.msra.mxu0 %v1545
    %2017 = vmatprep.subr.bf16.mxu0 %v1542
    %2018 = vmatpush1.bf16.msra.mxu0 %v1541
    %2019 = vmatprep.subr.bf16.mxu0 %v1538
    %2020 = vmatpush1.bf16.msra.mxu0 %v1537
    %2021 = vmatprep.subr.bf16.mxu0 %v1534
    %2022 = vmatpush1.bf16.msra.mxu0 %v1533
    %2023 = vmatprep.subr.bf16.mxu0 %v1530
    %2024 = vmatpush1.bf16.msra.mxu0 %v1529
    %2025 = vmatprep.subr.bf16.mxu0 %v1590
    %2026 = vmatpush2.bf16.msra.mxu0 %v1589
    %2027 = vmatprep.subr.bf16.mxu0 %v1586
    %2028 = vmatpush2.bf16.msra.mxu0 %v1585
    %2029 = vmatprep.subr.bf16.mxu0 %v1582
    %2030 = vmatpush2.bf16.msra.mxu0 %v1581
    %2031 = vmatprep.subr.bf16.mxu0 %v1578
    %2032 = vmatpush2.bf16.msra.mxu0 %v1577
    %2033 = vmatprep.subr.bf16.mxu0 %v1574
    %2034 = vmatpush2.bf16.msra.mxu0 %v1573
    %2035 = vmatprep.subr.bf16.mxu0 %v1570
    %2036 = vmatpush2.bf16.msra.mxu0 %v1569
    %2037 = vmatprep.subr.bf16.mxu0 %v1566
    %2038 = vmatpush2.bf16.msra.mxu0 %v1565
    %2039 = vmatprep.subr.bf16.mxu0 %v1562
    %2040 = vmatpush2.bf16.msra.mxu0 %v1561
    %2041 = vmatprep.mubr.bf16.mxu0 %v876
    %2042 = vmatmul.mubr.bf16.gmra.mxu0 %v875
    %v2043 = vpop.f32.mrf.mxu0
    %v2044 = vadd.f32 %v1134, %v2043
    %v2045 = vpop.f32.mrf.mxu0
    %v2046 = vadd.f32 %v1138, %v2045
    %v2047 = vpop.f32.mrf.mxu0
    %v2048 = vadd.f32 %v1134, %v2047
    %v2049 = vpop.f32.mrf.mxu0
    %v2050 = vadd.f32 %v1138, %v2049
    %2051 = vmatprep.mubr.bf16.mxu0 %v880
    %2052 = vmatmul.mubr.bf16.gmra.mxu0 %v879
    %v2053 = vpop.f32.mrf.mxu0
    %v2054 = vadd.f32 %v1134, %v2053
    %v2055 = vpop.f32.mrf.mxu0
    %v2056 = vadd.f32 %v1138, %v2055
    %v2057 = vpop.f32.mrf.mxu0
    %v2058 = vadd.f32 %v1134, %v2057
    %v2059 = vpop.f32.mrf.mxu0
    %v2060 = vadd.f32 %v1138, %v2059
    %2061 = vmatprep.mubr.bf16.mxu0 %v884
    %2062 = vmatmul.mubr.bf16.gmra.mxu0 %v883
    %v2063 = vpop.f32.mrf.mxu0
    %v2064 = vadd.f32 %v1134, %v2063
    %v2065 = vpop.f32.mrf.mxu0
    %v2066 = vadd.f32 %v1138, %v2065
    %v2067 = vpop.f32.mrf.mxu0
    %v2068 = vadd.f32 %v1134, %v2067
    %v2069 = vpop.f32.mrf.mxu0
    %v2070 = vadd.f32 %v1138, %v2069
    %2071 = vmatprep.mubr.bf16.mxu0 %v888
    %2072 = vmatmul.mubr.bf16.gmra.mxu0 %v887
    %v2073 = vpop.f32.mrf.mxu0
    %v2074 = vadd.f32 %v1134, %v2073
    %v2075 = vpop.f32.mrf.mxu0
    %v2076 = vadd.f32 %v1138, %v2075
    %v2077 = vpop.f32.mrf.mxu0
    %v2078 = vadd.f32 %v1134, %v2077
    %v2079 = vpop.f32.mrf.mxu0
    %v2080 = vadd.f32 %v1138, %v2079
    %2081 = vmatprep.mubr.bf16.mxu0 %v892
    %2082 = vmatmul.mubr.bf16.gmra.mxu0 %v891
    %v2083 = vpop.f32.mrf.mxu0
    %v2084 = vadd.f32 %v1134, %v2083
    %v2085 = vpop.f32.mrf.mxu0
    %v2086 = vadd.f32 %v1138, %v2085
    %v2087 = vpop.f32.mrf.mxu0
    %v2088 = vadd.f32 %v1134, %v2087
    %v2089 = vpop.f32.mrf.mxu0
    %v2090 = vadd.f32 %v1138, %v2089
    %2091 = vmatprep.mubr.bf16.mxu0 %v896
    %2092 = vmatmul.mubr.bf16.gmra.mxu0 %v895
    %v2093 = vpop.f32.mrf.mxu0
    %v2094 = vadd.f32 %v1134, %v2093
    %v2095 = vpop.f32.mrf.mxu0
    %v2096 = vadd.f32 %v1138, %v2095
    %v2097 = vpop.f32.mrf.mxu0
    %v2098 = vadd.f32 %v1134, %v2097
    %v2099 = vpop.f32.mrf.mxu0
    %v2100 = vadd.f32 %v1138, %v2099
    %2101 = vmatprep.mubr.bf16.mxu0 %v900
    %2102 = vmatmul.mubr.bf16.gmra.mxu0 %v899
    %v2103 = vpop.f32.mrf.mxu0
    %v2104 = vadd.f32 %v1134, %v2103
    %v2105 = vpop.f32.mrf.mxu0
    %v2106 = vadd.f32 %v1138, %v2105
    %v2107 = vpop.f32.mrf.mxu0
    %v2108 = vadd.f32 %v1134, %v2107
    %v2109 = vpop.f32.mrf.mxu0
    %v2110 = vadd.f32 %v1138, %v2109
    %2111 = vmatprep.mubr.bf16.mxu0 %v904
    %2112 = vmatmul.mubr.bf16.gmra.mxu0 %v903
    %v2113 = vpop.f32.mrf.mxu0
    %v2114 = vadd.f32 %v1134, %v2113
    %v2115 = vpop.f32.mrf.mxu0
    %v2116 = vadd.f32 %v1138, %v2115
    %v2117 = vpop.f32.mrf.mxu0
    %v2118 = vadd.f32 %v1134, %v2117
    %v2119 = vpop.f32.mrf.mxu0
    %v2120 = vadd.f32 %v1138, %v2119
    %2121 = vdwg.mxu0
    %2122 = vmatprep.subr.bf16.mxu0 %v1622
    %2123 = vmatpush1.bf16.msra.mxu0 %v1621
    %2124 = vmatprep.subr.bf16.mxu0 %v1618
    %2125 = vmatpush1.bf16.msra.mxu0 %v1617
    %2126 = vmatprep.subr.bf16.mxu0 %v1614
    %2127 = vmatpush1.bf16.msra.mxu0 %v1613
    %2128 = vmatprep.subr.bf16.mxu0 %v1610
    %2129 = vmatpush1.bf16.msra.mxu0 %v1609
    %2130 = vmatprep.subr.bf16.mxu0 %v1606
    %2131 = vmatpush1.bf16.msra.mxu0 %v1605
    %2132 = vmatprep.subr.bf16.mxu0 %v1602
    %2133 = vmatpush1.bf16.msra.mxu0 %v1601
    %2134 = vmatprep.subr.bf16.mxu0 %v1598
    %2135 = vmatpush1.bf16.msra.mxu0 %v1597
    %2136 = vmatprep.subr.bf16.mxu0 %v1594
    %2137 = vmatpush1.bf16.msra.mxu0 %v1593
    %2138 = vmatprep.subr.bf16.mxu0 %v1654
    %2139 = vmatpush2.bf16.msra.mxu0 %v1653
    %2140 = vmatprep.subr.bf16.mxu0 %v1650
    %2141 = vmatpush2.bf16.msra.mxu0 %v1649
    %2142 = vmatprep.subr.bf16.mxu0 %v1646
    %2143 = vmatpush2.bf16.msra.mxu0 %v1645
    %2144 = vmatprep.subr.bf16.mxu0 %v1642
    %2145 = vmatpush2.bf16.msra.mxu0 %v1641
    %2146 = vmatprep.subr.bf16.mxu0 %v1638
    %2147 = vmatpush2.bf16.msra.mxu0 %v1637
    %2148 = vmatprep.subr.bf16.mxu0 %v1634
    %2149 = vmatpush2.bf16.msra.mxu0 %v1633
    %2150 = vmatprep.subr.bf16.mxu0 %v1630
    %2151 = vmatpush2.bf16.msra.mxu0 %v1629
    %2152 = vmatprep.subr.bf16.mxu0 %v1626
    %2153 = vmatpush2.bf16.msra.mxu0 %v1625
    %2154 = vmatprep.mubr.bf16.mxu0 %v878
    %2155 = vmatmul.mubr.bf16.gmra.mxu0 %v877
    %v2156 = vpop.f32.mrf.mxu0
    %v2157 = vadd.f32 %v2044, %v2156
    %v2158 = vpop.f32.mrf.mxu0
    %v2159 = vadd.f32 %v2046, %v2158
    %v2160 = vpop.f32.mrf.mxu0
    %v2161 = vadd.f32 %v2048, %v2160
    %v2162 = vpop.f32.mrf.mxu0
    %v2163 = vadd.f32 %v2050, %v2162
    %2164 = vmatprep.mubr.bf16.mxu0 %v882
    %2165 = vmatmul.mubr.bf16.gmra.mxu0 %v881
    %v2166 = vpop.f32.mrf.mxu0
    %v2167 = vadd.f32 %v2054, %v2166
    %v2168 = vpop.f32.mrf.mxu0
    %v2169 = vadd.f32 %v2056, %v2168
    %v2170 = vpop.f32.mrf.mxu0
    %v2171 = vadd.f32 %v2058, %v2170
    %v2172 = vpop.f32.mrf.mxu0
    %v2173 = vadd.f32 %v2060, %v2172
    %2174 = vmatprep.mubr.bf16.mxu0 %v886
    %2175 = vmatmul.mubr.bf16.gmra.mxu0 %v885
    %v2176 = vpop.f32.mrf.mxu0
    %v2177 = vadd.f32 %v2064, %v2176
    %v2178 = vpop.f32.mrf.mxu0
    %v2179 = vadd.f32 %v2066, %v2178
    %v2180 = vpop.f32.mrf.mxu0
    %v2181 = vadd.f32 %v2068, %v2180
    %v2182 = vpop.f32.mrf.mxu0
    %v2183 = vadd.f32 %v2070, %v2182
    %2184 = vmatprep.mubr.bf16.mxu0 %v890
    %2185 = vmatmul.mubr.bf16.gmra.mxu0 %v889
    %v2186 = vpop.f32.mrf.mxu0
    %v2187 = vadd.f32 %v2074, %v2186
    %v2188 = vpop.f32.mrf.mxu0
    %v2189 = vadd.f32 %v2076, %v2188
    %v2190 = vpop.f32.mrf.mxu0
    %v2191 = vadd.f32 %v2078, %v2190
    %v2192 = vpop.f32.mrf.mxu0
    %v2193 = vadd.f32 %v2080, %v2192
    %2194 = vmatprep.mubr.bf16.mxu0 %v894
    %2195 = vmatmul.mubr.bf16.gmra.mxu0 %v893
    %v2196 = vpop.f32.mrf.mxu0
    %v2197 = vadd.f32 %v2084, %v2196
    %v2198 = vpop.f32.mrf.mxu0
    %v2199 = vadd.f32 %v2086, %v2198
    %v2200 = vpop.f32.mrf.mxu0
    %v2201 = vadd.f32 %v2088, %v2200
    %v2202 = vpop.f32.mrf.mxu0
    %v2203 = vadd.f32 %v2090, %v2202
    %2204 = vmatprep.mubr.bf16.mxu0 %v898
    %2205 = vmatmul.mubr.bf16.gmra.mxu0 %v897
    %v2206 = vpop.f32.mrf.mxu0
    %v2207 = vadd.f32 %v2094, %v2206
    %v2208 = vpop.f32.mrf.mxu0
    %v2209 = vadd.f32 %v2096, %v2208
    %v2210 = vpop.f32.mrf.mxu0
    %v2211 = vadd.f32 %v2098, %v2210
    %v2212 = vpop.f32.mrf.mxu0
    %v2213 = vadd.f32 %v2100, %v2212
    %2214 = vmatprep.mubr.bf16.mxu0 %v902
    %2215 = vmatmul.mubr.bf16.gmra.mxu0 %v901
    %v2216 = vpop.f32.mrf.mxu0
    %v2217 = vadd.f32 %v2104, %v2216
    %v2218 = vpop.f32.mrf.mxu0
    %v2219 = vadd.f32 %v2106, %v2218
    %v2220 = vpop.f32.mrf.mxu0
    %v2221 = vadd.f32 %v2108, %v2220
    %v2222 = vpop.f32.mrf.mxu0
    %v2223 = vadd.f32 %v2110, %v2222
    %2224 = vmatprep.mubr.bf16.mxu0 %v906
    %2225 = vmatmul.mubr.bf16.gmra.mxu0 %v905
    %v2226 = vpop.f32.mrf.mxu0
    %v2227 = vadd.f32 %v2114, %v2226
    %v2228 = vpop.f32.mrf.mxu0
    %v2229 = vadd.f32 %v2116, %v2228
    %v2230 = vpop.f32.mrf.mxu0
    %v2231 = vadd.f32 %v2118, %v2230
    %v2232 = vpop.f32.mrf.mxu0
    %v2233 = vadd.f32 %v2120, %v2232
    %2234 = vdwg.mxu0
    %v2235 = vmax.f32 %v1931, 0.0
    %v2236 = vmax.f32 %v1933, 0.0
    %v2237 = vmax.f32 %v2157, 0.0
    %v2238 = vmax.f32 %v2159, 0.0
    %v2239 = vmax.f32 %v1935, 0.0
    %v2240 = vmax.f32 %v1937, 0.0
    %v2241 = vmax.f32 %v2161, 0.0
    %v2242 = vmax.f32 %v2163, 0.0
    %v2243 = vmax.f32 %v1941, 0.0
    %v2244 = vmax.f32 %v1943, 0.0
    %v2245 = vmax.f32 %v2167, 0.0
    %v2246 = vmax.f32 %v2169, 0.0
    %v2247 = vmax.f32 %v1945, 0.0
    %v2248 = vmax.f32 %v1947, 0.0
    %v2249 = vmax.f32 %v2171, 0.0
    %v2250 = vmax.f32 %v2173, 0.0
    %v2251 = vmax.f32 %v1951, 0.0
    %v2252 = vmax.f32 %v1953, 0.0
    %v2253 = vmax.f32 %v2177, 0.0
    %v2254 = vmax.f32 %v2179, 0.0
    %v2255 = vmax.f32 %v1955, 0.0
    %v2256 = vmax.f32 %v1957, 0.0
    %v2257 = vmax.f32 %v2181, 0.0
    %v2258 = vmax.f32 %v2183, 0.0
    %v2259 = vmax.f32 %v1961, 0.0
    %v2260 = vmax.f32 %v1963, 0.0
    %v2261 = vmax.f32 %v2187, 0.0
    %v2262 = vmax.f32 %v2189, 0.0
    %v2263 = vmax.f32 %v1965, 0.0
    %v2264 = vmax.f32 %v1967, 0.0
    %v2265 = vmax.f32 %v2191, 0.0
    %v2266 = vmax.f32 %v2193, 0.0
    %v2267 = vmax.f32 %v1971, 0.0
    %v2268 = vmax.f32 %v1973, 0.0
    %v2269 = vmax.f32 %v2197, 0.0
    %v2270 = vmax.f32 %v2199, 0.0
    %v2271 = vmax.f32 %v1975, 0.0
    %v2272 = vmax.f32 %v1977, 0.0
    %v2273 = vmax.f32 %v2201, 0.0
    %v2274 = vmax.f32 %v2203, 0.0
    %v2275 = vmax.f32 %v1981, 0.0
    %v2276 = vmax.f32 %v1983, 0.0
    %v2277 = vmax.f32 %v2207, 0.0
    %v2278 = vmax.f32 %v2209, 0.0
    %v2279 = vmax.f32 %v1985, 0.0
    %v2280 = vmax.f32 %v1987, 0.0
    %v2281 = vmax.f32 %v2211, 0.0
    %v2282 = vmax.f32 %v2213, 0.0
    %v2283 = vmax.f32 %v1991, 0.0
    %v2284 = vmax.f32 %v1993, 0.0
    %v2285 = vmax.f32 %v2217, 0.0
    %v2286 = vmax.f32 %v2219, 0.0
    %v2287 = vmax.f32 %v1995, 0.0
    %v2288 = vmax.f32 %v1997, 0.0
    %v2289 = vmax.f32 %v2221, 0.0
    %v2290 = vmax.f32 %v2223, 0.0
    %v2291 = vmax.f32 %v2001, 0.0
    %v2292 = vmax.f32 %v2003, 0.0
    %v2293 = vmax.f32 %v2227, 0.0
    %v2294 = vmax.f32 %v2229, 0.0
    %v2295 = vmax.f32 %v2005, 0.0
    %v2296 = vmax.f32 %v2007, 0.0
    %v2297 = vmax.f32 %v2231, 0.0
    %v2298 = vmax.f32 %v2233, 0.0
    %v2299 = vpack.c.bf16 %v2239, %v2235
    %v2300 = vpack.c.bf16 %v2240, %v2236
    %v2301 = vpack.c.bf16 %v2241, %v2237
    %v2302 = vpack.c.bf16 %v2242, %v2238
    %v2303 = vpack.c.bf16 %v2247, %v2243
    %v2304 = vpack.c.bf16 %v2248, %v2244
    %v2305 = vpack.c.bf16 %v2249, %v2245
    %v2306 = vpack.c.bf16 %v2250, %v2246
    %v2307 = vpack.c.bf16 %v2255, %v2251
    %v2308 = vpack.c.bf16 %v2256, %v2252
    %v2309 = vpack.c.bf16 %v2257, %v2253
    %v2310 = vpack.c.bf16 %v2258, %v2254
    %v2311 = vpack.c.bf16 %v2263, %v2259
    %v2312 = vpack.c.bf16 %v2264, %v2260
    %v2313 = vpack.c.bf16 %v2265, %v2261
    %v2314 = vpack.c.bf16 %v2266, %v2262
    %v2315 = vpack.c.bf16 %v2271, %v2267
    %v2316 = vpack.c.bf16 %v2272, %v2268
    %v2317 = vpack.c.bf16 %v2273, %v2269
    %v2318 = vpack.c.bf16 %v2274, %v2270
    %v2319 = vpack.c.bf16 %v2279, %v2275
    %v2320 = vpack.c.bf16 %v2280, %v2276
    %v2321 = vpack.c.bf16 %v2281, %v2277
    %v2322 = vpack.c.bf16 %v2282, %v2278
    %v2323 = vpack.c.bf16 %v2287, %v2283
    %v2324 = vpack.c.bf16 %v2288, %v2284
    %v2325 = vpack.c.bf16 %v2289, %v2285
    %v2326 = vpack.c.bf16 %v2290, %v2286
    %v2327 = vpack.c.bf16 %v2295, %v2291
    %v2328 = vpack.c.bf16 %v2296, %v2292
    %v2329 = vpack.c.bf16 %v2297, %v2293
    %v2330 = vpack.c.bf16 %v2298, %v2294
    %v2331 = vld [vmem:[%s3] sm:$0xf]
    %v2332 = vld [vmem:[%s3 + $0x4] sm:$0xf]
    %v2333 = vld [vmem:[%s3 + $0x8] sm:$0xf]
    %v2334 = vld [vmem:[%s3 + $0xc] sm:$0xf]
    %v2335 = vld [vmem:[%s3 + $0x10] sm:$0xf]
    %v2336 = vld [vmem:[%s3 + $0x14] sm:$0xf]
    %v2337 = vld [vmem:[%s3 + $0x18] sm:$0xf]
    %v2338 = vld [vmem:[%s3 + $0x1c] sm:$0xf]
    %v2339 = vld [vmem:[%s3 + $0x20] sm:$0xf]
    %v2340 = vld [vmem:[%s3 + $0x24] sm:$0xf]
    %v2341 = vld [vmem:[%s3 + $0x28] sm:$0xf]
    %v2342 = vld [vmem:[%s3 + $0x2c] sm:$0xf]
    %v2343 = vld [vmem:[%s3 + $0x30] sm:$0xf]
    %v2344 = vld [vmem:[%s3 + $0x34] sm:$0xf]
    %v2345 = vld [vmem:[%s3 + $0x38] sm:$0xf]
    %v2346 = vld [vmem:[%s3 + $0x3c] sm:$0xf]
    %v2347 = vld [vmem:[%s3 + $0x40] sm:$0xf]
    %v2348 = vld [vmem:[%s3 + $0x44] sm:$0xf]
    %v2349 = vld [vmem:[%s3 + $0x48] sm:$0xf]
    %v2350 = vld [vmem:[%s3 + $0x4c] sm:$0xf]
    %v2351 = vld [vmem:[%s3 + $0x50] sm:$0xf]
    %v2352 = vld [vmem:[%s3 + $0x54] sm:$0xf]
    %v2353 = vld [vmem:[%s3 + $0x58] sm:$0xf]
    %v2354 = vld [vmem:[%s3 + $0x5c] sm:$0xf]
    %v2355 = vld [vmem:[%s3 + $0x60] sm:$0xf]
    %v2356 = vld [vmem:[%s3 + $0x64] sm:$0xf]
    %v2357 = vld [vmem:[%s3 + $0x68] sm:$0xf]
    %v2358 = vld [vmem:[%s3 + $0x6c] sm:$0xf]
    %v2359 = vld [vmem:[%s3 + $0x70] sm:$0xf]
    %v2360 = vld [vmem:[%s3 + $0x74] sm:$0xf]
    %v2361 = vld [vmem:[%s3 + $0x78] sm:$0xf]
    %v2362 = vld [vmem:[%s3 + $0x7c] sm:$0xf]
    %v2363 = vld [vmem:[%s3 + $0x80] sm:$0xf]
    %v2364 = vld [vmem:[%s3 + $0x84] sm:$0xf]
    %v2365 = vld [vmem:[%s3 + $0x88] sm:$0xf]
    %v2366 = vld [vmem:[%s3 + $0x8c] sm:$0xf]
    %v2367 = vld [vmem:[%s3 + $0x90] sm:$0xf]
    %v2368 = vld [vmem:[%s3 + $0x94] sm:$0xf]
    %v2369 = vld [vmem:[%s3 + $0x98] sm:$0xf]
    %v2370 = vld [vmem:[%s3 + $0x9c] sm:$0xf]
    %v2371 = vld [vmem:[%s3 + $0xa0] sm:$0xf]
    %v2372 = vld [vmem:[%s3 + $0xa4] sm:$0xf]
    %v2373 = vld [vmem:[%s3 + $0xa8] sm:$0xf]
    %v2374 = vld [vmem:[%s3 + $0xac] sm:$0xf]
    %v2375 = vld [vmem:[%s3 + $0xb0] sm:$0xf]
    %v2376 = vld [vmem:[%s3 + $0xb4] sm:$0xf]
    %v2377 = vld [vmem:[%s3 + $0xb8] sm:$0xf]
    %v2378 = vld [vmem:[%s3 + $0xbc] sm:$0xf]
    %v2379 = vld [vmem:[%s3 + $0xc0] sm:$0xf]
    %v2380 = vld [vmem:[%s3 + $0xc4] sm:$0xf]
    %v2381 = vld [vmem:[%s3 + $0xc8] sm:$0xf]
    %v2382 = vld [vmem:[%s3 + $0xcc] sm:$0xf]
    %v2383 = vld [vmem:[%s3 + $0xd0] sm:$0xf]
    %v2384 = vld [vmem:[%s3 + $0xd4] sm:$0xf]
    %v2385 = vld [vmem:[%s3 + $0xd8] sm:$0xf]
    %v2386 = vld [vmem:[%s3 + $0xdc] sm:$0xf]
    %v2387 = vld [vmem:[%s3 + $0xe0] sm:$0xf]
    %v2388 = vld [vmem:[%s3 + $0xe4] sm:$0xf]
    %v2389 = vld [vmem:[%s3 + $0xe8] sm:$0xf]
    %v2390 = vld [vmem:[%s3 + $0xec] sm:$0xf]
    %v2391 = vld [vmem:[%s3 + $0xf0] sm:$0xf]
    %v2392 = vld [vmem:[%s3 + $0xf4] sm:$0xf]
    %v2393 = vld [vmem:[%s3 + $0xf8] sm:$0xf]
    %v2394 = vld [vmem:[%s3 + $0xfc] sm:$0xf]
    %v2395 = vld [vmem:[#allocation13 + $0xc] sm:$0x1]
    %v2397 = vlaneseq
    %v2398 = vshrl.u32 %v2397, 7
    %v2399 = vsub.s32 0, %v2398
    %v2400 = vrot.slane %v2395, %v2399
    %v2466 = vunpack.c.l.b16 %v2331
    %v2467 = vunpack.c.l.b16 %v2332
    %v2468 = vunpack.c.l.b16 %v2333
    %v2469 = vunpack.c.l.b16 %v2334
    %v2470 = vunpack.c.l.b16 %v2335
    %v2471 = vunpack.c.l.b16 %v2336
    %v2472 = vunpack.c.l.b16 %v2337
    %v2473 = vunpack.c.l.b16 %v2338
    %v2474 = vunpack.c.l.b16 %v2339
    %v2475 = vunpack.c.l.b16 %v2340
    %v2476 = vunpack.c.l.b16 %v2341
    %v2477 = vunpack.c.l.b16 %v2342
    %v2478 = vunpack.c.l.b16 %v2343
    %v2479 = vunpack.c.l.b16 %v2344
    %v2480 = vunpack.c.l.b16 %v2345
    %v2481 = vunpack.c.l.b16 %v2346
    %v2482 = vunpack.c.l.b16 %v2347
    %v2483 = vunpack.c.l.b16 %v2348
    %v2484 = vunpack.c.l.b16 %v2349
    %v2485 = vunpack.c.l.b16 %v2350
    %v2486 = vunpack.c.l.b16 %v2351
    %v2487 = vunpack.c.l.b16 %v2352
    %v2488 = vunpack.c.l.b16 %v2353
    %v2489 = vunpack.c.l.b16 %v2354
    %v2490 = vunpack.c.l.b16 %v2355
    %v2491 = vunpack.c.l.b16 %v2356
    %v2492 = vunpack.c.l.b16 %v2357
    %v2493 = vunpack.c.l.b16 %v2358
    %v2494 = vunpack.c.l.b16 %v2359
    %v2495 = vunpack.c.l.b16 %v2360
    %v2496 = vunpack.c.l.b16 %v2361
    %v2497 = vunpack.c.l.b16 %v2362
    %v2498 = vunpack.c.l.b16 %v2363
    %v2499 = vunpack.c.l.b16 %v2364
    %v2500 = vunpack.c.l.b16 %v2365
    %v2501 = vunpack.c.l.b16 %v2366
    %v2502 = vunpack.c.l.b16 %v2367
    %v2503 = vunpack.c.l.b16 %v2368
    %v2504 = vunpack.c.l.b16 %v2369
    %v2505 = vunpack.c.l.b16 %v2370
    %v2506 = vunpack.c.l.b16 %v2371
    %v2507 = vunpack.c.l.b16 %v2372
    %v2508 = vunpack.c.l.b16 %v2373
    %v2509 = vunpack.c.l.b16 %v2374
    %v2510 = vunpack.c.l.b16 %v2375
    %v2511 = vunpack.c.l.b16 %v2376
    %v2512 = vunpack.c.l.b16 %v2377
    %v2513 = vunpack.c.l.b16 %v2378
    %v2514 = vunpack.c.l.b16 %v2379
    %v2515 = vunpack.c.l.b16 %v2380
    %v2516 = vunpack.c.l.b16 %v2381
    %v2517 = vunpack.c.l.b16 %v2382
    %v2518 = vunpack.c.l.b16 %v2383
    %v2519 = vunpack.c.l.b16 %v2384
    %v2520 = vunpack.c.l.b16 %v2385
    %v2521 = vunpack.c.l.b16 %v2386
    %v2522 = vunpack.c.l.b16 %v2387
    %v2523 = vunpack.c.l.b16 %v2388
    %v2524 = vunpack.c.l.b16 %v2389
    %v2525 = vunpack.c.l.b16 %v2390
    %v2526 = vunpack.c.l.b16 %v2391
    %v2527 = vunpack.c.l.b16 %v2392
    %v2528 = vunpack.c.l.b16 %v2393
    %v2529 = vunpack.c.l.b16 %v2394
    %v2530 = vpack.c.b16 %v2467, %v2466
    %v2531 = vpack.c.b16 %v2469, %v2468
    %v2532 = vpack.c.b16 %v2471, %v2470
    %v2533 = vpack.c.b16 %v2473, %v2472
    %v2534 = vpack.c.b16 %v2475, %v2474
    %v2535 = vpack.c.b16 %v2477, %v2476
    %v2536 = vpack.c.b16 %v2479, %v2478
    %v2537 = vpack.c.b16 %v2481, %v2480
    %v2538 = vpack.c.b16 %v2483, %v2482
    %v2539 = vpack.c.b16 %v2485, %v2484
    %v2540 = vpack.c.b16 %v2487, %v2486
    %v2541 = vpack.c.b16 %v2489, %v2488
    %v2542 = vpack.c.b16 %v2491, %v2490
    %v2543 = vpack.c.b16 %v2493, %v2492
    %v2544 = vpack.c.b16 %v2495, %v2494
    %v2545 = vpack.c.b16 %v2497, %v2496
    %v2546 = vpack.c.b16 %v2499, %v2498
    %v2547 = vpack.c.b16 %v2501, %v2500
    %v2548 = vpack.c.b16 %v2503, %v2502
    %v2549 = vpack.c.b16 %v2505, %v2504
    %v2550 = vpack.c.b16 %v2507, %v2506
    %v2551 = vpack.c.b16 %v2509, %v2508
    %v2552 = vpack.c.b16 %v2511, %v2510
    %v2553 = vpack.c.b16 %v2513, %v2512
    %v2554 = vpack.c.b16 %v2515, %v2514
    %v2555 = vpack.c.b16 %v2517, %v2516
    %v2556 = vpack.c.b16 %v2519, %v2518
    %v2557 = vpack.c.b16 %v2521, %v2520
    %v2558 = vpack.c.b16 %v2523, %v2522
    %v2559 = vpack.c.b16 %v2525, %v2524
    %v2560 = vpack.c.b16 %v2527, %v2526
    %v2561 = vpack.c.b16 %v2529, %v2528
    %2594 = vmatprep.subr.bf16.mxu0 0
    %2595 = vmatpush1.bf16.msra.mxu0 %v2537
    %2596 = vmatprep.subr.bf16.mxu0 0
    %2597 = vmatpush1.bf16.msra.mxu0 %v2536
    %2598 = vmatprep.subr.bf16.mxu0 0
    %2599 = vmatpush1.bf16.msra.mxu0 %v2535
    %2600 = vmatprep.subr.bf16.mxu0 0
    %2601 = vmatpush1.bf16.msra.mxu0 %v2534
    %2602 = vmatprep.subr.bf16.mxu0 0
    %2603 = vmatpush1.bf16.msra.mxu0 %v2533
    %2604 = vmatprep.subr.bf16.mxu0 0
    %2605 = vmatpush1.bf16.msra.mxu0 %v2532
    %2606 = vmatprep.subr.bf16.mxu0 0
    %2607 = vmatpush1.bf16.msra.mxu0 %v2531
    %2608 = vmatprep.subr.bf16.mxu0 0
    %2609 = vmatpush1.bf16.msra.mxu0 %v2530
    %2610 = vmatprep.subr.bf16.mxu0 0
    %2611 = vmatpush2.bf16.msra.mxu0 %v2545
    %2612 = vmatprep.subr.bf16.mxu0 0
    %2613 = vmatpush2.bf16.msra.mxu0 %v2544
    %2614 = vmatprep.subr.bf16.mxu0 0
    %2615 = vmatpush2.bf16.msra.mxu0 %v2543
    %2616 = vmatprep.subr.bf16.mxu0 0
    %2617 = vmatpush2.bf16.msra.mxu0 %v2542
    %2618 = vmatprep.subr.bf16.mxu0 0
    %2619 = vmatpush2.bf16.msra.mxu0 %v2541
    %2620 = vmatprep.subr.bf16.mxu0 0
    %2621 = vmatpush2.bf16.msra.mxu0 %v2540
    %2622 = vmatprep.subr.bf16.mxu0 0
    %2623 = vmatpush2.bf16.msra.mxu0 %v2539
    %2624 = vmatprep.subr.bf16.mxu0 0
    %2625 = vmatpush2.bf16.msra.mxu0 %v2538
    %2626 = vmatprep.mubr.bf16.mxu0 %v2300
    %2627 = vmatmul.mubr.bf16.gmra.mxu0 %v2299
    %v2628 = vpop.f32.mrf.mxu0
    %v2629 = vadd.f32 %v2400, %v2628
    %v2630 = vpop.f32.mrf.mxu0
    %v2631 = vpop.f32.mrf.mxu0
    %v2632 = vadd.f32 %v2400, %v2631
    %v2633 = vpop.f32.mrf.mxu0
    %2634 = vmatprep.mubr.bf16.mxu0 %v2304
    %2635 = vmatmul.mubr.bf16.gmra.mxu0 %v2303
    %v2636 = vpop.f32.mrf.mxu0
    %v2637 = vadd.f32 %v2400, %v2636
    %v2638 = vpop.f32.mrf.mxu0
    %v2639 = vpop.f32.mrf.mxu0
    %v2640 = vadd.f32 %v2400, %v2639
    %v2641 = vpop.f32.mrf.mxu0
    %2642 = vmatprep.mubr.bf16.mxu0 %v2308
    %2643 = vmatmul.mubr.bf16.gmra.mxu0 %v2307
    %v2644 = vpop.f32.mrf.mxu0
    %v2645 = vadd.f32 %v2400, %v2644
    %v2646 = vpop.f32.mrf.mxu0
    %v2647 = vpop.f32.mrf.mxu0
    %v2648 = vadd.f32 %v2400, %v2647
    %v2649 = vpop.f32.mrf.mxu0
    %2650 = vmatprep.mubr.bf16.mxu0 %v2312
    %2651 = vmatmul.mubr.bf16.gmra.mxu0 %v2311
    %v2652 = vpop.f32.mrf.mxu0
    %v2653 = vadd.f32 %v2400, %v2652
    %v2654 = vpop.f32.mrf.mxu0
    %v2655 = vpop.f32.mrf.mxu0
    %v2656 = vadd.f32 %v2400, %v2655
    %v2657 = vpop.f32.mrf.mxu0
    %2658 = vmatprep.mubr.bf16.mxu0 %v2316
    %2659 = vmatmul.mubr.bf16.gmra.mxu0 %v2315
    %v2660 = vpop.f32.mrf.mxu0
    %v2661 = vadd.f32 %v2400, %v2660
    %v2662 = vpop.f32.mrf.mxu0
    %v2663 = vpop.f32.mrf.mxu0
    %v2664 = vadd.f32 %v2400, %v2663
    %v2665 = vpop.f32.mrf.mxu0
    %2666 = vmatprep.mubr.bf16.mxu0 %v2320
    %2667 = vmatmul.mubr.bf16.gmra.mxu0 %v2319
    %v2668 = vpop.f32.mrf.mxu0
    %v2669 = vadd.f32 %v2400, %v2668
    %v2670 = vpop.f32.mrf.mxu0
    %v2671 = vpop.f32.mrf.mxu0
    %v2672 = vadd.f32 %v2400, %v2671
    %v2673 = vpop.f32.mrf.mxu0
    %2674 = vmatprep.mubr.bf16.mxu0 %v2324
    %2675 = vmatmul.mubr.bf16.gmra.mxu0 %v2323
    %v2676 = vpop.f32.mrf.mxu0
    %v2677 = vadd.f32 %v2400, %v2676
    %v2678 = vpop.f32.mrf.mxu0
    %v2679 = vpop.f32.mrf.mxu0
    %v2680 = vadd.f32 %v2400, %v2679
    %v2681 = vpop.f32.mrf.mxu0
    %2682 = vmatprep.mubr.bf16.mxu0 %v2328
    %2683 = vmatmul.mubr.bf16.gmra.mxu0 %v2327
    %v2684 = vpop.f32.mrf.mxu0
    %v2685 = vadd.f32 %v2400, %v2684
    %v2686 = vpop.f32.mrf.mxu0
    %v2687 = vpop.f32.mrf.mxu0
    %v2688 = vadd.f32 %v2400, %v2687
    %v2689 = vpop.f32.mrf.mxu0
    %2690 = vdwg.mxu0
    %2691 = vmatprep.subr.bf16.mxu0 0
    %2692 = vmatpush1.bf16.msra.mxu0 %v2553
    %2693 = vmatprep.subr.bf16.mxu0 0
    %2694 = vmatpush1.bf16.msra.mxu0 %v2552
    %2695 = vmatprep.subr.bf16.mxu0 0
    %2696 = vmatpush1.bf16.msra.mxu0 %v2551
    %2697 = vmatprep.subr.bf16.mxu0 0
    %2698 = vmatpush1.bf16.msra.mxu0 %v2550
    %2699 = vmatprep.subr.bf16.mxu0 0
    %2700 = vmatpush1.bf16.msra.mxu0 %v2549
    %2701 = vmatprep.subr.bf16.mxu0 0
    %2702 = vmatpush1.bf16.msra.mxu0 %v2548
    %2703 = vmatprep.subr.bf16.mxu0 0
    %2704 = vmatpush1.bf16.msra.mxu0 %v2547
    %2705 = vmatprep.subr.bf16.mxu0 0
    %2706 = vmatpush1.bf16.msra.mxu0 %v2546
    %2707 = vmatprep.subr.bf16.mxu0 0
    %2708 = vmatpush2.bf16.msra.mxu0 %v2561
    %2709 = vmatprep.subr.bf16.mxu0 0
    %2710 = vmatpush2.bf16.msra.mxu0 %v2560
    %2711 = vmatprep.subr.bf16.mxu0 0
    %2712 = vmatpush2.bf16.msra.mxu0 %v2559
    %2713 = vmatprep.subr.bf16.mxu0 0
    %2714 = vmatpush2.bf16.msra.mxu0 %v2558
    %2715 = vmatprep.subr.bf16.mxu0 0
    %2716 = vmatpush2.bf16.msra.mxu0 %v2557
    %2717 = vmatprep.subr.bf16.mxu0 0
    %2718 = vmatpush2.bf16.msra.mxu0 %v2556
    %2719 = vmatprep.subr.bf16.mxu0 0
    %2720 = vmatpush2.bf16.msra.mxu0 %v2555
    %2721 = vmatprep.subr.bf16.mxu0 0
    %2722 = vmatpush2.bf16.msra.mxu0 %v2554
    %2723 = vmatprep.mubr.bf16.mxu0 %v2302
    %2724 = vmatmul.mubr.bf16.gmra.mxu0 %v2301
    %v2725 = vpop.f32.mrf.mxu0
    %v2726 = vadd.f32 %v2629, %v2725
    %v2727 = vpop.f32.mrf.mxu0
    %v2728 = vpop.f32.mrf.mxu0
    %v2729 = vadd.f32 %v2632, %v2728
    %v2730 = vpop.f32.mrf.mxu0
    %2731 = vmatprep.mubr.bf16.mxu0 %v2306
    %2732 = vmatmul.mubr.bf16.gmra.mxu0 %v2305
    %v2733 = vpop.f32.mrf.mxu0
    %v2734 = vadd.f32 %v2637, %v2733
    %v2735 = vpop.f32.mrf.mxu0
    %v2736 = vpop.f32.mrf.mxu0
    %v2737 = vadd.f32 %v2640, %v2736
    %v2738 = vpop.f32.mrf.mxu0
    %2739 = vmatprep.mubr.bf16.mxu0 %v2310
    %2740 = vmatmul.mubr.bf16.gmra.mxu0 %v2309
    %v2741 = vpop.f32.mrf.mxu0
    %v2742 = vadd.f32 %v2645, %v2741
    %v2743 = vpop.f32.mrf.mxu0
    %v2744 = vpop.f32.mrf.mxu0
    %v2745 = vadd.f32 %v2648, %v2744
    %v2746 = vpop.f32.mrf.mxu0
    %2747 = vmatprep.mubr.bf16.mxu0 %v2314
    %2748 = vmatmul.mubr.bf16.gmra.mxu0 %v2313
    %v2749 = vpop.f32.mrf.mxu0
    %v2750 = vadd.f32 %v2653, %v2749
    %v2751 = vpop.f32.mrf.mxu0
    %v2752 = vpop.f32.mrf.mxu0
    %v2753 = vadd.f32 %v2656, %v2752
    %v2754 = vpop.f32.mrf.mxu0
    %2755 = vmatprep.mubr.bf16.mxu0 %v2318
    %2756 = vmatmul.mubr.bf16.gmra.mxu0 %v2317
    %v2757 = vpop.f32.mrf.mxu0
    %v2758 = vadd.f32 %v2661, %v2757
    %v2759 = vpop.f32.mrf.mxu0
    %v2760 = vpop.f32.mrf.mxu0
    %v2761 = vadd.f32 %v2664, %v2760
    %v2762 = vpop.f32.mrf.mxu0
    %2763 = vmatprep.mubr.bf16.mxu0 %v2322
    %2764 = vmatmul.mubr.bf16.gmra.mxu0 %v2321
    %v2765 = vpop.f32.mrf.mxu0
    %v2766 = vadd.f32 %v2669, %v2765
    %v2767 = vpop.f32.mrf.mxu0
    %v2768 = vpop.f32.mrf.mxu0
    %v2769 = vadd.f32 %v2672, %v2768
    %v2770 = vpop.f32.mrf.mxu0
    %2771 = vmatprep.mubr.bf16.mxu0 %v2326
    %2772 = vmatmul.mubr.bf16.gmra.mxu0 %v2325
    %v2773 = vpop.f32.mrf.mxu0
    %v2774 = vadd.f32 %v2677, %v2773
    %v2775 = vpop.f32.mrf.mxu0
    %v2776 = vpop.f32.mrf.mxu0
    %v2777 = vadd.f32 %v2680, %v2776
    %v2778 = vpop.f32.mrf.mxu0
    %2779 = vmatprep.mubr.bf16.mxu0 %v2330
    %2780 = vmatmul.mubr.bf16.gmra.mxu0 %v2329
    %v2781 = vpop.f32.mrf.mxu0
    %v2782 = vadd.f32 %v2685, %v2781
    %v2783 = vpop.f32.mrf.mxu0
    %v2784 = vpop.f32.mrf.mxu0
    %v2785 = vadd.f32 %v2688, %v2784
    %v2786 = vpop.f32.mrf.mxu0
    %2787 = vdwg.mxu0
    %vm2788 = vcmask 80896
    %v2789 = vsel %vm2788, %v2726, -inf
    %2790 = vmax.xlane.f32.xlu0 %v2789
    %v2791 = vpop.xlane.xlu0 %2790
    %v2792 = vsel %vm2788, %v2729, -inf
    %2793 = vmax.xlane.f32.xlu0 %v2792
    %v2794 = vpop.xlane.xlu0 %2793
    %v2795 = vsel %vm2788, %v2734, -inf
    %2796 = vmax.xlane.f32.xlu0 %v2795
    %v2797 = vpop.xlane.xlu0 %2796
    %v2798 = vsel %vm2788, %v2737, -inf
    %2799 = vmax.xlane.f32.xlu0 %v2798
    %v2800 = vpop.xlane.xlu0 %2799
    %v2801 = vsel %vm2788, %v2742, -inf
    %2802 = vmax.xlane.f32.xlu0 %v2801
    %v2803 = vpop.xlane.xlu0 %2802
    %v2804 = vsel %vm2788, %v2745, -inf
    %2805 = vmax.xlane.f32.xlu0 %v2804
    %v2806 = vpop.xlane.xlu0 %2805
    %v2807 = vsel %vm2788, %v2750, -inf
    %2808 = vmax.xlane.f32.xlu0 %v2807
    %v2809 = vpop.xlane.xlu0 %2808
    %v2810 = vsel %vm2788, %v2753, -inf
    %2811 = vmax.xlane.f32.xlu0 %v2810
    %v2812 = vpop.xlane.xlu0 %2811
    %v2813 = vsel %vm2788, %v2758, -inf
    %2814 = vmax.xlane.f32.xlu0 %v2813
    %v2815 = vpop.xlane.xlu0 %2814
    %v2816 = vsel %vm2788, %v2761, -inf
    %2817 = vmax.xlane.f32.xlu0 %v2816
    %v2818 = vpop.xlane.xlu0 %2817
    %v2819 = vsel %vm2788, %v2766, -inf
    %2820 = vmax.xlane.f32.xlu0 %v2819
    %v2821 = vpop.xlane.xlu0 %2820
    %v2822 = vsel %vm2788, %v2769, -inf
    %2823 = vmax.xlane.f32.xlu0 %v2822
    %v2824 = vpop.xlane.xlu0 %2823
    %v2825 = vsel %vm2788, %v2774, -inf
    %2826 = vmax.xlane.f32.xlu0 %v2825
    %v2827 = vpop.xlane.xlu0 %2826
    %v2828 = vsel %vm2788, %v2777, -inf
    %2829 = vmax.xlane.f32.xlu0 %v2828
    %v2830 = vpop.xlane.xlu0 %2829
    %v2831 = vsel %vm2788, %v2782, -inf
    %2832 = vmax.xlane.f32.xlu0 %v2831
    %v2833 = vpop.xlane.xlu0 %2832
    %v2834 = vsel %vm2788, %v2785, -inf
    %2835 = vmax.xlane.f32.xlu0 %v2834
    %v2836 = vpop.xlane.xlu0 %2835
    %v2837 = vsub.f32 %v2726, %v2791
    %v2838 = vsub.f32 %v2729, %v2794
    %v2839 = vsub.f32 %v2734, %v2797
    %v2840 = vsub.f32 %v2737, %v2800
    %v2841 = vsub.f32 %v2742, %v2803
    %v2842 = vsub.f32 %v2745, %v2806
    %v2843 = vsub.f32 %v2750, %v2809
    %v2844 = vsub.f32 %v2753, %v2812
    %v2845 = vsub.f32 %v2758, %v2815
    %v2846 = vsub.f32 %v2761, %v2818
    %v2847 = vsub.f32 %v2766, %v2821
    %v2848 = vsub.f32 %v2769, %v2824
    %v2849 = vsub.f32 %v2774, %v2827
    %v2850 = vsub.f32 %v2777, %v2830
    %v2851 = vsub.f32 %v2782, %v2833
    %v2852 = vsub.f32 %v2785, %v2836
    %v2853 = vmul.f32 %v2837, 1.442695
    %v2854 = vpow.pop %v2853
    %v2855 = vmul.f32 %v2838, 1.442695
    %v2856 = vpow.pop %v2855
    %v2857 = vmul.f32 %v2839, 1.442695
    %v2858 = vpow.pop %v2857
    %v2859 = vmul.f32 %v2840, 1.442695
    %v2860 = vpow.pop %v2859
    %v2861 = vmul.f32 %v2841, 1.442695
    %v2862 = vpow.pop %v2861
    %v2863 = vmul.f32 %v2842, 1.442695
    %v2864 = vpow.pop %v2863
    %v2865 = vmul.f32 %v2843, 1.442695
    %v2866 = vpow.pop %v2865
    %v2867 = vmul.f32 %v2844, 1.442695
    %v2868 = vpow.pop %v2867
    %v2869 = vmul.f32 %v2845, 1.442695
    %v2870 = vpow.pop %v2869
    %v2871 = vmul.f32 %v2846, 1.442695
    %v2872 = vpow.pop %v2871
    %v2873 = vmul.f32 %v2847, 1.442695
    %v2874 = vpow.pop %v2873
    %v2875 = vmul.f32 %v2848, 1.442695
    %v2876 = vpow.pop %v2875
    %v2877 = vmul.f32 %v2849, 1.442695
    %v2878 = vpow.pop %v2877
    %v2879 = vmul.f32 %v2850, 1.442695
    %v2880 = vpow.pop %v2879
    %v2881 = vmul.f32 %v2851, 1.442695
    %v2882 = vpow.pop %v2881
    %v2883 = vmul.f32 %v2852, 1.442695
    %v2884 = vpow.pop %v2883
    %v2885 = vsel %vm2788, %v2854, 0.0
    %2886 = vadd.xlane.f32.xlu0 %v2885
    %v2887 = vpop.xlane.xlu0 %2886
    %v2888 = vsel %vm2788, %v2856, 0.0
    %2889 = vadd.xlane.f32.xlu0 %v2888
    %v2890 = vpop.xlane.xlu0 %2889
    %v2891 = vsel %vm2788, %v2858, 0.0
    %2892 = vadd.xlane.f32.xlu0 %v2891
    %v2893 = vpop.xlane.xlu0 %2892
    %v2894 = vsel %vm2788, %v2860, 0.0
    %2895 = vadd.xlane.f32.xlu0 %v2894
    %v2896 = vpop.xlane.xlu0 %2895
    %v2897 = vsel %vm2788, %v2862, 0.0
    %2898 = vadd.xlane.f32.xlu0 %v2897
    %v2899 = vpop.xlane.xlu0 %2898
    %v2900 = vsel %vm2788, %v2864, 0.0
    %2901 = vadd.xlane.f32.xlu0 %v2900
    %v2902 = vpop.xlane.xlu0 %2901
    %v2903 = vsel %vm2788, %v2866, 0.0
    %2904 = vadd.xlane.f32.xlu0 %v2903
    %v2905 = vpop.xlane.xlu0 %2904
    %v2906 = vsel %vm2788, %v2868, 0.0
    %2907 = vadd.xlane.f32.xlu0 %v2906
    %v2908 = vpop.xlane.xlu0 %2907
    %v2909 = vsel %vm2788, %v2870, 0.0
    %2910 = vadd.xlane.f32.xlu0 %v2909
    %v2911 = vpop.xlane.xlu0 %2910
    %v2912 = vsel %vm2788, %v2872, 0.0
    %2913 = vadd.xlane.f32.xlu0 %v2912
    %v2914 = vpop.xlane.xlu0 %2913
    %v2915 = vsel %vm2788, %v2874, 0.0
    %2916 = vadd.xlane.f32.xlu0 %v2915
    %v2917 = vpop.xlane.xlu0 %2916
    %v2918 = vsel %vm2788, %v2876, 0.0
    %2919 = vadd.xlane.f32.xlu0 %v2918
    %v2920 = vpop.xlane.xlu0 %2919
    %v2921 = vsel %vm2788, %v2878, 0.0
    %2922 = vadd.xlane.f32.xlu0 %v2921
    %v2923 = vpop.xlane.xlu0 %2922
    %v2924 = vsel %vm2788, %v2880, 0.0
    %2925 = vadd.xlane.f32.xlu0 %v2924
    %v2926 = vpop.xlane.xlu0 %2925
    %v2927 = vsel %vm2788, %v2882, 0.0
    %2928 = vadd.xlane.f32.xlu0 %v2927
    %v2929 = vpop.xlane.xlu0 %2928
    %v2930 = vsel %vm2788, %v2884, 0.0
    %2931 = vadd.xlane.f32.xlu0 %v2930
    %v2932 = vpop.xlane.xlu0 %2931
    %v2933 = vrcp.pop %v2887
    %v2934 = vrcp.pop %v2890
    %v2935 = vrcp.pop %v2893
    %v2936 = vrcp.pop %v2896
    %v2937 = vrcp.pop %v2899
    %v2938 = vrcp.pop %v2902
    %v2939 = vrcp.pop %v2905
    %v2940 = vrcp.pop %v2908
    %v2941 = vrcp.pop %v2911
    %v2942 = vrcp.pop %v2914
    %v2943 = vrcp.pop %v2917
    %v2944 = vrcp.pop %v2920
    %v2945 = vrcp.pop %v2923
    %v2946 = vrcp.pop %v2926
    %v2947 = vrcp.pop %v2929
    %v2948 = vrcp.pop %v2932
    %v2949 = vmul.f32 %v2854, %v2933
    %v2950 = vmul.f32 %v2856, %v2934
    %v2951 = vmul.f32 %v2858, %v2935
    %v2952 = vmul.f32 %v2860, %v2936
    %v2953 = vmul.f32 %v2862, %v2937
    %v2954 = vmul.f32 %v2864, %v2938
    %v2955 = vmul.f32 %v2866, %v2939
    %v2956 = vmul.f32 %v2868, %v2940
    %v2957 = vmul.f32 %v2870, %v2941
    %v2958 = vmul.f32 %v2872, %v2942
    %v2959 = vmul.f32 %v2874, %v2943
    %v2960 = vmul.f32 %v2876, %v2944
    %v2961 = vmul.f32 %v2878, %v2945
    %v2962 = vmul.f32 %v2880, %v2946
    %v2963 = vmul.f32 %v2882, %v2947
    %v2964 = vmul.f32 %v2884, %v2948
    %v2965 = vlog2.pop %v2887
    %v2966 = vmul.f32 %v2965, 0.6931472
    %v2967 = vlog2.pop %v2890
    %v2968 = vmul.f32 %v2967, 0.6931472
    %v2969 = vlog2.pop %v2893
    %v2970 = vmul.f32 %v2969, 0.6931472
    %v2971 = vlog2.pop %v2896
    %v2972 = vmul.f32 %v2971, 0.6931472
    %v2973 = vlog2.pop %v2899
    %v2974 = vmul.f32 %v2973, 0.6931472
    %v2975 = vlog2.pop %v2902
    %v2976 = vmul.f32 %v2975, 0.6931472
    %v2977 = vlog2.pop %v2905
    %v2978 = vmul.f32 %v2977, 0.6931472
    %v2979 = vlog2.pop %v2908
    %v2980 = vmul.f32 %v2979, 0.6931472
    %v2981 = vlog2.pop %v2911
    %v2982 = vmul.f32 %v2981, 0.6931472
    %v2983 = vlog2.pop %v2914
    %v2984 = vmul.f32 %v2983, 0.6931472
    %v2985 = vlog2.pop %v2917
    %v2986 = vmul.f32 %v2985, 0.6931472
    %v2987 = vlog2.pop %v2920
    %v2988 = vmul.f32 %v2987, 0.6931472
    %v2989 = vlog2.pop %v2923
    %v2990 = vmul.f32 %v2989, 0.6931472
    %v2991 = vlog2.pop %v2926
    %v2992 = vmul.f32 %v2991, 0.6931472
    %v2993 = vlog2.pop %v2929
    %v2994 = vmul.f32 %v2993, 0.6931472
    %v2995 = vlog2.pop %v2932
    %v2996 = vmul.f32 %v2995, 0.6931472
    %v2997 = vsub.f32 %v2837, %v2966
    %v2998 = vsub.f32 %v2838, %v2968
    %v2999 = vsub.f32 %v2839, %v2970
    %v3000 = vsub.f32 %v2840, %v2972
    %v3001 = vsub.f32 %v2841, %v2974
    %v3002 = vsub.f32 %v2842, %v2976
    %v3003 = vsub.f32 %v2843, %v2978
    %v3004 = vsub.f32 %v2844, %v2980
    %v3005 = vsub.f32 %v2845, %v2982
    %v3006 = vsub.f32 %v2846, %v2984
    %v3007 = vsub.f32 %v2847, %v2986
    %v3008 = vsub.f32 %v2848, %v2988
    %v3009 = vsub.f32 %v2849, %v2990
    %v3010 = vsub.f32 %v2850, %v2992
    %v3011 = vsub.f32 %v2851, %v2994
    %v3012 = vsub.f32 %v2852, %v2996
    %v3013 = vadd.f32 %v143, 1e-20
    %v3014 = vadd.f32 %v144, 1e-20
    %v3015 = vadd.f32 %v145, 1e-20
    %v3016 = vadd.f32 %v146, 1e-20
    %v3017 = vadd.f32 %v147, 1e-20
    %v3018 = vadd.f32 %v148, 1e-20
    %v3019 = vadd.f32 %v149, 1e-20
    %v3020 = vadd.f32 %v150, 1e-20
    %v3021 = vadd.f32 %v151, 1e-20
    %v3022 = vadd.f32 %v152, 1e-20
    %v3023 = vadd.f32 %v153, 1e-20
    %v3024 = vadd.f32 %v154, 1e-20
    %v3025 = vadd.f32 %v155, 1e-20
    %v3026 = vadd.f32 %v156, 1e-20
    %v3027 = vadd.f32 %v157, 1e-20
    %v3028 = vadd.f32 %v158, 1e-20
    %v3029 = vlog2.pop %v3013
    %v3030 = vmul.f32 %v3029, 0.6931472
    %v3031 = vlog2.pop %v3014
    %v3032 = vmul.f32 %v3031, 0.6931472
    %v3033 = vlog2.pop %v3015
    %v3034 = vmul.f32 %v3033, 0.6931472
    %v3035 = vlog2.pop %v3016
    %v3036 = vmul.f32 %v3035, 0.6931472
    %v3037 = vlog2.pop %v3017
    %v3038 = vmul.f32 %v3037, 0.6931472
    %v3039 = vlog2.pop %v3018
    %v3040 = vmul.f32 %v3039, 0.6931472
    %v3041 = vlog2.pop %v3019
    %v3042 = vmul.f32 %v3041, 0.6931472
    %v3043 = vlog2.pop %v3020
    %v3044 = vmul.f32 %v3043, 0.6931472
    %v3045 = vlog2.pop %v3021
    %v3046 = vmul.f32 %v3045, 0.6931472
    %v3047 = vlog2.pop %v3022
    %v3048 = vmul.f32 %v3047, 0.6931472
    %v3049 = vlog2.pop %v3023
    %v3050 = vmul.f32 %v3049, 0.6931472
    %v3051 = vlog2.pop %v3024
    %v3052 = vmul.f32 %v3051, 0.6931472
    %v3053 = vlog2.pop %v3025
    %v3054 = vmul.f32 %v3053, 0.6931472
    %v3055 = vlog2.pop %v3026
    %v3056 = vmul.f32 %v3055, 0.6931472
    %v3057 = vlog2.pop %v3027
    %v3058 = vmul.f32 %v3057, 0.6931472
    %v3059 = vlog2.pop %v3028
    %v3060 = vmul.f32 %v3059, 0.6931472
    %v3061 = vsub.f32 0.0, %v3030
    %v3062 = vsub.f32 0.0, %v3032
    %v3063 = vsub.f32 0.0, %v3034
    %v3064 = vsub.f32 0.0, %v3036
    %v3065 = vsub.f32 0.0, %v3038
    %v3066 = vsub.f32 0.0, %v3040
    %v3067 = vsub.f32 0.0, %v3042
    %v3068 = vsub.f32 0.0, %v3044
    %v3069 = vsub.f32 0.0, %v3046
    %v3070 = vsub.f32 0.0, %v3048
    %v3071 = vsub.f32 0.0, %v3050
    %v3072 = vsub.f32 0.0, %v3052
    %v3073 = vsub.f32 0.0, %v3054
    %v3074 = vsub.f32 0.0, %v3056
    %v3075 = vsub.f32 0.0, %v3058
    %v3076 = vsub.f32 0.0, %v3060
    %v3077 = vadd.f32 %v3061, 1e-20
    %v3078 = vadd.f32 %v3062, 1e-20
    %v3079 = vadd.f32 %v3063, 1e-20
    %v3080 = vadd.f32 %v3064, 1e-20
    %v3081 = vadd.f32 %v3065, 1e-20
    %v3082 = vadd.f32 %v3066, 1e-20
    %v3083 = vadd.f32 %v3067, 1e-20
    %v3084 = vadd.f32 %v3068, 1e-20
    %v3085 = vadd.f32 %v3069, 1e-20
    %v3086 = vadd.f32 %v3070, 1e-20
    %v3087 = vadd.f32 %v3071, 1e-20
    %v3088 = vadd.f32 %v3072, 1e-20
    %v3089 = vadd.f32 %v3073, 1e-20
    %v3090 = vadd.f32 %v3074, 1e-20
    %v3091 = vadd.f32 %v3075, 1e-20
    %v3092 = vadd.f32 %v3076, 1e-20
    %v3093 = vlog2.pop %v3077
    %v3094 = vmul.f32 %v3093, 0.6931472
    %v3095 = vlog2.pop %v3078
    %v3096 = vmul.f32 %v3095, 0.6931472
    %v3097 = vlog2.pop %v3079
    %v3098 = vmul.f32 %v3097, 0.6931472
    %v3099 = vlog2.pop %v3080
    %v3100 = vmul.f32 %v3099, 0.6931472
    %v3101 = vlog2.pop %v3081
    %v3102 = vmul.f32 %v3101, 0.6931472
    %v3103 = vlog2.pop %v3082
    %v3104 = vmul.f32 %v3103, 0.6931472
    %v3105 = vlog2.pop %v3083
    %v3106 = vmul.f32 %v3105, 0.6931472
    %v3107 = vlog2.pop %v3084
    %v3108 = vmul.f32 %v3107, 0.6931472
    %v3109 = vlog2.pop %v3085
    %v3110 = vmul.f32 %v3109, 0.6931472
    %v3111 = vlog2.pop %v3086
    %v3112 = vmul.f32 %v3111, 0.6931472
    %v3113 = vlog2.pop %v3087
    %v3114 = vmul.f32 %v3113, 0.6931472
    %v3115 = vlog2.pop %v3088
    %v3116 = vmul.f32 %v3115, 0.6931472
    %v3117 = vlog2.pop %v3089
    %v3118 = vmul.f32 %v3117, 0.6931472
    %v3119 = vlog2.pop %v3090
    %v3120 = vmul.f32 %v3119, 0.6931472
    %v3121 = vlog2.pop %v3091
    %v3122 = vmul.f32 %v3121, 0.6931472
    %v3123 = vlog2.pop %v3092
    %v3124 = vmul.f32 %v3123, 0.6931472
    %v3125 = vsub.f32 0.0, %v3094
    %v3126 = vsub.f32 0.0, %v3096
    %v3127 = vsub.f32 0.0, %v3098
    %v3128 = vsub.f32 0.0, %v3100
    %v3129 = vsub.f32 0.0, %v3102
    %v3130 = vsub.f32 0.0, %v3104
    %v3131 = vsub.f32 0.0, %v3106
    %v3132 = vsub.f32 0.0, %v3108
    %v3133 = vsub.f32 0.0, %v3110
    %v3134 = vsub.f32 0.0, %v3112
    %v3135 = vsub.f32 0.0, %v3114
    %v3136 = vsub.f32 0.0, %v3116
    %v3137 = vsub.f32 0.0, %v3118
    %v3138 = vsub.f32 0.0, %v3120
    %v3139 = vsub.f32 0.0, %v3122
    %v3140 = vsub.f32 0.0, %v3124
    %v3141 = vadd.f32 %v2726, %v3125
    %v3142 = vadd.f32 %v2729, %v3126
    %v3143 = vadd.f32 %v2734, %v3127
    %v3144 = vadd.f32 %v2737, %v3128
    %v3145 = vadd.f32 %v2742, %v3129
    %v3146 = vadd.f32 %v2745, %v3130
    %v3147 = vadd.f32 %v2750, %v3131
    %v3148 = vadd.f32 %v2753, %v3132
    %v3149 = vadd.f32 %v2758, %v3133
    %v3150 = vadd.f32 %v2761, %v3134
    %v3151 = vadd.f32 %v2766, %v3135
    %v3152 = vadd.f32 %v2769, %v3136
    %v3153 = vadd.f32 %v2774, %v3137
    %v3154 = vadd.f32 %v2777, %v3138
    %v3155 = vadd.f32 %v2782, %v3139
    %v3156 = vadd.f32 %v2785, %v3140
    %v3157 = vsel %vm2788, %v3141, -inf
    %3158 = vmax.xlane.f32.xlu0 %v3157
    %v3159 = vpop.xlane.xlu0 %3158
    %v3160 = vsel %vm2788, %v3142, -inf
    %3161 = vmax.xlane.f32.xlu0 %v3160
    %v3162 = vpop.xlane.xlu0 %3161
    %v3163 = vsel %vm2788, %v3143, -inf
    %3164 = vmax.xlane.f32.xlu0 %v3163
    %v3165 = vpop.xlane.xlu0 %3164
    %v3166 = vsel %vm2788, %v3144, -inf
    %3167 = vmax.xlane.f32.xlu0 %v3166
    %v3168 = vpop.xlane.xlu0 %3167
    %v3169 = vsel %vm2788, %v3145, -inf
    %3170 = vmax.xlane.f32.xlu0 %v3169
    %v3171 = vpop.xlane.xlu0 %3170
    %v3172 = vsel %vm2788, %v3146, -inf
    %3173 = vmax.xlane.f32.xlu0 %v3172
    %v3174 = vpop.xlane.xlu0 %3173
    %v3175 = vsel %vm2788, %v3147, -inf
    %3176 = vmax.xlane.f32.xlu0 %v3175
    %v3177 = vpop.xlane.xlu0 %3176
    %v3178 = vsel %vm2788, %v3148, -inf
    %3179 = vmax.xlane.f32.xlu0 %v3178
    %v3180 = vpop.xlane.xlu0 %3179
    %v3181 = vsel %vm2788, %v3149, -inf
    %3182 = vmax.xlane.f32.xlu0 %v3181
    %v3183 = vpop.xlane.xlu0 %3182
    %v3184 = vsel %vm2788, %v3150, -inf
    %3185 = vmax.xlane.f32.xlu0 %v3184
    %v3186 = vpop.xlane.xlu0 %3185
    %v3187 = vsel %vm2788, %v3151, -inf
    %3188 = vmax.xlane.f32.xlu0 %v3187
    %v3189 = vpop.xlane.xlu0 %3188
    %v3190 = vsel %vm2788, %v3152, -inf
    %3191 = vmax.xlane.f32.xlu0 %v3190
    %v3192 = vpop.xlane.xlu0 %3191
    %v3193 = vsel %vm2788, %v3153, -inf
    %3194 = vmax.xlane.f32.xlu0 %v3193
    %v3195 = vpop.xlane.xlu0 %3194
    %v3196 = vsel %vm2788, %v3154, -inf
    %3197 = vmax.xlane.f32.xlu0 %v3196
    %v3198 = vpop.xlane.xlu0 %3197
    %v3199 = vsel %vm2788, %v3155, -inf
    %3200 = vmax.xlane.f32.xlu0 %v3199
    %v3201 = vpop.xlane.xlu0 %3200
    %v3202 = vsel %vm2788, %v3156, -inf
    %3203 = vmax.xlane.f32.xlu0 %v3202
    %v3204 = vpop.xlane.xlu0 %3203
    %v3205 = vsub.f32 %v3141, %v3159
    %v3206 = vsub.f32 %v3142, %v3162
    %v3207 = vsub.f32 %v3143, %v3165
    %v3208 = vsub.f32 %v3144, %v3168
    %v3209 = vsub.f32 %v3145, %v3171
    %v3210 = vsub.f32 %v3146, %v3174
    %v3211 = vsub.f32 %v3147, %v3177
    %v3212 = vsub.f32 %v3148, %v3180
    %v3213 = vsub.f32 %v3149, %v3183
    %v3214 = vsub.f32 %v3150, %v3186
    %v3215 = vsub.f32 %v3151, %v3189
    %v3216 = vsub.f32 %v3152, %v3192
    %v3217 = vsub.f32 %v3153, %v3195
    %v3218 = vsub.f32 %v3154, %v3198
    %v3219 = vsub.f32 %v3155, %v3201
    %v3220 = vsub.f32 %v3156, %v3204
    %v3221 = vmul.f32 %v3205, 1.442695
    %v3222 = vpow.pop %v3221
    %v3223 = vmul.f32 %v3206, 1.442695
    %v3224 = vpow.pop %v3223
    %v3225 = vmul.f32 %v3207, 1.442695
    %v3226 = vpow.pop %v3225
    %v3227 = vmul.f32 %v3208, 1.442695
    %v3228 = vpow.pop %v3227
    %v3229 = vmul.f32 %v3209, 1.442695
    %v3230 = vpow.pop %v3229
    %v3231 = vmul.f32 %v3210, 1.442695
    %v3232 = vpow.pop %v3231
    %v3233 = vmul.f32 %v3211, 1.442695
    %v3234 = vpow.pop %v3233
    %v3235 = vmul.f32 %v3212, 1.442695
    %v3236 = vpow.pop %v3235
    %v3237 = vmul.f32 %v3213, 1.442695
    %v3238 = vpow.pop %v3237
    %v3239 = vmul.f32 %v3214, 1.442695
    %v3240 = vpow.pop %v3239
    %v3241 = vmul.f32 %v3215, 1.442695
    %v3242 = vpow.pop %v3241
    %v3243 = vmul.f32 %v3216, 1.442695
    %v3244 = vpow.pop %v3243
    %v3245 = vmul.f32 %v3217, 1.442695
    %v3246 = vpow.pop %v3245
    %v3247 = vmul.f32 %v3218, 1.442695
    %v3248 = vpow.pop %v3247
    %v3249 = vmul.f32 %v3219, 1.442695
    %v3250 = vpow.pop %v3249
    %v3251 = vmul.f32 %v3220, 1.442695
    %v3252 = vpow.pop %v3251
    %v3253 = vsel %vm2788, %v3222, 0.0
    %3254 = vadd.xlane.f32.xlu0 %v3253
    %v3255 = vpop.xlane.xlu0 %3254
    %v3256 = vsel %vm2788, %v3224, 0.0
    %3257 = vadd.xlane.f32.xlu0 %v3256
    %v3258 = vpop.xlane.xlu0 %3257
    %v3259 = vsel %vm2788, %v3226, 0.0
    %3260 = vadd.xlane.f32.xlu0 %v3259
    %v3261 = vpop.xlane.xlu0 %3260
    %v3262 = vsel %vm2788, %v3228, 0.0
    %3263 = vadd.xlane.f32.xlu0 %v3262
    %v3264 = vpop.xlane.xlu0 %3263
    %v3265 = vsel %vm2788, %v3230, 0.0
    %3266 = vadd.xlane.f32.xlu0 %v3265
    %v3267 = vpop.xlane.xlu0 %3266
    %v3268 = vsel %vm2788, %v3232, 0.0
    %3269 = vadd.xlane.f32.xlu0 %v3268
    %v3270 = vpop.xlane.xlu0 %3269
    %v3271 = vsel %vm2788, %v3234, 0.0
    %3272 = vadd.xlane.f32.xlu0 %v3271
    %v3273 = vpop.xlane.xlu0 %3272
    %v3274 = vsel %vm2788, %v3236, 0.0
    %3275 = vadd.xlane.f32.xlu0 %v3274
    %v3276 = vpop.xlane.xlu0 %3275
    %v3277 = vsel %vm2788, %v3238, 0.0
    %3278 = vadd.xlane.f32.xlu0 %v3277
    %v3279 = vpop.xlane.xlu0 %3278
    %v3280 = vsel %vm2788, %v3240, 0.0
    %3281 = vadd.xlane.f32.xlu0 %v3280
    %v3282 = vpop.xlane.xlu0 %3281
    %v3283 = vsel %vm2788, %v3242, 0.0
    %3284 = vadd.xlane.f32.xlu0 %v3283
    %v3285 = vpop.xlane.xlu0 %3284
    %v3286 = vsel %vm2788, %v3244, 0.0
    %3287 = vadd.xlane.f32.xlu0 %v3286
    %v3288 = vpop.xlane.xlu0 %3287
    %v3289 = vsel %vm2788, %v3246, 0.0
    %3290 = vadd.xlane.f32.xlu0 %v3289
    %v3291 = vpop.xlane.xlu0 %3290
    %v3292 = vsel %vm2788, %v3248, 0.0
    %3293 = vadd.xlane.f32.xlu0 %v3292
    %v3294 = vpop.xlane.xlu0 %3293
    %v3295 = vsel %vm2788, %v3250, 0.0
    %3296 = vadd.xlane.f32.xlu0 %v3295
    %v3297 = vpop.xlane.xlu0 %3296
    %v3298 = vsel %vm2788, %v3252, 0.0
    %3299 = vadd.xlane.f32.xlu0 %v3298
    %v3300 = vpop.xlane.xlu0 %3299
    %v3301 = vrcp.pop %v3255
    %v3302 = vrcp.pop %v3258
    %v3303 = vrcp.pop %v3261
    %v3304 = vrcp.pop %v3264
    %v3305 = vrcp.pop %v3267
    %v3306 = vrcp.pop %v3270
    %v3307 = vrcp.pop %v3273
    %v3308 = vrcp.pop %v3276
    %v3309 = vrcp.pop %v3279
    %v3310 = vrcp.pop %v3282
    %v3311 = vrcp.pop %v3285
    %v3312 = vrcp.pop %v3288
    %v3313 = vrcp.pop %v3291
    %v3314 = vrcp.pop %v3294
    %v3315 = vrcp.pop %v3297
    %v3316 = vrcp.pop %v3300
    %v3317 = vmul.f32 %v3222, %v3301
    %v3318 = vmul.f32 %v3224, %v3302
    %v3319 = vmul.f32 %v3226, %v3303
    %v3320 = vmul.f32 %v3228, %v3304
    %v3321 = vmul.f32 %v3230, %v3305
    %v3322 = vmul.f32 %v3232, %v3306
    %v3323 = vmul.f32 %v3234, %v3307
    %v3324 = vmul.f32 %v3236, %v3308
    %v3325 = vmul.f32 %v3238, %v3309
    %v3326 = vmul.f32 %v3240, %v3310
    %v3327 = vmul.f32 %v3242, %v3311
    %v3328 = vmul.f32 %v3244, %v3312
    %v3329 = vmul.f32 %v3246, %v3313
    %v3330 = vmul.f32 %v3248, %v3314
    %v3331 = vmul.f32 %v3250, %v3315
    %v3332 = vmul.f32 %v3252, %v3316
    %v3333 = vpack.c.bf16 %v3318, %v3317
    %v3334 = vpack.c.bf16 %v3320, %v3319
    %v3335 = vpack.c.bf16 %v3322, %v3321
    %v3336 = vpack.c.bf16 %v3324, %v3323
    %v3337 = vpack.c.bf16 %v3326, %v3325
    %v3338 = vpack.c.bf16 %v3328, %v3327
    %v3339 = vpack.c.bf16 %v3330, %v3329
    %v3340 = vpack.c.bf16 %v3332, %v3331
    %v3341 = vld [vmem:[#allocation8] sm:$0xff]
    %v3342 = vld [vmem:[#allocation8 + $0x8] sm:$0xff]
    %v3343 = vld [vmem:[#allocation8 + $0x10] sm:$0xff]
    %v3344 = vld [vmem:[#allocation8 + $0x18] sm:$0x11]
    %v3345 = vld [vmem:[#allocation8 + $0x20] sm:$0x11]
    %v3346 = vld [vmem:[#allocation8 + $0x28] sm:$0x11]
    %v3353 = vunpack.c.l.b16 %v3341
    %v3354 = vunpack.c.h.b16 %v3341
    %v3355 = vunpack.c.l.b16 %v3342
    %v3356 = vunpack.c.h.b16 %v3342
    %v3357 = vunpack.c.l.b16 %v3343
    %v3358 = vunpack.c.h.b16 %v3343
    %v3359 = vunpack.c.l.b16 %v3344
    %v3360 = vunpack.c.h.b16 %v3344
    %v3361 = vunpack.c.l.b16 %v3345
    %v3362 = vunpack.c.h.b16 %v3345
    %v3363 = vunpack.c.l.b16 %v3346
    %v3364 = vunpack.c.h.b16 %v3346
    %v3365 = vpack.c.b16 %v3359, %v3353
    %v3366 = vpack.c.b16 %v3360, %v3354
    %v3367 = vpack.c.b16 %v3361, %v3355
    %v3368 = vpack.c.b16 %v3362, %v3356
    %v3369 = vpack.c.b16 %v3363, %v3357
    %v3370 = vpack.c.b16 %v3364, %v3358
    %v3372 = vsel %vm2788, %v3333, 0
    %v3375 = vsel %vm2788, %v3334, 0
    %v3378 = vsel %vm2788, %v3335, 0
    %v3381 = vsel %vm2788, %v3336, 0
    %v3384 = vsel %vm2788, %v3337, 0
    %v3387 = vsel %vm2788, %v3338, 0
    %v3390 = vsel %vm2788, %v3339, 0
    %v3393 = vsel %vm2788, %v3340, 0
    %vm3395 = vcmask 1044480
    %v3397 = vsel %vm3395, %v3365, 0
    %v3400 = vsel %vm3395, %v3366, 0
    %v3403 = vsel %vm3395, %v3367, 0
    %v3406 = vsel %vm3395, %v3368, 0
    %v3409 = vsel %vm3395, %v3369, 0
    %v3412 = vsel %vm3395, %v3370, 0
    %3414 = vmatprep.subr.bf16.mxu0 0
    %3415 = vmatpush1.bf16.msra.mxu0 0
    %3416 = vmatprep.subr.bf16.mxu0 0
    %3417 = vmatpush1.bf16.msra.mxu0 0
    %3418 = vmatprep.subr.bf16.mxu0 0
    %3419 = vmatpush1.bf16.msra.mxu0 0
    %3420 = vmatprep.subr.bf16.mxu0 0
    %3421 = vmatpush1.bf16.msra.mxu0 0
    %3422 = vmatprep.subr.bf16.mxu0 0
    %3423 = vmatpush1.bf16.msra.mxu0 0
    %3424 = vmatprep.subr.bf16.mxu0 0
    %3425 = vmatpush1.bf16.msra.mxu0 0
    %3426 = vmatprep.subr.bf16.mxu0 0
    %3427 = vmatpush1.bf16.msra.mxu0 0
    %3428 = vmatprep.subr.bf16.mxu0 %v3400
    %3429 = vmatpush1.bf16.msra.mxu0 %v3397
    %3430 = vmatprep.subr.bf16.mxu0 0
    %3431 = vmatpush2.bf16.msra.mxu0 0
    %3432 = vmatprep.subr.bf16.mxu0 0
    %3433 = vmatpush2.bf16.msra.mxu0 0
    %3434 = vmatprep.subr.bf16.mxu0 0
    %3435 = vmatpush2.bf16.msra.mxu0 0
    %3436 = vmatprep.subr.bf16.mxu0 0
    %3437 = vmatpush2.bf16.msra.mxu0 0
    %3438 = vmatprep.subr.bf16.mxu0 0
    %3439 = vmatpush2.bf16.msra.mxu0 0
    %3440 = vmatprep.subr.bf16.mxu0 0
    %3441 = vmatpush2.bf16.msra.mxu0 0
    %3442 = vmatprep.subr.bf16.mxu0 0
    %3443 = vmatpush2.bf16.msra.mxu0 0
    %3444 = vmatprep.subr.bf16.mxu0 0
    %3445 = vmatpush2.bf16.msra.mxu0 0
    %3446 = vmatprep.mubr.bf16.mxu0 0
    %3447 = vmatmul.mubr.bf16.gmra.mxu0 %v3372
    %v3448 = vpop.f32.mrf.mxu0
    %v3449 = vadd.f32 0.0, %v3448
    %v3450 = vpop.f32.mrf.mxu0
    %v3451 = vadd.f32 0.0, %v3450
    %v3452 = vpop.f32.mrf.mxu0
    %v3453 = vadd.f32 0.0, %v3452
    %v3454 = vpop.f32.mrf.mxu0
    %v3455 = vadd.f32 0.0, %v3454
    %3456 = vmatprep.mubr.bf16.mxu0 0
    %3457 = vmatmul.mubr.bf16.gmra.mxu0 %v3375
    %v3458 = vpop.f32.mrf.mxu0
    %v3459 = vadd.f32 0.0, %v3458
    %v3460 = vpop.f32.mrf.mxu0
    %v3461 = vadd.f32 0.0, %v3460
    %v3462 = vpop.f32.mrf.mxu0
    %v3463 = vadd.f32 0.0, %v3462
    %v3464 = vpop.f32.mrf.mxu0
    %v3465 = vadd.f32 0.0, %v3464
    %3466 = vmatprep.mubr.bf16.mxu0 0
    %3467 = vmatmul.mubr.bf16.gmra.mxu0 %v3378
    %v3468 = vpop.f32.mrf.mxu0
    %v3469 = vadd.f32 0.0, %v3468
    %v3470 = vpop.f32.mrf.mxu0
    %v3471 = vadd.f32 0.0, %v3470
    %v3472 = vpop.f32.mrf.mxu0
    %v3473 = vadd.f32 0.0, %v3472
    %v3474 = vpop.f32.mrf.mxu0
    %v3475 = vadd.f32 0.0, %v3474
    %3476 = vmatprep.mubr.bf16.mxu0 0
    %3477 = vmatmul.mubr.bf16.gmra.mxu0 %v3381
    %v3478 = vpop.f32.mrf.mxu0
    %v3479 = vadd.f32 0.0, %v3478
    %v3480 = vpop.f32.mrf.mxu0
    %v3481 = vadd.f32 0.0, %v3480
    %v3482 = vpop.f32.mrf.mxu0
    %v3483 = vadd.f32 0.0, %v3482
    %v3484 = vpop.f32.mrf.mxu0
    %v3485 = vadd.f32 0.0, %v3484
    %3486 = vmatprep.mubr.bf16.mxu0 0
    %3487 = vmatmul.mubr.bf16.gmra.mxu0 %v3384
    %v3488 = vpop.f32.mrf.mxu0
    %v3489 = vadd.f32 0.0, %v3488
    %v3490 = vpop.f32.mrf.mxu0
    %v3491 = vadd.f32 0.0, %v3490
    %v3492 = vpop.f32.mrf.mxu0
    %v3493 = vadd.f32 0.0, %v3492
    %v3494 = vpop.f32.mrf.mxu0
    %v3495 = vadd.f32 0.0, %v3494
    %3496 = vmatprep.mubr.bf16.mxu0 0
    %3497 = vmatmul.mubr.bf16.gmra.mxu0 %v3387
    %v3498 = vpop.f32.mrf.mxu0
    %v3499 = vadd.f32 0.0, %v3498
    %v3500 = vpop.f32.mrf.mxu0
    %v3501 = vadd.f32 0.0, %v3500
    %v3502 = vpop.f32.mrf.mxu0
    %v3503 = vadd.f32 0.0, %v3502
    %v3504 = vpop.f32.mrf.mxu0
    %v3505 = vadd.f32 0.0, %v3504
    %3506 = vmatprep.mubr.bf16.mxu0 0
    %3507 = vmatmul.mubr.bf16.gmra.mxu0 %v3390
    %v3508 = vpop.f32.mrf.mxu0
    %v3509 = vadd.f32 0.0, %v3508
    %v3510 = vpop.f32.mrf.mxu0
    %v3511 = vadd.f32 0.0, %v3510
    %v3512 = vpop.f32.mrf.mxu0
    %v3513 = vadd.f32 0.0, %v3512
    %v3514 = vpop.f32.mrf.mxu0
    %v3515 = vadd.f32 0.0, %v3514
    %3516 = vmatprep.mubr.bf16.mxu0 0
    %3517 = vmatmul.mubr.bf16.gmra.mxu0 %v3393
    %v3518 = vpop.f32.mrf.mxu0
    %v3519 = vadd.f32 0.0, %v3518
    %v3520 = vpop.f32.mrf.mxu0
    %v3521 = vadd.f32 0.0, %v3520
    %v3522 = vpop.f32.mrf.mxu0
    %v3523 = vadd.f32 0.0, %v3522
    %v3524 = vpop.f32.mrf.mxu0
    %v3525 = vadd.f32 0.0, %v3524
    %3526 = vdwg.mxu0
    %3527 = vmatprep.subr.bf16.mxu0 0
    %3528 = vmatpush1.bf16.msra.mxu0 0
    %3529 = vmatprep.subr.bf16.mxu0 0
    %3530 = vmatpush1.bf16.msra.mxu0 0
    %3531 = vmatprep.subr.bf16.mxu0 0
    %3532 = vmatpush1.bf16.msra.mxu0 0
    %3533 = vmatprep.subr.bf16.mxu0 0
    %3534 = vmatpush1.bf16.msra.mxu0 0
    %3535 = vmatprep.subr.bf16.mxu0 0
    %3536 = vmatpush1.bf16.msra.mxu0 0
    %3537 = vmatprep.subr.bf16.mxu0 0
    %3538 = vmatpush1.bf16.msra.mxu0 0
    %3539 = vmatprep.subr.bf16.mxu0 0
    %3540 = vmatpush1.bf16.msra.mxu0 0
    %3541 = vmatprep.subr.bf16.mxu0 %v3406
    %3542 = vmatpush1.bf16.msra.mxu0 %v3403
    %3543 = vmatprep.subr.bf16.mxu0 0
    %3544 = vmatpush2.bf16.msra.mxu0 0
    %3545 = vmatprep.subr.bf16.mxu0 0
    %3546 = vmatpush2.bf16.msra.mxu0 0
    %3547 = vmatprep.subr.bf16.mxu0 0
    %3548 = vmatpush2.bf16.msra.mxu0 0
    %3549 = vmatprep.subr.bf16.mxu0 0
    %3550 = vmatpush2.bf16.msra.mxu0 0
    %3551 = vmatprep.subr.bf16.mxu0 0
    %3552 = vmatpush2.bf16.msra.mxu0 0
    %3553 = vmatprep.subr.bf16.mxu0 0
    %3554 = vmatpush2.bf16.msra.mxu0 0
    %3555 = vmatprep.subr.bf16.mxu0 0
    %3556 = vmatpush2.bf16.msra.mxu0 0
    %3557 = vmatprep.subr.bf16.mxu0 0
    %3558 = vmatpush2.bf16.msra.mxu0 0
    %3559 = vmatprep.mubr.bf16.mxu0 0
    %3560 = vmatmul.mubr.bf16.gmra.mxu0 %v3372
    %v3561 = vpop.f32.mrf.mxu0
    %v3562 = vadd.f32 0.0, %v3561
    %v3563 = vpop.f32.mrf.mxu0
    %v3564 = vadd.f32 0.0, %v3563
    %v3565 = vpop.f32.mrf.mxu0
    %v3566 = vadd.f32 0.0, %v3565
    %v3567 = vpop.f32.mrf.mxu0
    %v3568 = vadd.f32 0.0, %v3567
    %3569 = vmatprep.mubr.bf16.mxu0 0
    %3570 = vmatmul.mubr.bf16.gmra.mxu0 %v3375
    %v3571 = vpop.f32.mrf.mxu0
    %v3572 = vadd.f32 0.0, %v3571
    %v3573 = vpop.f32.mrf.mxu0
    %v3574 = vadd.f32 0.0, %v3573
    %v3575 = vpop.f32.mrf.mxu0
    %v3576 = vadd.f32 0.0, %v3575
    %v3577 = vpop.f32.mrf.mxu0
    %v3578 = vadd.f32 0.0, %v3577
    %3579 = vmatprep.mubr.bf16.mxu0 0
    %3580 = vmatmul.mubr.bf16.gmra.mxu0 %v3378
    %v3581 = vpop.f32.mrf.mxu0
    %v3582 = vadd.f32 0.0, %v3581
    %v3583 = vpop.f32.mrf.mxu0
    %v3584 = vadd.f32 0.0, %v3583
    %v3585 = vpop.f32.mrf.mxu0
    %v3586 = vadd.f32 0.0, %v3585
    %v3587 = vpop.f32.mrf.mxu0
    %v3588 = vadd.f32 0.0, %v3587
    %3589 = vmatprep.mubr.bf16.mxu0 0
    %3590 = vmatmul.mubr.bf16.gmra.mxu0 %v3381
    %v3591 = vpop.f32.mrf.mxu0
    %v3592 = vadd.f32 0.0, %v3591
    %v3593 = vpop.f32.mrf.mxu0
    %v3594 = vadd.f32 0.0, %v3593
    %v3595 = vpop.f32.mrf.mxu0
    %v3596 = vadd.f32 0.0, %v3595
    %v3597 = vpop.f32.mrf.mxu0
    %v3598 = vadd.f32 0.0, %v3597
    %3599 = vmatprep.mubr.bf16.mxu0 0
    %3600 = vmatmul.mubr.bf16.gmra.mxu0 %v3384
    %v3601 = vpop.f32.mrf.mxu0
    %v3602 = vadd.f32 0.0, %v3601
    %v3603 = vpop.f32.mrf.mxu0
    %v3604 = vadd.f32 0.0, %v3603
    %v3605 = vpop.f32.mrf.mxu0
    %v3606 = vadd.f32 0.0, %v3605
    %v3607 = vpop.f32.mrf.mxu0
    %v3608 = vadd.f32 0.0, %v3607
    %3609 = vmatprep.mubr.bf16.mxu0 0
    %3610 = vmatmul.mubr.bf16.gmra.mxu0 %v3387
    %v3611 = vpop.f32.mrf.mxu0
    %v3612 = vadd.f32 0.0, %v3611
    %v3613 = vpop.f32.mrf.mxu0
    %v3614 = vadd.f32 0.0, %v3613
    %v3615 = vpop.f32.mrf.mxu0
    %v3616 = vadd.f32 0.0, %v3615
    %v3617 = vpop.f32.mrf.mxu0
    %v3618 = vadd.f32 0.0, %v3617
    %3619 = vmatprep.mubr.bf16.mxu0 0
    %3620 = vmatmul.mubr.bf16.gmra.mxu0 %v3390
    %v3621 = vpop.f32.mrf.mxu0
    %v3622 = vadd.f32 0.0, %v3621
    %v3623 = vpop.f32.mrf.mxu0
    %v3624 = vadd.f32 0.0, %v3623
    %v3625 = vpop.f32.mrf.mxu0
    %v3626 = vadd.f32 0.0, %v3625
    %v3627 = vpop.f32.mrf.mxu0
    %v3628 = vadd.f32 0.0, %v3627
    %3629 = vmatprep.mubr.bf16.mxu0 0
    %3630 = vmatmul.mubr.bf16.gmra.mxu0 %v3393
    %v3631 = vpop.f32.mrf.mxu0
    %v3632 = vadd.f32 0.0, %v3631
    %v3633 = vpop.f32.mrf.mxu0
    %v3634 = vadd.f32 0.0, %v3633
    %v3635 = vpop.f32.mrf.mxu0
    %v3636 = vadd.f32 0.0, %v3635
    %v3637 = vpop.f32.mrf.mxu0
    %v3638 = vadd.f32 0.0, %v3637
    %3639 = vdwg.mxu0
    %3640 = vmatprep.subr.bf16.mxu0 0
    %3641 = vmatpush1.bf16.msra.mxu0 0
    %3642 = vmatprep.subr.bf16.mxu0 0
    %3643 = vmatpush1.bf16.msra.mxu0 0
    %3644 = vmatprep.subr.bf16.mxu0 0
    %3645 = vmatpush1.bf16.msra.mxu0 0
    %3646 = vmatprep.subr.bf16.mxu0 0
    %3647 = vmatpush1.bf16.msra.mxu0 0
    %3648 = vmatprep.subr.bf16.mxu0 0
    %3649 = vmatpush1.bf16.msra.mxu0 0
    %3650 = vmatprep.subr.bf16.mxu0 0
    %3651 = vmatpush1.bf16.msra.mxu0 0
    %3652 = vmatprep.subr.bf16.mxu0 0
    %3653 = vmatpush1.bf16.msra.mxu0 0
    %3654 = vmatprep.subr.bf16.mxu0 %v3412
    %3655 = vmatpush1.bf16.msra.mxu0 %v3409
    %3656 = vmatprep.subr.bf16.mxu0 0
    %3657 = vmatpush2.bf16.msra.mxu0 0
    %3658 = vmatprep.subr.bf16.mxu0 0
    %3659 = vmatpush2.bf16.msra.mxu0 0
    %3660 = vmatprep.subr.bf16.mxu0 0
    %3661 = vmatpush2.bf16.msra.mxu0 0
    %3662 = vmatprep.subr.bf16.mxu0 0
    %3663 = vmatpush2.bf16.msra.mxu0 0
    %3664 = vmatprep.subr.bf16.mxu0 0
    %3665 = vmatpush2.bf16.msra.mxu0 0
    %3666 = vmatprep.subr.bf16.mxu0 0
    %3667 = vmatpush2.bf16.msra.mxu0 0
    %3668 = vmatprep.subr.bf16.mxu0 0
    %3669 = vmatpush2.bf16.msra.mxu0 0
    %3670 = vmatprep.subr.bf16.mxu0 0
    %3671 = vmatpush2.bf16.msra.mxu0 0
    %3672 = vmatprep.mubr.bf16.mxu0 0
    %3673 = vmatmul.mubr.bf16.gmra.mxu0 %v3372
    %v3674 = vpop.f32.mrf.mxu0
    %v3675 = vadd.f32 0.0, %v3674
    %v3676 = vpop.f32.mrf.mxu0
    %v3677 = vadd.f32 0.0, %v3676
    %v3678 = vpop.f32.mrf.mxu0
    %v3679 = vadd.f32 0.0, %v3678
    %v3680 = vpop.f32.mrf.mxu0
    %v3681 = vadd.f32 0.0, %v3680
    %3682 = vmatprep.mubr.bf16.mxu0 0
    %3683 = vmatmul.mubr.bf16.gmra.mxu0 %v3375
    %v3684 = vpop.f32.mrf.mxu0
    %v3685 = vadd.f32 0.0, %v3684
    %v3686 = vpop.f32.mrf.mxu0
    %v3687 = vadd.f32 0.0, %v3686
    %v3688 = vpop.f32.mrf.mxu0
    %v3689 = vadd.f32 0.0, %v3688
    %v3690 = vpop.f32.mrf.mxu0
    %v3691 = vadd.f32 0.0, %v3690
    %3692 = vmatprep.mubr.bf16.mxu0 0
    %3693 = vmatmul.mubr.bf16.gmra.mxu0 %v3378
    %v3694 = vpop.f32.mrf.mxu0
    %v3695 = vadd.f32 0.0, %v3694
    %v3696 = vpop.f32.mrf.mxu0
    %v3697 = vadd.f32 0.0, %v3696
    %v3698 = vpop.f32.mrf.mxu0
    %v3699 = vadd.f32 0.0, %v3698
    %v3700 = vpop.f32.mrf.mxu0
    %v3701 = vadd.f32 0.0, %v3700
    %3702 = vmatprep.mubr.bf16.mxu0 0
    %3703 = vmatmul.mubr.bf16.gmra.mxu0 %v3381
    %v3704 = vpop.f32.mrf.mxu0
    %v3705 = vadd.f32 0.0, %v3704
    %v3706 = vpop.f32.mrf.mxu0
    %v3707 = vadd.f32 0.0, %v3706
    %v3708 = vpop.f32.mrf.mxu0
    %v3709 = vadd.f32 0.0, %v3708
    %v3710 = vpop.f32.mrf.mxu0
    %v3711 = vadd.f32 0.0, %v3710
    %3712 = vmatprep.mubr.bf16.mxu0 0
    %3713 = vmatmul.mubr.bf16.gmra.mxu0 %v3384
    %v3714 = vpop.f32.mrf.mxu0
    %v3715 = vadd.f32 0.0, %v3714
    %v3716 = vpop.f32.mrf.mxu0
    %v3717 = vadd.f32 0.0, %v3716
    %v3718 = vpop.f32.mrf.mxu0
    %v3719 = vadd.f32 0.0, %v3718
    %v3720 = vpop.f32.mrf.mxu0
    %v3721 = vadd.f32 0.0, %v3720
    %3722 = vmatprep.mubr.bf16.mxu0 0
    %3723 = vmatmul.mubr.bf16.gmra.mxu0 %v3387
    %v3724 = vpop.f32.mrf.mxu0
    %v3725 = vadd.f32 0.0, %v3724
    %v3726 = vpop.f32.mrf.mxu0
    %v3727 = vadd.f32 0.0, %v3726
    %v3728 = vpop.f32.mrf.mxu0
    %v3729 = vadd.f32 0.0, %v3728
    %v3730 = vpop.f32.mrf.mxu0
    %v3731 = vadd.f32 0.0, %v3730
    %3732 = vmatprep.mubr.bf16.mxu0 0
    %3733 = vmatmul.mubr.bf16.gmra.mxu0 %v3390
    %v3734 = vpop.f32.mrf.mxu0
    %v3735 = vadd.f32 0.0, %v3734
    %v3736 = vpop.f32.mrf.mxu0
    %v3737 = vadd.f32 0.0, %v3736
    %v3738 = vpop.f32.mrf.mxu0
    %v3739 = vadd.f32 0.0, %v3738
    %v3740 = vpop.f32.mrf.mxu0
    %v3741 = vadd.f32 0.0, %v3740
    %3742 = vmatprep.mubr.bf16.mxu0 0
    %3743 = vmatmul.mubr.bf16.gmra.mxu0 %v3393
    %v3744 = vpop.f32.mrf.mxu0
    %v3745 = vadd.f32 0.0, %v3744
    %v3746 = vpop.f32.mrf.mxu0
    %v3747 = vadd.f32 0.0, %v3746
    %v3748 = vpop.f32.mrf.mxu0
    %v3749 = vadd.f32 0.0, %v3748
    %v3750 = vpop.f32.mrf.mxu0
    %v3751 = vadd.f32 0.0, %v3750
    %3752 = vdwg.mxu0
    %v3753 = vld [vmem:[#allocation13 + $0xd] sm:$0x1]
    %v3755 = vlaneseq
    %v3756 = vshrl.u32 %v3755, 7
    %v3757 = vsub.s32 0, %v3756
    %v3758 = vrot.slane %v3753, %v3757
    %v3760 = vadd.f32 %v3675, %v3758
    %v3761 = vadd.f32 %v3679, %v3758
    %v3762 = vadd.f32 %v3685, %v3758
    %v3763 = vadd.f32 %v3689, %v3758
    %v3764 = vadd.f32 %v3695, %v3758
    %v3765 = vadd.f32 %v3699, %v3758
    %v3766 = vadd.f32 %v3705, %v3758
    %v3767 = vadd.f32 %v3709, %v3758
    %v3768 = vadd.f32 %v3715, %v3758
    %v3769 = vadd.f32 %v3719, %v3758
    %v3770 = vadd.f32 %v3725, %v3758
    %v3771 = vadd.f32 %v3729, %v3758
    %v3772 = vadd.f32 %v3735, %v3758
    %v3773 = vadd.f32 %v3739, %v3758
    %v3774 = vadd.f32 %v3745, %v3758
    %v3775 = vadd.f32 %v3749, %v3758
    %v3776 = vld [vmem:[#allocation13 + $0xe] sm:$0x1]
    %v3778 = vlaneseq
    %v3779 = vshrl.u32 %v3778, 7
    %v3780 = vsub.s32 0, %v3779
    %v3781 = vrot.slane %v3776, %v3780
    %v3783 = vadd.f32 %v3677, %v3781
    %v3784 = vadd.f32 %v3681, %v3781
    %v3785 = vadd.f32 %v3687, %v3781
    %v3786 = vadd.f32 %v3691, %v3781
    %v3787 = vadd.f32 %v3697, %v3781
    %v3788 = vadd.f32 %v3701, %v3781
    %v3789 = vadd.f32 %v3707, %v3781
    %v3790 = vadd.f32 %v3711, %v3781
    %v3791 = vadd.f32 %v3717, %v3781
    %v3792 = vadd.f32 %v3721, %v3781
    %v3793 = vadd.f32 %v3727, %v3781
    %v3794 = vadd.f32 %v3731, %v3781
    %v3795 = vadd.f32 %v3737, %v3781
    %v3796 = vadd.f32 %v3741, %v3781
    %v3797 = vadd.f32 %v3747, %v3781
    %v3798 = vadd.f32 %v3751, %v3781
    %v3799 = vmax.f32 %v3783, 0.0
    %v3800 = vmax.f32 %v3784, 0.0
    %v3801 = vmax.f32 %v3785, 0.0
    %v3802 = vmax.f32 %v3786, 0.0
    %v3803 = vmax.f32 %v3787, 0.0
    %v3804 = vmax.f32 %v3788, 0.0
    %v3805 = vmax.f32 %v3789, 0.0
    %v3806 = vmax.f32 %v3790, 0.0
    %v3807 = vmax.f32 %v3791, 0.0
    %v3808 = vmax.f32 %v3792, 0.0
    %v3809 = vmax.f32 %v3793, 0.0
    %v3810 = vmax.f32 %v3794, 0.0
    %v3811 = vmax.f32 %v3795, 0.0
    %v3812 = vmax.f32 %v3796, 0.0
    %v3813 = vmax.f32 %v3797, 0.0
    %v3814 = vmax.f32 %v3798, 0.0
    %vm3815 = vcmp.ne.f32.partialorder %v3783, %v3783
    %vm3816 = vcmp.ne.f32.partialorder %v3784, %v3784
    %vm3817 = vcmp.ne.f32.partialorder %v3785, %v3785
    %vm3818 = vcmp.ne.f32.partialorder %v3786, %v3786
    %vm3819 = vcmp.ne.f32.partialorder %v3787, %v3787
    %vm3820 = vcmp.ne.f32.partialorder %v3788, %v3788
    %vm3821 = vcmp.ne.f32.partialorder %v3789, %v3789
    %vm3822 = vcmp.ne.f32.partialorder %v3790, %v3790
    %vm3823 = vcmp.ne.f32.partialorder %v3791, %v3791
    %vm3824 = vcmp.ne.f32.partialorder %v3792, %v3792
    %vm3825 = vcmp.ne.f32.partialorder %v3793, %v3793
    %vm3826 = vcmp.ne.f32.partialorder %v3794, %v3794
    %vm3827 = vcmp.ne.f32.partialorder %v3795, %v3795
    %vm3828 = vcmp.ne.f32.partialorder %v3796, %v3796
    %vm3829 = vcmp.ne.f32.partialorder %v3797, %v3797
    %vm3830 = vcmp.ne.f32.partialorder %v3798, %v3798
    %v3831 = vadd.f32 %v3783, 0.0
    %v3832 = vadd.f32 %v3784, 0.0
    %v3833 = vadd.f32 %v3785, 0.0
    %v3834 = vadd.f32 %v3786, 0.0
    %v3835 = vadd.f32 %v3787, 0.0
    %v3836 = vadd.f32 %v3788, 0.0
    %v3837 = vadd.f32 %v3789, 0.0
    %v3838 = vadd.f32 %v3790, 0.0
    %v3839 = vadd.f32 %v3791, 0.0
    %v3840 = vadd.f32 %v3792, 0.0
    %v3841 = vadd.f32 %v3793, 0.0
    %v3842 = vadd.f32 %v3794, 0.0
    %v3843 = vadd.f32 %v3795, 0.0
    %v3844 = vadd.f32 %v3796, 0.0
    %v3845 = vadd.f32 %v3797, 0.0
    %v3846 = vadd.f32 %v3798, 0.0
    %v3847 = vand.u32 2147483647, %v3783
    %v3848 = vand.u32 2147483647, %v3784
    %v3849 = vand.u32 2147483647, %v3785
    %v3850 = vand.u32 2147483647, %v3786
    %v3851 = vand.u32 2147483647, %v3787
    %v3852 = vand.u32 2147483647, %v3788
    %v3853 = vand.u32 2147483647, %v3789
    %v3854 = vand.u32 2147483647, %v3790
    %v3855 = vand.u32 2147483647, %v3791
    %v3856 = vand.u32 2147483647, %v3792
    %v3857 = vand.u32 2147483647, %v3793
    %v3858 = vand.u32 2147483647, %v3794
    %v3859 = vand.u32 2147483647, %v3795
    %v3860 = vand.u32 2147483647, %v3796
    %v3861 = vand.u32 2147483647, %v3797
    %v3862 = vand.u32 2147483647, %v3798
    %v3863 = vsub.f32 0.0, %v3847
    %v3864 = vsub.f32 0.0, %v3848
    %v3865 = vsub.f32 0.0, %v3849
    %v3866 = vsub.f32 0.0, %v3850
    %v3867 = vsub.f32 0.0, %v3851
    %v3868 = vsub.f32 0.0, %v3852
    %v3869 = vsub.f32 0.0, %v3853
    %v3870 = vsub.f32 0.0, %v3854
    %v3871 = vsub.f32 0.0, %v3855
    %v3872 = vsub.f32 0.0, %v3856
    %v3873 = vsub.f32 0.0, %v3857
    %v3874 = vsub.f32 0.0, %v3858
    %v3875 = vsub.f32 0.0, %v3859
    %v3876 = vsub.f32 0.0, %v3860
    %v3877 = vsub.f32 0.0, %v3861
    %v3878 = vsub.f32 0.0, %v3862
    %v3879 = vmul.f32 %v3863, 1.442695
    %v3880 = vpow.pop %v3879
    %v3881 = vmul.f32 %v3864, 1.442695
    %v3882 = vpow.pop %v3881
    %v3883 = vmul.f32 %v3865, 1.442695
    %v3884 = vpow.pop %v3883
    %v3885 = vmul.f32 %v3866, 1.442695
    %v3886 = vpow.pop %v3885
    %v3887 = vmul.f32 %v3867, 1.442695
    %v3888 = vpow.pop %v3887
    %v3889 = vmul.f32 %v3868, 1.442695
    %v3890 = vpow.pop %v3889
    %v3891 = vmul.f32 %v3869, 1.442695
    %v3892 = vpow.pop %v3891
    %v3893 = vmul.f32 %v3870, 1.442695
    %v3894 = vpow.pop %v3893
    %v3895 = vmul.f32 %v3871, 1.442695
    %v3896 = vpow.pop %v3895
    %v3897 = vmul.f32 %v3872, 1.442695
    %v3898 = vpow.pop %v3897
    %v3899 = vmul.f32 %v3873, 1.442695
    %v3900 = vpow.pop %v3899
    %v3901 = vmul.f32 %v3874, 1.442695
    %v3902 = vpow.pop %v3901
    %v3903 = vmul.f32 %v3875, 1.442695
    %v3904 = vpow.pop %v3903
    %v3905 = vmul.f32 %v3876, 1.442695
    %v3906 = vpow.pop %v3905
    %v3907 = vmul.f32 %v3877, 1.442695
    %v3908 = vpow.pop %v3907
    %v3909 = vmul.f32 %v3878, 1.442695
    %v3910 = vpow.pop %v3909
    %v3911 = vadd.f32 %v3880, 1.0
    %v3912 = vlog2.pop %v3911
    %v3913 = vmul.f32 %v3912, 0.6931472
    %v3914 = vmul.f32 -0.5, %v3880
    %v3915 = vadd.f32 %v3914, 1.0
    %v3916 = vmul.f32 %v3915, %v3880
    %v3917 = vand.u32 2147483647, %v3880
    %vm3918 = vcmp.lt.f32.partialorder %v3917, 0.0004427343
    %v3919 = vsel %vm3918, %v3916, %v3913
    %v3920 = vadd.f32 %v3882, 1.0
    %v3921 = vlog2.pop %v3920
    %v3922 = vmul.f32 %v3921, 0.6931472
    %v3923 = vmul.f32 -0.5, %v3882
    %v3924 = vadd.f32 %v3923, 1.0
    %v3925 = vmul.f32 %v3924, %v3882
    %v3926 = vand.u32 2147483647, %v3882
    %vm3927 = vcmp.lt.f32.partialorder %v3926, 0.0004427343
    %v3928 = vsel %vm3927, %v3925, %v3922
    %v3929 = vadd.f32 %v3884, 1.0
    %v3930 = vlog2.pop %v3929
    %v3931 = vmul.f32 %v3930, 0.6931472
    %v3932 = vmul.f32 -0.5, %v3884
    %v3933 = vadd.f32 %v3932, 1.0
    %v3934 = vmul.f32 %v3933, %v3884
    %v3935 = vand.u32 2147483647, %v3884
    %vm3936 = vcmp.lt.f32.partialorder %v3935, 0.0004427343
    %v3937 = vsel %vm3936, %v3934, %v3931
    %v3938 = vadd.f32 %v3886, 1.0
    %v3939 = vlog2.pop %v3938
    %v3940 = vmul.f32 %v3939, 0.6931472
    %v3941 = vmul.f32 -0.5, %v3886
    %v3942 = vadd.f32 %v3941, 1.0
    %v3943 = vmul.f32 %v3942, %v3886
    %v3944 = vand.u32 2147483647, %v3886
    %vm3945 = vcmp.lt.f32.partialorder %v3944, 0.0004427343
    %v3946 = vsel %vm3945, %v3943, %v3940
    %v3947 = vadd.f32 %v3888, 1.0
    %v3948 = vlog2.pop %v3947
    %v3949 = vmul.f32 %v3948, 0.6931472
    %v3950 = vmul.f32 -0.5, %v3888
    %v3951 = vadd.f32 %v3950, 1.0
    %v3952 = vmul.f32 %v3951, %v3888
    %v3953 = vand.u32 2147483647, %v3888
    %vm3954 = vcmp.lt.f32.partialorder %v3953, 0.0004427343
    %v3955 = vsel %vm3954, %v3952, %v3949
    %v3956 = vadd.f32 %v3890, 1.0
    %v3957 = vlog2.pop %v3956
    %v3958 = vmul.f32 %v3957, 0.6931472
    %v3959 = vmul.f32 -0.5, %v3890
    %v3960 = vadd.f32 %v3959, 1.0
    %v3961 = vmul.f32 %v3960, %v3890
    %v3962 = vand.u32 2147483647, %v3890
    %vm3963 = vcmp.lt.f32.partialorder %v3962, 0.0004427343
    %v3964 = vsel %vm3963, %v3961, %v3958
    %v3965 = vadd.f32 %v3892, 1.0
    %v3966 = vlog2.pop %v3965
    %v3967 = vmul.f32 %v3966, 0.6931472
    %v3968 = vmul.f32 -0.5, %v3892
    %v3969 = vadd.f32 %v3968, 1.0
    %v3970 = vmul.f32 %v3969, %v3892
    %v3971 = vand.u32 2147483647, %v3892
    %vm3972 = vcmp.lt.f32.partialorder %v3971, 0.0004427343
    %v3973 = vsel %vm3972, %v3970, %v3967
    %v3974 = vadd.f32 %v3894, 1.0
    %v3975 = vlog2.pop %v3974
    %v3976 = vmul.f32 %v3975, 0.6931472
    %v3977 = vmul.f32 -0.5, %v3894
    %v3978 = vadd.f32 %v3977, 1.0
    %v3979 = vmul.f32 %v3978, %v3894
    %v3980 = vand.u32 2147483647, %v3894
    %vm3981 = vcmp.lt.f32.partialorder %v3980, 0.0004427343
    %v3982 = vsel %vm3981, %v3979, %v3976
    %v3983 = vadd.f32 %v3896, 1.0
    %v3984 = vlog2.pop %v3983
    %v3985 = vmul.f32 %v3984, 0.6931472
    %v3986 = vmul.f32 -0.5, %v3896
    %v3987 = vadd.f32 %v3986, 1.0
    %v3988 = vmul.f32 %v3987, %v3896
    %v3989 = vand.u32 2147483647, %v3896
    %vm3990 = vcmp.lt.f32.partialorder %v3989, 0.0004427343
    %v3991 = vsel %vm3990, %v3988, %v3985
    %v3992 = vadd.f32 %v3898, 1.0
    %v3993 = vlog2.pop %v3992
    %v3994 = vmul.f32 %v3993, 0.6931472
    %v3995 = vmul.f32 -0.5, %v3898
    %v3996 = vadd.f32 %v3995, 1.0
    %v3997 = vmul.f32 %v3996, %v3898
    %v3998 = vand.u32 2147483647, %v3898
    %vm3999 = vcmp.lt.f32.partialorder %v3998, 0.0004427343
    %v4000 = vsel %vm3999, %v3997, %v3994
    %v4001 = vadd.f32 %v3900, 1.0
    %v4002 = vlog2.pop %v4001
    %v4003 = vmul.f32 %v4002, 0.6931472
    %v4004 = vmul.f32 -0.5, %v3900
    %v4005 = vadd.f32 %v4004, 1.0
    %v4006 = vmul.f32 %v4005, %v3900
    %v4007 = vand.u32 2147483647, %v3900
    %vm4008 = vcmp.lt.f32.partialorder %v4007, 0.0004427343
    %v4009 = vsel %vm4008, %v4006, %v4003
    %v4010 = vadd.f32 %v3902, 1.0
    %v4011 = vlog2.pop %v4010
    %v4012 = vmul.f32 %v4011, 0.6931472
    %v4013 = vmul.f32 -0.5, %v3902
    %v4014 = vadd.f32 %v4013, 1.0
    %v4015 = vmul.f32 %v4014, %v3902
    %v4016 = vand.u32 2147483647, %v3902
    %vm4017 = vcmp.lt.f32.partialorder %v4016, 0.0004427343
    %v4018 = vsel %vm4017, %v4015, %v4012
    %v4019 = vadd.f32 %v3904, 1.0
    %v4020 = vlog2.pop %v4019
    %v4021 = vmul.f32 %v4020, 0.6931472
    %v4022 = vmul.f32 -0.5, %v3904
    %v4023 = vadd.f32 %v4022, 1.0
    %v4024 = vmul.f32 %v4023, %v3904
    %v4025 = vand.u32 2147483647, %v3904
    %vm4026 = vcmp.lt.f32.partialorder %v4025, 0.0004427343
    %v4027 = vsel %vm4026, %v4024, %v4021
    %v4028 = vadd.f32 %v3906, 1.0
    %v4029 = vlog2.pop %v4028
    %v4030 = vmul.f32 %v4029, 0.6931472
    %v4031 = vmul.f32 -0.5, %v3906
    %v4032 = vadd.f32 %v4031, 1.0
    %v4033 = vmul.f32 %v4032, %v3906
    %v4034 = vand.u32 2147483647, %v3906
    %vm4035 = vcmp.lt.f32.partialorder %v4034, 0.0004427343
    %v4036 = vsel %vm4035, %v4033, %v4030
    %v4037 = vadd.f32 %v3908, 1.0
    %v4038 = vlog2.pop %v4037
    %v4039 = vmul.f32 %v4038, 0.6931472
    %v4040 = vmul.f32 -0.5, %v3908
    %v4041 = vadd.f32 %v4040, 1.0
    %v4042 = vmul.f32 %v4041, %v3908
    %v4043 = vand.u32 2147483647, %v3908
    %vm4044 = vcmp.lt.f32.partialorder %v4043, 0.0004427343
    %v4045 = vsel %vm4044, %v4042, %v4039
    %v4046 = vadd.f32 %v3910, 1.0
    %v4047 = vlog2.pop %v4046
    %v4048 = vmul.f32 %v4047, 0.6931472
    %v4049 = vmul.f32 -0.5, %v3910
    %v4050 = vadd.f32 %v4049, 1.0
    %v4051 = vmul.f32 %v4050, %v3910
    %v4052 = vand.u32 2147483647, %v3910
    %vm4053 = vcmp.lt.f32.partialorder %v4052, 0.0004427343
    %v4054 = vsel %vm4053, %v4051, %v4048
    %v4055 = vadd.f32 %v3799, %v3919
    %v4056 = vadd.f32 %v3800, %v3928
    %v4057 = vadd.f32 %v3801, %v3937
    %v4058 = vadd.f32 %v3802, %v3946
    %v4059 = vadd.f32 %v3803, %v3955
    %v4060 = vadd.f32 %v3804, %v3964
    %v4061 = vadd.f32 %v3805, %v3973
    %v4062 = vadd.f32 %v3806, %v3982
    %v4063 = vadd.f32 %v3807, %v3991
    %v4064 = vadd.f32 %v3808, %v4000
    %v4065 = vadd.f32 %v3809, %v4009
    %v4066 = vadd.f32 %v3810, %v4018
    %v4067 = vadd.f32 %v3811, %v4027
    %v4068 = vadd.f32 %v3812, %v4036
    %v4069 = vadd.f32 %v3813, %v4045
    %v4070 = vadd.f32 %v3814, %v4054
    %v4071 = vsel %vm3815, %v3831, %v4055
    %v4072 = vsel %vm3816, %v3832, %v4056
    %v4073 = vsel %vm3817, %v3833, %v4057
    %v4074 = vsel %vm3818, %v3834, %v4058
    %v4075 = vsel %vm3819, %v3835, %v4059
    %v4076 = vsel %vm3820, %v3836, %v4060
    %v4077 = vsel %vm3821, %v3837, %v4061
    %v4078 = vsel %vm3822, %v3838, %v4062
    %v4079 = vsel %vm3823, %v3839, %v4063
    %v4080 = vsel %vm3824, %v3840, %v4064
    %v4081 = vsel %vm3825, %v3841, %v4065
    %v4082 = vsel %vm3826, %v3842, %v4066
    %v4083 = vsel %vm3827, %v3843, %v4067
    %v4084 = vsel %vm3828, %v3844, %v4068
    %v4085 = vsel %vm3829, %v3845, %v4069
    %v4086 = vsel %vm3830, %v3846, %v4070
    %v4087 = vadd.f32 %v929, %v3449
    %v4088 = vadd.f32 %v930, %v3451
    %v4089 = vadd.f32 %v931, %v3562
    %v4090 = vadd.f32 %v932, %v3564
    %v4091 = vadd.f32 %v933, %v3453
    %v4092 = vadd.f32 %v934, %v3455
    %v4093 = vadd.f32 %v935, %v3566
    %v4094 = vadd.f32 %v936, %v3568
    %v4095 = vadd.f32 %v937, %v3459
    %v4096 = vadd.f32 %v938, %v3461
    %v4097 = vadd.f32 %v939, %v3572
    %v4098 = vadd.f32 %v940, %v3574
    %v4099 = vadd.f32 %v941, %v3463
    %v4100 = vadd.f32 %v942, %v3465
    %v4101 = vadd.f32 %v943, %v3576
    %v4102 = vadd.f32 %v944, %v3578
    %v4103 = vadd.f32 %v945, %v3469
    %v4104 = vadd.f32 %v946, %v3471
    %v4105 = vadd.f32 %v947, %v3582
    %v4106 = vadd.f32 %v948, %v3584
    %v4107 = vadd.f32 %v949, %v3473
    %v4108 = vadd.f32 %v950, %v3475
    %v4109 = vadd.f32 %v951, %v3586
    %v4110 = vadd.f32 %v952, %v3588
    %v4111 = vadd.f32 %v953, %v3479
    %v4112 = vadd.f32 %v954, %v3481
    %v4113 = vadd.f32 %v955, %v3592
    %v4114 = vadd.f32 %v956, %v3594
    %v4115 = vadd.f32 %v957, %v3483
    %v4116 = vadd.f32 %v958, %v3485
    %v4117 = vadd.f32 %v959, %v3596
    %v4118 = vadd.f32 %v960, %v3598
    %v4119 = vadd.f32 %v961, %v3489
    %v4120 = vadd.f32 %v962, %v3491
    %v4121 = vadd.f32 %v963, %v3602
    %v4122 = vadd.f32 %v964, %v3604
    %v4123 = vadd.f32 %v965, %v3493
    %v4124 = vadd.f32 %v966, %v3495
    %v4125 = vadd.f32 %v967, %v3606
    %v4126 = vadd.f32 %v968, %v3608
    %v4127 = vadd.f32 %v969, %v3499
    %v4128 = vadd.f32 %v970, %v3501
    %v4129 = vadd.f32 %v971, %v3612
    %v4130 = vadd.f32 %v972, %v3614
    %v4131 = vadd.f32 %v973, %v3503
    %v4132 = vadd.f32 %v974, %v3505
    %v4133 = vadd.f32 %v975, %v3616
    %v4134 = vadd.f32 %v976, %v3618
    %v4135 = vadd.f32 %v977, %v3509
    %v4136 = vadd.f32 %v978, %v3511
    %v4137 = vadd.f32 %v979, %v3622
    %v4138 = vadd.f32 %v980, %v3624
    %v4139 = vadd.f32 %v981, %v3513
    %v4140 = vadd.f32 %v982, %v3515
    %v4141 = vadd.f32 %v983, %v3626
    %v4142 = vadd.f32 %v984, %v3628
    %v4143 = vadd.f32 %v985, %v3519
    %v4144 = vadd.f32 %v986, %v3521
    %v4145 = vadd.f32 %v987, %v3632
    %v4146 = vadd.f32 %v988, %v3634
    %v4147 = vadd.f32 %v989, %v3523
    %v4148 = vadd.f32 %v990, %v3525
    %v4149 = vadd.f32 %v991, %v3636
    %v4150 = vadd.f32 %v992, %v3638
    %v4151 = vmax.f32 %v4087, 0.0
    %v4152 = vmax.f32 %v4088, 0.0
    %v4153 = vmax.f32 %v4089, 0.0
    %v4154 = vmax.f32 %v4090, 0.0
    %v4155 = vmax.f32 %v4091, 0.0
    %v4156 = vmax.f32 %v4092, 0.0
    %v4157 = vmax.f32 %v4093, 0.0
    %v4158 = vmax.f32 %v4094, 0.0
    %v4159 = vmax.f32 %v4095, 0.0
    %v4160 = vmax.f32 %v4096, 0.0
    %v4161 = vmax.f32 %v4097, 0.0
    %v4162 = vmax.f32 %v4098, 0.0
    %v4163 = vmax.f32 %v4099, 0.0
    %v4164 = vmax.f32 %v4100, 0.0
    %v4165 = vmax.f32 %v4101, 0.0
    %v4166 = vmax.f32 %v4102, 0.0
    %v4167 = vmax.f32 %v4103, 0.0
    %v4168 = vmax.f32 %v4104, 0.0
    %v4169 = vmax.f32 %v4105, 0.0
    %v4170 = vmax.f32 %v4106, 0.0
    %v4171 = vmax.f32 %v4107, 0.0
    %v4172 = vmax.f32 %v4108, 0.0
    %v4173 = vmax.f32 %v4109, 0.0
    %v4174 = vmax.f32 %v4110, 0.0
    %v4175 = vmax.f32 %v4111, 0.0
    %v4176 = vmax.f32 %v4112, 0.0
    %v4177 = vmax.f32 %v4113, 0.0
    %v4178 = vmax.f32 %v4114, 0.0
    %v4179 = vmax.f32 %v4115, 0.0
    %v4180 = vmax.f32 %v4116, 0.0
    %v4181 = vmax.f32 %v4117, 0.0
    %v4182 = vmax.f32 %v4118, 0.0
    %v4183 = vmax.f32 %v4119, 0.0
    %v4184 = vmax.f32 %v4120, 0.0
    %v4185 = vmax.f32 %v4121, 0.0
    %v4186 = vmax.f32 %v4122, 0.0
    %v4187 = vmax.f32 %v4123, 0.0
    %v4188 = vmax.f32 %v4124, 0.0
    %v4189 = vmax.f32 %v4125, 0.0
    %v4190 = vmax.f32 %v4126, 0.0
    %v4191 = vmax.f32 %v4127, 0.0
    %v4192 = vmax.f32 %v4128, 0.0
    %v4193 = vmax.f32 %v4129, 0.0
    %v4194 = vmax.f32 %v4130, 0.0
    %v4195 = vmax.f32 %v4131, 0.0
    %v4196 = vmax.f32 %v4132, 0.0
    %v4197 = vmax.f32 %v4133, 0.0
    %v4198 = vmax.f32 %v4134, 0.0
    %v4199 = vmax.f32 %v4135, 0.0
    %v4200 = vmax.f32 %v4136, 0.0
    %v4201 = vmax.f32 %v4137, 0.0
    %v4202 = vmax.f32 %v4138, 0.0
    %v4203 = vmax.f32 %v4139, 0.0
    %v4204 = vmax.f32 %v4140, 0.0
    %v4205 = vmax.f32 %v4141, 0.0
    %v4206 = vmax.f32 %v4142, 0.0
    %v4207 = vmax.f32 %v4143, 0.0
    %v4208 = vmax.f32 %v4144, 0.0
    %v4209 = vmax.f32 %v4145, 0.0
    %v4210 = vmax.f32 %v4146, 0.0
    %v4211 = vmax.f32 %v4147, 0.0
    %v4212 = vmax.f32 %v4148, 0.0
    %v4213 = vmax.f32 %v4149, 0.0
    %v4214 = vmax.f32 %v4150, 0.0
    %v4215 = vpack.c.bf16 %v4155, %v4151
    %v4216 = vpack.c.bf16 %v4156, %v4152
    %v4217 = vpack.c.bf16 %v4157, %v4153
    %v4218 = vpack.c.bf16 %v4158, %v4154
    %v4219 = vpack.c.bf16 %v4163, %v4159
    %v4220 = vpack.c.bf16 %v4164, %v4160
    %v4221 = vpack.c.bf16 %v4165, %v4161
    %v4222 = vpack.c.bf16 %v4166, %v4162
    %v4223 = vpack.c.bf16 %v4171, %v4167
    %v4224 = vpack.c.bf16 %v4172, %v4168
    %v4225 = vpack.c.bf16 %v4173, %v4169
    %v4226 = vpack.c.bf16 %v4174, %v4170
    %v4227 = vpack.c.bf16 %v4179, %v4175
    %v4228 = vpack.c.bf16 %v4180, %v4176
    %v4229 = vpack.c.bf16 %v4181, %v4177
    %v4230 = vpack.c.bf16 %v4182, %v4178
    %v4231 = vpack.c.bf16 %v4187, %v4183
    %v4232 = vpack.c.bf16 %v4188, %v4184
    %v4233 = vpack.c.bf16 %v4189, %v4185
    %v4234 = vpack.c.bf16 %v4190, %v4186
    %v4235 = vpack.c.bf16 %v4195, %v4191
    %v4236 = vpack.c.bf16 %v4196, %v4192
    %v4237 = vpack.c.bf16 %v4197, %v4193
    %v4238 = vpack.c.bf16 %v4198, %v4194
    %v4239 = vpack.c.bf16 %v4203, %v4199
    %v4240 = vpack.c.bf16 %v4204, %v4200
    %v4241 = vpack.c.bf16 %v4205, %v4201
    %v4242 = vpack.c.bf16 %v4206, %v4202
    %v4243 = vpack.c.bf16 %v4211, %v4207
    %v4244 = vpack.c.bf16 %v4212, %v4208
    %v4245 = vpack.c.bf16 %v4213, %v4209
    %v4246 = vpack.c.bf16 %v4214, %v4210
    %s4247 = scalar_lea.vmem [#allocation7], 1024
    %v4248 = vld [vmem:[%s4247] sm:$0xff]
    %v4249 = vld [vmem:[%s4247 + $0x8] sm:$0xff]
    %v4250 = vld [vmem:[%s4247 + $0x10] sm:$0xff]
    %v4251 = vld [vmem:[%s4247 + $0x18] sm:$0xff]
    %v4252 = vld [vmem:[%s4247 + $0x20] sm:$0xff]
    %v4253 = vld [vmem:[%s4247 + $0x28] sm:$0xff]
    %v4254 = vld [vmem:[%s4247 + $0x30] sm:$0xff]
    %v4255 = vld [vmem:[%s4247 + $0x38] sm:$0xff]
    %v4256 = vld [vmem:[%s4247 + $0x40] sm:$0xff]
    %v4257 = vld [vmem:[%s4247 + $0x48] sm:$0xff]
    %v4258 = vld [vmem:[%s4247 + $0x50] sm:$0xff]
    %v4259 = vld [vmem:[%s4247 + $0x58] sm:$0xff]
    %v4260 = vld [vmem:[%s4247 + $0x60] sm:$0xff]
    %v4261 = vld [vmem:[%s4247 + $0x68] sm:$0xff]
    %v4262 = vld [vmem:[%s4247 + $0x70] sm:$0xff]
    %v4263 = vld [vmem:[%s4247 + $0x78] sm:$0xff]
    %v4264 = vld [vmem:[%s4247 + $0x80] sm:$0xff]
    %v4265 = vld [vmem:[%s4247 + $0x88] sm:$0xff]
    %v4266 = vld [vmem:[%s4247 + $0x90] sm:$0xff]
    %v4267 = vld [vmem:[%s4247 + $0x98] sm:$0xff]
    %v4268 = vld [vmem:[%s4247 + $0xa0] sm:$0xff]
    %v4269 = vld [vmem:[%s4247 + $0xa8] sm:$0xff]
    %v4270 = vld [vmem:[%s4247 + $0xb0] sm:$0xff]
    %v4271 = vld [vmem:[%s4247 + $0xb8] sm:$0xff]
    %v4272 = vld [vmem:[%s4247 + $0xc0] sm:$0xff]
    %v4273 = vld [vmem:[%s4247 + $0xc8] sm:$0xff]
    %v4274 = vld [vmem:[%s4247 + $0xd0] sm:$0xff]
    %v4275 = vld [vmem:[%s4247 + $0xd8] sm:$0xff]
    %v4276 = vld [vmem:[%s4247 + $0xe0] sm:$0xff]
    %v4277 = vld [vmem:[%s4247 + $0xe8] sm:$0xff]
    %v4278 = vld [vmem:[%s4247 + $0xf0] sm:$0xff]
    %v4279 = vld [vmem:[%s4247 + $0xf8] sm:$0xff]
    %v4280 = vld [vmem:[%s4247 + $0x100] sm:$0xff]
    %v4281 = vld [vmem:[%s4247 + $0x108] sm:$0xff]
    %v4282 = vld [vmem:[%s4247 + $0x110] sm:$0xff]
    %v4283 = vld [vmem:[%s4247 + $0x118] sm:$0xff]
    %v4284 = vld [vmem:[%s4247 + $0x120] sm:$0xff]
    %v4285 = vld [vmem:[%s4247 + $0x128] sm:$0xff]
    %v4286 = vld [vmem:[%s4247 + $0x130] sm:$0xff]
    %v4287 = vld [vmem:[%s4247 + $0x138] sm:$0xff]
    %v4288 = vld [vmem:[%s4247 + $0x140] sm:$0xff]
    %v4289 = vld [vmem:[%s4247 + $0x148] sm:$0xff]
    %v4290 = vld [vmem:[%s4247 + $0x150] sm:$0xff]
    %v4291 = vld [vmem:[%s4247 + $0x158] sm:$0xff]
    %v4292 = vld [vmem:[%s4247 + $0x160] sm:$0xff]
    %v4293 = vld [vmem:[%s4247 + $0x168] sm:$0xff]
    %v4294 = vld [vmem:[%s4247 + $0x170] sm:$0xff]
    %v4295 = vld [vmem:[%s4247 + $0x178] sm:$0xff]
    %v4296 = vld [vmem:[%s4247 + $0x180] sm:$0xff]
    %v4297 = vld [vmem:[%s4247 + $0x188] sm:$0xff]
    %v4298 = vld [vmem:[%s4247 + $0x190] sm:$0xff]
    %v4299 = vld [vmem:[%s4247 + $0x198] sm:$0xff]
    %v4300 = vld [vmem:[%s4247 + $0x1a0] sm:$0xff]
    %v4301 = vld [vmem:[%s4247 + $0x1a8] sm:$0xff]
    %v4302 = vld [vmem:[%s4247 + $0x1b0] sm:$0xff]
    %v4303 = vld [vmem:[%s4247 + $0x1b8] sm:$0xff]
    %v4304 = vld [vmem:[%s4247 + $0x1c0] sm:$0xff]
    %v4305 = vld [vmem:[%s4247 + $0x1c8] sm:$0xff]
    %v4306 = vld [vmem:[%s4247 + $0x1d0] sm:$0xff]
    %v4307 = vld [vmem:[%s4247 + $0x1d8] sm:$0xff]
    %v4308 = vld [vmem:[%s4247 + $0x1e0] sm:$0xff]
    %v4309 = vld [vmem:[%s4247 + $0x1e8] sm:$0xff]
    %v4310 = vld [vmem:[%s4247 + $0x1f0] sm:$0xff]
    %v4311 = vld [vmem:[%s4247 + $0x1f8] sm:$0xff]
    %v4312 = vld [vmem:[%s4247 + $0x200] sm:$0xff]
    %v4313 = vld [vmem:[%s4247 + $0x208] sm:$0xff]
    %v4314 = vld [vmem:[%s4247 + $0x210] sm:$0xff]
    %v4315 = vld [vmem:[%s4247 + $0x218] sm:$0xff]
    %v4316 = vld [vmem:[%s4247 + $0x220] sm:$0xff]
    %v4317 = vld [vmem:[%s4247 + $0x228] sm:$0xff]
    %v4318 = vld [vmem:[%s4247 + $0x230] sm:$0xff]
    %v4319 = vld [vmem:[%s4247 + $0x238] sm:$0xff]
    %v4320 = vld [vmem:[%s4247 + $0x240] sm:$0xff]
    %v4321 = vld [vmem:[%s4247 + $0x248] sm:$0xff]
    %v4322 = vld [vmem:[%s4247 + $0x250] sm:$0xff]
    %v4323 = vld [vmem:[%s4247 + $0x258] sm:$0xff]
    %v4324 = vld [vmem:[%s4247 + $0x260] sm:$0xff]
    %v4325 = vld [vmem:[%s4247 + $0x268] sm:$0xff]
    %v4326 = vld [vmem:[%s4247 + $0x270] sm:$0xff]
    %v4327 = vld [vmem:[%s4247 + $0x278] sm:$0xff]
    %v4328 = vld [vmem:[%s4247 + $0x280] sm:$0xff]
    %v4329 = vld [vmem:[%s4247 + $0x288] sm:$0xff]
    %v4330 = vld [vmem:[%s4247 + $0x290] sm:$0xff]
    %v4331 = vld [vmem:[%s4247 + $0x298] sm:$0xff]
    %v4332 = vld [vmem:[%s4247 + $0x2a0] sm:$0xff]
    %v4333 = vld [vmem:[%s4247 + $0x2a8] sm:$0xff]
    %v4334 = vld [vmem:[%s4247 + $0x2b0] sm:$0xff]
    %v4335 = vld [vmem:[%s4247 + $0x2b8] sm:$0xff]
    %v4336 = vld [vmem:[%s4247 + $0x2c0] sm:$0xff]
    %v4337 = vld [vmem:[%s4247 + $0x2c8] sm:$0xff]
    %v4338 = vld [vmem:[%s4247 + $0x2d0] sm:$0xff]
    %v4339 = vld [vmem:[%s4247 + $0x2d8] sm:$0xff]
    %v4340 = vld [vmem:[%s4247 + $0x2e0] sm:$0xff]
    %v4341 = vld [vmem:[%s4247 + $0x2e8] sm:$0xff]
    %v4342 = vld [vmem:[%s4247 + $0x2f0] sm:$0xff]
    %v4343 = vld [vmem:[%s4247 + $0x2f8] sm:$0xff]
    %v4344 = vld [vmem:[%s4247 + $0x300] sm:$0xff]
    %v4345 = vld [vmem:[%s4247 + $0x308] sm:$0xff]
    %v4346 = vld [vmem:[%s4247 + $0x310] sm:$0xff]
    %v4347 = vld [vmem:[%s4247 + $0x318] sm:$0xff]
    %v4348 = vld [vmem:[%s4247 + $0x320] sm:$0xff]
    %v4349 = vld [vmem:[%s4247 + $0x328] sm:$0xff]
    %v4350 = vld [vmem:[%s4247 + $0x330] sm:$0xff]
    %v4351 = vld [vmem:[%s4247 + $0x338] sm:$0xff]
    %v4352 = vld [vmem:[%s4247 + $0x340] sm:$0xff]
    %v4353 = vld [vmem:[%s4247 + $0x348] sm:$0xff]
    %v4354 = vld [vmem:[%s4247 + $0x350] sm:$0xff]
    %v4355 = vld [vmem:[%s4247 + $0x358] sm:$0xff]
    %v4356 = vld [vmem:[%s4247 + $0x360] sm:$0xff]
    %v4357 = vld [vmem:[%s4247 + $0x368] sm:$0xff]
    %v4358 = vld [vmem:[%s4247 + $0x370] sm:$0xff]
    %v4359 = vld [vmem:[%s4247 + $0x378] sm:$0xff]
    %v4360 = vld [vmem:[%s4247 + $0x380] sm:$0xff]
    %v4361 = vld [vmem:[%s4247 + $0x388] sm:$0xff]
    %v4362 = vld [vmem:[%s4247 + $0x390] sm:$0xff]
    %v4363 = vld [vmem:[%s4247 + $0x398] sm:$0xff]
    %v4364 = vld [vmem:[%s4247 + $0x3a0] sm:$0xff]
    %v4365 = vld [vmem:[%s4247 + $0x3a8] sm:$0xff]
    %v4366 = vld [vmem:[%s4247 + $0x3b0] sm:$0xff]
    %v4367 = vld [vmem:[%s4247 + $0x3b8] sm:$0xff]
    %v4368 = vld [vmem:[%s4247 + $0x3c0] sm:$0xff]
    %v4369 = vld [vmem:[%s4247 + $0x3c8] sm:$0xff]
    %v4370 = vld [vmem:[%s4247 + $0x3d0] sm:$0xff]
    %v4371 = vld [vmem:[%s4247 + $0x3d8] sm:$0xff]
    %v4372 = vld [vmem:[%s4247 + $0x3e0] sm:$0xff]
    %v4373 = vld [vmem:[%s4247 + $0x3e8] sm:$0xff]
    %v4374 = vld [vmem:[%s4247 + $0x3f0] sm:$0xff]
    %v4375 = vld [vmem:[%s4247 + $0x3f8] sm:$0xff]
    %v4376 = vld [vmem:[#allocation13 + $0xf] sm:$0xf]
    %v4378 = vlaneseq
    %v4379 = vshrl.u32 %v4378, 7
    %v4380 = vsub.s32 0, %v4379
    %v4381 = vrot.slane %v4376, %v4380
    %v4382 = vlaneseq
    %v4383 = vshrl.u32 %v4382, 7
    %v4384 = vsub.s32 1, %v4383
    %v4385 = vrot.slane %v4376, %v4384
    %v4386 = vlaneseq
    %v4387 = vshrl.u32 %v4386, 7
    %v4388 = vsub.s32 2, %v4387
    %v4389 = vrot.slane %v4376, %v4388
    %v4390 = vlaneseq
    %v4391 = vshrl.u32 %v4390, 7
    %v4392 = vsub.s32 3, %v4391
    %v4393 = vrot.slane %v4376, %v4392
    %v4526 = vunpack.c.l.b16 %v4248
    %v4527 = vunpack.c.h.b16 %v4248
    %v4528 = vunpack.c.l.b16 %v4249
    %v4529 = vunpack.c.h.b16 %v4249
    %v4530 = vunpack.c.l.b16 %v4250
    %v4531 = vunpack.c.h.b16 %v4250
    %v4532 = vunpack.c.l.b16 %v4251
    %v4533 = vunpack.c.h.b16 %v4251
    %v4534 = vunpack.c.l.b16 %v4252
    %v4535 = vunpack.c.h.b16 %v4252
    %v4536 = vunpack.c.l.b16 %v4253
    %v4537 = vunpack.c.h.b16 %v4253
    %v4538 = vunpack.c.l.b16 %v4254
    %v4539 = vunpack.c.h.b16 %v4254
    %v4540 = vunpack.c.l.b16 %v4255
    %v4541 = vunpack.c.h.b16 %v4255
    %v4542 = vunpack.c.l.b16 %v4256
    %v4543 = vunpack.c.h.b16 %v4256
    %v4544 = vunpack.c.l.b16 %v4257
    %v4545 = vunpack.c.h.b16 %v4257
    %v4546 = vunpack.c.l.b16 %v4258
    %v4547 = vunpack.c.h.b16 %v4258
    %v4548 = vunpack.c.l.b16 %v4259
    %v4549 = vunpack.c.h.b16 %v4259
    %v4550 = vunpack.c.l.b16 %v4260
    %v4551 = vunpack.c.h.b16 %v4260
    %v4552 = vunpack.c.l.b16 %v4261
    %v4553 = vunpack.c.h.b16 %v4261
    %v4554 = vunpack.c.l.b16 %v4262
    %v4555 = vunpack.c.h.b16 %v4262
    %v4556 = vunpack.c.l.b16 %v4263
    %v4557 = vunpack.c.h.b16 %v4263
    %v4558 = vunpack.c.l.b16 %v4264
    %v4559 = vunpack.c.h.b16 %v4264
    %v4560 = vunpack.c.l.b16 %v4265
    %v4561 = vunpack.c.h.b16 %v4265
    %v4562 = vunpack.c.l.b16 %v4266
    %v4563 = vunpack.c.h.b16 %v4266
    %v4564 = vunpack.c.l.b16 %v4267
    %v4565 = vunpack.c.h.b16 %v4267
    %v4566 = vunpack.c.l.b16 %v4268
    %v4567 = vunpack.c.h.b16 %v4268
    %v4568 = vunpack.c.l.b16 %v4269
    %v4569 = vunpack.c.h.b16 %v4269
    %v4570 = vunpack.c.l.b16 %v4270
    %v4571 = vunpack.c.h.b16 %v4270
    %v4572 = vunpack.c.l.b16 %v4271
    %v4573 = vunpack.c.h.b16 %v4271
    %v4574 = vunpack.c.l.b16 %v4272
    %v4575 = vunpack.c.h.b16 %v4272
    %v4576 = vunpack.c.l.b16 %v4273
    %v4577 = vunpack.c.h.b16 %v4273
    %v4578 = vunpack.c.l.b16 %v4274
    %v4579 = vunpack.c.h.b16 %v4274
    %v4580 = vunpack.c.l.b16 %v4275
    %v4581 = vunpack.c.h.b16 %v4275
    %v4582 = vunpack.c.l.b16 %v4276
    %v4583 = vunpack.c.h.b16 %v4276
    %v4584 = vunpack.c.l.b16 %v4277
    %v4585 = vunpack.c.h.b16 %v4277
    %v4586 = vunpack.c.l.b16 %v4278
    %v4587 = vunpack.c.h.b16 %v4278
    %v4588 = vunpack.c.l.b16 %v4279
    %v4589 = vunpack.c.h.b16 %v4279
    %v4590 = vunpack.c.l.b16 %v4280
    %v4591 = vunpack.c.h.b16 %v4280
    %v4592 = vunpack.c.l.b16 %v4281
    %v4593 = vunpack.c.h.b16 %v4281
    %v4594 = vunpack.c.l.b16 %v4282
    %v4595 = vunpack.c.h.b16 %v4282
    %v4596 = vunpack.c.l.b16 %v4283
    %v4597 = vunpack.c.h.b16 %v4283
    %v4598 = vunpack.c.l.b16 %v4284
    %v4599 = vunpack.c.h.b16 %v4284
    %v4600 = vunpack.c.l.b16 %v4285
    %v4601 = vunpack.c.h.b16 %v4285
    %v4602 = vunpack.c.l.b16 %v4286
    %v4603 = vunpack.c.h.b16 %v4286
    %v4604 = vunpack.c.l.b16 %v4287
    %v4605 = vunpack.c.h.b16 %v4287
    %v4606 = vunpack.c.l.b16 %v4288
    %v4607 = vunpack.c.h.b16 %v4288
    %v4608 = vunpack.c.l.b16 %v4289
    %v4609 = vunpack.c.h.b16 %v4289
    %v4610 = vunpack.c.l.b16 %v4290
    %v4611 = vunpack.c.h.b16 %v4290
    %v4612 = vunpack.c.l.b16 %v4291
    %v4613 = vunpack.c.h.b16 %v4291
    %v4614 = vunpack.c.l.b16 %v4292
    %v4615 = vunpack.c.h.b16 %v4292
    %v4616 = vunpack.c.l.b16 %v4293
    %v4617 = vunpack.c.h.b16 %v4293
    %v4618 = vunpack.c.l.b16 %v4294
    %v4619 = vunpack.c.h.b16 %v4294
    %v4620 = vunpack.c.l.b16 %v4295
    %v4621 = vunpack.c.h.b16 %v4295
    %v4622 = vunpack.c.l.b16 %v4296
    %v4623 = vunpack.c.h.b16 %v4296
    %v4624 = vunpack.c.l.b16 %v4297
    %v4625 = vunpack.c.h.b16 %v4297
    %v4626 = vunpack.c.l.b16 %v4298
    %v4627 = vunpack.c.h.b16 %v4298
    %v4628 = vunpack.c.l.b16 %v4299
    %v4629 = vunpack.c.h.b16 %v4299
    %v4630 = vunpack.c.l.b16 %v4300
    %v4631 = vunpack.c.h.b16 %v4300
    %v4632 = vunpack.c.l.b16 %v4301
    %v4633 = vunpack.c.h.b16 %v4301
    %v4634 = vunpack.c.l.b16 %v4302
    %v4635 = vunpack.c.h.b16 %v4302
    %v4636 = vunpack.c.l.b16 %v4303
    %v4637 = vunpack.c.h.b16 %v4303
    %v4638 = vunpack.c.l.b16 %v4304
    %v4639 = vunpack.c.h.b16 %v4304
    %v4640 = vunpack.c.l.b16 %v4305
    %v4641 = vunpack.c.h.b16 %v4305
    %v4642 = vunpack.c.l.b16 %v4306
    %v4643 = vunpack.c.h.b16 %v4306
    %v4644 = vunpack.c.l.b16 %v4307
    %v4645 = vunpack.c.h.b16 %v4307
    %v4646 = vunpack.c.l.b16 %v4308
    %v4647 = vunpack.c.h.b16 %v4308
    %v4648 = vunpack.c.l.b16 %v4309
    %v4649 = vunpack.c.h.b16 %v4309
    %v4650 = vunpack.c.l.b16 %v4310
    %v4651 = vunpack.c.h.b16 %v4310
    %v4652 = vunpack.c.l.b16 %v4311
    %v4653 = vunpack.c.h.b16 %v4311
    %v4654 = vunpack.c.l.b16 %v4312
    %v4655 = vunpack.c.h.b16 %v4312
    %v4656 = vunpack.c.l.b16 %v4313
    %v4657 = vunpack.c.h.b16 %v4313
    %v4658 = vunpack.c.l.b16 %v4314
    %v4659 = vunpack.c.h.b16 %v4314
    %v4660 = vunpack.c.l.b16 %v4315
    %v4661 = vunpack.c.h.b16 %v4315
    %v4662 = vunpack.c.l.b16 %v4316
    %v4663 = vunpack.c.h.b16 %v4316
    %v4664 = vunpack.c.l.b16 %v4317
    %v4665 = vunpack.c.h.b16 %v4317
    %v4666 = vunpack.c.l.b16 %v4318
    %v4667 = vunpack.c.h.b16 %v4318
    %v4668 = vunpack.c.l.b16 %v4319
    %v4669 = vunpack.c.h.b16 %v4319
    %v4670 = vunpack.c.l.b16 %v4320
    %v4671 = vunpack.c.h.b16 %v4320
    %v4672 = vunpack.c.l.b16 %v4321
    %v4673 = vunpack.c.h.b16 %v4321
    %v4674 = vunpack.c.l.b16 %v4322
    %v4675 = vunpack.c.h.b16 %v4322
    %v4676 = vunpack.c.l.b16 %v4323
    %v4677 = vunpack.c.h.b16 %v4323
    %v4678 = vunpack.c.l.b16 %v4324
    %v4679 = vunpack.c.h.b16 %v4324
    %v4680 = vunpack.c.l.b16 %v4325
    %v4681 = vunpack.c.h.b16 %v4325
    %v4682 = vunpack.c.l.b16 %v4326
    %v4683 = vunpack.c.h.b16 %v4326
    %v4684 = vunpack.c.l.b16 %v4327
    %v4685 = vunpack.c.h.b16 %v4327
    %v4686 = vunpack.c.l.b16 %v4328
    %v4687 = vunpack.c.h.b16 %v4328
    %v4688 = vunpack.c.l.b16 %v4329
    %v4689 = vunpack.c.h.b16 %v4329
    %v4690 = vunpack.c.l.b16 %v4330
    %v4691 = vunpack.c.h.b16 %v4330
    %v4692 = vunpack.c.l.b16 %v4331
    %v4693 = vunpack.c.h.b16 %v4331
    %v4694 = vunpack.c.l.b16 %v4332
    %v4695 = vunpack.c.h.b16 %v4332
    %v4696 = vunpack.c.l.b16 %v4333
    %v4697 = vunpack.c.h.b16 %v4333
    %v4698 = vunpack.c.l.b16 %v4334
    %v4699 = vunpack.c.h.b16 %v4334
    %v4700 = vunpack.c.l.b16 %v4335
    %v4701 = vunpack.c.h.b16 %v4335
    %v4702 = vunpack.c.l.b16 %v4336
    %v4703 = vunpack.c.h.b16 %v4336
    %v4704 = vunpack.c.l.b16 %v4337
    %v4705 = vunpack.c.h.b16 %v4337
    %v4706 = vunpack.c.l.b16 %v4338
    %v4707 = vunpack.c.h.b16 %v4338
    %v4708 = vunpack.c.l.b16 %v4339
    %v4709 = vunpack.c.h.b16 %v4339
    %v4710 = vunpack.c.l.b16 %v4340
    %v4711 = vunpack.c.h.b16 %v4340
    %v4712 = vunpack.c.l.b16 %v4341
    %v4713 = vunpack.c.h.b16 %v4341
    %v4714 = vunpack.c.l.b16 %v4342
    %v4715 = vunpack.c.h.b16 %v4342
    %v4716 = vunpack.c.l.b16 %v4343
    %v4717 = vunpack.c.h.b16 %v4343
    %v4718 = vunpack.c.l.b16 %v4344
    %v4719 = vunpack.c.h.b16 %v4344
    %v4720 = vunpack.c.l.b16 %v4345
    %v4721 = vunpack.c.h.b16 %v4345
    %v4722 = vunpack.c.l.b16 %v4346
    %v4723 = vunpack.c.h.b16 %v4346
    %v4724 = vunpack.c.l.b16 %v4347
    %v4725 = vunpack.c.h.b16 %v4347
    %v4726 = vunpack.c.l.b16 %v4348
    %v4727 = vunpack.c.h.b16 %v4348
    %v4728 = vunpack.c.l.b16 %v4349
    %v4729 = vunpack.c.h.b16 %v4349
    %v4730 = vunpack.c.l.b16 %v4350
    %v4731 = vunpack.c.h.b16 %v4350
    %v4732 = vunpack.c.l.b16 %v4351
    %v4733 = vunpack.c.h.b16 %v4351
    %v4734 = vunpack.c.l.b16 %v4352
    %v4735 = vunpack.c.h.b16 %v4352
    %v4736 = vunpack.c.l.b16 %v4353
    %v4737 = vunpack.c.h.b16 %v4353
    %v4738 = vunpack.c.l.b16 %v4354
    %v4739 = vunpack.c.h.b16 %v4354
    %v4740 = vunpack.c.l.b16 %v4355
    %v4741 = vunpack.c.h.b16 %v4355
    %v4742 = vunpack.c.l.b16 %v4356
    %v4743 = vunpack.c.h.b16 %v4356
    %v4744 = vunpack.c.l.b16 %v4357
    %v4745 = vunpack.c.h.b16 %v4357
    %v4746 = vunpack.c.l.b16 %v4358
    %v4747 = vunpack.c.h.b16 %v4358
    %v4748 = vunpack.c.l.b16 %v4359
    %v4749 = vunpack.c.h.b16 %v4359
    %v4750 = vunpack.c.l.b16 %v4360
    %v4751 = vunpack.c.h.b16 %v4360
    %v4752 = vunpack.c.l.b16 %v4361
    %v4753 = vunpack.c.h.b16 %v4361
    %v4754 = vunpack.c.l.b16 %v4362
    %v4755 = vunpack.c.h.b16 %v4362
    %v4756 = vunpack.c.l.b16 %v4363
    %v4757 = vunpack.c.h.b16 %v4363
    %v4758 = vunpack.c.l.b16 %v4364
    %v4759 = vunpack.c.h.b16 %v4364
    %v4760 = vunpack.c.l.b16 %v4365
    %v4761 = vunpack.c.h.b16 %v4365
    %v4762 = vunpack.c.l.b16 %v4366
    %v4763 = vunpack.c.h.b16 %v4366
    %v4764 = vunpack.c.l.b16 %v4367
    %v4765 = vunpack.c.h.b16 %v4367
    %v4766 = vunpack.c.l.b16 %v4368
    %v4767 = vunpack.c.h.b16 %v4368
    %v4768 = vunpack.c.l.b16 %v4369
    %v4769 = vunpack.c.h.b16 %v4369
    %v4770 = vunpack.c.l.b16 %v4370
    %v4771 = vunpack.c.h.b16 %v4370
    %v4772 = vunpack.c.l.b16 %v4371
    %v4773 = vunpack.c.h.b16 %v4371
    %v4774 = vunpack.c.l.b16 %v4372
    %v4775 = vunpack.c.h.b16 %v4372
    %v4776 = vunpack.c.l.b16 %v4373
    %v4777 = vunpack.c.h.b16 %v4373
    %v4778 = vunpack.c.l.b16 %v4374
    %v4779 = vunpack.c.h.b16 %v4374
    %v4780 = vunpack.c.l.b16 %v4375
    %v4781 = vunpack.c.h.b16 %v4375
    %v4782 = vpack.c.b16 %v4530, %v4526
    %v4783 = vpack.c.b16 %v4531, %v4527
    %v4784 = vpack.c.b16 %v4532, %v4528
    %v4785 = vpack.c.b16 %v4533, %v4529
    %v4786 = vpack.c.b16 %v4538, %v4534
    %v4787 = vpack.c.b16 %v4539, %v4535
    %v4788 = vpack.c.b16 %v4540, %v4536
    %v4789 = vpack.c.b16 %v4541, %v4537
    %v4790 = vpack.c.b16 %v4546, %v4542
    %v4791 = vpack.c.b16 %v4547, %v4543
    %v4792 = vpack.c.b16 %v4548, %v4544
    %v4793 = vpack.c.b16 %v4549, %v4545
    %v4794 = vpack.c.b16 %v4554, %v4550
    %v4795 = vpack.c.b16 %v4555, %v4551
    %v4796 = vpack.c.b16 %v4556, %v4552
    %v4797 = vpack.c.b16 %v4557, %v4553
    %v4798 = vpack.c.b16 %v4562, %v4558
    %v4799 = vpack.c.b16 %v4563, %v4559
    %v4800 = vpack.c.b16 %v4564, %v4560
    %v4801 = vpack.c.b16 %v4565, %v4561
    %v4802 = vpack.c.b16 %v4570, %v4566
    %v4803 = vpack.c.b16 %v4571, %v4567
    %v4804 = vpack.c.b16 %v4572, %v4568
    %v4805 = vpack.c.b16 %v4573, %v4569
    %v4806 = vpack.c.b16 %v4578, %v4574
    %v4807 = vpack.c.b16 %v4579, %v4575
    %v4808 = vpack.c.b16 %v4580, %v4576
    %v4809 = vpack.c.b16 %v4581, %v4577
    %v4810 = vpack.c.b16 %v4586, %v4582
    %v4811 = vpack.c.b16 %v4587, %v4583
    %v4812 = vpack.c.b16 %v4588, %v4584
    %v4813 = vpack.c.b16 %v4589, %v4585
    %v4814 = vpack.c.b16 %v4594, %v4590
    %v4815 = vpack.c.b16 %v4595, %v4591
    %v4816 = vpack.c.b16 %v4596, %v4592
    %v4817 = vpack.c.b16 %v4597, %v4593
    %v4818 = vpack.c.b16 %v4602, %v4598
    %v4819 = vpack.c.b16 %v4603, %v4599
    %v4820 = vpack.c.b16 %v4604, %v4600
    %v4821 = vpack.c.b16 %v4605, %v4601
    %v4822 = vpack.c.b16 %v4610, %v4606
    %v4823 = vpack.c.b16 %v4611, %v4607
    %v4824 = vpack.c.b16 %v4612, %v4608
    %v4825 = vpack.c.b16 %v4613, %v4609
    %v4826 = vpack.c.b16 %v4618, %v4614
    %v4827 = vpack.c.b16 %v4619, %v4615
    %v4828 = vpack.c.b16 %v4620, %v4616
    %v4829 = vpack.c.b16 %v4621, %v4617
    %v4830 = vpack.c.b16 %v4626, %v4622
    %v4831 = vpack.c.b16 %v4627, %v4623
    %v4832 = vpack.c.b16 %v4628, %v4624
    %v4833 = vpack.c.b16 %v4629, %v4625
    %v4834 = vpack.c.b16 %v4634, %v4630
    %v4835 = vpack.c.b16 %v4635, %v4631
    %v4836 = vpack.c.b16 %v4636, %v4632
    %v4837 = vpack.c.b16 %v4637, %v4633
    %v4838 = vpack.c.b16 %v4642, %v4638
    %v4839 = vpack.c.b16 %v4643, %v4639
    %v4840 = vpack.c.b16 %v4644, %v4640
    %v4841 = vpack.c.b16 %v4645, %v4641
    %v4842 = vpack.c.b16 %v4650, %v4646
    %v4843 = vpack.c.b16 %v4651, %v4647
    %v4844 = vpack.c.b16 %v4652, %v4648
    %v4845 = vpack.c.b16 %v4653, %v4649
    %v4846 = vpack.c.b16 %v4658, %v4654
    %v4847 = vpack.c.b16 %v4659, %v4655
    %v4848 = vpack.c.b16 %v4660, %v4656
    %v4849 = vpack.c.b16 %v4661, %v4657
    %v4850 = vpack.c.b16 %v4666, %v4662
    %v4851 = vpack.c.b16 %v4667, %v4663
    %v4852 = vpack.c.b16 %v4668, %v4664
    %v4853 = vpack.c.b16 %v4669, %v4665
    %v4854 = vpack.c.b16 %v4674, %v4670
    %v4855 = vpack.c.b16 %v4675, %v4671
    %v4856 = vpack.c.b16 %v4676, %v4672
    %v4857 = vpack.c.b16 %v4677, %v4673
    %v4858 = vpack.c.b16 %v4682, %v4678
    %v4859 = vpack.c.b16 %v4683, %v4679
    %v4860 = vpack.c.b16 %v4684, %v4680
    %v4861 = vpack.c.b16 %v4685, %v4681
    %v4862 = vpack.c.b16 %v4690, %v4686
    %v4863 = vpack.c.b16 %v4691, %v4687
    %v4864 = vpack.c.b16 %v4692, %v4688
    %v4865 = vpack.c.b16 %v4693, %v4689
    %v4866 = vpack.c.b16 %v4698, %v4694
    %v4867 = vpack.c.b16 %v4699, %v4695
    %v4868 = vpack.c.b16 %v4700, %v4696
    %v4869 = vpack.c.b16 %v4701, %v4697
    %v4870 = vpack.c.b16 %v4706, %v4702
    %v4871 = vpack.c.b16 %v4707, %v4703
    %v4872 = vpack.c.b16 %v4708, %v4704
    %v4873 = vpack.c.b16 %v4709, %v4705
    %v4874 = vpack.c.b16 %v4714, %v4710
    %v4875 = vpack.c.b16 %v4715, %v4711
    %v4876 = vpack.c.b16 %v4716, %v4712
    %v4877 = vpack.c.b16 %v4717, %v4713
    %v4878 = vpack.c.b16 %v4722, %v4718
    %v4879 = vpack.c.b16 %v4723, %v4719
    %v4880 = vpack.c.b16 %v4724, %v4720
    %v4881 = vpack.c.b16 %v4725, %v4721
    %v4882 = vpack.c.b16 %v4730, %v4726
    %v4883 = vpack.c.b16 %v4731, %v4727
    %v4884 = vpack.c.b16 %v4732, %v4728
    %v4885 = vpack.c.b16 %v4733, %v4729
    %v4886 = vpack.c.b16 %v4738, %v4734
    %v4887 = vpack.c.b16 %v4739, %v4735
    %v4888 = vpack.c.b16 %v4740, %v4736
    %v4889 = vpack.c.b16 %v4741, %v4737
    %v4890 = vpack.c.b16 %v4746, %v4742
    %v4891 = vpack.c.b16 %v4747, %v4743
    %v4892 = vpack.c.b16 %v4748, %v4744
    %v4893 = vpack.c.b16 %v4749, %v4745
    %v4894 = vpack.c.b16 %v4754, %v4750
    %v4895 = vpack.c.b16 %v4755, %v4751
    %v4896 = vpack.c.b16 %v4756, %v4752
    %v4897 = vpack.c.b16 %v4757, %v4753
    %v4898 = vpack.c.b16 %v4762, %v4758
    %v4899 = vpack.c.b16 %v4763, %v4759
    %v4900 = vpack.c.b16 %v4764, %v4760
    %v4901 = vpack.c.b16 %v4765, %v4761
    %v4902 = vpack.c.b16 %v4770, %v4766
    %v4903 = vpack.c.b16 %v4771, %v4767
    %v4904 = vpack.c.b16 %v4772, %v4768
    %v4905 = vpack.c.b16 %v4773, %v4769
    %v4906 = vpack.c.b16 %v4778, %v4774
    %v4907 = vpack.c.b16 %v4779, %v4775
    %v4908 = vpack.c.b16 %v4780, %v4776
    %v4909 = vpack.c.b16 %v4781, %v4777
    %5038 = vmatprep.subr.bf16.mxu0 %v4811
    %5039 = vmatpush1.bf16.msra.mxu0 %v4810
    %5040 = vmatprep.subr.bf16.mxu0 %v4807
    %5041 = vmatpush1.bf16.msra.mxu0 %v4806
    %5042 = vmatprep.subr.bf16.mxu0 %v4803
    %5043 = vmatpush1.bf16.msra.mxu0 %v4802
    %5044 = vmatprep.subr.bf16.mxu0 %v4799
    %5045 = vmatpush1.bf16.msra.mxu0 %v4798
    %5046 = vmatprep.subr.bf16.mxu0 %v4795
    %5047 = vmatpush1.bf16.msra.mxu0 %v4794
    %5048 = vmatprep.subr.bf16.mxu0 %v4791
    %5049 = vmatpush1.bf16.msra.mxu0 %v4790
    %5050 = vmatprep.subr.bf16.mxu0 %v4787
    %5051 = vmatpush1.bf16.msra.mxu0 %v4786
    %5052 = vmatprep.subr.bf16.mxu0 %v4783
    %5053 = vmatpush1.bf16.msra.mxu0 %v4782
    %5054 = vmatprep.subr.bf16.mxu0 %v4843
    %5055 = vmatpush2.bf16.msra.mxu0 %v4842
    %5056 = vmatprep.subr.bf16.mxu0 %v4839
    %5057 = vmatpush2.bf16.msra.mxu0 %v4838
    %5058 = vmatprep.subr.bf16.mxu0 %v4835
    %5059 = vmatpush2.bf16.msra.mxu0 %v4834
    %5060 = vmatprep.subr.bf16.mxu0 %v4831
    %5061 = vmatpush2.bf16.msra.mxu0 %v4830
    %5062 = vmatprep.subr.bf16.mxu0 %v4827
    %5063 = vmatpush2.bf16.msra.mxu0 %v4826
    %5064 = vmatprep.subr.bf16.mxu0 %v4823
    %5065 = vmatpush2.bf16.msra.mxu0 %v4822
    %5066 = vmatprep.subr.bf16.mxu0 %v4819
    %5067 = vmatpush2.bf16.msra.mxu0 %v4818
    %5068 = vmatprep.subr.bf16.mxu0 %v4815
    %5069 = vmatpush2.bf16.msra.mxu0 %v4814
    %5070 = vmatprep.mubr.bf16.mxu0 %v4216
    %5071 = vmatmul.mubr.bf16.gmra.mxu0 %v4215
    %v5072 = vpop.f32.mrf.mxu0
    %v5073 = vadd.f32 %v4381, %v5072
    %v5074 = vpop.f32.mrf.mxu0
    %v5075 = vadd.f32 %v4385, %v5074
    %v5076 = vpop.f32.mrf.mxu0
    %v5077 = vadd.f32 %v4381, %v5076
    %v5078 = vpop.f32.mrf.mxu0
    %v5079 = vadd.f32 %v4385, %v5078
    %5080 = vmatprep.mubr.bf16.mxu0 %v4220
    %5081 = vmatmul.mubr.bf16.gmra.mxu0 %v4219
    %v5082 = vpop.f32.mrf.mxu0
    %v5083 = vadd.f32 %v4381, %v5082
    %v5084 = vpop.f32.mrf.mxu0
    %v5085 = vadd.f32 %v4385, %v5084
    %v5086 = vpop.f32.mrf.mxu0
    %v5087 = vadd.f32 %v4381, %v5086
    %v5088 = vpop.f32.mrf.mxu0
    %v5089 = vadd.f32 %v4385, %v5088
    %5090 = vmatprep.mubr.bf16.mxu0 %v4224
    %5091 = vmatmul.mubr.bf16.gmra.mxu0 %v4223
    %v5092 = vpop.f32.mrf.mxu0
    %v5093 = vadd.f32 %v4381, %v5092
    %v5094 = vpop.f32.mrf.mxu0
    %v5095 = vadd.f32 %v4385, %v5094
    %v5096 = vpop.f32.mrf.mxu0
    %v5097 = vadd.f32 %v4381, %v5096
    %v5098 = vpop.f32.mrf.mxu0
    %v5099 = vadd.f32 %v4385, %v5098
    %5100 = vmatprep.mubr.bf16.mxu0 %v4228
    %5101 = vmatmul.mubr.bf16.gmra.mxu0 %v4227
    %v5102 = vpop.f32.mrf.mxu0
    %v5103 = vadd.f32 %v4381, %v5102
    %v5104 = vpop.f32.mrf.mxu0
    %v5105 = vadd.f32 %v4385, %v5104
    %v5106 = vpop.f32.mrf.mxu0
    %v5107 = vadd.f32 %v4381, %v5106
    %v5108 = vpop.f32.mrf.mxu0
    %v5109 = vadd.f32 %v4385, %v5108
    %5110 = vmatprep.mubr.bf16.mxu0 %v4232
    %5111 = vmatmul.mubr.bf16.gmra.mxu0 %v4231
    %v5112 = vpop.f32.mrf.mxu0
    %v5113 = vadd.f32 %v4381, %v5112
    %v5114 = vpop.f32.mrf.mxu0
    %v5115 = vadd.f32 %v4385, %v5114
    %v5116 = vpop.f32.mrf.mxu0
    %v5117 = vadd.f32 %v4381, %v5116
    %v5118 = vpop.f32.mrf.mxu0
    %v5119 = vadd.f32 %v4385, %v5118
    %5120 = vmatprep.mubr.bf16.mxu0 %v4236
    %5121 = vmatmul.mubr.bf16.gmra.mxu0 %v4235
    %v5122 = vpop.f32.mrf.mxu0
    %v5123 = vadd.f32 %v4381, %v5122
    %v5124 = vpop.f32.mrf.mxu0
    %v5125 = vadd.f32 %v4385, %v5124
    %v5126 = vpop.f32.mrf.mxu0
    %v5127 = vadd.f32 %v4381, %v5126
    %v5128 = vpop.f32.mrf.mxu0
    %v5129 = vadd.f32 %v4385, %v5128
    %5130 = vmatprep.mubr.bf16.mxu0 %v4240
    %5131 = vmatmul.mubr.bf16.gmra.mxu0 %v4239
    %v5132 = vpop.f32.mrf.mxu0
    %v5133 = vadd.f32 %v4381, %v5132
    %v5134 = vpop.f32.mrf.mxu0
    %v5135 = vadd.f32 %v4385, %v5134
    %v5136 = vpop.f32.mrf.mxu0
    %v5137 = vadd.f32 %v4381, %v5136
    %v5138 = vpop.f32.mrf.mxu0
    %v5139 = vadd.f32 %v4385, %v5138
    %5140 = vmatprep.mubr.bf16.mxu0 %v4244
    %5141 = vmatmul.mubr.bf16.gmra.mxu0 %v4243
    %v5142 = vpop.f32.mrf.mxu0
    %v5143 = vadd.f32 %v4381, %v5142
    %v5144 = vpop.f32.mrf.mxu0
    %v5145 = vadd.f32 %v4385, %v5144
    %v5146 = vpop.f32.mrf.mxu0
    %v5147 = vadd.f32 %v4381, %v5146
    %v5148 = vpop.f32.mrf.mxu0
    %v5149 = vadd.f32 %v4385, %v5148
    %5150 = vdwg.mxu0
    %5151 = vmatprep.subr.bf16.mxu0 %v4875
    %5152 = vmatpush1.bf16.msra.mxu0 %v4874
    %5153 = vmatprep.subr.bf16.mxu0 %v4871
    %5154 = vmatpush1.bf16.msra.mxu0 %v4870
    %5155 = vmatprep.subr.bf16.mxu0 %v4867
    %5156 = vmatpush1.bf16.msra.mxu0 %v4866
    %5157 = vmatprep.subr.bf16.mxu0 %v4863
    %5158 = vmatpush1.bf16.msra.mxu0 %v4862
    %5159 = vmatprep.subr.bf16.mxu0 %v4859
    %5160 = vmatpush1.bf16.msra.mxu0 %v4858
    %5161 = vmatprep.subr.bf16.mxu0 %v4855
    %5162 = vmatpush1.bf16.msra.mxu0 %v4854
    %5163 = vmatprep.subr.bf16.mxu0 %v4851
    %5164 = vmatpush1.bf16.msra.mxu0 %v4850
    %5165 = vmatprep.subr.bf16.mxu0 %v4847
    %5166 = vmatpush1.bf16.msra.mxu0 %v4846
    %5167 = vmatprep.subr.bf16.mxu0 %v4907
    %5168 = vmatpush2.bf16.msra.mxu0 %v4906
    %5169 = vmatprep.subr.bf16.mxu0 %v4903
    %5170 = vmatpush2.bf16.msra.mxu0 %v4902
    %5171 = vmatprep.subr.bf16.mxu0 %v4899
    %5172 = vmatpush2.bf16.msra.mxu0 %v4898
    %5173 = vmatprep.subr.bf16.mxu0 %v4895
    %5174 = vmatpush2.bf16.msra.mxu0 %v4894
    %5175 = vmatprep.subr.bf16.mxu0 %v4891
    %5176 = vmatpush2.bf16.msra.mxu0 %v4890
    %5177 = vmatprep.subr.bf16.mxu0 %v4887
    %5178 = vmatpush2.bf16.msra.mxu0 %v4886
    %5179 = vmatprep.subr.bf16.mxu0 %v4883
    %5180 = vmatpush2.bf16.msra.mxu0 %v4882
    %5181 = vmatprep.subr.bf16.mxu0 %v4879
    %5182 = vmatpush2.bf16.msra.mxu0 %v4878
    %5183 = vmatprep.mubr.bf16.mxu0 %v4218
    %5184 = vmatmul.mubr.bf16.gmra.mxu0 %v4217
    %v5185 = vpop.f32.mrf.mxu0
    %v5186 = vadd.f32 %v5073, %v5185
    %v5187 = vpop.f32.mrf.mxu0
    %v5188 = vadd.f32 %v5075, %v5187
    %v5189 = vpop.f32.mrf.mxu0
    %v5190 = vadd.f32 %v5077, %v5189
    %v5191 = vpop.f32.mrf.mxu0
    %v5192 = vadd.f32 %v5079, %v5191
    %5193 = vmatprep.mubr.bf16.mxu0 %v4222
    %5194 = vmatmul.mubr.bf16.gmra.mxu0 %v4221
    %v5195 = vpop.f32.mrf.mxu0
    %v5196 = vadd.f32 %v5083, %v5195
    %v5197 = vpop.f32.mrf.mxu0
    %v5198 = vadd.f32 %v5085, %v5197
    %v5199 = vpop.f32.mrf.mxu0
    %v5200 = vadd.f32 %v5087, %v5199
    %v5201 = vpop.f32.mrf.mxu0
    %v5202 = vadd.f32 %v5089, %v5201
    %5203 = vmatprep.mubr.bf16.mxu0 %v4226
    %5204 = vmatmul.mubr.bf16.gmra.mxu0 %v4225
    %v5205 = vpop.f32.mrf.mxu0
    %v5206 = vadd.f32 %v5093, %v5205
    %v5207 = vpop.f32.mrf.mxu0
    %v5208 = vadd.f32 %v5095, %v5207
    %v5209 = vpop.f32.mrf.mxu0
    %v5210 = vadd.f32 %v5097, %v5209
    %v5211 = vpop.f32.mrf.mxu0
    %v5212 = vadd.f32 %v5099, %v5211
    %5213 = vmatprep.mubr.bf16.mxu0 %v4230
    %5214 = vmatmul.mubr.bf16.gmra.mxu0 %v4229
    %v5215 = vpop.f32.mrf.mxu0
    %v5216 = vadd.f32 %v5103, %v5215
    %v5217 = vpop.f32.mrf.mxu0
    %v5218 = vadd.f32 %v5105, %v5217
    %v5219 = vpop.f32.mrf.mxu0
    %v5220 = vadd.f32 %v5107, %v5219
    %v5221 = vpop.f32.mrf.mxu0
    %v5222 = vadd.f32 %v5109, %v5221
    %5223 = vmatprep.mubr.bf16.mxu0 %v4234
    %5224 = vmatmul.mubr.bf16.gmra.mxu0 %v4233
    %v5225 = vpop.f32.mrf.mxu0
    %v5226 = vadd.f32 %v5113, %v5225
    %v5227 = vpop.f32.mrf.mxu0
    %v5228 = vadd.f32 %v5115, %v5227
    %v5229 = vpop.f32.mrf.mxu0
    %v5230 = vadd.f32 %v5117, %v5229
    %v5231 = vpop.f32.mrf.mxu0
    %v5232 = vadd.f32 %v5119, %v5231
    %5233 = vmatprep.mubr.bf16.mxu0 %v4238
    %5234 = vmatmul.mubr.bf16.gmra.mxu0 %v4237
    %v5235 = vpop.f32.mrf.mxu0
    %v5236 = vadd.f32 %v5123, %v5235
    %v5237 = vpop.f32.mrf.mxu0
    %v5238 = vadd.f32 %v5125, %v5237
    %v5239 = vpop.f32.mrf.mxu0
    %v5240 = vadd.f32 %v5127, %v5239
    %v5241 = vpop.f32.mrf.mxu0
    %v5242 = vadd.f32 %v5129, %v5241
    %5243 = vmatprep.mubr.bf16.mxu0 %v4242
    %5244 = vmatmul.mubr.bf16.gmra.mxu0 %v4241
    %v5245 = vpop.f32.mrf.mxu0
    %v5246 = vadd.f32 %v5133, %v5245
    %v5247 = vpop.f32.mrf.mxu0
    %v5248 = vadd.f32 %v5135, %v5247
    %v5249 = vpop.f32.mrf.mxu0
    %v5250 = vadd.f32 %v5137, %v5249
    %v5251 = vpop.f32.mrf.mxu0
    %v5252 = vadd.f32 %v5139, %v5251
    %5253 = vmatprep.mubr.bf16.mxu0 %v4246
    %5254 = vmatmul.mubr.bf16.gmra.mxu0 %v4245
    %v5255 = vpop.f32.mrf.mxu0
    %v5256 = vadd.f32 %v5143, %v5255
    %v5257 = vpop.f32.mrf.mxu0
    %v5258 = vadd.f32 %v5145, %v5257
    %v5259 = vpop.f32.mrf.mxu0
    %v5260 = vadd.f32 %v5147, %v5259
    %v5261 = vpop.f32.mrf.mxu0
    %v5262 = vadd.f32 %v5149, %v5261
    %5263 = vdwg.mxu0
    %5264 = vmatprep.subr.bf16.mxu0 %v4813
    %5265 = vmatpush1.bf16.msra.mxu0 %v4812
    %5266 = vmatprep.subr.bf16.mxu0 %v4809
    %5267 = vmatpush1.bf16.msra.mxu0 %v4808
    %5268 = vmatprep.subr.bf16.mxu0 %v4805
    %5269 = vmatpush1.bf16.msra.mxu0 %v4804
    %5270 = vmatprep.subr.bf16.mxu0 %v4801
    %5271 = vmatpush1.bf16.msra.mxu0 %v4800
    %5272 = vmatprep.subr.bf16.mxu0 %v4797
    %5273 = vmatpush1.bf16.msra.mxu0 %v4796
    %5274 = vmatprep.subr.bf16.mxu0 %v4793
    %5275 = vmatpush1.bf16.msra.mxu0 %v4792
    %5276 = vmatprep.subr.bf16.mxu0 %v4789
    %5277 = vmatpush1.bf16.msra.mxu0 %v4788
    %5278 = vmatprep.subr.bf16.mxu0 %v4785
    %5279 = vmatpush1.bf16.msra.mxu0 %v4784
    %5280 = vmatprep.subr.bf16.mxu0 %v4845
    %5281 = vmatpush2.bf16.msra.mxu0 %v4844
    %5282 = vmatprep.subr.bf16.mxu0 %v4841
    %5283 = vmatpush2.bf16.msra.mxu0 %v4840
    %5284 = vmatprep.subr.bf16.mxu0 %v4837
    %5285 = vmatpush2.bf16.msra.mxu0 %v4836
    %5286 = vmatprep.subr.bf16.mxu0 %v4833
    %5287 = vmatpush2.bf16.msra.mxu0 %v4832
    %5288 = vmatprep.subr.bf16.mxu0 %v4829
    %5289 = vmatpush2.bf16.msra.mxu0 %v4828
    %5290 = vmatprep.subr.bf16.mxu0 %v4825
    %5291 = vmatpush2.bf16.msra.mxu0 %v4824
    %5292 = vmatprep.subr.bf16.mxu0 %v4821
    %5293 = vmatpush2.bf16.msra.mxu0 %v4820
    %5294 = vmatprep.subr.bf16.mxu0 %v4817
    %5295 = vmatpush2.bf16.msra.mxu0 %v4816
    %5296 = vmatprep.mubr.bf16.mxu0 %v4216
    %5297 = vmatmul.mubr.bf16.gmra.mxu0 %v4215
    %v5298 = vpop.f32.mrf.mxu0
    %v5299 = vadd.f32 %v4389, %v5298
    %v5300 = vpop.f32.mrf.mxu0
    %v5301 = vadd.f32 %v4393, %v5300
    %v5302 = vpop.f32.mrf.mxu0
    %v5303 = vadd.f32 %v4389, %v5302
    %v5304 = vpop.f32.mrf.mxu0
    %v5305 = vadd.f32 %v4393, %v5304
    %5306 = vmatprep.mubr.bf16.mxu0 %v4220
    %5307 = vmatmul.mubr.bf16.gmra.mxu0 %v4219
    %v5308 = vpop.f32.mrf.mxu0
    %v5309 = vadd.f32 %v4389, %v5308
    %v5310 = vpop.f32.mrf.mxu0
    %v5311 = vadd.f32 %v4393, %v5310
    %v5312 = vpop.f32.mrf.mxu0
    %v5313 = vadd.f32 %v4389, %v5312
    %v5314 = vpop.f32.mrf.mxu0
    %v5315 = vadd.f32 %v4393, %v5314
    %5316 = vmatprep.mubr.bf16.mxu0 %v4224
    %5317 = vmatmul.mubr.bf16.gmra.mxu0 %v4223
    %v5318 = vpop.f32.mrf.mxu0
    %v5319 = vadd.f32 %v4389, %v5318
    %v5320 = vpop.f32.mrf.mxu0
    %v5321 = vadd.f32 %v4393, %v5320
    %v5322 = vpop.f32.mrf.mxu0
    %v5323 = vadd.f32 %v4389, %v5322
    %v5324 = vpop.f32.mrf.mxu0
    %v5325 = vadd.f32 %v4393, %v5324
    %5326 = vmatprep.mubr.bf16.mxu0 %v4228
    %5327 = vmatmul.mubr.bf16.gmra.mxu0 %v4227
    %v5328 = vpop.f32.mrf.mxu0
    %v5329 = vadd.f32 %v4389, %v5328
    %v5330 = vpop.f32.mrf.mxu0
    %v5331 = vadd.f32 %v4393, %v5330
    %v5332 = vpop.f32.mrf.mxu0
    %v5333 = vadd.f32 %v4389, %v5332
    %v5334 = vpop.f32.mrf.mxu0
    %v5335 = vadd.f32 %v4393, %v5334
    %5336 = vmatprep.mubr.bf16.mxu0 %v4232
    %5337 = vmatmul.mubr.bf16.gmra.mxu0 %v4231
    %v5338 = vpop.f32.mrf.mxu0
    %v5339 = vadd.f32 %v4389, %v5338
    %v5340 = vpop.f32.mrf.mxu0
    %v5341 = vadd.f32 %v4393, %v5340
    %v5342 = vpop.f32.mrf.mxu0
    %v5343 = vadd.f32 %v4389, %v5342
    %v5344 = vpop.f32.mrf.mxu0
    %v5345 = vadd.f32 %v4393, %v5344
    %5346 = vmatprep.mubr.bf16.mxu0 %v4236
    %5347 = vmatmul.mubr.bf16.gmra.mxu0 %v4235
    %v5348 = vpop.f32.mrf.mxu0
    %v5349 = vadd.f32 %v4389, %v5348
    %v5350 = vpop.f32.mrf.mxu0
    %v5351 = vadd.f32 %v4393, %v5350
    %v5352 = vpop.f32.mrf.mxu0
    %v5353 = vadd.f32 %v4389, %v5352
    %v5354 = vpop.f32.mrf.mxu0
    %v5355 = vadd.f32 %v4393, %v5354
    %5356 = vmatprep.mubr.bf16.mxu0 %v4240
    %5357 = vmatmul.mubr.bf16.gmra.mxu0 %v4239
    %v5358 = vpop.f32.mrf.mxu0
    %v5359 = vadd.f32 %v4389, %v5358
    %v5360 = vpop.f32.mrf.mxu0
    %v5361 = vadd.f32 %v4393, %v5360
    %v5362 = vpop.f32.mrf.mxu0
    %v5363 = vadd.f32 %v4389, %v5362
    %v5364 = vpop.f32.mrf.mxu0
    %v5365 = vadd.f32 %v4393, %v5364
    %5366 = vmatprep.mubr.bf16.mxu0 %v4244
    %5367 = vmatmul.mubr.bf16.gmra.mxu0 %v4243
    %v5368 = vpop.f32.mrf.mxu0
    %v5369 = vadd.f32 %v4389, %v5368
    %v5370 = vpop.f32.mrf.mxu0
    %v5371 = vadd.f32 %v4393, %v5370
    %v5372 = vpop.f32.mrf.mxu0
    %v5373 = vadd.f32 %v4389, %v5372
    %v5374 = vpop.f32.mrf.mxu0
    %v5375 = vadd.f32 %v4393, %v5374
    %5376 = vdwg.mxu0
    %5377 = vmatprep.subr.bf16.mxu0 %v4877
    %5378 = vmatpush1.bf16.msra.mxu0 %v4876
    %5379 = vmatprep.subr.bf16.mxu0 %v4873
    %5380 = vmatpush1.bf16.msra.mxu0 %v4872
    %5381 = vmatprep.subr.bf16.mxu0 %v4869
    %5382 = vmatpush1.bf16.msra.mxu0 %v4868
    %5383 = vmatprep.subr.bf16.mxu0 %v4865
    %5384 = vmatpush1.bf16.msra.mxu0 %v4864
    %5385 = vmatprep.subr.bf16.mxu0 %v4861
    %5386 = vmatpush1.bf16.msra.mxu0 %v4860
    %5387 = vmatprep.subr.bf16.mxu0 %v4857
    %5388 = vmatpush1.bf16.msra.mxu0 %v4856
    %5389 = vmatprep.subr.bf16.mxu0 %v4853
    %5390 = vmatpush1.bf16.msra.mxu0 %v4852
    %5391 = vmatprep.subr.bf16.mxu0 %v4849
    %5392 = vmatpush1.bf16.msra.mxu0 %v4848
    %5393 = vmatprep.subr.bf16.mxu0 %v4909
    %5394 = vmatpush2.bf16.msra.mxu0 %v4908
    %5395 = vmatprep.subr.bf16.mxu0 %v4905
    %5396 = vmatpush2.bf16.msra.mxu0 %v4904
    %5397 = vmatprep.subr.bf16.mxu0 %v4901
    %5398 = vmatpush2.bf16.msra.mxu0 %v4900
    %5399 = vmatprep.subr.bf16.mxu0 %v4897
    %5400 = vmatpush2.bf16.msra.mxu0 %v4896
    %5401 = vmatprep.subr.bf16.mxu0 %v4893
    %5402 = vmatpush2.bf16.msra.mxu0 %v4892
    %5403 = vmatprep.subr.bf16.mxu0 %v4889
    %5404 = vmatpush2.bf16.msra.mxu0 %v4888
    %5405 = vmatprep.subr.bf16.mxu0 %v4885
    %5406 = vmatpush2.bf16.msra.mxu0 %v4884
    %5407 = vmatprep.subr.bf16.mxu0 %v4881
    %5408 = vmatpush2.bf16.msra.mxu0 %v4880
    %5409 = vmatprep.mubr.bf16.mxu0 %v4218
    %5410 = vmatmul.mubr.bf16.gmra.mxu0 %v4217
    %v5411 = vpop.f32.mrf.mxu0
    %v5412 = vadd.f32 %v5299, %v5411
    %v5413 = vpop.f32.mrf.mxu0
    %v5414 = vadd.f32 %v5301, %v5413
    %v5415 = vpop.f32.mrf.mxu0
    %v5416 = vadd.f32 %v5303, %v5415
    %v5417 = vpop.f32.mrf.mxu0
    %v5418 = vadd.f32 %v5305, %v5417
    %5419 = vmatprep.mubr.bf16.mxu0 %v4222
    %5420 = vmatmul.mubr.bf16.gmra.mxu0 %v4221
    %v5421 = vpop.f32.mrf.mxu0
    %v5422 = vadd.f32 %v5309, %v5421
    %v5423 = vpop.f32.mrf.mxu0
    %v5424 = vadd.f32 %v5311, %v5423
    %v5425 = vpop.f32.mrf.mxu0
    %v5426 = vadd.f32 %v5313, %v5425
    %v5427 = vpop.f32.mrf.mxu0
    %v5428 = vadd.f32 %v5315, %v5427
    %5429 = vmatprep.mubr.bf16.mxu0 %v4226
    %5430 = vmatmul.mubr.bf16.gmra.mxu0 %v4225
    %v5431 = vpop.f32.mrf.mxu0
    %v5432 = vadd.f32 %v5319, %v5431
    %v5433 = vpop.f32.mrf.mxu0
    %v5434 = vadd.f32 %v5321, %v5433
    %v5435 = vpop.f32.mrf.mxu0
    %v5436 = vadd.f32 %v5323, %v5435
    %v5437 = vpop.f32.mrf.mxu0
    %v5438 = vadd.f32 %v5325, %v5437
    %5439 = vmatprep.mubr.bf16.mxu0 %v4230
    %5440 = vmatmul.mubr.bf16.gmra.mxu0 %v4229
    %v5441 = vpop.f32.mrf.mxu0
    %v5442 = vadd.f32 %v5329, %v5441
    %v5443 = vpop.f32.mrf.mxu0
    %v5444 = vadd.f32 %v5331, %v5443
    %v5445 = vpop.f32.mrf.mxu0
    %v5446 = vadd.f32 %v5333, %v5445
    %v5447 = vpop.f32.mrf.mxu0
    %v5448 = vadd.f32 %v5335, %v5447
    %5449 = vmatprep.mubr.bf16.mxu0 %v4234
    %5450 = vmatmul.mubr.bf16.gmra.mxu0 %v4233
    %v5451 = vpop.f32.mrf.mxu0
    %v5452 = vadd.f32 %v5339, %v5451
    %v5453 = vpop.f32.mrf.mxu0
    %v5454 = vadd.f32 %v5341, %v5453
    %v5455 = vpop.f32.mrf.mxu0
    %v5456 = vadd.f32 %v5343, %v5455
    %v5457 = vpop.f32.mrf.mxu0
    %v5458 = vadd.f32 %v5345, %v5457
    %5459 = vmatprep.mubr.bf16.mxu0 %v4238
    %5460 = vmatmul.mubr.bf16.gmra.mxu0 %v4237
    %v5461 = vpop.f32.mrf.mxu0
    %v5462 = vadd.f32 %v5349, %v5461
    %v5463 = vpop.f32.mrf.mxu0
    %v5464 = vadd.f32 %v5351, %v5463
    %v5465 = vpop.f32.mrf.mxu0
    %v5466 = vadd.f32 %v5353, %v5465
    %v5467 = vpop.f32.mrf.mxu0
    %v5468 = vadd.f32 %v5355, %v5467
    %5469 = vmatprep.mubr.bf16.mxu0 %v4242
    %5470 = vmatmul.mubr.bf16.gmra.mxu0 %v4241
    %v5471 = vpop.f32.mrf.mxu0
    %v5472 = vadd.f32 %v5359, %v5471
    %v5473 = vpop.f32.mrf.mxu0
    %v5474 = vadd.f32 %v5361, %v5473
    %v5475 = vpop.f32.mrf.mxu0
    %v5476 = vadd.f32 %v5363, %v5475
    %v5477 = vpop.f32.mrf.mxu0
    %v5478 = vadd.f32 %v5365, %v5477
    %5479 = vmatprep.mubr.bf16.mxu0 %v4246
    %5480 = vmatmul.mubr.bf16.gmra.mxu0 %v4245
    %v5481 = vpop.f32.mrf.mxu0
    %v5482 = vadd.f32 %v5369, %v5481
    %v5483 = vpop.f32.mrf.mxu0
    %v5484 = vadd.f32 %v5371, %v5483
    %v5485 = vpop.f32.mrf.mxu0
    %v5486 = vadd.f32 %v5373, %v5485
    %v5487 = vpop.f32.mrf.mxu0
    %v5488 = vadd.f32 %v5375, %v5487
    %5489 = vdwg.mxu0
    %v5490 = vmax.f32 %v5186, 0.0
    %v5491 = vmax.f32 %v5188, 0.0
    %v5492 = vmax.f32 %v5412, 0.0
    %v5493 = vmax.f32 %v5414, 0.0
    %v5494 = vmax.f32 %v5190, 0.0
    %v5495 = vmax.f32 %v5192, 0.0
    %v5496 = vmax.f32 %v5416, 0.0
    %v5497 = vmax.f32 %v5418, 0.0
    %v5498 = vmax.f32 %v5196, 0.0
    %v5499 = vmax.f32 %v5198, 0.0
    %v5500 = vmax.f32 %v5422, 0.0
    %v5501 = vmax.f32 %v5424, 0.0
    %v5502 = vmax.f32 %v5200, 0.0
    %v5503 = vmax.f32 %v5202, 0.0
    %v5504 = vmax.f32 %v5426, 0.0
    %v5505 = vmax.f32 %v5428, 0.0
    %v5506 = vmax.f32 %v5206, 0.0
    %v5507 = vmax.f32 %v5208, 0.0
    %v5508 = vmax.f32 %v5432, 0.0
    %v5509 = vmax.f32 %v5434, 0.0
    %v5510 = vmax.f32 %v5210, 0.0
    %v5511 = vmax.f32 %v5212, 0.0
    %v5512 = vmax.f32 %v5436, 0.0
    %v5513 = vmax.f32 %v5438, 0.0
    %v5514 = vmax.f32 %v5216, 0.0
    %v5515 = vmax.f32 %v5218, 0.0
    %v5516 = vmax.f32 %v5442, 0.0
    %v5517 = vmax.f32 %v5444, 0.0
    %v5518 = vmax.f32 %v5220, 0.0
    %v5519 = vmax.f32 %v5222, 0.0
    %v5520 = vmax.f32 %v5446, 0.0
    %v5521 = vmax.f32 %v5448, 0.0
    %v5522 = vmax.f32 %v5226, 0.0
    %v5523 = vmax.f32 %v5228, 0.0
    %v5524 = vmax.f32 %v5452, 0.0
    %v5525 = vmax.f32 %v5454, 0.0
    %v5526 = vmax.f32 %v5230, 0.0
    %v5527 = vmax.f32 %v5232, 0.0
    %v5528 = vmax.f32 %v5456, 0.0
    %v5529 = vmax.f32 %v5458, 0.0
    %v5530 = vmax.f32 %v5236, 0.0
    %v5531 = vmax.f32 %v5238, 0.0
    %v5532 = vmax.f32 %v5462, 0.0
    %v5533 = vmax.f32 %v5464, 0.0
    %v5534 = vmax.f32 %v5240, 0.0
    %v5535 = vmax.f32 %v5242, 0.0
    %v5536 = vmax.f32 %v5466, 0.0
    %v5537 = vmax.f32 %v5468, 0.0
    %v5538 = vmax.f32 %v5246, 0.0
    %v5539 = vmax.f32 %v5248, 0.0
    %v5540 = vmax.f32 %v5472, 0.0
    %v5541 = vmax.f32 %v5474, 0.0
    %v5542 = vmax.f32 %v5250, 0.0
    %v5543 = vmax.f32 %v5252, 0.0
    %v5544 = vmax.f32 %v5476, 0.0
    %v5545 = vmax.f32 %v5478, 0.0
    %v5546 = vmax.f32 %v5256, 0.0
    %v5547 = vmax.f32 %v5258, 0.0
    %v5548 = vmax.f32 %v5482, 0.0
    %v5549 = vmax.f32 %v5484, 0.0
    %v5550 = vmax.f32 %v5260, 0.0
    %v5551 = vmax.f32 %v5262, 0.0
    %v5552 = vmax.f32 %v5486, 0.0
    %v5553 = vmax.f32 %v5488, 0.0
    %v5554 = vpack.c.bf16 %v5494, %v5490
    %v5555 = vpack.c.bf16 %v5495, %v5491
    %v5556 = vpack.c.bf16 %v5496, %v5492
    %v5557 = vpack.c.bf16 %v5497, %v5493
    %v5558 = vpack.c.bf16 %v5502, %v5498
    %v5559 = vpack.c.bf16 %v5503, %v5499
    %v5560 = vpack.c.bf16 %v5504, %v5500
    %v5561 = vpack.c.bf16 %v5505, %v5501
    %v5562 = vpack.c.bf16 %v5510, %v5506
    %v5563 = vpack.c.bf16 %v5511, %v5507
    %v5564 = vpack.c.bf16 %v5512, %v5508
    %v5565 = vpack.c.bf16 %v5513, %v5509
    %v5566 = vpack.c.bf16 %v5518, %v5514
    %v5567 = vpack.c.bf16 %v5519, %v5515
    %v5568 = vpack.c.bf16 %v5520, %v5516
    %v5569 = vpack.c.bf16 %v5521, %v5517
    %v5570 = vpack.c.bf16 %v5526, %v5522
    %v5571 = vpack.c.bf16 %v5527, %v5523
    %v5572 = vpack.c.bf16 %v5528, %v5524
    %v5573 = vpack.c.bf16 %v5529, %v5525
    %v5574 = vpack.c.bf16 %v5534, %v5530
    %v5575 = vpack.c.bf16 %v5535, %v5531
    %v5576 = vpack.c.bf16 %v5536, %v5532
    %v5577 = vpack.c.bf16 %v5537, %v5533
    %v5578 = vpack.c.bf16 %v5542, %v5538
    %v5579 = vpack.c.bf16 %v5543, %v5539
    %v5580 = vpack.c.bf16 %v5544, %v5540
    %v5581 = vpack.c.bf16 %v5545, %v5541
    %v5582 = vpack.c.bf16 %v5550, %v5546
    %v5583 = vpack.c.bf16 %v5551, %v5547
    %v5584 = vpack.c.bf16 %v5552, %v5548
    %v5585 = vpack.c.bf16 %v5553, %v5549
    %v5586 = vld [vmem:[#allocation10] sm:$0xff]
    %v5587 = vld [vmem:[#allocation10 + $0x8] sm:$0xff]
    %v5588 = vld [vmem:[#allocation10 + $0x10] sm:$0xff]
    %v5589 = vld [vmem:[#allocation10 + $0x18] sm:$0xff]
    %v5590 = vld [vmem:[#allocation10 + $0x20] sm:$0xff]
    %v5591 = vld [vmem:[#allocation10 + $0x28] sm:$0xff]
    %v5592 = vld [vmem:[#allocation10 + $0x30] sm:$0xff]
    %v5593 = vld [vmem:[#allocation10 + $0x38] sm:$0xff]
    %v5594 = vld [vmem:[#allocation10 + $0x40] sm:$0xff]
    %v5595 = vld [vmem:[#allocation10 + $0x48] sm:$0xff]
    %v5596 = vld [vmem:[#allocation10 + $0x50] sm:$0xff]
    %v5597 = vld [vmem:[#allocation10 + $0x58] sm:$0xff]
    %v5598 = vld [vmem:[#allocation10 + $0x60] sm:$0xff]
    %v5599 = vld [vmem:[#allocation10 + $0x68] sm:$0xff]
    %v5600 = vld [vmem:[#allocation10 + $0x70] sm:$0xff]
    %v5601 = vld [vmem:[#allocation10 + $0x78] sm:$0xff]
    %v5602 = vld [vmem:[#allocation10 + $0x80] sm:$0xff]
    %v5603 = vld [vmem:[#allocation10 + $0x88] sm:$0xff]
    %v5604 = vld [vmem:[#allocation10 + $0x90] sm:$0xff]
    %v5605 = vld [vmem:[#allocation10 + $0x98] sm:$0xff]
    %v5606 = vld [vmem:[#allocation10 + $0xa0] sm:$0xff]
    %v5607 = vld [vmem:[#allocation10 + $0xa8] sm:$0xff]
    %v5608 = vld [vmem:[#allocation10 + $0xb0] sm:$0xff]
    %v5609 = vld [vmem:[#allocation10 + $0xb8] sm:$0xff]
    %v5610 = vld [vmem:[#allocation10 + $0xc0] sm:$0xff]
    %v5611 = vld [vmem:[#allocation10 + $0xc8] sm:$0xff]
    %v5612 = vld [vmem:[#allocation10 + $0xd0] sm:$0xff]
    %v5613 = vld [vmem:[#allocation10 + $0xd8] sm:$0xff]
    %v5614 = vld [vmem:[#allocation10 + $0xe0] sm:$0xff]
    %v5615 = vld [vmem:[#allocation10 + $0xe8] sm:$0xff]
    %v5616 = vld [vmem:[#allocation10 + $0xf0] sm:$0xff]
    %v5617 = vld [vmem:[#allocation10 + $0xf8] sm:$0xff]
    %v5618 = vld [vmem:[#allocation10 + $0x100] sm:$0xff]
    %v5619 = vld [vmem:[#allocation10 + $0x108] sm:$0xff]
    %v5620 = vld [vmem:[#allocation10 + $0x110] sm:$0xff]
    %v5621 = vld [vmem:[#allocation10 + $0x118] sm:$0xff]
    %v5622 = vld [vmem:[#allocation10 + $0x120] sm:$0xff]
    %v5623 = vld [vmem:[#allocation10 + $0x128] sm:$0xff]
    %v5624 = vld [vmem:[#allocation10 + $0x130] sm:$0xff]
    %v5625 = vld [vmem:[#allocation10 + $0x138] sm:$0xff]
    %v5626 = vld [vmem:[#allocation10 + $0x140] sm:$0xff]
    %v5627 = vld [vmem:[#allocation10 + $0x148] sm:$0xff]
    %v5628 = vld [vmem:[#allocation10 + $0x150] sm:$0xff]
    %v5629 = vld [vmem:[#allocation10 + $0x158] sm:$0xff]
    %v5630 = vld [vmem:[#allocation10 + $0x160] sm:$0xff]
    %v5631 = vld [vmem:[#allocation10 + $0x168] sm:$0xff]
    %v5632 = vld [vmem:[#allocation10 + $0x170] sm:$0xff]
    %v5633 = vld [vmem:[#allocation10 + $0x178] sm:$0xff]
    %v5634 = vld [vmem:[#allocation10 + $0x180] sm:$0xff]
    %v5635 = vld [vmem:[#allocation10 + $0x188] sm:$0xff]
    %v5636 = vld [vmem:[#allocation10 + $0x190] sm:$0xff]
    %v5637 = vld [vmem:[#allocation10 + $0x198] sm:$0xff]
    %v5638 = vld [vmem:[#allocation10 + $0x1a0] sm:$0xff]
    %v5639 = vld [vmem:[#allocation10 + $0x1a8] sm:$0xff]
    %v5640 = vld [vmem:[#allocation10 + $0x1b0] sm:$0xff]
    %v5641 = vld [vmem:[#allocation10 + $0x1b8] sm:$0xff]
    %v5642 = vld [vmem:[#allocation10 + $0x1c0] sm:$0xff]
    %v5643 = vld [vmem:[#allocation10 + $0x1c8] sm:$0xff]
    %v5644 = vld [vmem:[#allocation10 + $0x1d0] sm:$0xff]
    %v5645 = vld [vmem:[#allocation10 + $0x1d8] sm:$0xff]
    %v5646 = vld [vmem:[#allocation10 + $0x1e0] sm:$0xff]
    %v5647 = vld [vmem:[#allocation10 + $0x1e8] sm:$0xff]
    %v5648 = vld [vmem:[#allocation10 + $0x1f0] sm:$0xff]
    %v5649 = vld [vmem:[#allocation10 + $0x1f8] sm:$0xff]
    %v5714 = vunpack.c.l.b16 %v5586
    %v5715 = vunpack.c.h.b16 %v5586
    %v5716 = vunpack.c.l.b16 %v5587
    %v5717 = vunpack.c.h.b16 %v5587
    %v5718 = vunpack.c.l.b16 %v5588
    %v5719 = vunpack.c.h.b16 %v5588
    %v5720 = vunpack.c.l.b16 %v5589
    %v5721 = vunpack.c.h.b16 %v5589
    %v5722 = vunpack.c.l.b16 %v5590
    %v5723 = vunpack.c.h.b16 %v5590
    %v5724 = vunpack.c.l.b16 %v5591
    %v5725 = vunpack.c.h.b16 %v5591
    %v5726 = vunpack.c.l.b16 %v5592
    %v5727 = vunpack.c.h.b16 %v5592
    %v5728 = vunpack.c.l.b16 %v5593
    %v5729 = vunpack.c.h.b16 %v5593
    %v5730 = vunpack.c.l.b16 %v5594
    %v5731 = vunpack.c.h.b16 %v5594
    %v5732 = vunpack.c.l.b16 %v5595
    %v5733 = vunpack.c.h.b16 %v5595
    %v5734 = vunpack.c.l.b16 %v5596
    %v5735 = vunpack.c.h.b16 %v5596
    %v5736 = vunpack.c.l.b16 %v5597
    %v5737 = vunpack.c.h.b16 %v5597
    %v5738 = vunpack.c.l.b16 %v5598
    %v5739 = vunpack.c.h.b16 %v5598
    %v5740 = vunpack.c.l.b16 %v5599
    %v5741 = vunpack.c.h.b16 %v5599
    %v5742 = vunpack.c.l.b16 %v5600
    %v5743 = vunpack.c.h.b16 %v5600
    %v5744 = vunpack.c.l.b16 %v5601
    %v5745 = vunpack.c.h.b16 %v5601
    %v5746 = vunpack.c.l.b16 %v5602
    %v5747 = vunpack.c.h.b16 %v5602
    %v5748 = vunpack.c.l.b16 %v5603
    %v5749 = vunpack.c.h.b16 %v5603
    %v5750 = vunpack.c.l.b16 %v5604
    %v5751 = vunpack.c.h.b16 %v5604
    %v5752 = vunpack.c.l.b16 %v5605
    %v5753 = vunpack.c.h.b16 %v5605
    %v5754 = vunpack.c.l.b16 %v5606
    %v5755 = vunpack.c.h.b16 %v5606
    %v5756 = vunpack.c.l.b16 %v5607
    %v5757 = vunpack.c.h.b16 %v5607
    %v5758 = vunpack.c.l.b16 %v5608
    %v5759 = vunpack.c.h.b16 %v5608
    %v5760 = vunpack.c.l.b16 %v5609
    %v5761 = vunpack.c.h.b16 %v5609
    %v5762 = vunpack.c.l.b16 %v5610
    %v5763 = vunpack.c.h.b16 %v5610
    %v5764 = vunpack.c.l.b16 %v5611
    %v5765 = vunpack.c.h.b16 %v5611
    %v5766 = vunpack.c.l.b16 %v5612
    %v5767 = vunpack.c.h.b16 %v5612
    %v5768 = vunpack.c.l.b16 %v5613
    %v5769 = vunpack.c.h.b16 %v5613
    %v5770 = vunpack.c.l.b16 %v5614
    %v5771 = vunpack.c.h.b16 %v5614
    %v5772 = vunpack.c.l.b16 %v5615
    %v5773 = vunpack.c.h.b16 %v5615
    %v5774 = vunpack.c.l.b16 %v5616
    %v5775 = vunpack.c.h.b16 %v5616
    %v5776 = vunpack.c.l.b16 %v5617
    %v5777 = vunpack.c.h.b16 %v5617
    %v5778 = vunpack.c.l.b16 %v5618
    %v5779 = vunpack.c.h.b16 %v5618
    %v5780 = vunpack.c.l.b16 %v5619
    %v5781 = vunpack.c.h.b16 %v5619
    %v5782 = vunpack.c.l.b16 %v5620
    %v5783 = vunpack.c.h.b16 %v5620
    %v5784 = vunpack.c.l.b16 %v5621
    %v5785 = vunpack.c.h.b16 %v5621
    %v5786 = vunpack.c.l.b16 %v5622
    %v5787 = vunpack.c.h.b16 %v5622
    %v5788 = vunpack.c.l.b16 %v5623
    %v5789 = vunpack.c.h.b16 %v5623
    %v5790 = vunpack.c.l.b16 %v5624
    %v5791 = vunpack.c.h.b16 %v5624
    %v5792 = vunpack.c.l.b16 %v5625
    %v5793 = vunpack.c.h.b16 %v5625
    %v5794 = vunpack.c.l.b16 %v5626
    %v5795 = vunpack.c.h.b16 %v5626
    %v5796 = vunpack.c.l.b16 %v5627
    %v5797 = vunpack.c.h.b16 %v5627
    %v5798 = vunpack.c.l.b16 %v5628
    %v5799 = vunpack.c.h.b16 %v5628
    %v5800 = vunpack.c.l.b16 %v5629
    %v5801 = vunpack.c.h.b16 %v5629
    %v5802 = vunpack.c.l.b16 %v5630
    %v5803 = vunpack.c.h.b16 %v5630
    %v5804 = vunpack.c.l.b16 %v5631
    %v5805 = vunpack.c.h.b16 %v5631
    %v5806 = vunpack.c.l.b16 %v5632
    %v5807 = vunpack.c.h.b16 %v5632
    %v5808 = vunpack.c.l.b16 %v5633
    %v5809 = vunpack.c.h.b16 %v5633
    %v5810 = vunpack.c.l.b16 %v5634
    %v5811 = vunpack.c.h.b16 %v5634
    %v5812 = vunpack.c.l.b16 %v5635
    %v5813 = vunpack.c.h.b16 %v5635
    %v5814 = vunpack.c.l.b16 %v5636
    %v5815 = vunpack.c.h.b16 %v5636
    %v5816 = vunpack.c.l.b16 %v5637
    %v5817 = vunpack.c.h.b16 %v5637
    %v5818 = vunpack.c.l.b16 %v5638
    %v5819 = vunpack.c.h.b16 %v5638
    %v5820 = vunpack.c.l.b16 %v5639
    %v5821 = vunpack.c.h.b16 %v5639
    %v5822 = vunpack.c.l.b16 %v5640
    %v5823 = vunpack.c.h.b16 %v5640
    %v5824 = vunpack.c.l.b16 %v5641
    %v5825 = vunpack.c.h.b16 %v5641
    %v5826 = vunpack.c.l.b16 %v5642
    %v5827 = vunpack.c.h.b16 %v5642
    %v5828 = vunpack.c.l.b16 %v5643
    %v5829 = vunpack.c.h.b16 %v5643
    %v5830 = vunpack.c.l.b16 %v5644
    %v5831 = vunpack.c.h.b16 %v5644
    %v5832 = vunpack.c.l.b16 %v5645
    %v5833 = vunpack.c.h.b16 %v5645
    %v5834 = vunpack.c.l.b16 %v5646
    %v5835 = vunpack.c.h.b16 %v5646
    %v5836 = vunpack.c.l.b16 %v5647
    %v5837 = vunpack.c.h.b16 %v5647
    %v5838 = vunpack.c.l.b16 %v5648
    %v5839 = vunpack.c.h.b16 %v5648
    %v5840 = vunpack.c.l.b16 %v5649
    %v5841 = vunpack.c.h.b16 %v5649
    %v5842 = vpack.c.b16 %v5716, %v5714
    %v5843 = vpack.c.b16 %v5717, %v5715
    %v5844 = vpack.c.b16 %v5720, %v5718
    %v5845 = vpack.c.b16 %v5721, %v5719
    %v5846 = vpack.c.b16 %v5724, %v5722
    %v5847 = vpack.c.b16 %v5725, %v5723
    %v5848 = vpack.c.b16 %v5728, %v5726
    %v5849 = vpack.c.b16 %v5729, %v5727
    %v5850 = vpack.c.b16 %v5732, %v5730
    %v5851 = vpack.c.b16 %v5733, %v5731
    %v5852 = vpack.c.b16 %v5736, %v5734
    %v5853 = vpack.c.b16 %v5737, %v5735
    %v5854 = vpack.c.b16 %v5740, %v5738
    %v5855 = vpack.c.b16 %v5741, %v5739
    %v5856 = vpack.c.b16 %v5744, %v5742
    %v5857 = vpack.c.b16 %v5745, %v5743
    %v5858 = vpack.c.b16 %v5748, %v5746
    %v5859 = vpack.c.b16 %v5749, %v5747
    %v5860 = vpack.c.b16 %v5752, %v5750
    %v5861 = vpack.c.b16 %v5753, %v5751
    %v5862 = vpack.c.b16 %v5756, %v5754
    %v5863 = vpack.c.b16 %v5757, %v5755
    %v5864 = vpack.c.b16 %v5760, %v5758
    %v5865 = vpack.c.b16 %v5761, %v5759
    %v5866 = vpack.c.b16 %v5764, %v5762
    %v5867 = vpack.c.b16 %v5765, %v5763
    %v5868 = vpack.c.b16 %v5768, %v5766
    %v5869 = vpack.c.b16 %v5769, %v5767
    %v5870 = vpack.c.b16 %v5772, %v5770
    %v5871 = vpack.c.b16 %v5773, %v5771
    %v5872 = vpack.c.b16 %v5776, %v5774
    %v5873 = vpack.c.b16 %v5777, %v5775
    %v5874 = vpack.c.b16 %v5780, %v5778
    %v5875 = vpack.c.b16 %v5781, %v5779
    %v5876 = vpack.c.b16 %v5784, %v5782
    %v5877 = vpack.c.b16 %v5785, %v5783
    %v5878 = vpack.c.b16 %v5788, %v5786
    %v5879 = vpack.c.b16 %v5789, %v5787
    %v5880 = vpack.c.b16 %v5792, %v5790
    %v5881 = vpack.c.b16 %v5793, %v5791
    %v5882 = vpack.c.b16 %v5796, %v5794
    %v5883 = vpack.c.b16 %v5797, %v5795
    %v5884 = vpack.c.b16 %v5800, %v5798
    %v5885 = vpack.c.b16 %v5801, %v5799
    %v5886 = vpack.c.b16 %v5804, %v5802
    %v5887 = vpack.c.b16 %v5805, %v5803
    %v5888 = vpack.c.b16 %v5808, %v5806
    %v5889 = vpack.c.b16 %v5809, %v5807
    %v5890 = vpack.c.b16 %v5812, %v5810
    %v5891 = vpack.c.b16 %v5813, %v5811
    %v5892 = vpack.c.b16 %v5816, %v5814
    %v5893 = vpack.c.b16 %v5817, %v5815
    %v5894 = vpack.c.b16 %v5820, %v5818
    %v5895 = vpack.c.b16 %v5821, %v5819
    %v5896 = vpack.c.b16 %v5824, %v5822
    %v5897 = vpack.c.b16 %v5825, %v5823
    %v5898 = vpack.c.b16 %v5828, %v5826
    %v5899 = vpack.c.b16 %v5829, %v5827
    %v5900 = vpack.c.b16 %v5832, %v5830
    %v5901 = vpack.c.b16 %v5833, %v5831
    %v5902 = vpack.c.b16 %v5836, %v5834
    %v5903 = vpack.c.b16 %v5837, %v5835
    %v5904 = vpack.c.b16 %v5840, %v5838
    %v5905 = vpack.c.b16 %v5841, %v5839
    %5970 = vmatprep.subr.bf16.mxu0 %v5857
    %5971 = vmatpush1.bf16.msra.mxu0 %v5856
    %5972 = vmatprep.subr.bf16.mxu0 %v5855
    %5973 = vmatpush1.bf16.msra.mxu0 %v5854
    %5974 = vmatprep.subr.bf16.mxu0 %v5853
    %5975 = vmatpush1.bf16.msra.mxu0 %v5852
    %5976 = vmatprep.subr.bf16.mxu0 %v5851
    %5977 = vmatpush1.bf16.msra.mxu0 %v5850
    %5978 = vmatprep.subr.bf16.mxu0 %v5849
    %5979 = vmatpush1.bf16.msra.mxu0 %v5848
    %5980 = vmatprep.subr.bf16.mxu0 %v5847
    %5981 = vmatpush1.bf16.msra.mxu0 %v5846
    %5982 = vmatprep.subr.bf16.mxu0 %v5845
    %5983 = vmatpush1.bf16.msra.mxu0 %v5844
    %5984 = vmatprep.subr.bf16.mxu0 %v5843
    %5985 = vmatpush1.bf16.msra.mxu0 %v5842
    %5986 = vmatprep.subr.bf16.mxu0 %v5873
    %5987 = vmatpush2.bf16.msra.mxu0 %v5872
    %5988 = vmatprep.subr.bf16.mxu0 %v5871
    %5989 = vmatpush2.bf16.msra.mxu0 %v5870
    %5990 = vmatprep.subr.bf16.mxu0 %v5869
    %5991 = vmatpush2.bf16.msra.mxu0 %v5868
    %5992 = vmatprep.subr.bf16.mxu0 %v5867
    %5993 = vmatpush2.bf16.msra.mxu0 %v5866
    %5994 = vmatprep.subr.bf16.mxu0 %v5865
    %5995 = vmatpush2.bf16.msra.mxu0 %v5864
    %5996 = vmatprep.subr.bf16.mxu0 %v5863
    %5997 = vmatpush2.bf16.msra.mxu0 %v5862
    %5998 = vmatprep.subr.bf16.mxu0 %v5861
    %5999 = vmatpush2.bf16.msra.mxu0 %v5860
    %6000 = vmatprep.subr.bf16.mxu0 %v5859
    %6001 = vmatpush2.bf16.msra.mxu0 %v5858
    %6002 = vmatprep.mubr.bf16.mxu0 %v5555
    %6003 = vmatmul.mubr.bf16.gmra.mxu0 %v5554
    %v6004 = vpop.f32.mrf.mxu0
    %v6005 = vadd.f32 0.0, %v6004
    %v6006 = vpop.f32.mrf.mxu0
    %v6007 = vadd.f32 0.0, %v6006
    %v6008 = vpop.f32.mrf.mxu0
    %v6009 = vadd.f32 0.0, %v6008
    %v6010 = vpop.f32.mrf.mxu0
    %v6011 = vadd.f32 0.0, %v6010
    %6012 = vmatprep.mubr.bf16.mxu0 %v5559
    %6013 = vmatmul.mubr.bf16.gmra.mxu0 %v5558
    %v6014 = vpop.f32.mrf.mxu0
    %v6015 = vadd.f32 0.0, %v6014
    %v6016 = vpop.f32.mrf.mxu0
    %v6017 = vadd.f32 0.0, %v6016
    %v6018 = vpop.f32.mrf.mxu0
    %v6019 = vadd.f32 0.0, %v6018
    %v6020 = vpop.f32.mrf.mxu0
    %v6021 = vadd.f32 0.0, %v6020
    %6022 = vmatprep.mubr.bf16.mxu0 %v5563
    %6023 = vmatmul.mubr.bf16.gmra.mxu0 %v5562
    %v6024 = vpop.f32.mrf.mxu0
    %v6025 = vadd.f32 0.0, %v6024
    %v6026 = vpop.f32.mrf.mxu0
    %v6027 = vadd.f32 0.0, %v6026
    %v6028 = vpop.f32.mrf.mxu0
    %v6029 = vadd.f32 0.0, %v6028
    %v6030 = vpop.f32.mrf.mxu0
    %v6031 = vadd.f32 0.0, %v6030
    %6032 = vmatprep.mubr.bf16.mxu0 %v5567
    %6033 = vmatmul.mubr.bf16.gmra.mxu0 %v5566
    %v6034 = vpop.f32.mrf.mxu0
    %v6035 = vadd.f32 0.0, %v6034
    %v6036 = vpop.f32.mrf.mxu0
    %v6037 = vadd.f32 0.0, %v6036
    %v6038 = vpop.f32.mrf.mxu0
    %v6039 = vadd.f32 0.0, %v6038
    %v6040 = vpop.f32.mrf.mxu0
    %v6041 = vadd.f32 0.0, %v6040
    %6042 = vmatprep.mubr.bf16.mxu0 %v5571
    %6043 = vmatmul.mubr.bf16.gmra.mxu0 %v5570
    %v6044 = vpop.f32.mrf.mxu0
    %v6045 = vadd.f32 0.0, %v6044
    %v6046 = vpop.f32.mrf.mxu0
    %v6047 = vadd.f32 0.0, %v6046
    %v6048 = vpop.f32.mrf.mxu0
    %v6049 = vadd.f32 0.0, %v6048
    %v6050 = vpop.f32.mrf.mxu0
    %v6051 = vadd.f32 0.0, %v6050
    %6052 = vmatprep.mubr.bf16.mxu0 %v5575
    %6053 = vmatmul.mubr.bf16.gmra.mxu0 %v5574
    %v6054 = vpop.f32.mrf.mxu0
    %v6055 = vadd.f32 0.0, %v6054
    %v6056 = vpop.f32.mrf.mxu0
    %v6057 = vadd.f32 0.0, %v6056
    %v6058 = vpop.f32.mrf.mxu0
    %v6059 = vadd.f32 0.0, %v6058
    %v6060 = vpop.f32.mrf.mxu0
    %v6061 = vadd.f32 0.0, %v6060
    %6062 = vmatprep.mubr.bf16.mxu0 %v5579
    %6063 = vmatmul.mubr.bf16.gmra.mxu0 %v5578
    %v6064 = vpop.f32.mrf.mxu0
    %v6065 = vadd.f32 0.0, %v6064
    %v6066 = vpop.f32.mrf.mxu0
    %v6067 = vadd.f32 0.0, %v6066
    %v6068 = vpop.f32.mrf.mxu0
    %v6069 = vadd.f32 0.0, %v6068
    %v6070 = vpop.f32.mrf.mxu0
    %v6071 = vadd.f32 0.0, %v6070
    %6072 = vmatprep.mubr.bf16.mxu0 %v5583
    %6073 = vmatmul.mubr.bf16.gmra.mxu0 %v5582
    %v6074 = vpop.f32.mrf.mxu0
    %v6075 = vadd.f32 0.0, %v6074
    %v6076 = vpop.f32.mrf.mxu0
    %v6077 = vadd.f32 0.0, %v6076
    %v6078 = vpop.f32.mrf.mxu0
    %v6079 = vadd.f32 0.0, %v6078
    %v6080 = vpop.f32.mrf.mxu0
    %v6081 = vadd.f32 0.0, %v6080
    %6082 = vdwg.mxu0
    %6083 = vmatprep.subr.bf16.mxu0 %v5889
    %6084 = vmatpush1.bf16.msra.mxu0 %v5888
    %6085 = vmatprep.subr.bf16.mxu0 %v5887
    %6086 = vmatpush1.bf16.msra.mxu0 %v5886
    %6087 = vmatprep.subr.bf16.mxu0 %v5885
    %6088 = vmatpush1.bf16.msra.mxu0 %v5884
    %6089 = vmatprep.subr.bf16.mxu0 %v5883
    %6090 = vmatpush1.bf16.msra.mxu0 %v5882
    %6091 = vmatprep.subr.bf16.mxu0 %v5881
    %6092 = vmatpush1.bf16.msra.mxu0 %v5880
    %6093 = vmatprep.subr.bf16.mxu0 %v5879
    %6094 = vmatpush1.bf16.msra.mxu0 %v5878
    %6095 = vmatprep.subr.bf16.mxu0 %v5877
    %6096 = vmatpush1.bf16.msra.mxu0 %v5876
    %6097 = vmatprep.subr.bf16.mxu0 %v5875
    %6098 = vmatpush1.bf16.msra.mxu0 %v5874
    %6099 = vmatprep.subr.bf16.mxu0 %v5905
    %6100 = vmatpush2.bf16.msra.mxu0 %v5904
    %6101 = vmatprep.subr.bf16.mxu0 %v5903
    %6102 = vmatpush2.bf16.msra.mxu0 %v5902
    %6103 = vmatprep.subr.bf16.mxu0 %v5901
    %6104 = vmatpush2.bf16.msra.mxu0 %v5900
    %6105 = vmatprep.subr.bf16.mxu0 %v5899
    %6106 = vmatpush2.bf16.msra.mxu0 %v5898
    %6107 = vmatprep.subr.bf16.mxu0 %v5897
    %6108 = vmatpush2.bf16.msra.mxu0 %v5896
    %6109 = vmatprep.subr.bf16.mxu0 %v5895
    %6110 = vmatpush2.bf16.msra.mxu0 %v5894
    %6111 = vmatprep.subr.bf16.mxu0 %v5893
    %6112 = vmatpush2.bf16.msra.mxu0 %v5892
    %6113 = vmatprep.subr.bf16.mxu0 %v5891
    %6114 = vmatpush2.bf16.msra.mxu0 %v5890
    %6115 = vmatprep.mubr.bf16.mxu0 %v5557
    %6116 = vmatmul.mubr.bf16.gmra.mxu0 %v5556
    %v6117 = vpop.f32.mrf.mxu0
    %v6118 = vadd.f32 %v6005, %v6117
    %v6119 = vpop.f32.mrf.mxu0
    %v6120 = vadd.f32 %v6007, %v6119
    %v6121 = vpop.f32.mrf.mxu0
    %v6122 = vadd.f32 %v6009, %v6121
    %v6123 = vpop.f32.mrf.mxu0
    %v6124 = vadd.f32 %v6011, %v6123
    %6125 = vmatprep.mubr.bf16.mxu0 %v5561
    %6126 = vmatmul.mubr.bf16.gmra.mxu0 %v5560
    %v6127 = vpop.f32.mrf.mxu0
    %v6128 = vadd.f32 %v6015, %v6127
    %v6129 = vpop.f32.mrf.mxu0
    %v6130 = vadd.f32 %v6017, %v6129
    %v6131 = vpop.f32.mrf.mxu0
    %v6132 = vadd.f32 %v6019, %v6131
    %v6133 = vpop.f32.mrf.mxu0
    %v6134 = vadd.f32 %v6021, %v6133
    %6135 = vmatprep.mubr.bf16.mxu0 %v5565
    %6136 = vmatmul.mubr.bf16.gmra.mxu0 %v5564
    %v6137 = vpop.f32.mrf.mxu0
    %v6138 = vadd.f32 %v6025, %v6137
    %v6139 = vpop.f32.mrf.mxu0
    %v6140 = vadd.f32 %v6027, %v6139
    %v6141 = vpop.f32.mrf.mxu0
    %v6142 = vadd.f32 %v6029, %v6141
    %v6143 = vpop.f32.mrf.mxu0
    %v6144 = vadd.f32 %v6031, %v6143
    %6145 = vmatprep.mubr.bf16.mxu0 %v5569
    %6146 = vmatmul.mubr.bf16.gmra.mxu0 %v5568
    %v6147 = vpop.f32.mrf.mxu0
    %v6148 = vadd.f32 %v6035, %v6147
    %v6149 = vpop.f32.mrf.mxu0
    %v6150 = vadd.f32 %v6037, %v6149
    %v6151 = vpop.f32.mrf.mxu0
    %v6152 = vadd.f32 %v6039, %v6151
    %v6153 = vpop.f32.mrf.mxu0
    %v6154 = vadd.f32 %v6041, %v6153
    %6155 = vmatprep.mubr.bf16.mxu0 %v5573
    %6156 = vmatmul.mubr.bf16.gmra.mxu0 %v5572
    %v6157 = vpop.f32.mrf.mxu0
    %v6158 = vadd.f32 %v6045, %v6157
    %v6159 = vpop.f32.mrf.mxu0
    %v6160 = vadd.f32 %v6047, %v6159
    %v6161 = vpop.f32.mrf.mxu0
    %v6162 = vadd.f32 %v6049, %v6161
    %v6163 = vpop.f32.mrf.mxu0
    %v6164 = vadd.f32 %v6051, %v6163
    %6165 = vmatprep.mubr.bf16.mxu0 %v5577
    %6166 = vmatmul.mubr.bf16.gmra.mxu0 %v5576
    %v6167 = vpop.f32.mrf.mxu0
    %v6168 = vadd.f32 %v6055, %v6167
    %v6169 = vpop.f32.mrf.mxu0
    %v6170 = vadd.f32 %v6057, %v6169
    %v6171 = vpop.f32.mrf.mxu0
    %v6172 = vadd.f32 %v6059, %v6171
    %v6173 = vpop.f32.mrf.mxu0
    %v6174 = vadd.f32 %v6061, %v6173
    %6175 = vmatprep.mubr.bf16.mxu0 %v5581
    %6176 = vmatmul.mubr.bf16.gmra.mxu0 %v5580
    %v6177 = vpop.f32.mrf.mxu0
    %v6178 = vadd.f32 %v6065, %v6177
    %v6179 = vpop.f32.mrf.mxu0
    %v6180 = vadd.f32 %v6067, %v6179
    %v6181 = vpop.f32.mrf.mxu0
    %v6182 = vadd.f32 %v6069, %v6181
    %v6183 = vpop.f32.mrf.mxu0
    %v6184 = vadd.f32 %v6071, %v6183
    %6185 = vmatprep.mubr.bf16.mxu0 %v5585
    %6186 = vmatmul.mubr.bf16.gmra.mxu0 %v5584
    %v6187 = vpop.f32.mrf.mxu0
    %v6188 = vadd.f32 %v6075, %v6187
    %v6189 = vpop.f32.mrf.mxu0
    %v6190 = vadd.f32 %v6077, %v6189
    %v6191 = vpop.f32.mrf.mxu0
    %v6192 = vadd.f32 %v6079, %v6191
    %v6193 = vpop.f32.mrf.mxu0
    %v6194 = vadd.f32 %v6081, %v6193
    %6195 = vdwg.mxu0
    %v6196 = vld [vmem:[#allocation13 + $0x13] sm:$0x1]
    %v6198 = vlaneseq
    %v6199 = vshrl.u32 %v6198, 7
    %v6200 = vsub.s32 0, %v6199
    %v6201 = vrot.slane %v6196, %v6200
    %v6203 = vadd.f32 %v6118, %v6201
    %v6204 = vadd.f32 %v6122, %v6201
    %v6205 = vadd.f32 %v6128, %v6201
    %v6206 = vadd.f32 %v6132, %v6201
    %v6207 = vadd.f32 %v6138, %v6201
    %v6208 = vadd.f32 %v6142, %v6201
    %v6209 = vadd.f32 %v6148, %v6201
    %v6210 = vadd.f32 %v6152, %v6201
    %v6211 = vadd.f32 %v6158, %v6201
    %v6212 = vadd.f32 %v6162, %v6201
    %v6213 = vadd.f32 %v6168, %v6201
    %v6214 = vadd.f32 %v6172, %v6201
    %v6215 = vadd.f32 %v6178, %v6201
    %v6216 = vadd.f32 %v6182, %v6201
    %v6217 = vadd.f32 %v6188, %v6201
    %v6218 = vadd.f32 %v6192, %v6201
    %v6219 = vld [vmem:[#allocation13 + $0x14] sm:$0x1]
    %v6221 = vlaneseq
    %v6222 = vshrl.u32 %v6221, 7
    %v6223 = vsub.s32 0, %v6222
    %v6224 = vrot.slane %v6219, %v6223
    %v6226 = vadd.f32 %v6120, %v6224
    %v6227 = vadd.f32 %v6124, %v6224
    %v6228 = vadd.f32 %v6130, %v6224
    %v6229 = vadd.f32 %v6134, %v6224
    %v6230 = vadd.f32 %v6140, %v6224
    %v6231 = vadd.f32 %v6144, %v6224
    %v6232 = vadd.f32 %v6150, %v6224
    %v6233 = vadd.f32 %v6154, %v6224
    %v6234 = vadd.f32 %v6160, %v6224
    %v6235 = vadd.f32 %v6164, %v6224
    %v6236 = vadd.f32 %v6170, %v6224
    %v6237 = vadd.f32 %v6174, %v6224
    %v6238 = vadd.f32 %v6180, %v6224
    %v6239 = vadd.f32 %v6184, %v6224
    %v6240 = vadd.f32 %v6190, %v6224
    %v6241 = vadd.f32 %v6194, %v6224
    %v6242 = vmax.f32 %v6226, 0.0
    %v6243 = vmax.f32 %v6227, 0.0
    %v6244 = vmax.f32 %v6228, 0.0
    %v6245 = vmax.f32 %v6229, 0.0
    %v6246 = vmax.f32 %v6230, 0.0
    %v6247 = vmax.f32 %v6231, 0.0
    %v6248 = vmax.f32 %v6232, 0.0
    %v6249 = vmax.f32 %v6233, 0.0
    %v6250 = vmax.f32 %v6234, 0.0
    %v6251 = vmax.f32 %v6235, 0.0
    %v6252 = vmax.f32 %v6236, 0.0
    %v6253 = vmax.f32 %v6237, 0.0
    %v6254 = vmax.f32 %v6238, 0.0
    %v6255 = vmax.f32 %v6239, 0.0
    %v6256 = vmax.f32 %v6240, 0.0
    %v6257 = vmax.f32 %v6241, 0.0
    %vm6258 = vcmp.ne.f32.partialorder %v6226, %v6226
    %vm6259 = vcmp.ne.f32.partialorder %v6227, %v6227
    %vm6260 = vcmp.ne.f32.partialorder %v6228, %v6228
    %vm6261 = vcmp.ne.f32.partialorder %v6229, %v6229
    %vm6262 = vcmp.ne.f32.partialorder %v6230, %v6230
    %vm6263 = vcmp.ne.f32.partialorder %v6231, %v6231
    %vm6264 = vcmp.ne.f32.partialorder %v6232, %v6232
    %vm6265 = vcmp.ne.f32.partialorder %v6233, %v6233
    %vm6266 = vcmp.ne.f32.partialorder %v6234, %v6234
    %vm6267 = vcmp.ne.f32.partialorder %v6235, %v6235
    %vm6268 = vcmp.ne.f32.partialorder %v6236, %v6236
    %vm6269 = vcmp.ne.f32.partialorder %v6237, %v6237
    %vm6270 = vcmp.ne.f32.partialorder %v6238, %v6238
    %vm6271 = vcmp.ne.f32.partialorder %v6239, %v6239
    %vm6272 = vcmp.ne.f32.partialorder %v6240, %v6240
    %vm6273 = vcmp.ne.f32.partialorder %v6241, %v6241
    %v6274 = vadd.f32 %v6226, 0.0
    %v6275 = vadd.f32 %v6227, 0.0
    %v6276 = vadd.f32 %v6228, 0.0
    %v6277 = vadd.f32 %v6229, 0.0
    %v6278 = vadd.f32 %v6230, 0.0
    %v6279 = vadd.f32 %v6231, 0.0
    %v6280 = vadd.f32 %v6232, 0.0
    %v6281 = vadd.f32 %v6233, 0.0
    %v6282 = vadd.f32 %v6234, 0.0
    %v6283 = vadd.f32 %v6235, 0.0
    %v6284 = vadd.f32 %v6236, 0.0
    %v6285 = vadd.f32 %v6237, 0.0
    %v6286 = vadd.f32 %v6238, 0.0
    %v6287 = vadd.f32 %v6239, 0.0
    %v6288 = vadd.f32 %v6240, 0.0
    %v6289 = vadd.f32 %v6241, 0.0
    %v6290 = vand.u32 2147483647, %v6226
    %v6291 = vand.u32 2147483647, %v6227
    %v6292 = vand.u32 2147483647, %v6228
    %v6293 = vand.u32 2147483647, %v6229
    %v6294 = vand.u32 2147483647, %v6230
    %v6295 = vand.u32 2147483647, %v6231
    %v6296 = vand.u32 2147483647, %v6232
    %v6297 = vand.u32 2147483647, %v6233
    %v6298 = vand.u32 2147483647, %v6234
    %v6299 = vand.u32 2147483647, %v6235
    %v6300 = vand.u32 2147483647, %v6236
    %v6301 = vand.u32 2147483647, %v6237
    %v6302 = vand.u32 2147483647, %v6238
    %v6303 = vand.u32 2147483647, %v6239
    %v6304 = vand.u32 2147483647, %v6240
    %v6305 = vand.u32 2147483647, %v6241
    %v6306 = vsub.f32 0.0, %v6290
    %v6307 = vsub.f32 0.0, %v6291
    %v6308 = vsub.f32 0.0, %v6292
    %v6309 = vsub.f32 0.0, %v6293
    %v6310 = vsub.f32 0.0, %v6294
    %v6311 = vsub.f32 0.0, %v6295
    %v6312 = vsub.f32 0.0, %v6296
    %v6313 = vsub.f32 0.0, %v6297
    %v6314 = vsub.f32 0.0, %v6298
    %v6315 = vsub.f32 0.0, %v6299
    %v6316 = vsub.f32 0.0, %v6300
    %v6317 = vsub.f32 0.0, %v6301
    %v6318 = vsub.f32 0.0, %v6302
    %v6319 = vsub.f32 0.0, %v6303
    %v6320 = vsub.f32 0.0, %v6304
    %v6321 = vsub.f32 0.0, %v6305
    %v6322 = vmul.f32 %v6306, 1.442695
    %v6323 = vpow.pop %v6322
    %v6324 = vmul.f32 %v6307, 1.442695
    %v6325 = vpow.pop %v6324
    %v6326 = vmul.f32 %v6308, 1.442695
    %v6327 = vpow.pop %v6326
    %v6328 = vmul.f32 %v6309, 1.442695
    %v6329 = vpow.pop %v6328
    %v6330 = vmul.f32 %v6310, 1.442695
    %v6331 = vpow.pop %v6330
    %v6332 = vmul.f32 %v6311, 1.442695
    %v6333 = vpow.pop %v6332
    %v6334 = vmul.f32 %v6312, 1.442695
    %v6335 = vpow.pop %v6334
    %v6336 = vmul.f32 %v6313, 1.442695
    %v6337 = vpow.pop %v6336
    %v6338 = vmul.f32 %v6314, 1.442695
    %v6339 = vpow.pop %v6338
    %v6340 = vmul.f32 %v6315, 1.442695
    %v6341 = vpow.pop %v6340
    %v6342 = vmul.f32 %v6316, 1.442695
    %v6343 = vpow.pop %v6342
    %v6344 = vmul.f32 %v6317, 1.442695
    %v6345 = vpow.pop %v6344
    %v6346 = vmul.f32 %v6318, 1.442695
    %v6347 = vpow.pop %v6346
    %v6348 = vmul.f32 %v6319, 1.442695
    %v6349 = vpow.pop %v6348
    %v6350 = vmul.f32 %v6320, 1.442695
    %v6351 = vpow.pop %v6350
    %v6352 = vmul.f32 %v6321, 1.442695
    %v6353 = vpow.pop %v6352
    %v6354 = vadd.f32 %v6323, 1.0
    %v6355 = vlog2.pop %v6354
    %v6356 = vmul.f32 %v6355, 0.6931472
    %v6357 = vmul.f32 -0.5, %v6323
    %v6358 = vadd.f32 %v6357, 1.0
    %v6359 = vmul.f32 %v6358, %v6323
    %v6360 = vand.u32 2147483647, %v6323
    %vm6361 = vcmp.lt.f32.partialorder %v6360, 0.0004427343
    %v6362 = vsel %vm6361, %v6359, %v6356
    %v6363 = vadd.f32 %v6325, 1.0
    %v6364 = vlog2.pop %v6363
    %v6365 = vmul.f32 %v6364, 0.6931472
    %v6366 = vmul.f32 -0.5, %v6325
    %v6367 = vadd.f32 %v6366, 1.0
    %v6368 = vmul.f32 %v6367, %v6325
    %v6369 = vand.u32 2147483647, %v6325
    %vm6370 = vcmp.lt.f32.partialorder %v6369, 0.0004427343
    %v6371 = vsel %vm6370, %v6368, %v6365
    %v6372 = vadd.f32 %v6327, 1.0
    %v6373 = vlog2.pop %v6372
    %v6374 = vmul.f32 %v6373, 0.6931472
    %v6375 = vmul.f32 -0.5, %v6327
    %v6376 = vadd.f32 %v6375, 1.0
    %v6377 = vmul.f32 %v6376, %v6327
    %v6378 = vand.u32 2147483647, %v6327
    %vm6379 = vcmp.lt.f32.partialorder %v6378, 0.0004427343
    %v6380 = vsel %vm6379, %v6377, %v6374
    %v6381 = vadd.f32 %v6329, 1.0
    %v6382 = vlog2.pop %v6381
    %v6383 = vmul.f32 %v6382, 0.6931472
    %v6384 = vmul.f32 -0.5, %v6329
    %v6385 = vadd.f32 %v6384, 1.0
    %v6386 = vmul.f32 %v6385, %v6329
    %v6387 = vand.u32 2147483647, %v6329
    %vm6388 = vcmp.lt.f32.partialorder %v6387, 0.0004427343
    %v6389 = vsel %vm6388, %v6386, %v6383
    %v6390 = vadd.f32 %v6331, 1.0
    %v6391 = vlog2.pop %v6390
    %v6392 = vmul.f32 %v6391, 0.6931472
    %v6393 = vmul.f32 -0.5, %v6331
    %v6394 = vadd.f32 %v6393, 1.0
    %v6395 = vmul.f32 %v6394, %v6331
    %v6396 = vand.u32 2147483647, %v6331
    %vm6397 = vcmp.lt.f32.partialorder %v6396, 0.0004427343
    %v6398 = vsel %vm6397, %v6395, %v6392
    %v6399 = vadd.f32 %v6333, 1.0
    %v6400 = vlog2.pop %v6399
    %v6401 = vmul.f32 %v6400, 0.6931472
    %v6402 = vmul.f32 -0.5, %v6333
    %v6403 = vadd.f32 %v6402, 1.0
    %v6404 = vmul.f32 %v6403, %v6333
    %v6405 = vand.u32 2147483647, %v6333
    %vm6406 = vcmp.lt.f32.partialorder %v6405, 0.0004427343
    %v6407 = vsel %vm6406, %v6404, %v6401
    %v6408 = vadd.f32 %v6335, 1.0
    %v6409 = vlog2.pop %v6408
    %v6410 = vmul.f32 %v6409, 0.6931472
    %v6411 = vmul.f32 -0.5, %v6335
    %v6412 = vadd.f32 %v6411, 1.0
    %v6413 = vmul.f32 %v6412, %v6335
    %v6414 = vand.u32 2147483647, %v6335
    %vm6415 = vcmp.lt.f32.partialorder %v6414, 0.0004427343
    %v6416 = vsel %vm6415, %v6413, %v6410
    %v6417 = vadd.f32 %v6337, 1.0
    %v6418 = vlog2.pop %v6417
    %v6419 = vmul.f32 %v6418, 0.6931472
    %v6420 = vmul.f32 -0.5, %v6337
    %v6421 = vadd.f32 %v6420, 1.0
    %v6422 = vmul.f32 %v6421, %v6337
    %v6423 = vand.u32 2147483647, %v6337
    %vm6424 = vcmp.lt.f32.partialorder %v6423, 0.0004427343
    %v6425 = vsel %vm6424, %v6422, %v6419
    %v6426 = vadd.f32 %v6339, 1.0
    %v6427 = vlog2.pop %v6426
    %v6428 = vmul.f32 %v6427, 0.6931472
    %v6429 = vmul.f32 -0.5, %v6339
    %v6430 = vadd.f32 %v6429, 1.0
    %v6431 = vmul.f32 %v6430, %v6339
    %v6432 = vand.u32 2147483647, %v6339
    %vm6433 = vcmp.lt.f32.partialorder %v6432, 0.0004427343
    %v6434 = vsel %vm6433, %v6431, %v6428
    %v6435 = vadd.f32 %v6341, 1.0
    %v6436 = vlog2.pop %v6435
    %v6437 = vmul.f32 %v6436, 0.6931472
    %v6438 = vmul.f32 -0.5, %v6341
    %v6439 = vadd.f32 %v6438, 1.0
    %v6440 = vmul.f32 %v6439, %v6341
    %v6441 = vand.u32 2147483647, %v6341
    %vm6442 = vcmp.lt.f32.partialorder %v6441, 0.0004427343
    %v6443 = vsel %vm6442, %v6440, %v6437
    %v6444 = vadd.f32 %v6343, 1.0
    %v6445 = vlog2.pop %v6444
    %v6446 = vmul.f32 %v6445, 0.6931472
    %v6447 = vmul.f32 -0.5, %v6343
    %v6448 = vadd.f32 %v6447, 1.0
    %v6449 = vmul.f32 %v6448, %v6343
    %v6450 = vand.u32 2147483647, %v6343
    %vm6451 = vcmp.lt.f32.partialorder %v6450, 0.0004427343
    %v6452 = vsel %vm6451, %v6449, %v6446
    %v6453 = vadd.f32 %v6345, 1.0
    %v6454 = vlog2.pop %v6453
    %v6455 = vmul.f32 %v6454, 0.6931472
    %v6456 = vmul.f32 -0.5, %v6345
    %v6457 = vadd.f32 %v6456, 1.0
    %v6458 = vmul.f32 %v6457, %v6345
    %v6459 = vand.u32 2147483647, %v6345
    %vm6460 = vcmp.lt.f32.partialorder %v6459, 0.0004427343
    %v6461 = vsel %vm6460, %v6458, %v6455
    %v6462 = vadd.f32 %v6347, 1.0
    %v6463 = vlog2.pop %v6462
    %v6464 = vmul.f32 %v6463, 0.6931472
    %v6465 = vmul.f32 -0.5, %v6347
    %v6466 = vadd.f32 %v6465, 1.0
    %v6467 = vmul.f32 %v6466, %v6347
    %v6468 = vand.u32 2147483647, %v6347
    %vm6469 = vcmp.lt.f32.partialorder %v6468, 0.0004427343
    %v6470 = vsel %vm6469, %v6467, %v6464
    %v6471 = vadd.f32 %v6349, 1.0
    %v6472 = vlog2.pop %v6471
    %v6473 = vmul.f32 %v6472, 0.6931472
    %v6474 = vmul.f32 -0.5, %v6349
    %v6475 = vadd.f32 %v6474, 1.0
    %v6476 = vmul.f32 %v6475, %v6349
    %v6477 = vand.u32 2147483647, %v6349
    %vm6478 = vcmp.lt.f32.partialorder %v6477, 0.0004427343
    %v6479 = vsel %vm6478, %v6476, %v6473
    %v6480 = vadd.f32 %v6351, 1.0
    %v6481 = vlog2.pop %v6480
    %v6482 = vmul.f32 %v6481, 0.6931472
    %v6483 = vmul.f32 -0.5, %v6351
    %v6484 = vadd.f32 %v6483, 1.0
    %v6485 = vmul.f32 %v6484, %v6351
    %v6486 = vand.u32 2147483647, %v6351
    %vm6487 = vcmp.lt.f32.partialorder %v6486, 0.0004427343
    %v6488 = vsel %vm6487, %v6485, %v6482
    %v6489 = vadd.f32 %v6353, 1.0
    %v6490 = vlog2.pop %v6489
    %v6491 = vmul.f32 %v6490, 0.6931472
    %v6492 = vmul.f32 -0.5, %v6353
    %v6493 = vadd.f32 %v6492, 1.0
    %v6494 = vmul.f32 %v6493, %v6353
    %v6495 = vand.u32 2147483647, %v6353
    %vm6496 = vcmp.lt.f32.partialorder %v6495, 0.0004427343
    %v6497 = vsel %vm6496, %v6494, %v6491
    %v6498 = vadd.f32 %v6242, %v6362
    %v6499 = vadd.f32 %v6243, %v6371
    %v6500 = vadd.f32 %v6244, %v6380
    %v6501 = vadd.f32 %v6245, %v6389
    %v6502 = vadd.f32 %v6246, %v6398
    %v6503 = vadd.f32 %v6247, %v6407
    %v6504 = vadd.f32 %v6248, %v6416
    %v6505 = vadd.f32 %v6249, %v6425
    %v6506 = vadd.f32 %v6250, %v6434
    %v6507 = vadd.f32 %v6251, %v6443
    %v6508 = vadd.f32 %v6252, %v6452
    %v6509 = vadd.f32 %v6253, %v6461
    %v6510 = vadd.f32 %v6254, %v6470
    %v6511 = vadd.f32 %v6255, %v6479
    %v6512 = vadd.f32 %v6256, %v6488
    %v6513 = vadd.f32 %v6257, %v6497
    %v6514 = vsel %vm6258, %v6274, %v6498
    %v6515 = vsel %vm6259, %v6275, %v6499
    %v6516 = vsel %vm6260, %v6276, %v6500
    %v6517 = vsel %vm6261, %v6277, %v6501
    %v6518 = vsel %vm6262, %v6278, %v6502
    %v6519 = vsel %vm6263, %v6279, %v6503
    %v6520 = vsel %vm6264, %v6280, %v6504
    %v6521 = vsel %vm6265, %v6281, %v6505
    %v6522 = vsel %vm6266, %v6282, %v6506
    %v6523 = vsel %vm6267, %v6283, %v6507
    %v6524 = vsel %vm6268, %v6284, %v6508
    %v6525 = vsel %vm6269, %v6285, %v6509
    %v6526 = vsel %vm6270, %v6286, %v6510
    %v6527 = vsel %vm6271, %v6287, %v6511
    %v6528 = vsel %vm6272, %v6288, %v6512
    %v6529 = vsel %vm6273, %v6289, %v6513
    %v6530 = vadd.f32 %v6514, 1e-10
    %v6531 = vadd.f32 %v6515, 1e-10
    %v6532 = vadd.f32 %v6516, 1e-10
    %v6533 = vadd.f32 %v6517, 1e-10
    %v6534 = vadd.f32 %v6518, 1e-10
    %v6535 = vadd.f32 %v6519, 1e-10
    %v6536 = vadd.f32 %v6520, 1e-10
    %v6537 = vadd.f32 %v6521, 1e-10
    %v6538 = vadd.f32 %v6522, 1e-10
    %v6539 = vadd.f32 %v6523, 1e-10
    %v6540 = vadd.f32 %v6524, 1e-10
    %v6541 = vadd.f32 %v6525, 1e-10
    %v6542 = vadd.f32 %v6526, 1e-10
    %v6543 = vadd.f32 %v6527, 1e-10
    %v6544 = vadd.f32 %v6528, 1e-10
    %v6545 = vadd.f32 %v6529, 1e-10
    %v6546 = vrsqrt.pop %v6530
    %v6547 = vmul.f32 %v6530, %v6546
    %vm6548 = vcmp.eq.f32.partialorder %v6530, inf
    %v6549 = vsel %vm6548, %v6530, %v6547
    %vm6550 = vcmp.eq.f32.partialorder %v6530, 0.0
    %v6551 = vand.u32 %v6530, 2147483648
    %v6552 = vsel %vm6550, %v6551, %v6549
    %v6553 = vrsqrt.pop %v6531
    %v6554 = vmul.f32 %v6531, %v6553
    %vm6555 = vcmp.eq.f32.partialorder %v6531, inf
    %v6556 = vsel %vm6555, %v6531, %v6554
    %vm6557 = vcmp.eq.f32.partialorder %v6531, 0.0
    %v6558 = vand.u32 %v6531, 2147483648
    %v6559 = vsel %vm6557, %v6558, %v6556
    %v6560 = vrsqrt.pop %v6532
    %v6561 = vmul.f32 %v6532, %v6560
    %vm6562 = vcmp.eq.f32.partialorder %v6532, inf
    %v6563 = vsel %vm6562, %v6532, %v6561
    %vm6564 = vcmp.eq.f32.partialorder %v6532, 0.0
    %v6565 = vand.u32 %v6532, 2147483648
    %v6566 = vsel %vm6564, %v6565, %v6563
    %v6567 = vrsqrt.pop %v6533
    %v6568 = vmul.f32 %v6533, %v6567
    %vm6569 = vcmp.eq.f32.partialorder %v6533, inf
    %v6570 = vsel %vm6569, %v6533, %v6568
    %vm6571 = vcmp.eq.f32.partialorder %v6533, 0.0
    %v6572 = vand.u32 %v6533, 2147483648
    %v6573 = vsel %vm6571, %v6572, %v6570
    %v6574 = vrsqrt.pop %v6534
    %v6575 = vmul.f32 %v6534, %v6574
    %vm6576 = vcmp.eq.f32.partialorder %v6534, inf
    %v6577 = vsel %vm6576, %v6534, %v6575
    %vm6578 = vcmp.eq.f32.partialorder %v6534, 0.0
    %v6579 = vand.u32 %v6534, 2147483648
    %v6580 = vsel %vm6578, %v6579, %v6577
    %v6581 = vrsqrt.pop %v6535
    %v6582 = vmul.f32 %v6535, %v6581
    %vm6583 = vcmp.eq.f32.partialorder %v6535, inf
    %v6584 = vsel %vm6583, %v6535, %v6582
    %vm6585 = vcmp.eq.f32.partialorder %v6535, 0.0
    %v6586 = vand.u32 %v6535, 2147483648
    %v6587 = vsel %vm6585, %v6586, %v6584
    %v6588 = vrsqrt.pop %v6536
    %v6589 = vmul.f32 %v6536, %v6588
    %vm6590 = vcmp.eq.f32.partialorder %v6536, inf
    %v6591 = vsel %vm6590, %v6536, %v6589
    %vm6592 = vcmp.eq.f32.partialorder %v6536, 0.0
    %v6593 = vand.u32 %v6536, 2147483648
    %v6594 = vsel %vm6592, %v6593, %v6591
    %v6595 = vrsqrt.pop %v6537
    %v6596 = vmul.f32 %v6537, %v6595
    %vm6597 = vcmp.eq.f32.partialorder %v6537, inf
    %v6598 = vsel %vm6597, %v6537, %v6596
    %vm6599 = vcmp.eq.f32.partialorder %v6537, 0.0
    %v6600 = vand.u32 %v6537, 2147483648
    %v6601 = vsel %vm6599, %v6600, %v6598
    %v6602 = vrsqrt.pop %v6538
    %v6603 = vmul.f32 %v6538, %v6602
    %vm6604 = vcmp.eq.f32.partialorder %v6538, inf
    %v6605 = vsel %vm6604, %v6538, %v6603
    %vm6606 = vcmp.eq.f32.partialorder %v6538, 0.0
    %v6607 = vand.u32 %v6538, 2147483648
    %v6608 = vsel %vm6606, %v6607, %v6605
    %v6609 = vrsqrt.pop %v6539
    %v6610 = vmul.f32 %v6539, %v6609
    %vm6611 = vcmp.eq.f32.partialorder %v6539, inf
    %v6612 = vsel %vm6611, %v6539, %v6610
    %vm6613 = vcmp.eq.f32.partialorder %v6539, 0.0
    %v6614 = vand.u32 %v6539, 2147483648
    %v6615 = vsel %vm6613, %v6614, %v6612
    %v6616 = vrsqrt.pop %v6540
    %v6617 = vmul.f32 %v6540, %v6616
    %vm6618 = vcmp.eq.f32.partialorder %v6540, inf
    %v6619 = vsel %vm6618, %v6540, %v6617
    %vm6620 = vcmp.eq.f32.partialorder %v6540, 0.0
    %v6621 = vand.u32 %v6540, 2147483648
    %v6622 = vsel %vm6620, %v6621, %v6619
    %v6623 = vrsqrt.pop %v6541
    %v6624 = vmul.f32 %v6541, %v6623
    %vm6625 = vcmp.eq.f32.partialorder %v6541, inf
    %v6626 = vsel %vm6625, %v6541, %v6624
    %vm6627 = vcmp.eq.f32.partialorder %v6541, 0.0
    %v6628 = vand.u32 %v6541, 2147483648
    %v6629 = vsel %vm6627, %v6628, %v6626
    %v6630 = vrsqrt.pop %v6542
    %v6631 = vmul.f32 %v6542, %v6630
    %vm6632 = vcmp.eq.f32.partialorder %v6542, inf
    %v6633 = vsel %vm6632, %v6542, %v6631
    %vm6634 = vcmp.eq.f32.partialorder %v6542, 0.0
    %v6635 = vand.u32 %v6542, 2147483648
    %v6636 = vsel %vm6634, %v6635, %v6633
    %v6637 = vrsqrt.pop %v6543
    %v6638 = vmul.f32 %v6543, %v6637
    %vm6639 = vcmp.eq.f32.partialorder %v6543, inf
    %v6640 = vsel %vm6639, %v6543, %v6638
    %vm6641 = vcmp.eq.f32.partialorder %v6543, 0.0
    %v6642 = vand.u32 %v6543, 2147483648
    %v6643 = vsel %vm6641, %v6642, %v6640
    %v6644 = vrsqrt.pop %v6544
    %v6645 = vmul.f32 %v6544, %v6644
    %vm6646 = vcmp.eq.f32.partialorder %v6544, inf
    %v6647 = vsel %vm6646, %v6544, %v6645
    %vm6648 = vcmp.eq.f32.partialorder %v6544, 0.0
    %v6649 = vand.u32 %v6544, 2147483648
    %v6650 = vsel %vm6648, %v6649, %v6647
    %v6651 = vrsqrt.pop %v6545
    %v6652 = vmul.f32 %v6545, %v6651
    %vm6653 = vcmp.eq.f32.partialorder %v6545, inf
    %v6654 = vsel %vm6653, %v6545, %v6652
    %vm6655 = vcmp.eq.f32.partialorder %v6545, 0.0
    %v6656 = vand.u32 %v6545, 2147483648
    %v6657 = vsel %vm6655, %v6656, %v6654
    %v6658 = vmul.f32 %v159, %v6552
    %v6659 = vmul.f32 %v160, %v6559
    %v6660 = vmul.f32 %v161, %v6566
    %v6661 = vmul.f32 %v162, %v6573
    %v6662 = vmul.f32 %v163, %v6580
    %v6663 = vmul.f32 %v164, %v6587
    %v6664 = vmul.f32 %v165, %v6594
    %v6665 = vmul.f32 %v166, %v6601
    %v6666 = vmul.f32 %v167, %v6608
    %v6667 = vmul.f32 %v168, %v6615
    %v6668 = vmul.f32 %v169, %v6622
    %v6669 = vmul.f32 %v170, %v6629
    %v6670 = vmul.f32 %v171, %v6636
    %v6671 = vmul.f32 %v172, %v6643
    %v6672 = vmul.f32 %v173, %v6650
    %v6673 = vmul.f32 %v174, %v6657
    %v6674 = vadd.f32 %v6203, %v6658
    %v6675 = vadd.f32 %v6204, %v6659
    %v6676 = vadd.f32 %v6205, %v6660
    %v6677 = vadd.f32 %v6206, %v6661
    %v6678 = vadd.f32 %v6207, %v6662
    %v6679 = vadd.f32 %v6208, %v6663
    %v6680 = vadd.f32 %v6209, %v6664
    %v6681 = vadd.f32 %v6210, %v6665
    %v6682 = vadd.f32 %v6211, %v6666
    %v6683 = vadd.f32 %v6212, %v6667
    %v6684 = vadd.f32 %v6213, %v6668
    %v6685 = vadd.f32 %v6214, %v6669
    %v6686 = vadd.f32 %v6215, %v6670
    %v6687 = vadd.f32 %v6216, %v6671
    %v6688 = vadd.f32 %v6217, %v6672
    %v6689 = vadd.f32 %v6218, %v6673
    %v6690 = vpack.c.bf16 %v6675, %v6674
    %v6691 = vpack.c.bf16 %v6677, %v6676
    %v6692 = vpack.c.bf16 %v6679, %v6678
    %v6693 = vpack.c.bf16 %v6681, %v6680
    %v6694 = vpack.c.bf16 %v6683, %v6682
    %v6695 = vpack.c.bf16 %v6685, %v6684
    %v6696 = vpack.c.bf16 %v6687, %v6686
    %v6697 = vpack.c.bf16 %v6689, %v6688
    %v6698 = vld [vmem:[#allocation11] sm:$0xff]
    %v6699 = vld [vmem:[#allocation11 + $0x8] sm:$0xff]
    %v6700 = vld [vmem:[#allocation13 + $0x15] sm:$0xf]
    %v6702 = vlaneseq
    %v6703 = vshrl.u32 %v6702, 7
    %v6704 = vsub.s32 0, %v6703
    %v6705 = vrot.slane %v6700, %v6704
    %v6706 = vlaneseq
    %v6707 = vshrl.u32 %v6706, 7
    %v6708 = vsub.s32 1, %v6707
    %v6709 = vrot.slane %v6700, %v6708
    %v6710 = vlaneseq
    %v6711 = vshrl.u32 %v6710, 7
    %v6712 = vsub.s32 2, %v6711
    %v6713 = vrot.slane %v6700, %v6712
    %v6714 = vlaneseq
    %v6715 = vshrl.u32 %v6714, 7
    %v6716 = vsub.s32 3, %v6715
    %v6717 = vrot.slane %v6700, %v6716
    %v6724 = vunpack.c.l.b16 %v6698
    %v6725 = vunpack.c.h.b16 %v6698
    %v6726 = vunpack.c.l.b16 %v6699
    %v6727 = vunpack.c.h.b16 %v6699
    %v6728 = vpack.c.b16 %v6724, %v6724
    %v6729 = vpack.c.b16 %v6725, %v6725
    %v6730 = vpack.c.b16 %v6726, %v6726
    %v6731 = vpack.c.b16 %v6727, %v6727
    %vm6732 = vcmask 64512
    %v6734 = vsel %vm6732, %v6690, 0
    %v6737 = vsel %vm6732, %v6691, 0
    %v6740 = vsel %vm6732, %v6692, 0
    %v6743 = vsel %vm6732, %v6693, 0
    %v6746 = vsel %vm6732, %v6694, 0
    %v6749 = vsel %vm6732, %v6695, 0
    %v6752 = vsel %vm6732, %v6696, 0
    %v6755 = vsel %vm6732, %v6697, 0
    %vm6757 = vcmask 1043456
    %v6759 = vsel %vm6757, %v6728, 0
    %v6762 = vsel %vm6757, %v6729, 0
    %v6765 = vsel %vm6757, %v6730, 0
    %v6768 = vsel %vm6757, %v6731, 0
    %6770 = vmatprep.subr.bf16.mxu0 0
    %6771 = vmatpush1.bf16.msra.mxu0 0
    %6772 = vmatprep.subr.bf16.mxu0 0
    %6773 = vmatpush1.bf16.msra.mxu0 0
    %6774 = vmatprep.subr.bf16.mxu0 0
    %6775 = vmatpush1.bf16.msra.mxu0 0
    %6776 = vmatprep.subr.bf16.mxu0 0
    %6777 = vmatpush1.bf16.msra.mxu0 0
    %6778 = vmatprep.subr.bf16.mxu0 0
    %6779 = vmatpush1.bf16.msra.mxu0 0
    %6780 = vmatprep.subr.bf16.mxu0 0
    %6781 = vmatpush1.bf16.msra.mxu0 0
    %6782 = vmatprep.subr.bf16.mxu0 0
    %6783 = vmatpush1.bf16.msra.mxu0 0
    %6784 = vmatprep.subr.bf16.mxu0 %v6762
    %6785 = vmatpush1.bf16.msra.mxu0 %v6759
    %6786 = vmatprep.subr.bf16.mxu0 0
    %6787 = vmatpush2.bf16.msra.mxu0 0
    %6788 = vmatprep.subr.bf16.mxu0 0
    %6789 = vmatpush2.bf16.msra.mxu0 0
    %6790 = vmatprep.subr.bf16.mxu0 0
    %6791 = vmatpush2.bf16.msra.mxu0 0
    %6792 = vmatprep.subr.bf16.mxu0 0
    %6793 = vmatpush2.bf16.msra.mxu0 0
    %6794 = vmatprep.subr.bf16.mxu0 0
    %6795 = vmatpush2.bf16.msra.mxu0 0
    %6796 = vmatprep.subr.bf16.mxu0 0
    %6797 = vmatpush2.bf16.msra.mxu0 0
    %6798 = vmatprep.subr.bf16.mxu0 0
    %6799 = vmatpush2.bf16.msra.mxu0 0
    %6800 = vmatprep.subr.bf16.mxu0 0
    %6801 = vmatpush2.bf16.msra.mxu0 0
    %6802 = vmatprep.mubr.bf16.mxu0 0
    %6803 = vmatmul.mubr.bf16.gmra.mxu0 %v6734
    %v6804 = vpop.f32.mrf.mxu0
    %v6805 = vadd.f32 %v6705, %v6804
    %v6806 = vpop.f32.mrf.mxu0
    %v6807 = vadd.f32 %v6709, %v6806
    %v6808 = vpop.f32.mrf.mxu0
    %v6809 = vadd.f32 %v6705, %v6808
    %v6810 = vpop.f32.mrf.mxu0
    %v6811 = vadd.f32 %v6709, %v6810
    %6812 = vmatprep.mubr.bf16.mxu0 0
    %6813 = vmatmul.mubr.bf16.gmra.mxu0 %v6737
    %v6814 = vpop.f32.mrf.mxu0
    %v6815 = vadd.f32 %v6705, %v6814
    %v6816 = vpop.f32.mrf.mxu0
    %v6817 = vadd.f32 %v6709, %v6816
    %v6818 = vpop.f32.mrf.mxu0
    %v6819 = vadd.f32 %v6705, %v6818
    %v6820 = vpop.f32.mrf.mxu0
    %v6821 = vadd.f32 %v6709, %v6820
    %6822 = vmatprep.mubr.bf16.mxu0 0
    %6823 = vmatmul.mubr.bf16.gmra.mxu0 %v6740
    %v6824 = vpop.f32.mrf.mxu0
    %v6825 = vadd.f32 %v6705, %v6824
    %v6826 = vpop.f32.mrf.mxu0
    %v6827 = vadd.f32 %v6709, %v6826
    %v6828 = vpop.f32.mrf.mxu0
    %v6829 = vadd.f32 %v6705, %v6828
    %v6830 = vpop.f32.mrf.mxu0
    %v6831 = vadd.f32 %v6709, %v6830
    %6832 = vmatprep.mubr.bf16.mxu0 0
    %6833 = vmatmul.mubr.bf16.gmra.mxu0 %v6743
    %v6834 = vpop.f32.mrf.mxu0
    %v6835 = vadd.f32 %v6705, %v6834
    %v6836 = vpop.f32.mrf.mxu0
    %v6837 = vadd.f32 %v6709, %v6836
    %v6838 = vpop.f32.mrf.mxu0
    %v6839 = vadd.f32 %v6705, %v6838
    %v6840 = vpop.f32.mrf.mxu0
    %v6841 = vadd.f32 %v6709, %v6840
    %6842 = vmatprep.mubr.bf16.mxu0 0
    %6843 = vmatmul.mubr.bf16.gmra.mxu0 %v6746
    %v6844 = vpop.f32.mrf.mxu0
    %v6845 = vadd.f32 %v6705, %v6844
    %v6846 = vpop.f32.mrf.mxu0
    %v6847 = vadd.f32 %v6709, %v6846
    %v6848 = vpop.f32.mrf.mxu0
    %v6849 = vadd.f32 %v6705, %v6848
    %v6850 = vpop.f32.mrf.mxu0
    %v6851 = vadd.f32 %v6709, %v6850
    %6852 = vmatprep.mubr.bf16.mxu0 0
    %6853 = vmatmul.mubr.bf16.gmra.mxu0 %v6749
    %v6854 = vpop.f32.mrf.mxu0
    %v6855 = vadd.f32 %v6705, %v6854
    %v6856 = vpop.f32.mrf.mxu0
    %v6857 = vadd.f32 %v6709, %v6856
    %v6858 = vpop.f32.mrf.mxu0
    %v6859 = vadd.f32 %v6705, %v6858
    %v6860 = vpop.f32.mrf.mxu0
    %v6861 = vadd.f32 %v6709, %v6860
    %6862 = vmatprep.mubr.bf16.mxu0 0
    %6863 = vmatmul.mubr.bf16.gmra.mxu0 %v6752
    %v6864 = vpop.f32.mrf.mxu0
    %v6865 = vadd.f32 %v6705, %v6864
    %v6866 = vpop.f32.mrf.mxu0
    %v6867 = vadd.f32 %v6709, %v6866
    %v6868 = vpop.f32.mrf.mxu0
    %v6869 = vadd.f32 %v6705, %v6868
    %v6870 = vpop.f32.mrf.mxu0
    %v6871 = vadd.f32 %v6709, %v6870
    %6872 = vmatprep.mubr.bf16.mxu0 0
    %6873 = vmatmul.mubr.bf16.gmra.mxu0 %v6755
    %v6874 = vpop.f32.mrf.mxu0
    %v6875 = vadd.f32 %v6705, %v6874
    %v6876 = vpop.f32.mrf.mxu0
    %v6877 = vadd.f32 %v6709, %v6876
    %v6878 = vpop.f32.mrf.mxu0
    %v6879 = vadd.f32 %v6705, %v6878
    %v6880 = vpop.f32.mrf.mxu0
    %v6881 = vadd.f32 %v6709, %v6880
    %6882 = vdwg.mxu0
    %6883 = vmatprep.subr.bf16.mxu0 0
    %6884 = vmatpush1.bf16.msra.mxu0 0
    %6885 = vmatprep.subr.bf16.mxu0 0
    %6886 = vmatpush1.bf16.msra.mxu0 0
    %6887 = vmatprep.subr.bf16.mxu0 0
    %6888 = vmatpush1.bf16.msra.mxu0 0
    %6889 = vmatprep.subr.bf16.mxu0 0
    %6890 = vmatpush1.bf16.msra.mxu0 0
    %6891 = vmatprep.subr.bf16.mxu0 0
    %6892 = vmatpush1.bf16.msra.mxu0 0
    %6893 = vmatprep.subr.bf16.mxu0 0
    %6894 = vmatpush1.bf16.msra.mxu0 0
    %6895 = vmatprep.subr.bf16.mxu0 0
    %6896 = vmatpush1.bf16.msra.mxu0 0
    %6897 = vmatprep.subr.bf16.mxu0 %v6768
    %6898 = vmatpush1.bf16.msra.mxu0 %v6765
    %6899 = vmatprep.subr.bf16.mxu0 0
    %6900 = vmatpush2.bf16.msra.mxu0 0
    %6901 = vmatprep.subr.bf16.mxu0 0
    %6902 = vmatpush2.bf16.msra.mxu0 0
    %6903 = vmatprep.subr.bf16.mxu0 0
    %6904 = vmatpush2.bf16.msra.mxu0 0
    %6905 = vmatprep.subr.bf16.mxu0 0
    %6906 = vmatpush2.bf16.msra.mxu0 0
    %6907 = vmatprep.subr.bf16.mxu0 0
    %6908 = vmatpush2.bf16.msra.mxu0 0
    %6909 = vmatprep.subr.bf16.mxu0 0
    %6910 = vmatpush2.bf16.msra.mxu0 0
    %6911 = vmatprep.subr.bf16.mxu0 0
    %6912 = vmatpush2.bf16.msra.mxu0 0
    %6913 = vmatprep.subr.bf16.mxu0 0
    %6914 = vmatpush2.bf16.msra.mxu0 0
    %6915 = vmatprep.mubr.bf16.mxu0 0
    %6916 = vmatmul.mubr.bf16.gmra.mxu0 %v6734
    %v6917 = vpop.f32.mrf.mxu0
    %v6918 = vadd.f32 %v6713, %v6917
    %v6919 = vpop.f32.mrf.mxu0
    %v6920 = vadd.f32 %v6717, %v6919
    %v6921 = vpop.f32.mrf.mxu0
    %v6922 = vadd.f32 %v6713, %v6921
    %v6923 = vpop.f32.mrf.mxu0
    %v6924 = vadd.f32 %v6717, %v6923
    %6925 = vmatprep.mubr.bf16.mxu0 0
    %6926 = vmatmul.mubr.bf16.gmra.mxu0 %v6737
    %v6927 = vpop.f32.mrf.mxu0
    %v6928 = vadd.f32 %v6713, %v6927
    %v6929 = vpop.f32.mrf.mxu0
    %v6930 = vadd.f32 %v6717, %v6929
    %v6931 = vpop.f32.mrf.mxu0
    %v6932 = vadd.f32 %v6713, %v6931
    %v6933 = vpop.f32.mrf.mxu0
    %v6934 = vadd.f32 %v6717, %v6933
    %6935 = vmatprep.mubr.bf16.mxu0 0
    %6936 = vmatmul.mubr.bf16.gmra.mxu0 %v6740
    %v6937 = vpop.f32.mrf.mxu0
    %v6938 = vadd.f32 %v6713, %v6937
    %v6939 = vpop.f32.mrf.mxu0
    %v6940 = vadd.f32 %v6717, %v6939
    %v6941 = vpop.f32.mrf.mxu0
    %v6942 = vadd.f32 %v6713, %v6941
    %v6943 = vpop.f32.mrf.mxu0
    %v6944 = vadd.f32 %v6717, %v6943
    %6945 = vmatprep.mubr.bf16.mxu0 0
    %6946 = vmatmul.mubr.bf16.gmra.mxu0 %v6743
    %v6947 = vpop.f32.mrf.mxu0
    %v6948 = vadd.f32 %v6713, %v6947
    %v6949 = vpop.f32.mrf.mxu0
    %v6950 = vadd.f32 %v6717, %v6949
    %v6951 = vpop.f32.mrf.mxu0
    %v6952 = vadd.f32 %v6713, %v6951
    %v6953 = vpop.f32.mrf.mxu0
    %v6954 = vadd.f32 %v6717, %v6953
    %6955 = vmatprep.mubr.bf16.mxu0 0
    %6956 = vmatmul.mubr.bf16.gmra.mxu0 %v6746
    %v6957 = vpop.f32.mrf.mxu0
    %v6958 = vadd.f32 %v6713, %v6957
    %v6959 = vpop.f32.mrf.mxu0
    %v6960 = vadd.f32 %v6717, %v6959
    %v6961 = vpop.f32.mrf.mxu0
    %v6962 = vadd.f32 %v6713, %v6961
    %v6963 = vpop.f32.mrf.mxu0
    %v6964 = vadd.f32 %v6717, %v6963
    %6965 = vmatprep.mubr.bf16.mxu0 0
    %6966 = vmatmul.mubr.bf16.gmra.mxu0 %v6749
    %v6967 = vpop.f32.mrf.mxu0
    %v6968 = vadd.f32 %v6713, %v6967
    %v6969 = vpop.f32.mrf.mxu0
    %v6970 = vadd.f32 %v6717, %v6969
    %v6971 = vpop.f32.mrf.mxu0
    %v6972 = vadd.f32 %v6713, %v6971
    %v6973 = vpop.f32.mrf.mxu0
    %v6974 = vadd.f32 %v6717, %v6973
    %6975 = vmatprep.mubr.bf16.mxu0 0
    %6976 = vmatmul.mubr.bf16.gmra.mxu0 %v6752
    %v6977 = vpop.f32.mrf.mxu0
    %v6978 = vadd.f32 %v6713, %v6977
    %v6979 = vpop.f32.mrf.mxu0
    %v6980 = vadd.f32 %v6717, %v6979
    %v6981 = vpop.f32.mrf.mxu0
    %v6982 = vadd.f32 %v6713, %v6981
    %v6983 = vpop.f32.mrf.mxu0
    %v6984 = vadd.f32 %v6717, %v6983
    %6985 = vmatprep.mubr.bf16.mxu0 0
    %6986 = vmatmul.mubr.bf16.gmra.mxu0 %v6755
    %v6987 = vpop.f32.mrf.mxu0
    %v6988 = vadd.f32 %v6713, %v6987
    %v6989 = vpop.f32.mrf.mxu0
    %v6990 = vadd.f32 %v6717, %v6989
    %v6991 = vpop.f32.mrf.mxu0
    %v6992 = vadd.f32 %v6713, %v6991
    %v6993 = vpop.f32.mrf.mxu0
    %v6994 = vadd.f32 %v6717, %v6993
    %6995 = vdwg.mxu0
    %v6996 = vmax.f32 %v6805, 0.0
    %v6997 = vmax.f32 %v6807, 0.0
    %v6998 = vmax.f32 %v6918, 0.0
    %v6999 = vmax.f32 %v6920, 0.0
    %v7000 = vmax.f32 %v6809, 0.0
    %v7001 = vmax.f32 %v6811, 0.0
    %v7002 = vmax.f32 %v6922, 0.0
    %v7003 = vmax.f32 %v6924, 0.0
    %v7004 = vmax.f32 %v6815, 0.0
    %v7005 = vmax.f32 %v6817, 0.0
    %v7006 = vmax.f32 %v6928, 0.0
    %v7007 = vmax.f32 %v6930, 0.0
    %v7008 = vmax.f32 %v6819, 0.0
    %v7009 = vmax.f32 %v6821, 0.0
    %v7010 = vmax.f32 %v6932, 0.0
    %v7011 = vmax.f32 %v6934, 0.0
    %v7012 = vmax.f32 %v6825, 0.0
    %v7013 = vmax.f32 %v6827, 0.0
    %v7014 = vmax.f32 %v6938, 0.0
    %v7015 = vmax.f32 %v6940, 0.0
    %v7016 = vmax.f32 %v6829, 0.0
    %v7017 = vmax.f32 %v6831, 0.0
    %v7018 = vmax.f32 %v6942, 0.0
    %v7019 = vmax.f32 %v6944, 0.0
    %v7020 = vmax.f32 %v6835, 0.0
    %v7021 = vmax.f32 %v6837, 0.0
    %v7022 = vmax.f32 %v6948, 0.0
    %v7023 = vmax.f32 %v6950, 0.0
    %v7024 = vmax.f32 %v6839, 0.0
    %v7025 = vmax.f32 %v6841, 0.0
    %v7026 = vmax.f32 %v6952, 0.0
    %v7027 = vmax.f32 %v6954, 0.0
    %v7028 = vmax.f32 %v6845, 0.0
    %v7029 = vmax.f32 %v6847, 0.0
    %v7030 = vmax.f32 %v6958, 0.0
    %v7031 = vmax.f32 %v6960, 0.0
    %v7032 = vmax.f32 %v6849, 0.0
    %v7033 = vmax.f32 %v6851, 0.0
    %v7034 = vmax.f32 %v6962, 0.0
    %v7035 = vmax.f32 %v6964, 0.0
    %v7036 = vmax.f32 %v6855, 0.0
    %v7037 = vmax.f32 %v6857, 0.0
    %v7038 = vmax.f32 %v6968, 0.0
    %v7039 = vmax.f32 %v6970, 0.0
    %v7040 = vmax.f32 %v6859, 0.0
    %v7041 = vmax.f32 %v6861, 0.0
    %v7042 = vmax.f32 %v6972, 0.0
    %v7043 = vmax.f32 %v6974, 0.0
    %v7044 = vmax.f32 %v6865, 0.0
    %v7045 = vmax.f32 %v6867, 0.0
    %v7046 = vmax.f32 %v6978, 0.0
    %v7047 = vmax.f32 %v6980, 0.0
    %v7048 = vmax.f32 %v6869, 0.0
    %v7049 = vmax.f32 %v6871, 0.0
    %v7050 = vmax.f32 %v6982, 0.0
    %v7051 = vmax.f32 %v6984, 0.0
    %v7052 = vmax.f32 %v6875, 0.0
    %v7053 = vmax.f32 %v6877, 0.0
    %v7054 = vmax.f32 %v6988, 0.0
    %v7055 = vmax.f32 %v6990, 0.0
    %v7056 = vmax.f32 %v6879, 0.0
    %v7057 = vmax.f32 %v6881, 0.0
    %v7058 = vmax.f32 %v6992, 0.0
    %v7059 = vmax.f32 %v6994, 0.0
    %v7060 = vpack.c.bf16 %v7000, %v6996
    %v7061 = vpack.c.bf16 %v7001, %v6997
    %v7062 = vpack.c.bf16 %v7002, %v6998
    %v7063 = vpack.c.bf16 %v7003, %v6999
    %v7064 = vpack.c.bf16 %v7008, %v7004
    %v7065 = vpack.c.bf16 %v7009, %v7005
    %v7066 = vpack.c.bf16 %v7010, %v7006
    %v7067 = vpack.c.bf16 %v7011, %v7007
    %v7068 = vpack.c.bf16 %v7016, %v7012
    %v7069 = vpack.c.bf16 %v7017, %v7013
    %v7070 = vpack.c.bf16 %v7018, %v7014
    %v7071 = vpack.c.bf16 %v7019, %v7015
    %v7072 = vpack.c.bf16 %v7024, %v7020
    %v7073 = vpack.c.bf16 %v7025, %v7021
    %v7074 = vpack.c.bf16 %v7026, %v7022
    %v7075 = vpack.c.bf16 %v7027, %v7023
    %v7076 = vpack.c.bf16 %v7032, %v7028
    %v7077 = vpack.c.bf16 %v7033, %v7029
    %v7078 = vpack.c.bf16 %v7034, %v7030
    %v7079 = vpack.c.bf16 %v7035, %v7031
    %v7080 = vpack.c.bf16 %v7040, %v7036
    %v7081 = vpack.c.bf16 %v7041, %v7037
    %v7082 = vpack.c.bf16 %v7042, %v7038
    %v7083 = vpack.c.bf16 %v7043, %v7039
    %v7084 = vpack.c.bf16 %v7048, %v7044
    %v7085 = vpack.c.bf16 %v7049, %v7045
    %v7086 = vpack.c.bf16 %v7050, %v7046
    %v7087 = vpack.c.bf16 %v7051, %v7047
    %v7088 = vpack.c.bf16 %v7056, %v7052
    %v7089 = vpack.c.bf16 %v7057, %v7053
    %v7090 = vpack.c.bf16 %v7058, %v7054
    %v7091 = vpack.c.bf16 %v7059, %v7055
    %s7092 = scalar_lea.vmem [#allocation7], 2048
    %v7093 = vld [vmem:[%s7092] sm:$0xff]
    %v7094 = vld [vmem:[%s7092 + $0x8] sm:$0xff]
    %v7095 = vld [vmem:[%s7092 + $0x10] sm:$0xff]
    %v7096 = vld [vmem:[%s7092 + $0x18] sm:$0xff]
    %v7097 = vld [vmem:[%s7092 + $0x20] sm:$0xff]
    %v7098 = vld [vmem:[%s7092 + $0x28] sm:$0xff]
    %v7099 = vld [vmem:[%s7092 + $0x30] sm:$0xff]
    %v7100 = vld [vmem:[%s7092 + $0x38] sm:$0xff]
    %v7101 = vld [vmem:[%s7092 + $0x40] sm:$0xff]
    %v7102 = vld [vmem:[%s7092 + $0x48] sm:$0xff]
    %v7103 = vld [vmem:[%s7092 + $0x50] sm:$0xff]
    %v7104 = vld [vmem:[%s7092 + $0x58] sm:$0xff]
    %v7105 = vld [vmem:[%s7092 + $0x60] sm:$0xff]
    %v7106 = vld [vmem:[%s7092 + $0x68] sm:$0xff]
    %v7107 = vld [vmem:[%s7092 + $0x70] sm:$0xff]
    %v7108 = vld [vmem:[%s7092 + $0x78] sm:$0xff]
    %v7109 = vld [vmem:[%s7092 + $0x80] sm:$0xff]
    %v7110 = vld [vmem:[%s7092 + $0x88] sm:$0xff]
    %v7111 = vld [vmem:[%s7092 + $0x90] sm:$0xff]
    %v7112 = vld [vmem:[%s7092 + $0x98] sm:$0xff]
    %v7113 = vld [vmem:[%s7092 + $0xa0] sm:$0xff]
    %v7114 = vld [vmem:[%s7092 + $0xa8] sm:$0xff]
    %v7115 = vld [vmem:[%s7092 + $0xb0] sm:$0xff]
    %v7116 = vld [vmem:[%s7092 + $0xb8] sm:$0xff]
    %v7117 = vld [vmem:[%s7092 + $0xc0] sm:$0xff]
    %v7118 = vld [vmem:[%s7092 + $0xc8] sm:$0xff]
    %v7119 = vld [vmem:[%s7092 + $0xd0] sm:$0xff]
    %v7120 = vld [vmem:[%s7092 + $0xd8] sm:$0xff]
    %v7121 = vld [vmem:[%s7092 + $0xe0] sm:$0xff]
    %v7122 = vld [vmem:[%s7092 + $0xe8] sm:$0xff]
    %v7123 = vld [vmem:[%s7092 + $0xf0] sm:$0xff]
    %v7124 = vld [vmem:[%s7092 + $0xf8] sm:$0xff]
    %v7125 = vld [vmem:[%s7092 + $0x100] sm:$0xff]
    %v7126 = vld [vmem:[%s7092 + $0x108] sm:$0xff]
    %v7127 = vld [vmem:[%s7092 + $0x110] sm:$0xff]
    %v7128 = vld [vmem:[%s7092 + $0x118] sm:$0xff]
    %v7129 = vld [vmem:[%s7092 + $0x120] sm:$0xff]
    %v7130 = vld [vmem:[%s7092 + $0x128] sm:$0xff]
    %v7131 = vld [vmem:[%s7092 + $0x130] sm:$0xff]
    %v7132 = vld [vmem:[%s7092 + $0x138] sm:$0xff]
    %v7133 = vld [vmem:[%s7092 + $0x140] sm:$0xff]
    %v7134 = vld [vmem:[%s7092 + $0x148] sm:$0xff]
    %v7135 = vld [vmem:[%s7092 + $0x150] sm:$0xff]
    %v7136 = vld [vmem:[%s7092 + $0x158] sm:$0xff]
    %v7137 = vld [vmem:[%s7092 + $0x160] sm:$0xff]
    %v7138 = vld [vmem:[%s7092 + $0x168] sm:$0xff]
    %v7139 = vld [vmem:[%s7092 + $0x170] sm:$0xff]
    %v7140 = vld [vmem:[%s7092 + $0x178] sm:$0xff]
    %v7141 = vld [vmem:[%s7092 + $0x180] sm:$0xff]
    %v7142 = vld [vmem:[%s7092 + $0x188] sm:$0xff]
    %v7143 = vld [vmem:[%s7092 + $0x190] sm:$0xff]
    %v7144 = vld [vmem:[%s7092 + $0x198] sm:$0xff]
    %v7145 = vld [vmem:[%s7092 + $0x1a0] sm:$0xff]
    %v7146 = vld [vmem:[%s7092 + $0x1a8] sm:$0xff]
    %v7147 = vld [vmem:[%s7092 + $0x1b0] sm:$0xff]
    %v7148 = vld [vmem:[%s7092 + $0x1b8] sm:$0xff]
    %v7149 = vld [vmem:[%s7092 + $0x1c0] sm:$0xff]
    %v7150 = vld [vmem:[%s7092 + $0x1c8] sm:$0xff]
    %v7151 = vld [vmem:[%s7092 + $0x1d0] sm:$0xff]
    %v7152 = vld [vmem:[%s7092 + $0x1d8] sm:$0xff]
    %v7153 = vld [vmem:[%s7092 + $0x1e0] sm:$0xff]
    %v7154 = vld [vmem:[%s7092 + $0x1e8] sm:$0xff]
    %v7155 = vld [vmem:[%s7092 + $0x1f0] sm:$0xff]
    %v7156 = vld [vmem:[%s7092 + $0x1f8] sm:$0xff]
    %v7157 = vld [vmem:[%s7092 + $0x200] sm:$0xff]
    %v7158 = vld [vmem:[%s7092 + $0x208] sm:$0xff]
    %v7159 = vld [vmem:[%s7092 + $0x210] sm:$0xff]
    %v7160 = vld [vmem:[%s7092 + $0x218] sm:$0xff]
    %v7161 = vld [vmem:[%s7092 + $0x220] sm:$0xff]
    %v7162 = vld [vmem:[%s7092 + $0x228] sm:$0xff]
    %v7163 = vld [vmem:[%s7092 + $0x230] sm:$0xff]
    %v7164 = vld [vmem:[%s7092 + $0x238] sm:$0xff]
    %v7165 = vld [vmem:[%s7092 + $0x240] sm:$0xff]
    %v7166 = vld [vmem:[%s7092 + $0x248] sm:$0xff]
    %v7167 = vld [vmem:[%s7092 + $0x250] sm:$0xff]
    %v7168 = vld [vmem:[%s7092 + $0x258] sm:$0xff]
    %v7169 = vld [vmem:[%s7092 + $0x260] sm:$0xff]
    %v7170 = vld [vmem:[%s7092 + $0x268] sm:$0xff]
    %v7171 = vld [vmem:[%s7092 + $0x270] sm:$0xff]
    %v7172 = vld [vmem:[%s7092 + $0x278] sm:$0xff]
    %v7173 = vld [vmem:[%s7092 + $0x280] sm:$0xff]
    %v7174 = vld [vmem:[%s7092 + $0x288] sm:$0xff]
    %v7175 = vld [vmem:[%s7092 + $0x290] sm:$0xff]
    %v7176 = vld [vmem:[%s7092 + $0x298] sm:$0xff]
    %v7177 = vld [vmem:[%s7092 + $0x2a0] sm:$0xff]
    %v7178 = vld [vmem:[%s7092 + $0x2a8] sm:$0xff]
    %v7179 = vld [vmem:[%s7092 + $0x2b0] sm:$0xff]
    %v7180 = vld [vmem:[%s7092 + $0x2b8] sm:$0xff]
    %v7181 = vld [vmem:[%s7092 + $0x2c0] sm:$0xff]
    %v7182 = vld [vmem:[%s7092 + $0x2c8] sm:$0xff]
    %v7183 = vld [vmem:[%s7092 + $0x2d0] sm:$0xff]
    %v7184 = vld [vmem:[%s7092 + $0x2d8] sm:$0xff]
    %v7185 = vld [vmem:[%s7092 + $0x2e0] sm:$0xff]
    %v7186 = vld [vmem:[%s7092 + $0x2e8] sm:$0xff]
    %v7187 = vld [vmem:[%s7092 + $0x2f0] sm:$0xff]
    %v7188 = vld [vmem:[%s7092 + $0x2f8] sm:$0xff]
    %v7189 = vld [vmem:[%s7092 + $0x300] sm:$0xff]
    %v7190 = vld [vmem:[%s7092 + $0x308] sm:$0xff]
    %v7191 = vld [vmem:[%s7092 + $0x310] sm:$0xff]
    %v7192 = vld [vmem:[%s7092 + $0x318] sm:$0xff]
    %v7193 = vld [vmem:[%s7092 + $0x320] sm:$0xff]
    %v7194 = vld [vmem:[%s7092 + $0x328] sm:$0xff]
    %v7195 = vld [vmem:[%s7092 + $0x330] sm:$0xff]
    %v7196 = vld [vmem:[%s7092 + $0x338] sm:$0xff]
    %v7197 = vld [vmem:[%s7092 + $0x340] sm:$0xff]
    %v7198 = vld [vmem:[%s7092 + $0x348] sm:$0xff]
    %v7199 = vld [vmem:[%s7092 + $0x350] sm:$0xff]
    %v7200 = vld [vmem:[%s7092 + $0x358] sm:$0xff]
    %v7201 = vld [vmem:[%s7092 + $0x360] sm:$0xff]
    %v7202 = vld [vmem:[%s7092 + $0x368] sm:$0xff]
    %v7203 = vld [vmem:[%s7092 + $0x370] sm:$0xff]
    %v7204 = vld [vmem:[%s7092 + $0x378] sm:$0xff]
    %v7205 = vld [vmem:[%s7092 + $0x380] sm:$0xff]
    %v7206 = vld [vmem:[%s7092 + $0x388] sm:$0xff]
    %v7207 = vld [vmem:[%s7092 + $0x390] sm:$0xff]
    %v7208 = vld [vmem:[%s7092 + $0x398] sm:$0xff]
    %v7209 = vld [vmem:[%s7092 + $0x3a0] sm:$0xff]
    %v7210 = vld [vmem:[%s7092 + $0x3a8] sm:$0xff]
    %v7211 = vld [vmem:[%s7092 + $0x3b0] sm:$0xff]
    %v7212 = vld [vmem:[%s7092 + $0x3b8] sm:$0xff]
    %v7213 = vld [vmem:[%s7092 + $0x3c0] sm:$0xff]
    %v7214 = vld [vmem:[%s7092 + $0x3c8] sm:$0xff]
    %v7215 = vld [vmem:[%s7092 + $0x3d0] sm:$0xff]
    %v7216 = vld [vmem:[%s7092 + $0x3d8] sm:$0xff]
    %v7217 = vld [vmem:[%s7092 + $0x3e0] sm:$0xff]
    %v7218 = vld [vmem:[%s7092 + $0x3e8] sm:$0xff]
    %v7219 = vld [vmem:[%s7092 + $0x3f0] sm:$0xff]
    %v7220 = vld [vmem:[%s7092 + $0x3f8] sm:$0xff]
    %v7221 = vld [vmem:[#allocation13 + $0x19] sm:$0xf]
    %v7223 = vlaneseq
    %v7224 = vshrl.u32 %v7223, 7
    %v7225 = vsub.s32 0, %v7224
    %v7226 = vrot.slane %v7221, %v7225
    %v7227 = vlaneseq
    %v7228 = vshrl.u32 %v7227, 7
    %v7229 = vsub.s32 1, %v7228
    %v7230 = vrot.slane %v7221, %v7229
    %v7231 = vlaneseq
    %v7232 = vshrl.u32 %v7231, 7
    %v7233 = vsub.s32 2, %v7232
    %v7234 = vrot.slane %v7221, %v7233
    %v7235 = vlaneseq
    %v7236 = vshrl.u32 %v7235, 7
    %v7237 = vsub.s32 3, %v7236
    %v7238 = vrot.slane %v7221, %v7237
    %v7371 = vunpack.c.l.b16 %v7093
    %v7372 = vunpack.c.h.b16 %v7093
    %v7373 = vunpack.c.l.b16 %v7094
    %v7374 = vunpack.c.h.b16 %v7094
    %v7375 = vunpack.c.l.b16 %v7095
    %v7376 = vunpack.c.h.b16 %v7095
    %v7377 = vunpack.c.l.b16 %v7096
    %v7378 = vunpack.c.h.b16 %v7096
    %v7379 = vunpack.c.l.b16 %v7097
    %v7380 = vunpack.c.h.b16 %v7097
    %v7381 = vunpack.c.l.b16 %v7098
    %v7382 = vunpack.c.h.b16 %v7098
    %v7383 = vunpack.c.l.b16 %v7099
    %v7384 = vunpack.c.h.b16 %v7099
    %v7385 = vunpack.c.l.b16 %v7100
    %v7386 = vunpack.c.h.b16 %v7100
    %v7387 = vunpack.c.l.b16 %v7101
    %v7388 = vunpack.c.h.b16 %v7101
    %v7389 = vunpack.c.l.b16 %v7102
    %v7390 = vunpack.c.h.b16 %v7102
    %v7391 = vunpack.c.l.b16 %v7103
    %v7392 = vunpack.c.h.b16 %v7103
    %v7393 = vunpack.c.l.b16 %v7104
    %v7394 = vunpack.c.h.b16 %v7104
    %v7395 = vunpack.c.l.b16 %v7105
    %v7396 = vunpack.c.h.b16 %v7105
    %v7397 = vunpack.c.l.b16 %v7106
    %v7398 = vunpack.c.h.b16 %v7106
    %v7399 = vunpack.c.l.b16 %v7107
    %v7400 = vunpack.c.h.b16 %v7107
    %v7401 = vunpack.c.l.b16 %v7108
    %v7402 = vunpack.c.h.b16 %v7108
    %v7403 = vunpack.c.l.b16 %v7109
    %v7404 = vunpack.c.h.b16 %v7109
    %v7405 = vunpack.c.l.b16 %v7110
    %v7406 = vunpack.c.h.b16 %v7110
    %v7407 = vunpack.c.l.b16 %v7111
    %v7408 = vunpack.c.h.b16 %v7111
    %v7409 = vunpack.c.l.b16 %v7112
    %v7410 = vunpack.c.h.b16 %v7112
    %v7411 = vunpack.c.l.b16 %v7113
    %v7412 = vunpack.c.h.b16 %v7113
    %v7413 = vunpack.c.l.b16 %v7114
    %v7414 = vunpack.c.h.b16 %v7114
    %v7415 = vunpack.c.l.b16 %v7115
    %v7416 = vunpack.c.h.b16 %v7115
    %v7417 = vunpack.c.l.b16 %v7116
    %v7418 = vunpack.c.h.b16 %v7116
    %v7419 = vunpack.c.l.b16 %v7117
    %v7420 = vunpack.c.h.b16 %v7117
    %v7421 = vunpack.c.l.b16 %v7118
    %v7422 = vunpack.c.h.b16 %v7118
    %v7423 = vunpack.c.l.b16 %v7119
    %v7424 = vunpack.c.h.b16 %v7119
    %v7425 = vunpack.c.l.b16 %v7120
    %v7426 = vunpack.c.h.b16 %v7120
    %v7427 = vunpack.c.l.b16 %v7121
    %v7428 = vunpack.c.h.b16 %v7121
    %v7429 = vunpack.c.l.b16 %v7122
    %v7430 = vunpack.c.h.b16 %v7122
    %v7431 = vunpack.c.l.b16 %v7123
    %v7432 = vunpack.c.h.b16 %v7123
    %v7433 = vunpack.c.l.b16 %v7124
    %v7434 = vunpack.c.h.b16 %v7124
    %v7435 = vunpack.c.l.b16 %v7125
    %v7436 = vunpack.c.h.b16 %v7125
    %v7437 = vunpack.c.l.b16 %v7126
    %v7438 = vunpack.c.h.b16 %v7126
    %v7439 = vunpack.c.l.b16 %v7127
    %v7440 = vunpack.c.h.b16 %v7127
    %v7441 = vunpack.c.l.b16 %v7128
    %v7442 = vunpack.c.h.b16 %v7128
    %v7443 = vunpack.c.l.b16 %v7129
    %v7444 = vunpack.c.h.b16 %v7129
    %v7445 = vunpack.c.l.b16 %v7130
    %v7446 = vunpack.c.h.b16 %v7130
    %v7447 = vunpack.c.l.b16 %v7131
    %v7448 = vunpack.c.h.b16 %v7131
    %v7449 = vunpack.c.l.b16 %v7132
    %v7450 = vunpack.c.h.b16 %v7132
    %v7451 = vunpack.c.l.b16 %v7133
    %v7452 = vunpack.c.h.b16 %v7133
    %v7453 = vunpack.c.l.b16 %v7134
    %v7454 = vunpack.c.h.b16 %v7134
    %v7455 = vunpack.c.l.b16 %v7135
    %v7456 = vunpack.c.h.b16 %v7135
    %v7457 = vunpack.c.l.b16 %v7136
    %v7458 = vunpack.c.h.b16 %v7136
    %v7459 = vunpack.c.l.b16 %v7137
    %v7460 = vunpack.c.h.b16 %v7137
    %v7461 = vunpack.c.l.b16 %v7138
    %v7462 = vunpack.c.h.b16 %v7138
    %v7463 = vunpack.c.l.b16 %v7139
    %v7464 = vunpack.c.h.b16 %v7139
    %v7465 = vunpack.c.l.b16 %v7140
    %v7466 = vunpack.c.h.b16 %v7140
    %v7467 = vunpack.c.l.b16 %v7141
    %v7468 = vunpack.c.h.b16 %v7141
    %v7469 = vunpack.c.l.b16 %v7142
    %v7470 = vunpack.c.h.b16 %v7142
    %v7471 = vunpack.c.l.b16 %v7143
    %v7472 = vunpack.c.h.b16 %v7143
    %v7473 = vunpack.c.l.b16 %v7144
    %v7474 = vunpack.c.h.b16 %v7144
    %v7475 = vunpack.c.l.b16 %v7145
    %v7476 = vunpack.c.h.b16 %v7145
    %v7477 = vunpack.c.l.b16 %v7146
    %v7478 = vunpack.c.h.b16 %v7146
    %v7479 = vunpack.c.l.b16 %v7147
    %v7480 = vunpack.c.h.b16 %v7147
    %v7481 = vunpack.c.l.b16 %v7148
    %v7482 = vunpack.c.h.b16 %v7148
    %v7483 = vunpack.c.l.b16 %v7149
    %v7484 = vunpack.c.h.b16 %v7149
    %v7485 = vunpack.c.l.b16 %v7150
    %v7486 = vunpack.c.h.b16 %v7150
    %v7487 = vunpack.c.l.b16 %v7151
    %v7488 = vunpack.c.h.b16 %v7151
    %v7489 = vunpack.c.l.b16 %v7152
    %v7490 = vunpack.c.h.b16 %v7152
    %v7491 = vunpack.c.l.b16 %v7153
    %v7492 = vunpack.c.h.b16 %v7153
    %v7493 = vunpack.c.l.b16 %v7154
    %v7494 = vunpack.c.h.b16 %v7154
    %v7495 = vunpack.c.l.b16 %v7155
    %v7496 = vunpack.c.h.b16 %v7155
    %v7497 = vunpack.c.l.b16 %v7156
    %v7498 = vunpack.c.h.b16 %v7156
    %v7499 = vunpack.c.l.b16 %v7157
    %v7500 = vunpack.c.h.b16 %v7157
    %v7501 = vunpack.c.l.b16 %v7158
    %v7502 = vunpack.c.h.b16 %v7158
    %v7503 = vunpack.c.l.b16 %v7159
    %v7504 = vunpack.c.h.b16 %v7159
    %v7505 = vunpack.c.l.b16 %v7160
    %v7506 = vunpack.c.h.b16 %v7160
    %v7507 = vunpack.c.l.b16 %v7161
    %v7508 = vunpack.c.h.b16 %v7161
    %v7509 = vunpack.c.l.b16 %v7162
    %v7510 = vunpack.c.h.b16 %v7162
    %v7511 = vunpack.c.l.b16 %v7163
    %v7512 = vunpack.c.h.b16 %v7163
    %v7513 = vunpack.c.l.b16 %v7164
    %v7514 = vunpack.c.h.b16 %v7164
    %v7515 = vunpack.c.l.b16 %v7165
    %v7516 = vunpack.c.h.b16 %v7165
    %v7517 = vunpack.c.l.b16 %v7166
    %v7518 = vunpack.c.h.b16 %v7166
    %v7519 = vunpack.c.l.b16 %v7167
    %v7520 = vunpack.c.h.b16 %v7167
    %v7521 = vunpack.c.l.b16 %v7168
    %v7522 = vunpack.c.h.b16 %v7168
    %v7523 = vunpack.c.l.b16 %v7169
    %v7524 = vunpack.c.h.b16 %v7169
    %v7525 = vunpack.c.l.b16 %v7170
    %v7526 = vunpack.c.h.b16 %v7170
    %v7527 = vunpack.c.l.b16 %v7171
    %v7528 = vunpack.c.h.b16 %v7171
    %v7529 = vunpack.c.l.b16 %v7172
    %v7530 = vunpack.c.h.b16 %v7172
    %v7531 = vunpack.c.l.b16 %v7173
    %v7532 = vunpack.c.h.b16 %v7173
    %v7533 = vunpack.c.l.b16 %v7174
    %v7534 = vunpack.c.h.b16 %v7174
    %v7535 = vunpack.c.l.b16 %v7175
    %v7536 = vunpack.c.h.b16 %v7175
    %v7537 = vunpack.c.l.b16 %v7176
    %v7538 = vunpack.c.h.b16 %v7176
    %v7539 = vunpack.c.l.b16 %v7177
    %v7540 = vunpack.c.h.b16 %v7177
    %v7541 = vunpack.c.l.b16 %v7178
    %v7542 = vunpack.c.h.b16 %v7178
    %v7543 = vunpack.c.l.b16 %v7179
    %v7544 = vunpack.c.h.b16 %v7179
    %v7545 = vunpack.c.l.b16 %v7180
    %v7546 = vunpack.c.h.b16 %v7180
    %v7547 = vunpack.c.l.b16 %v7181
    %v7548 = vunpack.c.h.b16 %v7181
    %v7549 = vunpack.c.l.b16 %v7182
    %v7550 = vunpack.c.h.b16 %v7182
    %v7551 = vunpack.c.l.b16 %v7183
    %v7552 = vunpack.c.h.b16 %v7183
    %v7553 = vunpack.c.l.b16 %v7184
    %v7554 = vunpack.c.h.b16 %v7184
    %v7555 = vunpack.c.l.b16 %v7185
    %v7556 = vunpack.c.h.b16 %v7185
    %v7557 = vunpack.c.l.b16 %v7186
    %v7558 = vunpack.c.h.b16 %v7186
    %v7559 = vunpack.c.l.b16 %v7187
    %v7560 = vunpack.c.h.b16 %v7187
    %v7561 = vunpack.c.l.b16 %v7188
    %v7562 = vunpack.c.h.b16 %v7188
    %v7563 = vunpack.c.l.b16 %v7189
    %v7564 = vunpack.c.h.b16 %v7189
    %v7565 = vunpack.c.l.b16 %v7190
    %v7566 = vunpack.c.h.b16 %v7190
    %v7567 = vunpack.c.l.b16 %v7191
    %v7568 = vunpack.c.h.b16 %v7191
    %v7569 = vunpack.c.l.b16 %v7192
    %v7570 = vunpack.c.h.b16 %v7192
    %v7571 = vunpack.c.l.b16 %v7193
    %v7572 = vunpack.c.h.b16 %v7193
    %v7573 = vunpack.c.l.b16 %v7194
    %v7574 = vunpack.c.h.b16 %v7194
    %v7575 = vunpack.c.l.b16 %v7195
    %v7576 = vunpack.c.h.b16 %v7195
    %v7577 = vunpack.c.l.b16 %v7196
    %v7578 = vunpack.c.h.b16 %v7196
    %v7579 = vunpack.c.l.b16 %v7197
    %v7580 = vunpack.c.h.b16 %v7197
    %v7581 = vunpack.c.l.b16 %v7198
    %v7582 = vunpack.c.h.b16 %v7198
    %v7583 = vunpack.c.l.b16 %v7199
    %v7584 = vunpack.c.h.b16 %v7199
    %v7585 = vunpack.c.l.b16 %v7200
    %v7586 = vunpack.c.h.b16 %v7200
    %v7587 = vunpack.c.l.b16 %v7201
    %v7588 = vunpack.c.h.b16 %v7201
    %v7589 = vunpack.c.l.b16 %v7202
    %v7590 = vunpack.c.h.b16 %v7202
    %v7591 = vunpack.c.l.b16 %v7203
    %v7592 = vunpack.c.h.b16 %v7203
    %v7593 = vunpack.c.l.b16 %v7204
    %v7594 = vunpack.c.h.b16 %v7204
    %v7595 = vunpack.c.l.b16 %v7205
    %v7596 = vunpack.c.h.b16 %v7205
    %v7597 = vunpack.c.l.b16 %v7206
    %v7598 = vunpack.c.h.b16 %v7206
    %v7599 = vunpack.c.l.b16 %v7207
    %v7600 = vunpack.c.h.b16 %v7207
    %v7601 = vunpack.c.l.b16 %v7208
    %v7602 = vunpack.c.h.b16 %v7208
    %v7603 = vunpack.c.l.b16 %v7209
    %v7604 = vunpack.c.h.b16 %v7209
    %v7605 = vunpack.c.l.b16 %v7210
    %v7606 = vunpack.c.h.b16 %v7210
    %v7607 = vunpack.c.l.b16 %v7211
    %v7608 = vunpack.c.h.b16 %v7211
    %v7609 = vunpack.c.l.b16 %v7212
    %v7610 = vunpack.c.h.b16 %v7212
    %v7611 = vunpack.c.l.b16 %v7213
    %v7612 = vunpack.c.h.b16 %v7213
    %v7613 = vunpack.c.l.b16 %v7214
    %v7614 = vunpack.c.h.b16 %v7214
    %v7615 = vunpack.c.l.b16 %v7215
    %v7616 = vunpack.c.h.b16 %v7215
    %v7617 = vunpack.c.l.b16 %v7216
    %v7618 = vunpack.c.h.b16 %v7216
    %v7619 = vunpack.c.l.b16 %v7217
    %v7620 = vunpack.c.h.b16 %v7217
    %v7621 = vunpack.c.l.b16 %v7218
    %v7622 = vunpack.c.h.b16 %v7218
    %v7623 = vunpack.c.l.b16 %v7219
    %v7624 = vunpack.c.h.b16 %v7219
    %v7625 = vunpack.c.l.b16 %v7220
    %v7626 = vunpack.c.h.b16 %v7220
    %v7627 = vpack.c.b16 %v7375, %v7371
    %v7628 = vpack.c.b16 %v7376, %v7372
    %v7629 = vpack.c.b16 %v7377, %v7373
    %v7630 = vpack.c.b16 %v7378, %v7374
    %v7631 = vpack.c.b16 %v7383, %v7379
    %v7632 = vpack.c.b16 %v7384, %v7380
    %v7633 = vpack.c.b16 %v7385, %v7381
    %v7634 = vpack.c.b16 %v7386, %v7382
    %v7635 = vpack.c.b16 %v7391, %v7387
    %v7636 = vpack.c.b16 %v7392, %v7388
    %v7637 = vpack.c.b16 %v7393, %v7389
    %v7638 = vpack.c.b16 %v7394, %v7390
    %v7639 = vpack.c.b16 %v7399, %v7395
    %v7640 = vpack.c.b16 %v7400, %v7396
    %v7641 = vpack.c.b16 %v7401, %v7397
    %v7642 = vpack.c.b16 %v7402, %v7398
    %v7643 = vpack.c.b16 %v7407, %v7403
    %v7644 = vpack.c.b16 %v7408, %v7404
    %v7645 = vpack.c.b16 %v7409, %v7405
    %v7646 = vpack.c.b16 %v7410, %v7406
    %v7647 = vpack.c.b16 %v7415, %v7411
    %v7648 = vpack.c.b16 %v7416, %v7412
    %v7649 = vpack.c.b16 %v7417, %v7413
    %v7650 = vpack.c.b16 %v7418, %v7414
    %v7651 = vpack.c.b16 %v7423, %v7419
    %v7652 = vpack.c.b16 %v7424, %v7420
    %v7653 = vpack.c.b16 %v7425, %v7421
    %v7654 = vpack.c.b16 %v7426, %v7422
    %v7655 = vpack.c.b16 %v7431, %v7427
    %v7656 = vpack.c.b16 %v7432, %v7428
    %v7657 = vpack.c.b16 %v7433, %v7429
    %v7658 = vpack.c.b16 %v7434, %v7430
    %v7659 = vpack.c.b16 %v7439, %v7435
    %v7660 = vpack.c.b16 %v7440, %v7436
    %v7661 = vpack.c.b16 %v7441, %v7437
    %v7662 = vpack.c.b16 %v7442, %v7438
    %v7663 = vpack.c.b16 %v7447, %v7443
    %v7664 = vpack.c.b16 %v7448, %v7444
    %v7665 = vpack.c.b16 %v7449, %v7445
    %v7666 = vpack.c.b16 %v7450, %v7446
    %v7667 = vpack.c.b16 %v7455, %v7451
    %v7668 = vpack.c.b16 %v7456, %v7452
    %v7669 = vpack.c.b16 %v7457, %v7453
    %v7670 = vpack.c.b16 %v7458, %v7454
    %v7671 = vpack.c.b16 %v7463, %v7459
    %v7672 = vpack.c.b16 %v7464, %v7460
    %v7673 = vpack.c.b16 %v7465, %v7461
    %v7674 = vpack.c.b16 %v7466, %v7462
    %v7675 = vpack.c.b16 %v7471, %v7467
    %v7676 = vpack.c.b16 %v7472, %v7468
    %v7677 = vpack.c.b16 %v7473, %v7469
    %v7678 = vpack.c.b16 %v7474, %v7470
    %v7679 = vpack.c.b16 %v7479, %v7475
    %v7680 = vpack.c.b16 %v7480, %v7476
    %v7681 = vpack.c.b16 %v7481, %v7477
    %v7682 = vpack.c.b16 %v7482, %v7478
    %v7683 = vpack.c.b16 %v7487, %v7483
    %v7684 = vpack.c.b16 %v7488, %v7484
    %v7685 = vpack.c.b16 %v7489, %v7485
    %v7686 = vpack.c.b16 %v7490, %v7486
    %v7687 = vpack.c.b16 %v7495, %v7491
    %v7688 = vpack.c.b16 %v7496, %v7492
    %v7689 = vpack.c.b16 %v7497, %v7493
    %v7690 = vpack.c.b16 %v7498, %v7494
    %v7691 = vpack.c.b16 %v7503, %v7499
    %v7692 = vpack.c.b16 %v7504, %v7500
    %v7693 = vpack.c.b16 %v7505, %v7501
    %v7694 = vpack.c.b16 %v7506, %v7502
    %v7695 = vpack.c.b16 %v7511, %v7507
    %v7696 = vpack.c.b16 %v7512, %v7508
    %v7697 = vpack.c.b16 %v7513, %v7509
    %v7698 = vpack.c.b16 %v7514, %v7510
    %v7699 = vpack.c.b16 %v7519, %v7515
    %v7700 = vpack.c.b16 %v7520, %v7516
    %v7701 = vpack.c.b16 %v7521, %v7517
    %v7702 = vpack.c.b16 %v7522, %v7518
    %v7703 = vpack.c.b16 %v7527, %v7523
    %v7704 = vpack.c.b16 %v7528, %v7524
    %v7705 = vpack.c.b16 %v7529, %v7525
    %v7706 = vpack.c.b16 %v7530, %v7526
    %v7707 = vpack.c.b16 %v7535, %v7531
    %v7708 = vpack.c.b16 %v7536, %v7532
    %v7709 = vpack.c.b16 %v7537, %v7533
    %v7710 = vpack.c.b16 %v7538, %v7534
    %v7711 = vpack.c.b16 %v7543, %v7539
    %v7712 = vpack.c.b16 %v7544, %v7540
    %v7713 = vpack.c.b16 %v7545, %v7541
    %v7714 = vpack.c.b16 %v7546, %v7542
    %v7715 = vpack.c.b16 %v7551, %v7547
    %v7716 = vpack.c.b16 %v7552, %v7548
    %v7717 = vpack.c.b16 %v7553, %v7549
    %v7718 = vpack.c.b16 %v7554, %v7550
    %v7719 = vpack.c.b16 %v7559, %v7555
    %v7720 = vpack.c.b16 %v7560, %v7556
    %v7721 = vpack.c.b16 %v7561, %v7557
    %v7722 = vpack.c.b16 %v7562, %v7558
    %v7723 = vpack.c.b16 %v7567, %v7563
    %v7724 = vpack.c.b16 %v7568, %v7564
    %v7725 = vpack.c.b16 %v7569, %v7565
    %v7726 = vpack.c.b16 %v7570, %v7566
    %v7727 = vpack.c.b16 %v7575, %v7571
    %v7728 = vpack.c.b16 %v7576, %v7572
    %v7729 = vpack.c.b16 %v7577, %v7573
    %v7730 = vpack.c.b16 %v7578, %v7574
    %v7731 = vpack.c.b16 %v7583, %v7579
    %v7732 = vpack.c.b16 %v7584, %v7580
    %v7733 = vpack.c.b16 %v7585, %v7581
    %v7734 = vpack.c.b16 %v7586, %v7582
    %v7735 = vpack.c.b16 %v7591, %v7587
    %v7736 = vpack.c.b16 %v7592, %v7588
    %v7737 = vpack.c.b16 %v7593, %v7589
    %v7738 = vpack.c.b16 %v7594, %v7590
    %v7739 = vpack.c.b16 %v7599, %v7595
    %v7740 = vpack.c.b16 %v7600, %v7596
    %v7741 = vpack.c.b16 %v7601, %v7597
    %v7742 = vpack.c.b16 %v7602, %v7598
    %v7743 = vpack.c.b16 %v7607, %v7603
    %v7744 = vpack.c.b16 %v7608, %v7604
    %v7745 = vpack.c.b16 %v7609, %v7605
    %v7746 = vpack.c.b16 %v7610, %v7606
    %v7747 = vpack.c.b16 %v7615, %v7611
    %v7748 = vpack.c.b16 %v7616, %v7612
    %v7749 = vpack.c.b16 %v7617, %v7613
    %v7750 = vpack.c.b16 %v7618, %v7614
    %v7751 = vpack.c.b16 %v7623, %v7619
    %v7752 = vpack.c.b16 %v7624, %v7620
    %v7753 = vpack.c.b16 %v7625, %v7621
    %v7754 = vpack.c.b16 %v7626, %v7622
    %7883 = vmatprep.subr.bf16.mxu0 %v7656
    %7884 = vmatpush1.bf16.msra.mxu0 %v7655
    %7885 = vmatprep.subr.bf16.mxu0 %v7652
    %7886 = vmatpush1.bf16.msra.mxu0 %v7651
    %7887 = vmatprep.subr.bf16.mxu0 %v7648
    %7888 = vmatpush1.bf16.msra.mxu0 %v7647
    %7889 = vmatprep.subr.bf16.mxu0 %v7644
    %7890 = vmatpush1.bf16.msra.mxu0 %v7643
    %7891 = vmatprep.subr.bf16.mxu0 %v7640
    %7892 = vmatpush1.bf16.msra.mxu0 %v7639
    %7893 = vmatprep.subr.bf16.mxu0 %v7636
    %7894 = vmatpush1.bf16.msra.mxu0 %v7635
    %7895 = vmatprep.subr.bf16.mxu0 %v7632
    %7896 = vmatpush1.bf16.msra.mxu0 %v7631
    %7897 = vmatprep.subr.bf16.mxu0 %v7628
    %7898 = vmatpush1.bf16.msra.mxu0 %v7627
    %7899 = vmatprep.subr.bf16.mxu0 %v7688
    %7900 = vmatpush2.bf16.msra.mxu0 %v7687
    %7901 = vmatprep.subr.bf16.mxu0 %v7684
    %7902 = vmatpush2.bf16.msra.mxu0 %v7683
    %7903 = vmatprep.subr.bf16.mxu0 %v7680
    %7904 = vmatpush2.bf16.msra.mxu0 %v7679
    %7905 = vmatprep.subr.bf16.mxu0 %v7676
    %7906 = vmatpush2.bf16.msra.mxu0 %v7675
    %7907 = vmatprep.subr.bf16.mxu0 %v7672
    %7908 = vmatpush2.bf16.msra.mxu0 %v7671
    %7909 = vmatprep.subr.bf16.mxu0 %v7668
    %7910 = vmatpush2.bf16.msra.mxu0 %v7667
    %7911 = vmatprep.subr.bf16.mxu0 %v7664
    %7912 = vmatpush2.bf16.msra.mxu0 %v7663
    %7913 = vmatprep.subr.bf16.mxu0 %v7660
    %7914 = vmatpush2.bf16.msra.mxu0 %v7659
    %7915 = vmatprep.mubr.bf16.mxu0 %v7061
    %7916 = vmatmul.mubr.bf16.gmra.mxu0 %v7060
    %v7917 = vpop.f32.mrf.mxu0
    %v7918 = vadd.f32 %v7226, %v7917
    %v7919 = vpop.f32.mrf.mxu0
    %v7920 = vadd.f32 %v7230, %v7919
    %v7921 = vpop.f32.mrf.mxu0
    %v7922 = vadd.f32 %v7226, %v7921
    %v7923 = vpop.f32.mrf.mxu0
    %v7924 = vadd.f32 %v7230, %v7923
    %7925 = vmatprep.mubr.bf16.mxu0 %v7065
    %7926 = vmatmul.mubr.bf16.gmra.mxu0 %v7064
    %v7927 = vpop.f32.mrf.mxu0
    %v7928 = vadd.f32 %v7226, %v7927
    %v7929 = vpop.f32.mrf.mxu0
    %v7930 = vadd.f32 %v7230, %v7929
    %v7931 = vpop.f32.mrf.mxu0
    %v7932 = vadd.f32 %v7226, %v7931
    %v7933 = vpop.f32.mrf.mxu0
    %v7934 = vadd.f32 %v7230, %v7933
    %7935 = vmatprep.mubr.bf16.mxu0 %v7069
    %7936 = vmatmul.mubr.bf16.gmra.mxu0 %v7068
    %v7937 = vpop.f32.mrf.mxu0
    %v7938 = vadd.f32 %v7226, %v7937
    %v7939 = vpop.f32.mrf.mxu0
    %v7940 = vadd.f32 %v7230, %v7939
    %v7941 = vpop.f32.mrf.mxu0
    %v7942 = vadd.f32 %v7226, %v7941
    %v7943 = vpop.f32.mrf.mxu0
    %v7944 = vadd.f32 %v7230, %v7943
    %7945 = vmatprep.mubr.bf16.mxu0 %v7073
    %7946 = vmatmul.mubr.bf16.gmra.mxu0 %v7072
    %v7947 = vpop.f32.mrf.mxu0
    %v7948 = vadd.f32 %v7226, %v7947
    %v7949 = vpop.f32.mrf.mxu0
    %v7950 = vadd.f32 %v7230, %v7949
    %v7951 = vpop.f32.mrf.mxu0
    %v7952 = vadd.f32 %v7226, %v7951
    %v7953 = vpop.f32.mrf.mxu0
    %v7954 = vadd.f32 %v7230, %v7953
    %7955 = vmatprep.mubr.bf16.mxu0 %v7077
    %7956 = vmatmul.mubr.bf16.gmra.mxu0 %v7076
    %v7957 = vpop.f32.mrf.mxu0
    %v7958 = vadd.f32 %v7226, %v7957
    %v7959 = vpop.f32.mrf.mxu0
    %v7960 = vadd.f32 %v7230, %v7959
    %v7961 = vpop.f32.mrf.mxu0
    %v7962 = vadd.f32 %v7226, %v7961
    %v7963 = vpop.f32.mrf.mxu0
    %v7964 = vadd.f32 %v7230, %v7963
    %7965 = vmatprep.mubr.bf16.mxu0 %v7081
    %7966 = vmatmul.mubr.bf16.gmra.mxu0 %v7080
    %v7967 = vpop.f32.mrf.mxu0
    %v7968 = vadd.f32 %v7226, %v7967
    %v7969 = vpop.f32.mrf.mxu0
    %v7970 = vadd.f32 %v7230, %v7969
    %v7971 = vpop.f32.mrf.mxu0
    %v7972 = vadd.f32 %v7226, %v7971
    %v7973 = vpop.f32.mrf.mxu0
    %v7974 = vadd.f32 %v7230, %v7973
    %7975 = vmatprep.mubr.bf16.mxu0 %v7085
    %7976 = vmatmul.mubr.bf16.gmra.mxu0 %v7084
    %v7977 = vpop.f32.mrf.mxu0
    %v7978 = vadd.f32 %v7226, %v7977
    %v7979 = vpop.f32.mrf.mxu0
    %v7980 = vadd.f32 %v7230, %v7979
    %v7981 = vpop.f32.mrf.mxu0
    %v7982 = vadd.f32 %v7226, %v7981
    %v7983 = vpop.f32.mrf.mxu0
    %v7984 = vadd.f32 %v7230, %v7983
    %7985 = vmatprep.mubr.bf16.mxu0 %v7089
    %7986 = vmatmul.mubr.bf16.gmra.mxu0 %v7088
    %v7987 = vpop.f32.mrf.mxu0
    %v7988 = vadd.f32 %v7226, %v7987
    %v7989 = vpop.f32.mrf.mxu0
    %v7990 = vadd.f32 %v7230, %v7989
    %v7991 = vpop.f32.mrf.mxu0
    %v7992 = vadd.f32 %v7226, %v7991
    %v7993 = vpop.f32.mrf.mxu0
    %v7994 = vadd.f32 %v7230, %v7993
    %7995 = vdwg.mxu0
    %7996 = vmatprep.subr.bf16.mxu0 %v7720
    %7997 = vmatpush1.bf16.msra.mxu0 %v7719
    %7998 = vmatprep.subr.bf16.mxu0 %v7716
    %7999 = vmatpush1.bf16.msra.mxu0 %v7715
    %8000 = vmatprep.subr.bf16.mxu0 %v7712
    %8001 = vmatpush1.bf16.msra.mxu0 %v7711
    %8002 = vmatprep.subr.bf16.mxu0 %v7708
    %8003 = vmatpush1.bf16.msra.mxu0 %v7707
    %8004 = vmatprep.subr.bf16.mxu0 %v7704
    %8005 = vmatpush1.bf16.msra.mxu0 %v7703
    %8006 = vmatprep.subr.bf16.mxu0 %v7700
    %8007 = vmatpush1.bf16.msra.mxu0 %v7699
    %8008 = vmatprep.subr.bf16.mxu0 %v7696
    %8009 = vmatpush1.bf16.msra.mxu0 %v7695
    %8010 = vmatprep.subr.bf16.mxu0 %v7692
    %8011 = vmatpush1.bf16.msra.mxu0 %v7691
    %8012 = vmatprep.subr.bf16.mxu0 %v7752
    %8013 = vmatpush2.bf16.msra.mxu0 %v7751
    %8014 = vmatprep.subr.bf16.mxu0 %v7748
    %8015 = vmatpush2.bf16.msra.mxu0 %v7747
    %8016 = vmatprep.subr.bf16.mxu0 %v7744
    %8017 = vmatpush2.bf16.msra.mxu0 %v7743
    %8018 = vmatprep.subr.bf16.mxu0 %v7740
    %8019 = vmatpush2.bf16.msra.mxu0 %v7739
    %8020 = vmatprep.subr.bf16.mxu0 %v7736
    %8021 = vmatpush2.bf16.msra.mxu0 %v7735
    %8022 = vmatprep.subr.bf16.mxu0 %v7732
    %8023 = vmatpush2.bf16.msra.mxu0 %v7731
    %8024 = vmatprep.subr.bf16.mxu0 %v7728
    %8025 = vmatpush2.bf16.msra.mxu0 %v7727
    %8026 = vmatprep.subr.bf16.mxu0 %v7724
    %8027 = vmatpush2.bf16.msra.mxu0 %v7723
    %8028 = vmatprep.mubr.bf16.mxu0 %v7063
    %8029 = vmatmul.mubr.bf16.gmra.mxu0 %v7062
    %v8030 = vpop.f32.mrf.mxu0
    %v8031 = vadd.f32 %v7918, %v8030
    %v8032 = vpop.f32.mrf.mxu0
    %v8033 = vadd.f32 %v7920, %v8032
    %v8034 = vpop.f32.mrf.mxu0
    %v8035 = vadd.f32 %v7922, %v8034
    %v8036 = vpop.f32.mrf.mxu0
    %v8037 = vadd.f32 %v7924, %v8036
    %8038 = vmatprep.mubr.bf16.mxu0 %v7067
    %8039 = vmatmul.mubr.bf16.gmra.mxu0 %v7066
    %v8040 = vpop.f32.mrf.mxu0
    %v8041 = vadd.f32 %v7928, %v8040
    %v8042 = vpop.f32.mrf.mxu0
    %v8043 = vadd.f32 %v7930, %v8042
    %v8044 = vpop.f32.mrf.mxu0
    %v8045 = vadd.f32 %v7932, %v8044
    %v8046 = vpop.f32.mrf.mxu0
    %v8047 = vadd.f32 %v7934, %v8046
    %8048 = vmatprep.mubr.bf16.mxu0 %v7071
    %8049 = vmatmul.mubr.bf16.gmra.mxu0 %v7070
    %v8050 = vpop.f32.mrf.mxu0
    %v8051 = vadd.f32 %v7938, %v8050
    %v8052 = vpop.f32.mrf.mxu0
    %v8053 = vadd.f32 %v7940, %v8052
    %v8054 = vpop.f32.mrf.mxu0
    %v8055 = vadd.f32 %v7942, %v8054
    %v8056 = vpop.f32.mrf.mxu0
    %v8057 = vadd.f32 %v7944, %v8056
    %8058 = vmatprep.mubr.bf16.mxu0 %v7075
    %8059 = vmatmul.mubr.bf16.gmra.mxu0 %v7074
    %v8060 = vpop.f32.mrf.mxu0
    %v8061 = vadd.f32 %v7948, %v8060
    %v8062 = vpop.f32.mrf.mxu0
    %v8063 = vadd.f32 %v7950, %v8062
    %v8064 = vpop.f32.mrf.mxu0
    %v8065 = vadd.f32 %v7952, %v8064
    %v8066 = vpop.f32.mrf.mxu0
    %v8067 = vadd.f32 %v7954, %v8066
    %8068 = vmatprep.mubr.bf16.mxu0 %v7079
    %8069 = vmatmul.mubr.bf16.gmra.mxu0 %v7078
    %v8070 = vpop.f32.mrf.mxu0
    %v8071 = vadd.f32 %v7958, %v8070
    %v8072 = vpop.f32.mrf.mxu0
    %v8073 = vadd.f32 %v7960, %v8072
    %v8074 = vpop.f32.mrf.mxu0
    %v8075 = vadd.f32 %v7962, %v8074
    %v8076 = vpop.f32.mrf.mxu0
    %v8077 = vadd.f32 %v7964, %v8076
    %8078 = vmatprep.mubr.bf16.mxu0 %v7083
    %8079 = vmatmul.mubr.bf16.gmra.mxu0 %v7082
    %v8080 = vpop.f32.mrf.mxu0
    %v8081 = vadd.f32 %v7968, %v8080
    %v8082 = vpop.f32.mrf.mxu0
    %v8083 = vadd.f32 %v7970, %v8082
    %v8084 = vpop.f32.mrf.mxu0
    %v8085 = vadd.f32 %v7972, %v8084
    %v8086 = vpop.f32.mrf.mxu0
    %v8087 = vadd.f32 %v7974, %v8086
    %8088 = vmatprep.mubr.bf16.mxu0 %v7087
    %8089 = vmatmul.mubr.bf16.gmra.mxu0 %v7086
    %v8090 = vpop.f32.mrf.mxu0
    %v8091 = vadd.f32 %v7978, %v8090
    %v8092 = vpop.f32.mrf.mxu0
    %v8093 = vadd.f32 %v7980, %v8092
    %v8094 = vpop.f32.mrf.mxu0
    %v8095 = vadd.f32 %v7982, %v8094
    %v8096 = vpop.f32.mrf.mxu0
    %v8097 = vadd.f32 %v7984, %v8096
    %8098 = vmatprep.mubr.bf16.mxu0 %v7091
    %8099 = vmatmul.mubr.bf16.gmra.mxu0 %v7090
    %v8100 = vpop.f32.mrf.mxu0
    %v8101 = vadd.f32 %v7988, %v8100
    %v8102 = vpop.f32.mrf.mxu0
    %v8103 = vadd.f32 %v7990, %v8102
    %v8104 = vpop.f32.mrf.mxu0
    %v8105 = vadd.f32 %v7992, %v8104
    %v8106 = vpop.f32.mrf.mxu0
    %v8107 = vadd.f32 %v7994, %v8106
    %8108 = vdwg.mxu0
    %8109 = vmatprep.subr.bf16.mxu0 %v7658
    %8110 = vmatpush1.bf16.msra.mxu0 %v7657
    %8111 = vmatprep.subr.bf16.mxu0 %v7654
    %8112 = vmatpush1.bf16.msra.mxu0 %v7653
    %8113 = vmatprep.subr.bf16.mxu0 %v7650
    %8114 = vmatpush1.bf16.msra.mxu0 %v7649
    %8115 = vmatprep.subr.bf16.mxu0 %v7646
    %8116 = vmatpush1.bf16.msra.mxu0 %v7645
    %8117 = vmatprep.subr.bf16.mxu0 %v7642
    %8118 = vmatpush1.bf16.msra.mxu0 %v7641
    %8119 = vmatprep.subr.bf16.mxu0 %v7638
    %8120 = vmatpush1.bf16.msra.mxu0 %v7637
    %8121 = vmatprep.subr.bf16.mxu0 %v7634
    %8122 = vmatpush1.bf16.msra.mxu0 %v7633
    %8123 = vmatprep.subr.bf16.mxu0 %v7630
    %8124 = vmatpush1.bf16.msra.mxu0 %v7629
    %8125 = vmatprep.subr.bf16.mxu0 %v7690
    %8126 = vmatpush2.bf16.msra.mxu0 %v7689
    %8127 = vmatprep.subr.bf16.mxu0 %v7686
    %8128 = vmatpush2.bf16.msra.mxu0 %v7685
    %8129 = vmatprep.subr.bf16.mxu0 %v7682
    %8130 = vmatpush2.bf16.msra.mxu0 %v7681
    %8131 = vmatprep.subr.bf16.mxu0 %v7678
    %8132 = vmatpush2.bf16.msra.mxu0 %v7677
    %8133 = vmatprep.subr.bf16.mxu0 %v7674
    %8134 = vmatpush2.bf16.msra.mxu0 %v7673
    %8135 = vmatprep.subr.bf16.mxu0 %v7670
    %8136 = vmatpush2.bf16.msra.mxu0 %v7669
    %8137 = vmatprep.subr.bf16.mxu0 %v7666
    %8138 = vmatpush2.bf16.msra.mxu0 %v7665
    %8139 = vmatprep.subr.bf16.mxu0 %v7662
    %8140 = vmatpush2.bf16.msra.mxu0 %v7661
    %8141 = vmatprep.mubr.bf16.mxu0 %v7061
    %8142 = vmatmul.mubr.bf16.gmra.mxu0 %v7060
    %v8143 = vpop.f32.mrf.mxu0
    %v8144 = vadd.f32 %v7234, %v8143
    %v8145 = vpop.f32.mrf.mxu0
    %v8146 = vadd.f32 %v7238, %v8145
    %v8147 = vpop.f32.mrf.mxu0
    %v8148 = vadd.f32 %v7234, %v8147
    %v8149 = vpop.f32.mrf.mxu0
    %v8150 = vadd.f32 %v7238, %v8149
    %8151 = vmatprep.mubr.bf16.mxu0 %v7065
    %8152 = vmatmul.mubr.bf16.gmra.mxu0 %v7064
    %v8153 = vpop.f32.mrf.mxu0
    %v8154 = vadd.f32 %v7234, %v8153
    %v8155 = vpop.f32.mrf.mxu0
    %v8156 = vadd.f32 %v7238, %v8155
    %v8157 = vpop.f32.mrf.mxu0
    %v8158 = vadd.f32 %v7234, %v8157
    %v8159 = vpop.f32.mrf.mxu0
    %v8160 = vadd.f32 %v7238, %v8159
    %8161 = vmatprep.mubr.bf16.mxu0 %v7069
    %8162 = vmatmul.mubr.bf16.gmra.mxu0 %v7068
    %v8163 = vpop.f32.mrf.mxu0
    %v8164 = vadd.f32 %v7234, %v8163
    %v8165 = vpop.f32.mrf.mxu0
    %v8166 = vadd.f32 %v7238, %v8165
    %v8167 = vpop.f32.mrf.mxu0
    %v8168 = vadd.f32 %v7234, %v8167
    %v8169 = vpop.f32.mrf.mxu0
    %v8170 = vadd.f32 %v7238, %v8169
    %8171 = vmatprep.mubr.bf16.mxu0 %v7073
    %8172 = vmatmul.mubr.bf16.gmra.mxu0 %v7072
    %v8173 = vpop.f32.mrf.mxu0
    %v8174 = vadd.f32 %v7234, %v8173
    %v8175 = vpop.f32.mrf.mxu0
    %v8176 = vadd.f32 %v7238, %v8175
    %v8177 = vpop.f32.mrf.mxu0
    %v8178 = vadd.f32 %v7234, %v8177
    %v8179 = vpop.f32.mrf.mxu0
    %v8180 = vadd.f32 %v7238, %v8179
    %8181 = vmatprep.mubr.bf16.mxu0 %v7077
    %8182 = vmatmul.mubr.bf16.gmra.mxu0 %v7076
    %v8183 = vpop.f32.mrf.mxu0
    %v8184 = vadd.f32 %v7234, %v8183
    %v8185 = vpop.f32.mrf.mxu0
    %v8186 = vadd.f32 %v7238, %v8185
    %v8187 = vpop.f32.mrf.mxu0
    %v8188 = vadd.f32 %v7234, %v8187
    %v8189 = vpop.f32.mrf.mxu0
    %v8190 = vadd.f32 %v7238, %v8189
    %8191 = vmatprep.mubr.bf16.mxu0 %v7081
    %8192 = vmatmul.mubr.bf16.gmra.mxu0 %v7080
    %v8193 = vpop.f32.mrf.mxu0
    %v8194 = vadd.f32 %v7234, %v8193
    %v8195 = vpop.f32.mrf.mxu0
    %v8196 = vadd.f32 %v7238, %v8195
    %v8197 = vpop.f32.mrf.mxu0
    %v8198 = vadd.f32 %v7234, %v8197
    %v8199 = vpop.f32.mrf.mxu0
    %v8200 = vadd.f32 %v7238, %v8199
    %8201 = vmatprep.mubr.bf16.mxu0 %v7085
    %8202 = vmatmul.mubr.bf16.gmra.mxu0 %v7084
    %v8203 = vpop.f32.mrf.mxu0
    %v8204 = vadd.f32 %v7234, %v8203
    %v8205 = vpop.f32.mrf.mxu0
    %v8206 = vadd.f32 %v7238, %v8205
    %v8207 = vpop.f32.mrf.mxu0
    %v8208 = vadd.f32 %v7234, %v8207
    %v8209 = vpop.f32.mrf.mxu0
    %v8210 = vadd.f32 %v7238, %v8209
    %8211 = vmatprep.mubr.bf16.mxu0 %v7089
    %8212 = vmatmul.mubr.bf16.gmra.mxu0 %v7088
    %v8213 = vpop.f32.mrf.mxu0
    %v8214 = vadd.f32 %v7234, %v8213
    %v8215 = vpop.f32.mrf.mxu0
    %v8216 = vadd.f32 %v7238, %v8215
    %v8217 = vpop.f32.mrf.mxu0
    %v8218 = vadd.f32 %v7234, %v8217
    %v8219 = vpop.f32.mrf.mxu0
    %v8220 = vadd.f32 %v7238, %v8219
    %8221 = vdwg.mxu0
    %8222 = vmatprep.subr.bf16.mxu0 %v7722
    %8223 = vmatpush1.bf16.msra.mxu0 %v7721
    %8224 = vmatprep.subr.bf16.mxu0 %v7718
    %8225 = vmatpush1.bf16.msra.mxu0 %v7717
    %8226 = vmatprep.subr.bf16.mxu0 %v7714
    %8227 = vmatpush1.bf16.msra.mxu0 %v7713
    %8228 = vmatprep.subr.bf16.mxu0 %v7710
    %8229 = vmatpush1.bf16.msra.mxu0 %v7709
    %8230 = vmatprep.subr.bf16.mxu0 %v7706
    %8231 = vmatpush1.bf16.msra.mxu0 %v7705
    %8232 = vmatprep.subr.bf16.mxu0 %v7702
    %8233 = vmatpush1.bf16.msra.mxu0 %v7701
    %8234 = vmatprep.subr.bf16.mxu0 %v7698
    %8235 = vmatpush1.bf16.msra.mxu0 %v7697
    %8236 = vmatprep.subr.bf16.mxu0 %v7694
    %8237 = vmatpush1.bf16.msra.mxu0 %v7693
    %8238 = vmatprep.subr.bf16.mxu0 %v7754
    %8239 = vmatpush2.bf16.msra.mxu0 %v7753
    %8240 = vmatprep.subr.bf16.mxu0 %v7750
    %8241 = vmatpush2.bf16.msra.mxu0 %v7749
    %8242 = vmatprep.subr.bf16.mxu0 %v7746
    %8243 = vmatpush2.bf16.msra.mxu0 %v7745
    %8244 = vmatprep.subr.bf16.mxu0 %v7742
    %8245 = vmatpush2.bf16.msra.mxu0 %v7741
    %8246 = vmatprep.subr.bf16.mxu0 %v7738
    %8247 = vmatpush2.bf16.msra.mxu0 %v7737
    %8248 = vmatprep.subr.bf16.mxu0 %v7734
    %8249 = vmatpush2.bf16.msra.mxu0 %v7733
    %8250 = vmatprep.subr.bf16.mxu0 %v7730
    %8251 = vmatpush2.bf16.msra.mxu0 %v7729
    %8252 = vmatprep.subr.bf16.mxu0 %v7726
    %8253 = vmatpush2.bf16.msra.mxu0 %v7725
    %8254 = vmatprep.mubr.bf16.mxu0 %v7063
    %8255 = vmatmul.mubr.bf16.gmra.mxu0 %v7062
    %v8256 = vpop.f32.mrf.mxu0
    %v8257 = vadd.f32 %v8144, %v8256
    %v8258 = vpop.f32.mrf.mxu0
    %v8259 = vadd.f32 %v8146, %v8258
    %v8260 = vpop.f32.mrf.mxu0
    %v8261 = vadd.f32 %v8148, %v8260
    %v8262 = vpop.f32.mrf.mxu0
    %v8263 = vadd.f32 %v8150, %v8262
    %8264 = vmatprep.mubr.bf16.mxu0 %v7067
    %8265 = vmatmul.mubr.bf16.gmra.mxu0 %v7066
    %v8266 = vpop.f32.mrf.mxu0
    %v8267 = vadd.f32 %v8154, %v8266
    %v8268 = vpop.f32.mrf.mxu0
    %v8269 = vadd.f32 %v8156, %v8268
    %v8270 = vpop.f32.mrf.mxu0
    %v8271 = vadd.f32 %v8158, %v8270
    %v8272 = vpop.f32.mrf.mxu0
    %v8273 = vadd.f32 %v8160, %v8272
    %8274 = vmatprep.mubr.bf16.mxu0 %v7071
    %8275 = vmatmul.mubr.bf16.gmra.mxu0 %v7070
    %v8276 = vpop.f32.mrf.mxu0
    %v8277 = vadd.f32 %v8164, %v8276
    %v8278 = vpop.f32.mrf.mxu0
    %v8279 = vadd.f32 %v8166, %v8278
    %v8280 = vpop.f32.mrf.mxu0
    %v8281 = vadd.f32 %v8168, %v8280
    %v8282 = vpop.f32.mrf.mxu0
    %v8283 = vadd.f32 %v8170, %v8282
    %8284 = vmatprep.mubr.bf16.mxu0 %v7075
    %8285 = vmatmul.mubr.bf16.gmra.mxu0 %v7074
    %v8286 = vpop.f32.mrf.mxu0
    %v8287 = vadd.f32 %v8174, %v8286
    %v8288 = vpop.f32.mrf.mxu0
    %v8289 = vadd.f32 %v8176, %v8288
    %v8290 = vpop.f32.mrf.mxu0
    %v8291 = vadd.f32 %v8178, %v8290
    %v8292 = vpop.f32.mrf.mxu0
    %v8293 = vadd.f32 %v8180, %v8292
    %8294 = vmatprep.mubr.bf16.mxu0 %v7079
    %8295 = vmatmul.mubr.bf16.gmra.mxu0 %v7078
    %v8296 = vpop.f32.mrf.mxu0
    %v8297 = vadd.f32 %v8184, %v8296
    %v8298 = vpop.f32.mrf.mxu0
    %v8299 = vadd.f32 %v8186, %v8298
    %v8300 = vpop.f32.mrf.mxu0
    %v8301 = vadd.f32 %v8188, %v8300
    %v8302 = vpop.f32.mrf.mxu0
    %v8303 = vadd.f32 %v8190, %v8302
    %8304 = vmatprep.mubr.bf16.mxu0 %v7083
    %8305 = vmatmul.mubr.bf16.gmra.mxu0 %v7082
    %v8306 = vpop.f32.mrf.mxu0
    %v8307 = vadd.f32 %v8194, %v8306
    %v8308 = vpop.f32.mrf.mxu0
    %v8309 = vadd.f32 %v8196, %v8308
    %v8310 = vpop.f32.mrf.mxu0
    %v8311 = vadd.f32 %v8198, %v8310
    %v8312 = vpop.f32.mrf.mxu0
    %v8313 = vadd.f32 %v8200, %v8312
    %8314 = vmatprep.mubr.bf16.mxu0 %v7087
    %8315 = vmatmul.mubr.bf16.gmra.mxu0 %v7086
    %v8316 = vpop.f32.mrf.mxu0
    %v8317 = vadd.f32 %v8204, %v8316
    %v8318 = vpop.f32.mrf.mxu0
    %v8319 = vadd.f32 %v8206, %v8318
    %v8320 = vpop.f32.mrf.mxu0
    %v8321 = vadd.f32 %v8208, %v8320
    %v8322 = vpop.f32.mrf.mxu0
    %v8323 = vadd.f32 %v8210, %v8322
    %8324 = vmatprep.mubr.bf16.mxu0 %v7091
    %8325 = vmatmul.mubr.bf16.gmra.mxu0 %v7090
    %v8326 = vpop.f32.mrf.mxu0
    %v8327 = vadd.f32 %v8214, %v8326
    %v8328 = vpop.f32.mrf.mxu0
    %v8329 = vadd.f32 %v8216, %v8328
    %v8330 = vpop.f32.mrf.mxu0
    %v8331 = vadd.f32 %v8218, %v8330
    %v8332 = vpop.f32.mrf.mxu0
    %v8333 = vadd.f32 %v8220, %v8332
    %8334 = vdwg.mxu0
    %v8335 = vmax.f32 %v8031, 0.0
    %v8336 = vmax.f32 %v8033, 0.0
    %v8337 = vmax.f32 %v8257, 0.0
    %v8338 = vmax.f32 %v8259, 0.0
    %v8339 = vmax.f32 %v8035, 0.0
    %v8340 = vmax.f32 %v8037, 0.0
    %v8341 = vmax.f32 %v8261, 0.0
    %v8342 = vmax.f32 %v8263, 0.0
    %v8343 = vmax.f32 %v8041, 0.0
    %v8344 = vmax.f32 %v8043, 0.0
    %v8345 = vmax.f32 %v8267, 0.0
    %v8346 = vmax.f32 %v8269, 0.0
    %v8347 = vmax.f32 %v8045, 0.0
    %v8348 = vmax.f32 %v8047, 0.0
    %v8349 = vmax.f32 %v8271, 0.0
    %v8350 = vmax.f32 %v8273, 0.0
    %v8351 = vmax.f32 %v8051, 0.0
    %v8352 = vmax.f32 %v8053, 0.0
    %v8353 = vmax.f32 %v8277, 0.0
    %v8354 = vmax.f32 %v8279, 0.0
    %v8355 = vmax.f32 %v8055, 0.0
    %v8356 = vmax.f32 %v8057, 0.0
    %v8357 = vmax.f32 %v8281, 0.0
    %v8358 = vmax.f32 %v8283, 0.0
    %v8359 = vmax.f32 %v8061, 0.0
    %v8360 = vmax.f32 %v8063, 0.0
    %v8361 = vmax.f32 %v8287, 0.0
    %v8362 = vmax.f32 %v8289, 0.0
    %v8363 = vmax.f32 %v8065, 0.0
    %v8364 = vmax.f32 %v8067, 0.0
    %v8365 = vmax.f32 %v8291, 0.0
    %v8366 = vmax.f32 %v8293, 0.0
    %v8367 = vmax.f32 %v8071, 0.0
    %v8368 = vmax.f32 %v8073, 0.0
    %v8369 = vmax.f32 %v8297, 0.0
    %v8370 = vmax.f32 %v8299, 0.0
    %v8371 = vmax.f32 %v8075, 0.0
    %v8372 = vmax.f32 %v8077, 0.0
    %v8373 = vmax.f32 %v8301, 0.0
    %v8374 = vmax.f32 %v8303, 0.0
    %v8375 = vmax.f32 %v8081, 0.0
    %v8376 = vmax.f32 %v8083, 0.0
    %v8377 = vmax.f32 %v8307, 0.0
    %v8378 = vmax.f32 %v8309, 0.0
    %v8379 = vmax.f32 %v8085, 0.0
    %v8380 = vmax.f32 %v8087, 0.0
    %v8381 = vmax.f32 %v8311, 0.0
    %v8382 = vmax.f32 %v8313, 0.0
    %v8383 = vmax.f32 %v8091, 0.0
    %v8384 = vmax.f32 %v8093, 0.0
    %v8385 = vmax.f32 %v8317, 0.0
    %v8386 = vmax.f32 %v8319, 0.0
    %v8387 = vmax.f32 %v8095, 0.0
    %v8388 = vmax.f32 %v8097, 0.0
    %v8389 = vmax.f32 %v8321, 0.0
    %v8390 = vmax.f32 %v8323, 0.0
    %v8391 = vmax.f32 %v8101, 0.0
    %v8392 = vmax.f32 %v8103, 0.0
    %v8393 = vmax.f32 %v8327, 0.0
    %v8394 = vmax.f32 %v8329, 0.0
    %v8395 = vmax.f32 %v8105, 0.0
    %v8396 = vmax.f32 %v8107, 0.0
    %v8397 = vmax.f32 %v8331, 0.0
    %v8398 = vmax.f32 %v8333, 0.0
    %v8399 = vpack.c.bf16 %v8339, %v8335
    %v8400 = vpack.c.bf16 %v8340, %v8336
    %v8401 = vpack.c.bf16 %v8341, %v8337
    %v8402 = vpack.c.bf16 %v8342, %v8338
    %v8403 = vpack.c.bf16 %v8347, %v8343
    %v8404 = vpack.c.bf16 %v8348, %v8344
    %v8405 = vpack.c.bf16 %v8349, %v8345
    %v8406 = vpack.c.bf16 %v8350, %v8346
    %v8407 = vpack.c.bf16 %v8355, %v8351
    %v8408 = vpack.c.bf16 %v8356, %v8352
    %v8409 = vpack.c.bf16 %v8357, %v8353
    %v8410 = vpack.c.bf16 %v8358, %v8354
    %v8411 = vpack.c.bf16 %v8363, %v8359
    %v8412 = vpack.c.bf16 %v8364, %v8360
    %v8413 = vpack.c.bf16 %v8365, %v8361
    %v8414 = vpack.c.bf16 %v8366, %v8362
    %v8415 = vpack.c.bf16 %v8371, %v8367
    %v8416 = vpack.c.bf16 %v8372, %v8368
    %v8417 = vpack.c.bf16 %v8373, %v8369
    %v8418 = vpack.c.bf16 %v8374, %v8370
    %v8419 = vpack.c.bf16 %v8379, %v8375
    %v8420 = vpack.c.bf16 %v8380, %v8376
    %v8421 = vpack.c.bf16 %v8381, %v8377
    %v8422 = vpack.c.bf16 %v8382, %v8378
    %v8423 = vpack.c.bf16 %v8387, %v8383
    %v8424 = vpack.c.bf16 %v8388, %v8384
    %v8425 = vpack.c.bf16 %v8389, %v8385
    %v8426 = vpack.c.bf16 %v8390, %v8386
    %v8427 = vpack.c.bf16 %v8395, %v8391
    %v8428 = vpack.c.bf16 %v8396, %v8392
    %v8429 = vpack.c.bf16 %v8397, %v8393
    %v8430 = vpack.c.bf16 %v8398, %v8394
    %v8431 = vld [vmem:[%s7] sm:$0xf]
    %v8432 = vld [vmem:[%s7 + $0x4] sm:$0xf]
    %v8433 = vld [vmem:[%s7 + $0x8] sm:$0xf]
    %v8434 = vld [vmem:[%s7 + $0xc] sm:$0xf]
    %v8435 = vld [vmem:[%s7 + $0x10] sm:$0xf]
    %v8436 = vld [vmem:[%s7 + $0x14] sm:$0xf]
    %v8437 = vld [vmem:[%s7 + $0x18] sm:$0xf]
    %v8438 = vld [vmem:[%s7 + $0x1c] sm:$0xf]
    %v8439 = vld [vmem:[%s7 + $0x20] sm:$0xf]
    %v8440 = vld [vmem:[%s7 + $0x24] sm:$0xf]
    %v8441 = vld [vmem:[%s7 + $0x28] sm:$0xf]
    %v8442 = vld [vmem:[%s7 + $0x2c] sm:$0xf]
    %v8443 = vld [vmem:[%s7 + $0x30] sm:$0xf]
    %v8444 = vld [vmem:[%s7 + $0x34] sm:$0xf]
    %v8445 = vld [vmem:[%s7 + $0x38] sm:$0xf]
    %v8446 = vld [vmem:[%s7 + $0x3c] sm:$0xf]
    %v8447 = vld [vmem:[%s7 + $0x40] sm:$0xf]
    %v8448 = vld [vmem:[%s7 + $0x44] sm:$0xf]
    %v8449 = vld [vmem:[%s7 + $0x48] sm:$0xf]
    %v8450 = vld [vmem:[%s7 + $0x4c] sm:$0xf]
    %v8451 = vld [vmem:[%s7 + $0x50] sm:$0xf]
    %v8452 = vld [vmem:[%s7 + $0x54] sm:$0xf]
    %v8453 = vld [vmem:[%s7 + $0x58] sm:$0xf]
    %v8454 = vld [vmem:[%s7 + $0x5c] sm:$0xf]
    %v8455 = vld [vmem:[%s7 + $0x60] sm:$0xf]
    %v8456 = vld [vmem:[%s7 + $0x64] sm:$0xf]
    %v8457 = vld [vmem:[%s7 + $0x68] sm:$0xf]
    %v8458 = vld [vmem:[%s7 + $0x6c] sm:$0xf]
    %v8459 = vld [vmem:[%s7 + $0x70] sm:$0xf]
    %v8460 = vld [vmem:[%s7 + $0x74] sm:$0xf]
    %v8461 = vld [vmem:[%s7 + $0x78] sm:$0xf]
    %v8462 = vld [vmem:[%s7 + $0x7c] sm:$0xf]
    %v8463 = vld [vmem:[%s7 + $0x80] sm:$0xf]
    %v8464 = vld [vmem:[%s7 + $0x84] sm:$0xf]
    %v8465 = vld [vmem:[%s7 + $0x88] sm:$0xf]
    %v8466 = vld [vmem:[%s7 + $0x8c] sm:$0xf]
    %v8467 = vld [vmem:[%s7 + $0x90] sm:$0xf]
    %v8468 = vld [vmem:[%s7 + $0x94] sm:$0xf]
    %v8469 = vld [vmem:[%s7 + $0x98] sm:$0xf]
    %v8470 = vld [vmem:[%s7 + $0x9c] sm:$0xf]
    %v8471 = vld [vmem:[%s7 + $0xa0] sm:$0xf]
    %v8472 = vld [vmem:[%s7 + $0xa4] sm:$0xf]
    %v8473 = vld [vmem:[%s7 + $0xa8] sm:$0xf]
    %v8474 = vld [vmem:[%s7 + $0xac] sm:$0xf]
    %v8475 = vld [vmem:[%s7 + $0xb0] sm:$0xf]
    %v8476 = vld [vmem:[%s7 + $0xb4] sm:$0xf]
    %v8477 = vld [vmem:[%s7 + $0xb8] sm:$0xf]
    %v8478 = vld [vmem:[%s7 + $0xbc] sm:$0xf]
    %v8479 = vld [vmem:[%s7 + $0xc0] sm:$0xf]
    %v8480 = vld [vmem:[%s7 + $0xc4] sm:$0xf]
    %v8481 = vld [vmem:[%s7 + $0xc8] sm:$0xf]
    %v8482 = vld [vmem:[%s7 + $0xcc] sm:$0xf]
    %v8483 = vld [vmem:[%s7 + $0xd0] sm:$0xf]
    %v8484 = vld [vmem:[%s7 + $0xd4] sm:$0xf]
    %v8485 = vld [vmem:[%s7 + $0xd8] sm:$0xf]
    %v8486 = vld [vmem:[%s7 + $0xdc] sm:$0xf]
    %v8487 = vld [vmem:[%s7 + $0xe0] sm:$0xf]
    %v8488 = vld [vmem:[%s7 + $0xe4] sm:$0xf]
    %v8489 = vld [vmem:[%s7 + $0xe8] sm:$0xf]
    %v8490 = vld [vmem:[%s7 + $0xec] sm:$0xf]
    %v8491 = vld [vmem:[%s7 + $0xf0] sm:$0xf]
    %v8492 = vld [vmem:[%s7 + $0xf4] sm:$0xf]
    %v8493 = vld [vmem:[%s7 + $0xf8] sm:$0xf]
    %v8494 = vld [vmem:[%s7 + $0xfc] sm:$0xf]
    %v8495 = vld [vmem:[#allocation13 + $0x1d] sm:$0x1]
    %v8497 = vlaneseq
    %v8498 = vshrl.u32 %v8497, 7
    %v8499 = vsub.s32 0, %v8498
    %v8500 = vrot.slane %v8495, %v8499
    %v8566 = vunpack.c.l.b16 %v8431
    %v8567 = vunpack.c.l.b16 %v8432
    %v8568 = vunpack.c.l.b16 %v8433
    %v8569 = vunpack.c.l.b16 %v8434
    %v8570 = vunpack.c.l.b16 %v8435
    %v8571 = vunpack.c.l.b16 %v8436
    %v8572 = vunpack.c.l.b16 %v8437
    %v8573 = vunpack.c.l.b16 %v8438
    %v8574 = vunpack.c.l.b16 %v8439
    %v8575 = vunpack.c.l.b16 %v8440
    %v8576 = vunpack.c.l.b16 %v8441
    %v8577 = vunpack.c.l.b16 %v8442
    %v8578 = vunpack.c.l.b16 %v8443
    %v8579 = vunpack.c.l.b16 %v8444
    %v8580 = vunpack.c.l.b16 %v8445
    %v8581 = vunpack.c.l.b16 %v8446
    %v8582 = vunpack.c.l.b16 %v8447
    %v8583 = vunpack.c.l.b16 %v8448
    %v8584 = vunpack.c.l.b16 %v8449
    %v8585 = vunpack.c.l.b16 %v8450
    %v8586 = vunpack.c.l.b16 %v8451
    %v8587 = vunpack.c.l.b16 %v8452
    %v8588 = vunpack.c.l.b16 %v8453
    %v8589 = vunpack.c.l.b16 %v8454
    %v8590 = vunpack.c.l.b16 %v8455
    %v8591 = vunpack.c.l.b16 %v8456
    %v8592 = vunpack.c.l.b16 %v8457
    %v8593 = vunpack.c.l.b16 %v8458
    %v8594 = vunpack.c.l.b16 %v8459
    %v8595 = vunpack.c.l.b16 %v8460
    %v8596 = vunpack.c.l.b16 %v8461
    %v8597 = vunpack.c.l.b16 %v8462
    %v8598 = vunpack.c.l.b16 %v8463
    %v8599 = vunpack.c.l.b16 %v8464
    %v8600 = vunpack.c.l.b16 %v8465
    %v8601 = vunpack.c.l.b16 %v8466
    %v8602 = vunpack.c.l.b16 %v8467
    %v8603 = vunpack.c.l.b16 %v8468
    %v8604 = vunpack.c.l.b16 %v8469
    %v8605 = vunpack.c.l.b16 %v8470
    %v8606 = vunpack.c.l.b16 %v8471
    %v8607 = vunpack.c.l.b16 %v8472
    %v8608 = vunpack.c.l.b16 %v8473
    %v8609 = vunpack.c.l.b16 %v8474
    %v8610 = vunpack.c.l.b16 %v8475
    %v8611 = vunpack.c.l.b16 %v8476
    %v8612 = vunpack.c.l.b16 %v8477
    %v8613 = vunpack.c.l.b16 %v8478
    %v8614 = vunpack.c.l.b16 %v8479
    %v8615 = vunpack.c.l.b16 %v8480
    %v8616 = vunpack.c.l.b16 %v8481
    %v8617 = vunpack.c.l.b16 %v8482
    %v8618 = vunpack.c.l.b16 %v8483
    %v8619 = vunpack.c.l.b16 %v8484
    %v8620 = vunpack.c.l.b16 %v8485
    %v8621 = vunpack.c.l.b16 %v8486
    %v8622 = vunpack.c.l.b16 %v8487
    %v8623 = vunpack.c.l.b16 %v8488
    %v8624 = vunpack.c.l.b16 %v8489
    %v8625 = vunpack.c.l.b16 %v8490
    %v8626 = vunpack.c.l.b16 %v8491
    %v8627 = vunpack.c.l.b16 %v8492
    %v8628 = vunpack.c.l.b16 %v8493
    %v8629 = vunpack.c.l.b16 %v8494
    %v8630 = vpack.c.b16 %v8567, %v8566
    %v8631 = vpack.c.b16 %v8569, %v8568
    %v8632 = vpack.c.b16 %v8571, %v8570
    %v8633 = vpack.c.b16 %v8573, %v8572
    %v8634 = vpack.c.b16 %v8575, %v8574
    %v8635 = vpack.c.b16 %v8577, %v8576
    %v8636 = vpack.c.b16 %v8579, %v8578
    %v8637 = vpack.c.b16 %v8581, %v8580
    %v8638 = vpack.c.b16 %v8583, %v8582
    %v8639 = vpack.c.b16 %v8585, %v8584
    %v8640 = vpack.c.b16 %v8587, %v8586
    %v8641 = vpack.c.b16 %v8589, %v8588
    %v8642 = vpack.c.b16 %v8591, %v8590
    %v8643 = vpack.c.b16 %v8593, %v8592
    %v8644 = vpack.c.b16 %v8595, %v8594
    %v8645 = vpack.c.b16 %v8597, %v8596
    %v8646 = vpack.c.b16 %v8599, %v8598
    %v8647 = vpack.c.b16 %v8601, %v8600
    %v8648 = vpack.c.b16 %v8603, %v8602
    %v8649 = vpack.c.b16 %v8605, %v8604
    %v8650 = vpack.c.b16 %v8607, %v8606
    %v8651 = vpack.c.b16 %v8609, %v8608
    %v8652 = vpack.c.b16 %v8611, %v8610
    %v8653 = vpack.c.b16 %v8613, %v8612
    %v8654 = vpack.c.b16 %v8615, %v8614
    %v8655 = vpack.c.b16 %v8617, %v8616
    %v8656 = vpack.c.b16 %v8619, %v8618
    %v8657 = vpack.c.b16 %v8621, %v8620
    %v8658 = vpack.c.b16 %v8623, %v8622
    %v8659 = vpack.c.b16 %v8625, %v8624
    %v8660 = vpack.c.b16 %v8627, %v8626
    %v8661 = vpack.c.b16 %v8629, %v8628
    %8694 = vmatprep.subr.bf16.mxu0 0
    %8695 = vmatpush1.bf16.msra.mxu0 %v8637
    %8696 = vmatprep.subr.bf16.mxu0 0
    %8697 = vmatpush1.bf16.msra.mxu0 %v8636
    %8698 = vmatprep.subr.bf16.mxu0 0
    %8699 = vmatpush1.bf16.msra.mxu0 %v8635
    %8700 = vmatprep.subr.bf16.mxu0 0
    %8701 = vmatpush1.bf16.msra.mxu0 %v8634
    %8702 = vmatprep.subr.bf16.mxu0 0
    %8703 = vmatpush1.bf16.msra.mxu0 %v8633
    %8704 = vmatprep.subr.bf16.mxu0 0
    %8705 = vmatpush1.bf16.msra.mxu0 %v8632
    %8706 = vmatprep.subr.bf16.mxu0 0
    %8707 = vmatpush1.bf16.msra.mxu0 %v8631
    %8708 = vmatprep.subr.bf16.mxu0 0
    %8709 = vmatpush1.bf16.msra.mxu0 %v8630
    %8710 = vmatprep.subr.bf16.mxu0 0
    %8711 = vmatpush2.bf16.msra.mxu0 %v8645
    %8712 = vmatprep.subr.bf16.mxu0 0
    %8713 = vmatpush2.bf16.msra.mxu0 %v8644
    %8714 = vmatprep.subr.bf16.mxu0 0
    %8715 = vmatpush2.bf16.msra.mxu0 %v8643
    %8716 = vmatprep.subr.bf16.mxu0 0
    %8717 = vmatpush2.bf16.msra.mxu0 %v8642
    %8718 = vmatprep.subr.bf16.mxu0 0
    %8719 = vmatpush2.bf16.msra.mxu0 %v8641
    %8720 = vmatprep.subr.bf16.mxu0 0
    %8721 = vmatpush2.bf16.msra.mxu0 %v8640
    %8722 = vmatprep.subr.bf16.mxu0 0
    %8723 = vmatpush2.bf16.msra.mxu0 %v8639
    %8724 = vmatprep.subr.bf16.mxu0 0
    %8725 = vmatpush2.bf16.msra.mxu0 %v8638
    %8726 = vmatprep.mubr.bf16.mxu0 %v8400
    %8727 = vmatmul.mubr.bf16.gmra.mxu0 %v8399
    %v8728 = vpop.f32.mrf.mxu0
    %v8729 = vadd.f32 %v8500, %v8728
    %v8730 = vpop.f32.mrf.mxu0
    %v8731 = vpop.f32.mrf.mxu0
    %v8732 = vadd.f32 %v8500, %v8731
    %v8733 = vpop.f32.mrf.mxu0
    %8734 = vmatprep.mubr.bf16.mxu0 %v8404
    %8735 = vmatmul.mubr.bf16.gmra.mxu0 %v8403
    %v8736 = vpop.f32.mrf.mxu0
    %v8737 = vadd.f32 %v8500, %v8736
    %v8738 = vpop.f32.mrf.mxu0
    %v8739 = vpop.f32.mrf.mxu0
    %v8740 = vadd.f32 %v8500, %v8739
    %v8741 = vpop.f32.mrf.mxu0
    %8742 = vmatprep.mubr.bf16.mxu0 %v8408
    %8743 = vmatmul.mubr.bf16.gmra.mxu0 %v8407
    %v8744 = vpop.f32.mrf.mxu0
    %v8745 = vadd.f32 %v8500, %v8744
    %v8746 = vpop.f32.mrf.mxu0
    %v8747 = vpop.f32.mrf.mxu0
    %v8748 = vadd.f32 %v8500, %v8747
    %v8749 = vpop.f32.mrf.mxu0
    %8750 = vmatprep.mubr.bf16.mxu0 %v8412
    %8751 = vmatmul.mubr.bf16.gmra.mxu0 %v8411
    %v8752 = vpop.f32.mrf.mxu0
    %v8753 = vadd.f32 %v8500, %v8752
    %v8754 = vpop.f32.mrf.mxu0
    %v8755 = vpop.f32.mrf.mxu0
    %v8756 = vadd.f32 %v8500, %v8755
    %v8757 = vpop.f32.mrf.mxu0
    %8758 = vmatprep.mubr.bf16.mxu0 %v8416
    %8759 = vmatmul.mubr.bf16.gmra.mxu0 %v8415
    %v8760 = vpop.f32.mrf.mxu0
    %v8761 = vadd.f32 %v8500, %v8760
    %v8762 = vpop.f32.mrf.mxu0
    %v8763 = vpop.f32.mrf.mxu0
    %v8764 = vadd.f32 %v8500, %v8763
    %v8765 = vpop.f32.mrf.mxu0
    %8766 = vmatprep.mubr.bf16.mxu0 %v8420
    %8767 = vmatmul.mubr.bf16.gmra.mxu0 %v8419
    %v8768 = vpop.f32.mrf.mxu0
    %v8769 = vadd.f32 %v8500, %v8768
    %v8770 = vpop.f32.mrf.mxu0
    %v8771 = vpop.f32.mrf.mxu0
    %v8772 = vadd.f32 %v8500, %v8771
    %v8773 = vpop.f32.mrf.mxu0
    %8774 = vmatprep.mubr.bf16.mxu0 %v8424
    %8775 = vmatmul.mubr.bf16.gmra.mxu0 %v8423
    %v8776 = vpop.f32.mrf.mxu0
    %v8777 = vadd.f32 %v8500, %v8776
    %v8778 = vpop.f32.mrf.mxu0
    %v8779 = vpop.f32.mrf.mxu0
    %v8780 = vadd.f32 %v8500, %v8779
    %v8781 = vpop.f32.mrf.mxu0
    %8782 = vmatprep.mubr.bf16.mxu0 %v8428
    %8783 = vmatmul.mubr.bf16.gmra.mxu0 %v8427
    %v8784 = vpop.f32.mrf.mxu0
    %v8785 = vadd.f32 %v8500, %v8784
    %v8786 = vpop.f32.mrf.mxu0
    %v8787 = vpop.f32.mrf.mxu0
    %v8788 = vadd.f32 %v8500, %v8787
    %v8789 = vpop.f32.mrf.mxu0
    %8790 = vdwg.mxu0
    %8791 = vmatprep.subr.bf16.mxu0 0
    %8792 = vmatpush1.bf16.msra.mxu0 %v8653
    %8793 = vmatprep.subr.bf16.mxu0 0
    %8794 = vmatpush1.bf16.msra.mxu0 %v8652
    %8795 = vmatprep.subr.bf16.mxu0 0
    %8796 = vmatpush1.bf16.msra.mxu0 %v8651
    %8797 = vmatprep.subr.bf16.mxu0 0
    %8798 = vmatpush1.bf16.msra.mxu0 %v8650
    %8799 = vmatprep.subr.bf16.mxu0 0
    %8800 = vmatpush1.bf16.msra.mxu0 %v8649
    %8801 = vmatprep.subr.bf16.mxu0 0
    %8802 = vmatpush1.bf16.msra.mxu0 %v8648
    %8803 = vmatprep.subr.bf16.mxu0 0
    %8804 = vmatpush1.bf16.msra.mxu0 %v8647
    %8805 = vmatprep.subr.bf16.mxu0 0
    %8806 = vmatpush1.bf16.msra.mxu0 %v8646
    %8807 = vmatprep.subr.bf16.mxu0 0
    %8808 = vmatpush2.bf16.msra.mxu0 %v8661
    %8809 = vmatprep.subr.bf16.mxu0 0
    %8810 = vmatpush2.bf16.msra.mxu0 %v8660
    %8811 = vmatprep.subr.bf16.mxu0 0
    %8812 = vmatpush2.bf16.msra.mxu0 %v8659
    %8813 = vmatprep.subr.bf16.mxu0 0
    %8814 = vmatpush2.bf16.msra.mxu0 %v8658
    %8815 = vmatprep.subr.bf16.mxu0 0
    %8816 = vmatpush2.bf16.msra.mxu0 %v8657
    %8817 = vmatprep.subr.bf16.mxu0 0
    %8818 = vmatpush2.bf16.msra.mxu0 %v8656
    %8819 = vmatprep.subr.bf16.mxu0 0
    %8820 = vmatpush2.bf16.msra.mxu0 %v8655
    %8821 = vmatprep.subr.bf16.mxu0 0
    %8822 = vmatpush2.bf16.msra.mxu0 %v8654
    %8823 = vmatprep.mubr.bf16.mxu0 %v8402
    %8824 = vmatmul.mubr.bf16.gmra.mxu0 %v8401
    %v8825 = vpop.f32.mrf.mxu0
    %v8826 = vadd.f32 %v8729, %v8825
    %v8827 = vpop.f32.mrf.mxu0
    %v8828 = vpop.f32.mrf.mxu0
    %v8829 = vadd.f32 %v8732, %v8828
    %v8830 = vpop.f32.mrf.mxu0
    %8831 = vmatprep.mubr.bf16.mxu0 %v8406
    %8832 = vmatmul.mubr.bf16.gmra.mxu0 %v8405
    %v8833 = vpop.f32.mrf.mxu0
    %v8834 = vadd.f32 %v8737, %v8833
    %v8835 = vpop.f32.mrf.mxu0
    %v8836 = vpop.f32.mrf.mxu0
    %v8837 = vadd.f32 %v8740, %v8836
    %v8838 = vpop.f32.mrf.mxu0
    %8839 = vmatprep.mubr.bf16.mxu0 %v8410
    %8840 = vmatmul.mubr.bf16.gmra.mxu0 %v8409
    %v8841 = vpop.f32.mrf.mxu0
    %v8842 = vadd.f32 %v8745, %v8841
    %v8843 = vpop.f32.mrf.mxu0
    %v8844 = vpop.f32.mrf.mxu0
    %v8845 = vadd.f32 %v8748, %v8844
    %v8846 = vpop.f32.mrf.mxu0
    %8847 = vmatprep.mubr.bf16.mxu0 %v8414
    %8848 = vmatmul.mubr.bf16.gmra.mxu0 %v8413
    %v8849 = vpop.f32.mrf.mxu0
    %v8850 = vadd.f32 %v8753, %v8849
    %v8851 = vpop.f32.mrf.mxu0
    %v8852 = vpop.f32.mrf.mxu0
    %v8853 = vadd.f32 %v8756, %v8852
    %v8854 = vpop.f32.mrf.mxu0
    %8855 = vmatprep.mubr.bf16.mxu0 %v8418
    %8856 = vmatmul.mubr.bf16.gmra.mxu0 %v8417
    %v8857 = vpop.f32.mrf.mxu0
    %v8858 = vadd.f32 %v8761, %v8857
    %v8859 = vpop.f32.mrf.mxu0
    %v8860 = vpop.f32.mrf.mxu0
    %v8861 = vadd.f32 %v8764, %v8860
    %v8862 = vpop.f32.mrf.mxu0
    %8863 = vmatprep.mubr.bf16.mxu0 %v8422
    %8864 = vmatmul.mubr.bf16.gmra.mxu0 %v8421
    %v8865 = vpop.f32.mrf.mxu0
    %v8866 = vadd.f32 %v8769, %v8865
    %v8867 = vpop.f32.mrf.mxu0
    %v8868 = vpop.f32.mrf.mxu0
    %v8869 = vadd.f32 %v8772, %v8868
    %v8870 = vpop.f32.mrf.mxu0
    %8871 = vmatprep.mubr.bf16.mxu0 %v8426
    %8872 = vmatmul.mubr.bf16.gmra.mxu0 %v8425
    %v8873 = vpop.f32.mrf.mxu0
    %v8874 = vadd.f32 %v8777, %v8873
    %v8875 = vpop.f32.mrf.mxu0
    %v8876 = vpop.f32.mrf.mxu0
    %v8877 = vadd.f32 %v8780, %v8876
    %v8878 = vpop.f32.mrf.mxu0
    %8879 = vmatprep.mubr.bf16.mxu0 %v8430
    %8880 = vmatmul.mubr.bf16.gmra.mxu0 %v8429
    %v8881 = vpop.f32.mrf.mxu0
    %v8882 = vadd.f32 %v8785, %v8881
    %v8883 = vpop.f32.mrf.mxu0
    %v8884 = vpop.f32.mrf.mxu0
    %v8885 = vadd.f32 %v8788, %v8884
    %v8886 = vpop.f32.mrf.mxu0
    %8887 = vdwg.mxu0
    %v8888 = vsub.f32 0.0, %v8826
    %v8889 = vsub.f32 0.0, %v8829
    %v8890 = vsub.f32 0.0, %v8834
    %v8891 = vsub.f32 0.0, %v8837
    %v8892 = vsub.f32 0.0, %v8842
    %v8893 = vsub.f32 0.0, %v8845
    %v8894 = vsub.f32 0.0, %v8850
    %v8895 = vsub.f32 0.0, %v8853
    %v8896 = vsub.f32 0.0, %v8858
    %v8897 = vsub.f32 0.0, %v8861
    %v8898 = vsub.f32 0.0, %v8866
    %v8899 = vsub.f32 0.0, %v8869
    %v8900 = vsub.f32 0.0, %v8874
    %v8901 = vsub.f32 0.0, %v8877
    %v8902 = vsub.f32 0.0, %v8882
    %v8903 = vsub.f32 0.0, %v8885
    %v8904 = vmax.f32 %v8888, 0.0
    %v8905 = vmax.f32 %v8889, 0.0
    %v8906 = vmax.f32 %v8890, 0.0
    %v8907 = vmax.f32 %v8891, 0.0
    %v8908 = vmax.f32 %v8892, 0.0
    %v8909 = vmax.f32 %v8893, 0.0
    %v8910 = vmax.f32 %v8894, 0.0
    %v8911 = vmax.f32 %v8895, 0.0
    %v8912 = vmax.f32 %v8896, 0.0
    %v8913 = vmax.f32 %v8897, 0.0
    %v8914 = vmax.f32 %v8898, 0.0
    %v8915 = vmax.f32 %v8899, 0.0
    %v8916 = vmax.f32 %v8900, 0.0
    %v8917 = vmax.f32 %v8901, 0.0
    %v8918 = vmax.f32 %v8902, 0.0
    %v8919 = vmax.f32 %v8903, 0.0
    %vm8920 = vcmp.ne.f32.partialorder %v8888, %v8888
    %vm8921 = vcmp.ne.f32.partialorder %v8889, %v8889
    %vm8922 = vcmp.ne.f32.partialorder %v8890, %v8890
    %vm8923 = vcmp.ne.f32.partialorder %v8891, %v8891
    %vm8924 = vcmp.ne.f32.partialorder %v8892, %v8892
    %vm8925 = vcmp.ne.f32.partialorder %v8893, %v8893
    %vm8926 = vcmp.ne.f32.partialorder %v8894, %v8894
    %vm8927 = vcmp.ne.f32.partialorder %v8895, %v8895
    %vm8928 = vcmp.ne.f32.partialorder %v8896, %v8896
    %vm8929 = vcmp.ne.f32.partialorder %v8897, %v8897
    %vm8930 = vcmp.ne.f32.partialorder %v8898, %v8898
    %vm8931 = vcmp.ne.f32.partialorder %v8899, %v8899
    %vm8932 = vcmp.ne.f32.partialorder %v8900, %v8900
    %vm8933 = vcmp.ne.f32.partialorder %v8901, %v8901
    %vm8934 = vcmp.ne.f32.partialorder %v8902, %v8902
    %vm8935 = vcmp.ne.f32.partialorder %v8903, %v8903
    %v8936 = vadd.f32 %v8888, 0.0
    %v8937 = vadd.f32 %v8889, 0.0
    %v8938 = vadd.f32 %v8890, 0.0
    %v8939 = vadd.f32 %v8891, 0.0
    %v8940 = vadd.f32 %v8892, 0.0
    %v8941 = vadd.f32 %v8893, 0.0
    %v8942 = vadd.f32 %v8894, 0.0
    %v8943 = vadd.f32 %v8895, 0.0
    %v8944 = vadd.f32 %v8896, 0.0
    %v8945 = vadd.f32 %v8897, 0.0
    %v8946 = vadd.f32 %v8898, 0.0
    %v8947 = vadd.f32 %v8899, 0.0
    %v8948 = vadd.f32 %v8900, 0.0
    %v8949 = vadd.f32 %v8901, 0.0
    %v8950 = vadd.f32 %v8902, 0.0
    %v8951 = vadd.f32 %v8903, 0.0
    %v8952 = vand.u32 2147483647, %v8888
    %v8953 = vand.u32 2147483647, %v8889
    %v8954 = vand.u32 2147483647, %v8890
    %v8955 = vand.u32 2147483647, %v8891
    %v8956 = vand.u32 2147483647, %v8892
    %v8957 = vand.u32 2147483647, %v8893
    %v8958 = vand.u32 2147483647, %v8894
    %v8959 = vand.u32 2147483647, %v8895
    %v8960 = vand.u32 2147483647, %v8896
    %v8961 = vand.u32 2147483647, %v8897
    %v8962 = vand.u32 2147483647, %v8898
    %v8963 = vand.u32 2147483647, %v8899
    %v8964 = vand.u32 2147483647, %v8900
    %v8965 = vand.u32 2147483647, %v8901
    %v8966 = vand.u32 2147483647, %v8902
    %v8967 = vand.u32 2147483647, %v8903
    %v8968 = vsub.f32 0.0, %v8952
    %v8969 = vsub.f32 0.0, %v8953
    %v8970 = vsub.f32 0.0, %v8954
    %v8971 = vsub.f32 0.0, %v8955
    %v8972 = vsub.f32 0.0, %v8956
    %v8973 = vsub.f32 0.0, %v8957
    %v8974 = vsub.f32 0.0, %v8958
    %v8975 = vsub.f32 0.0, %v8959
    %v8976 = vsub.f32 0.0, %v8960
    %v8977 = vsub.f32 0.0, %v8961
    %v8978 = vsub.f32 0.0, %v8962
    %v8979 = vsub.f32 0.0, %v8963
    %v8980 = vsub.f32 0.0, %v8964
    %v8981 = vsub.f32 0.0, %v8965
    %v8982 = vsub.f32 0.0, %v8966
    %v8983 = vsub.f32 0.0, %v8967
    %v8984 = vmul.f32 %v8968, 1.442695
    %v8985 = vpow.pop %v8984
    %v8986 = vmul.f32 %v8969, 1.442695
    %v8987 = vpow.pop %v8986
    %v8988 = vmul.f32 %v8970, 1.442695
    %v8989 = vpow.pop %v8988
    %v8990 = vmul.f32 %v8971, 1.442695
    %v8991 = vpow.pop %v8990
    %v8992 = vmul.f32 %v8972, 1.442695
    %v8993 = vpow.pop %v8992
    %v8994 = vmul.f32 %v8973, 1.442695
    %v8995 = vpow.pop %v8994
    %v8996 = vmul.f32 %v8974, 1.442695
    %v8997 = vpow.pop %v8996
    %v8998 = vmul.f32 %v8975, 1.442695
    %v8999 = vpow.pop %v8998
    %v9000 = vmul.f32 %v8976, 1.442695
    %v9001 = vpow.pop %v9000
    %v9002 = vmul.f32 %v8977, 1.442695
    %v9003 = vpow.pop %v9002
    %v9004 = vmul.f32 %v8978, 1.442695
    %v9005 = vpow.pop %v9004
    %v9006 = vmul.f32 %v8979, 1.442695
    %v9007 = vpow.pop %v9006
    %v9008 = vmul.f32 %v8980, 1.442695
    %v9009 = vpow.pop %v9008
    %v9010 = vmul.f32 %v8981, 1.442695
    %v9011 = vpow.pop %v9010
    %v9012 = vmul.f32 %v8982, 1.442695
    %v9013 = vpow.pop %v9012
    %v9014 = vmul.f32 %v8983, 1.442695
    %v9015 = vpow.pop %v9014
    %v9016 = vadd.f32 %v8985, 1.0
    %v9017 = vlog2.pop %v9016
    %v9018 = vmul.f32 %v9017, 0.6931472
    %v9019 = vmul.f32 -0.5, %v8985
    %v9020 = vadd.f32 %v9019, 1.0
    %v9021 = vmul.f32 %v9020, %v8985
    %v9022 = vand.u32 2147483647, %v8985
    %vm9023 = vcmp.lt.f32.partialorder %v9022, 0.0004427343
    %v9024 = vsel %vm9023, %v9021, %v9018
    %v9025 = vadd.f32 %v8987, 1.0
    %v9026 = vlog2.pop %v9025
    %v9027 = vmul.f32 %v9026, 0.6931472
    %v9028 = vmul.f32 -0.5, %v8987
    %v9029 = vadd.f32 %v9028, 1.0
    %v9030 = vmul.f32 %v9029, %v8987
    %v9031 = vand.u32 2147483647, %v8987
    %vm9032 = vcmp.lt.f32.partialorder %v9031, 0.0004427343
    %v9033 = vsel %vm9032, %v9030, %v9027
    %v9034 = vadd.f32 %v8989, 1.0
    %v9035 = vlog2.pop %v9034
    %v9036 = vmul.f32 %v9035, 0.6931472
    %v9037 = vmul.f32 -0.5, %v8989
    %v9038 = vadd.f32 %v9037, 1.0
    %v9039 = vmul.f32 %v9038, %v8989
    %v9040 = vand.u32 2147483647, %v8989
    %vm9041 = vcmp.lt.f32.partialorder %v9040, 0.0004427343
    %v9042 = vsel %vm9041, %v9039, %v9036
    %v9043 = vadd.f32 %v8991, 1.0
    %v9044 = vlog2.pop %v9043
    %v9045 = vmul.f32 %v9044, 0.6931472
    %v9046 = vmul.f32 -0.5, %v8991
    %v9047 = vadd.f32 %v9046, 1.0
    %v9048 = vmul.f32 %v9047, %v8991
    %v9049 = vand.u32 2147483647, %v8991
    %vm9050 = vcmp.lt.f32.partialorder %v9049, 0.0004427343
    %v9051 = vsel %vm9050, %v9048, %v9045
    %v9052 = vadd.f32 %v8993, 1.0
    %v9053 = vlog2.pop %v9052
    %v9054 = vmul.f32 %v9053, 0.6931472
    %v9055 = vmul.f32 -0.5, %v8993
    %v9056 = vadd.f32 %v9055, 1.0
    %v9057 = vmul.f32 %v9056, %v8993
    %v9058 = vand.u32 2147483647, %v8993
    %vm9059 = vcmp.lt.f32.partialorder %v9058, 0.0004427343
    %v9060 = vsel %vm9059, %v9057, %v9054
    %v9061 = vadd.f32 %v8995, 1.0
    %v9062 = vlog2.pop %v9061
    %v9063 = vmul.f32 %v9062, 0.6931472
    %v9064 = vmul.f32 -0.5, %v8995
    %v9065 = vadd.f32 %v9064, 1.0
    %v9066 = vmul.f32 %v9065, %v8995
    %v9067 = vand.u32 2147483647, %v8995
    %vm9068 = vcmp.lt.f32.partialorder %v9067, 0.0004427343
    %v9069 = vsel %vm9068, %v9066, %v9063
    %v9070 = vadd.f32 %v8997, 1.0
    %v9071 = vlog2.pop %v9070
    %v9072 = vmul.f32 %v9071, 0.6931472
    %v9073 = vmul.f32 -0.5, %v8997
    %v9074 = vadd.f32 %v9073, 1.0
    %v9075 = vmul.f32 %v9074, %v8997
    %v9076 = vand.u32 2147483647, %v8997
    %vm9077 = vcmp.lt.f32.partialorder %v9076, 0.0004427343
    %v9078 = vsel %vm9077, %v9075, %v9072
    %v9079 = vadd.f32 %v8999, 1.0
    %v9080 = vlog2.pop %v9079
    %v9081 = vmul.f32 %v9080, 0.6931472
    %v9082 = vmul.f32 -0.5, %v8999
    %v9083 = vadd.f32 %v9082, 1.0
    %v9084 = vmul.f32 %v9083, %v8999
    %v9085 = vand.u32 2147483647, %v8999
    %vm9086 = vcmp.lt.f32.partialorder %v9085, 0.0004427343
    %v9087 = vsel %vm9086, %v9084, %v9081
    %v9088 = vadd.f32 %v9001, 1.0
    %v9089 = vlog2.pop %v9088
    %v9090 = vmul.f32 %v9089, 0.6931472
    %v9091 = vmul.f32 -0.5, %v9001
    %v9092 = vadd.f32 %v9091, 1.0
    %v9093 = vmul.f32 %v9092, %v9001
    %v9094 = vand.u32 2147483647, %v9001
    %vm9095 = vcmp.lt.f32.partialorder %v9094, 0.0004427343
    %v9096 = vsel %vm9095, %v9093, %v9090
    %v9097 = vadd.f32 %v9003, 1.0
    %v9098 = vlog2.pop %v9097
    %v9099 = vmul.f32 %v9098, 0.6931472
    %v9100 = vmul.f32 -0.5, %v9003
    %v9101 = vadd.f32 %v9100, 1.0
    %v9102 = vmul.f32 %v9101, %v9003
    %v9103 = vand.u32 2147483647, %v9003
    %vm9104 = vcmp.lt.f32.partialorder %v9103, 0.0004427343
    %v9105 = vsel %vm9104, %v9102, %v9099
    %v9106 = vadd.f32 %v9005, 1.0
    %v9107 = vlog2.pop %v9106
    %v9108 = vmul.f32 %v9107, 0.6931472
    %v9109 = vmul.f32 -0.5, %v9005
    %v9110 = vadd.f32 %v9109, 1.0
    %v9111 = vmul.f32 %v9110, %v9005
    %v9112 = vand.u32 2147483647, %v9005
    %vm9113 = vcmp.lt.f32.partialorder %v9112, 0.0004427343
    %v9114 = vsel %vm9113, %v9111, %v9108
    %v9115 = vadd.f32 %v9007, 1.0
    %v9116 = vlog2.pop %v9115
    %v9117 = vmul.f32 %v9116, 0.6931472
    %v9118 = vmul.f32 -0.5, %v9007
    %v9119 = vadd.f32 %v9118, 1.0
    %v9120 = vmul.f32 %v9119, %v9007
    %v9121 = vand.u32 2147483647, %v9007
    %vm9122 = vcmp.lt.f32.partialorder %v9121, 0.0004427343
    %v9123 = vsel %vm9122, %v9120, %v9117
    %v9124 = vadd.f32 %v9009, 1.0
    %v9125 = vlog2.pop %v9124
    %v9126 = vmul.f32 %v9125, 0.6931472
    %v9127 = vmul.f32 -0.5, %v9009
    %v9128 = vadd.f32 %v9127, 1.0
    %v9129 = vmul.f32 %v9128, %v9009
    %v9130 = vand.u32 2147483647, %v9009
    %vm9131 = vcmp.lt.f32.partialorder %v9130, 0.0004427343
    %v9132 = vsel %vm9131, %v9129, %v9126
    %v9133 = vadd.f32 %v9011, 1.0
    %v9134 = vlog2.pop %v9133
    %v9135 = vmul.f32 %v9134, 0.6931472
    %v9136 = vmul.f32 -0.5, %v9011
    %v9137 = vadd.f32 %v9136, 1.0
    %v9138 = vmul.f32 %v9137, %v9011
    %v9139 = vand.u32 2147483647, %v9011
    %vm9140 = vcmp.lt.f32.partialorder %v9139, 0.0004427343
    %v9141 = vsel %vm9140, %v9138, %v9135
    %v9142 = vadd.f32 %v9013, 1.0
    %v9143 = vlog2.pop %v9142
    %v9144 = vmul.f32 %v9143, 0.6931472
    %v9145 = vmul.f32 -0.5, %v9013
    %v9146 = vadd.f32 %v9145, 1.0
    %v9147 = vmul.f32 %v9146, %v9013
    %v9148 = vand.u32 2147483647, %v9013
    %vm9149 = vcmp.lt.f32.partialorder %v9148, 0.0004427343
    %v9150 = vsel %vm9149, %v9147, %v9144
    %v9151 = vadd.f32 %v9015, 1.0
    %v9152 = vlog2.pop %v9151
    %v9153 = vmul.f32 %v9152, 0.6931472
    %v9154 = vmul.f32 -0.5, %v9015
    %v9155 = vadd.f32 %v9154, 1.0
    %v9156 = vmul.f32 %v9155, %v9015
    %v9157 = vand.u32 2147483647, %v9015
    %vm9158 = vcmp.lt.f32.partialorder %v9157, 0.0004427343
    %v9159 = vsel %vm9158, %v9156, %v9153
    %v9160 = vadd.f32 %v8904, %v9024
    %v9161 = vadd.f32 %v8905, %v9033
    %v9162 = vadd.f32 %v8906, %v9042
    %v9163 = vadd.f32 %v8907, %v9051
    %v9164 = vadd.f32 %v8908, %v9060
    %v9165 = vadd.f32 %v8909, %v9069
    %v9166 = vadd.f32 %v8910, %v9078
    %v9167 = vadd.f32 %v8911, %v9087
    %v9168 = vadd.f32 %v8912, %v9096
    %v9169 = vadd.f32 %v8913, %v9105
    %v9170 = vadd.f32 %v8914, %v9114
    %v9171 = vadd.f32 %v8915, %v9123
    %v9172 = vadd.f32 %v8916, %v9132
    %v9173 = vadd.f32 %v8917, %v9141
    %v9174 = vadd.f32 %v8918, %v9150
    %v9175 = vadd.f32 %v8919, %v9159
    %v9176 = vsel %vm8920, %v8936, %v9160
    %v9177 = vsel %vm8921, %v8937, %v9161
    %v9178 = vsel %vm8922, %v8938, %v9162
    %v9179 = vsel %vm8923, %v8939, %v9163
    %v9180 = vsel %vm8924, %v8940, %v9164
    %v9181 = vsel %vm8925, %v8941, %v9165
    %v9182 = vsel %vm8926, %v8942, %v9166
    %v9183 = vsel %vm8927, %v8943, %v9167
    %v9184 = vsel %vm8928, %v8944, %v9168
    %v9185 = vsel %vm8929, %v8945, %v9169
    %v9186 = vsel %vm8930, %v8946, %v9170
    %v9187 = vsel %vm8931, %v8947, %v9171
    %v9188 = vsel %vm8932, %v8948, %v9172
    %v9189 = vsel %vm8933, %v8949, %v9173
    %v9190 = vsel %vm8934, %v8950, %v9174
    %v9191 = vsel %vm8935, %v8951, %v9175
    %v9192 = vsub.f32 0.0, %v9176
    %v9193 = vsub.f32 0.0, %v9177
    %v9194 = vsub.f32 0.0, %v9178
    %v9195 = vsub.f32 0.0, %v9179
    %v9196 = vsub.f32 0.0, %v9180
    %v9197 = vsub.f32 0.0, %v9181
    %v9198 = vsub.f32 0.0, %v9182
    %v9199 = vsub.f32 0.0, %v9183
    %v9200 = vsub.f32 0.0, %v9184
    %v9201 = vsub.f32 0.0, %v9185
    %v9202 = vsub.f32 0.0, %v9186
    %v9203 = vsub.f32 0.0, %v9187
    %v9204 = vsub.f32 0.0, %v9188
    %v9205 = vsub.f32 0.0, %v9189
    %v9206 = vsub.f32 0.0, %v9190
    %v9207 = vsub.f32 0.0, %v9191
    %v9208 = vmax.f32 %v9192, -100.0
    %v9209 = vmax.f32 %v9193, -100.0
    %v9210 = vmax.f32 %v9194, -100.0
    %v9211 = vmax.f32 %v9195, -100.0
    %v9212 = vmax.f32 %v9196, -100.0
    %v9213 = vmax.f32 %v9197, -100.0
    %v9214 = vmax.f32 %v9198, -100.0
    %v9215 = vmax.f32 %v9199, -100.0
    %v9216 = vmax.f32 %v9200, -100.0
    %v9217 = vmax.f32 %v9201, -100.0
    %v9218 = vmax.f32 %v9202, -100.0
    %v9219 = vmax.f32 %v9203, -100.0
    %v9220 = vmax.f32 %v9204, -100.0
    %v9221 = vmax.f32 %v9205, -100.0
    %v9222 = vmax.f32 %v9206, -100.0
    %v9223 = vmax.f32 %v9207, -100.0
    %v9224 = vsub.f32 %v9192, %v8826
    %v9225 = vsub.f32 %v9193, %v8829
    %v9226 = vsub.f32 %v9194, %v8834
    %v9227 = vsub.f32 %v9195, %v8837
    %v9228 = vsub.f32 %v9196, %v8842
    %v9229 = vsub.f32 %v9197, %v8845
    %v9230 = vsub.f32 %v9198, %v8850
    %v9231 = vsub.f32 %v9199, %v8853
    %v9232 = vsub.f32 %v9200, %v8858
    %v9233 = vsub.f32 %v9201, %v8861
    %v9234 = vsub.f32 %v9202, %v8866
    %v9235 = vsub.f32 %v9203, %v8869
    %v9236 = vsub.f32 %v9204, %v8874
    %v9237 = vsub.f32 %v9205, %v8877
    %v9238 = vsub.f32 %v9206, %v8882
    %v9239 = vsub.f32 %v9207, %v8885
    %v9240 = vmax.f32 %v9224, -100.0
    %v9241 = vmax.f32 %v9225, -100.0
    %v9242 = vmax.f32 %v9226, -100.0
    %v9243 = vmax.f32 %v9227, -100.0
    %v9244 = vmax.f32 %v9228, -100.0
    %v9245 = vmax.f32 %v9229, -100.0
    %v9246 = vmax.f32 %v9230, -100.0
    %v9247 = vmax.f32 %v9231, -100.0
    %v9248 = vmax.f32 %v9232, -100.0
    %v9249 = vmax.f32 %v9233, -100.0
    %v9250 = vmax.f32 %v9234, -100.0
    %v9251 = vmax.f32 %v9235, -100.0
    %v9252 = vmax.f32 %v9236, -100.0
    %v9253 = vmax.f32 %v9237, -100.0
    %v9254 = vmax.f32 %v9238, -100.0
    %v9255 = vmax.f32 %v9239, -100.0
    %v9256 = vmul.f32 %v127, %v9208
    %v9257 = vmul.f32 %v128, %v9209
    %v9258 = vmul.f32 %v129, %v9210
    %v9259 = vmul.f32 %v130, %v9211
    %v9260 = vmul.f32 %v131, %v9212
    %v9261 = vmul.f32 %v132, %v9213
    %v9262 = vmul.f32 %v133, %v9214
    %v9263 = vmul.f32 %v134, %v9215
    %v9264 = vmul.f32 %v135, %v9216
    %v9265 = vmul.f32 %v136, %v9217
    %v9266 = vmul.f32 %v137, %v9218
    %v9267 = vmul.f32 %v138, %v9219
    %v9268 = vmul.f32 %v139, %v9220
    %v9269 = vmul.f32 %v140, %v9221
    %v9270 = vmul.f32 %v141, %v9222
    %v9271 = vmul.f32 %v142, %v9223
    %v9272 = vsub.f32 1.0, %v127
    %v9273 = vsub.f32 1.0, %v128
    %v9274 = vsub.f32 1.0, %v129
    %v9275 = vsub.f32 1.0, %v130
    %v9276 = vsub.f32 1.0, %v131
    %v9277 = vsub.f32 1.0, %v132
    %v9278 = vsub.f32 1.0, %v133
    %v9279 = vsub.f32 1.0, %v134
    %v9280 = vsub.f32 1.0, %v135
    %v9281 = vsub.f32 1.0, %v136
    %v9282 = vsub.f32 1.0, %v137
    %v9283 = vsub.f32 1.0, %v138
    %v9284 = vsub.f32 1.0, %v139
    %v9285 = vsub.f32 1.0, %v140
    %v9286 = vsub.f32 1.0, %v141
    %v9287 = vsub.f32 1.0, %v142
    %v9288 = vmul.f32 %v9272, %v9240
    %v9289 = vmul.f32 %v9273, %v9241
    %v9290 = vmul.f32 %v9274, %v9242
    %v9291 = vmul.f32 %v9275, %v9243
    %v9292 = vmul.f32 %v9276, %v9244
    %v9293 = vmul.f32 %v9277, %v9245
    %v9294 = vmul.f32 %v9278, %v9246
    %v9295 = vmul.f32 %v9279, %v9247
    %v9296 = vmul.f32 %v9280, %v9248
    %v9297 = vmul.f32 %v9281, %v9249
    %v9298 = vmul.f32 %v9282, %v9250
    %v9299 = vmul.f32 %v9283, %v9251
    %v9300 = vmul.f32 %v9284, %v9252
    %v9301 = vmul.f32 %v9285, %v9253
    %v9302 = vmul.f32 %v9286, %v9254
    %v9303 = vmul.f32 %v9287, %v9255
    %v9304 = vadd.f32 %v9256, %v9288
    %v9305 = vadd.f32 %v9257, %v9289
    %v9306 = vadd.f32 %v9258, %v9290
    %v9307 = vadd.f32 %v9259, %v9291
    %v9308 = vadd.f32 %v9260, %v9292
    %v9309 = vadd.f32 %v9261, %v9293
    %v9310 = vadd.f32 %v9262, %v9294
    %v9311 = vadd.f32 %v9263, %v9295
    %v9312 = vadd.f32 %v9264, %v9296
    %v9313 = vadd.f32 %v9265, %v9297
    %v9314 = vadd.f32 %v9266, %v9298
    %v9315 = vadd.f32 %v9267, %v9299
    %v9316 = vadd.f32 %v9268, %v9300
    %v9317 = vadd.f32 %v9269, %v9301
    %v9318 = vadd.f32 %v9270, %v9302
    %v9319 = vadd.f32 %v9271, %v9303
    %v9320 = vsel %vm223, %v9304, 0.0
    %9321 = vadd.xlane.f32.xlu0 %v9320
    %v9322 = vpop.xlane.xlu0 %9321
    %v9323 = vsel %vm223, %v9305, 0.0
    %9324 = vadd.xlane.f32.xlu0 %v9323
    %v9325 = vpop.xlane.xlu0 %9324
    %v9326 = vsel %vm223, %v9306, 0.0
    %9327 = vadd.xlane.f32.xlu0 %v9326
    %v9328 = vpop.xlane.xlu0 %9327
    %v9329 = vsel %vm223, %v9307, 0.0
    %9330 = vadd.xlane.f32.xlu0 %v9329
    %v9331 = vpop.xlane.xlu0 %9330
    %v9332 = vsel %vm223, %v9308, 0.0
    %9333 = vadd.xlane.f32.xlu0 %v9332
    %v9334 = vpop.xlane.xlu0 %9333
    %v9335 = vsel %vm223, %v9309, 0.0
    %9336 = vadd.xlane.f32.xlu0 %v9335
    %v9337 = vpop.xlane.xlu0 %9336
    %v9338 = vsel %vm223, %v9310, 0.0
    %9339 = vadd.xlane.f32.xlu0 %v9338
    %v9340 = vpop.xlane.xlu0 %9339
    %v9341 = vsel %vm223, %v9311, 0.0
    %9342 = vadd.xlane.f32.xlu0 %v9341
    %v9343 = vpop.xlane.xlu0 %9342
    %v9344 = vsel %vm223, %v9312, 0.0
    %9345 = vadd.xlane.f32.xlu0 %v9344
    %v9346 = vpop.xlane.xlu0 %9345
    %v9347 = vsel %vm223, %v9313, 0.0
    %9348 = vadd.xlane.f32.xlu0 %v9347
    %v9349 = vpop.xlane.xlu0 %9348
    %v9350 = vsel %vm223, %v9314, 0.0
    %9351 = vadd.xlane.f32.xlu0 %v9350
    %v9352 = vpop.xlane.xlu0 %9351
    %v9353 = vsel %vm223, %v9315, 0.0
    %9354 = vadd.xlane.f32.xlu0 %v9353
    %v9355 = vpop.xlane.xlu0 %9354
    %v9356 = vsel %vm223, %v9316, 0.0
    %9357 = vadd.xlane.f32.xlu0 %v9356
    %v9358 = vpop.xlane.xlu0 %9357
    %v9359 = vsel %vm223, %v9317, 0.0
    %9360 = vadd.xlane.f32.xlu0 %v9359
    %v9361 = vpop.xlane.xlu0 %9360
    %v9362 = vsel %vm223, %v9318, 0.0
    %9363 = vadd.xlane.f32.xlu0 %v9362
    %v9364 = vpop.xlane.xlu0 %9363
    %v9365 = vsel %vm223, %v9319, 0.0
    %9366 = vadd.xlane.f32.xlu0 %v9365
    %v9367 = vpop.xlane.xlu0 %9366
    %v9368 = vsub.f32 0.0, %v9322
    %v9369 = vsub.f32 0.0, %v9325
    %v9370 = vsub.f32 0.0, %v9328
    %v9371 = vsub.f32 0.0, %v9331
    %v9372 = vsub.f32 0.0, %v9334
    %v9373 = vsub.f32 0.0, %v9337
    %v9374 = vsub.f32 0.0, %v9340
    %v9375 = vsub.f32 0.0, %v9343
    %v9376 = vsub.f32 0.0, %v9346
    %v9377 = vsub.f32 0.0, %v9349
    %v9378 = vsub.f32 0.0, %v9352
    %v9379 = vsub.f32 0.0, %v9355
    %v9380 = vsub.f32 0.0, %v9358
    %v9381 = vsub.f32 0.0, %v9361
    %v9382 = vsub.f32 0.0, %v9364
    %v9383 = vsub.f32 0.0, %v9367
    %v9384 = vadd.f32 %v6514, 1e-08
    %v9385 = vadd.f32 %v6515, 1e-08
    %v9386 = vadd.f32 %v6516, 1e-08
    %v9387 = vadd.f32 %v6517, 1e-08
    %v9388 = vadd.f32 %v6518, 1e-08
    %v9389 = vadd.f32 %v6519, 1e-08
    %v9390 = vadd.f32 %v6520, 1e-08
    %v9391 = vadd.f32 %v6521, 1e-08
    %v9392 = vadd.f32 %v6522, 1e-08
    %v9393 = vadd.f32 %v6523, 1e-08
    %v9394 = vadd.f32 %v6524, 1e-08
    %v9395 = vadd.f32 %v6525, 1e-08
    %v9396 = vadd.f32 %v6526, 1e-08
    %v9397 = vadd.f32 %v6527, 1e-08
    %v9398 = vadd.f32 %v6528, 1e-08
    %v9399 = vadd.f32 %v6529, 1e-08
    %v9400 = vlog2.pop %v9384
    %v9401 = vmul.f32 %v9400, 0.6931472
    %v9402 = vlog2.pop %v9385
    %v9403 = vmul.f32 %v9402, 0.6931472
    %v9404 = vlog2.pop %v9386
    %v9405 = vmul.f32 %v9404, 0.6931472
    %v9406 = vlog2.pop %v9387
    %v9407 = vmul.f32 %v9406, 0.6931472
    %v9408 = vlog2.pop %v9388
    %v9409 = vmul.f32 %v9408, 0.6931472
    %v9410 = vlog2.pop %v9389
    %v9411 = vmul.f32 %v9410, 0.6931472
    %v9412 = vlog2.pop %v9390
    %v9413 = vmul.f32 %v9412, 0.6931472
    %v9414 = vlog2.pop %v9391
    %v9415 = vmul.f32 %v9414, 0.6931472
    %v9416 = vlog2.pop %v9392
    %v9417 = vmul.f32 %v9416, 0.6931472
    %v9418 = vlog2.pop %v9393
    %v9419 = vmul.f32 %v9418, 0.6931472
    %v9420 = vlog2.pop %v9394
    %v9421 = vmul.f32 %v9420, 0.6931472
    %v9422 = vlog2.pop %v9395
    %v9423 = vmul.f32 %v9422, 0.6931472
    %v9424 = vlog2.pop %v9396
    %v9425 = vmul.f32 %v9424, 0.6931472
    %v9426 = vlog2.pop %v9397
    %v9427 = vmul.f32 %v9426, 0.6931472
    %v9428 = vlog2.pop %v9398
    %v9429 = vmul.f32 %v9428, 0.6931472
    %v9430 = vlog2.pop %v9399
    %v9431 = vmul.f32 %v9430, 0.6931472
    %v9432 = vsub.f32 %v6674, %v6203
    %v9433 = vsub.f32 %v6675, %v6204
    %v9434 = vsub.f32 %v6676, %v6205
    %v9435 = vsub.f32 %v6677, %v6206
    %v9436 = vsub.f32 %v6678, %v6207
    %v9437 = vsub.f32 %v6679, %v6208
    %v9438 = vsub.f32 %v6680, %v6209
    %v9439 = vsub.f32 %v6681, %v6210
    %v9440 = vsub.f32 %v6682, %v6211
    %v9441 = vsub.f32 %v6683, %v6212
    %v9442 = vsub.f32 %v6684, %v6213
    %v9443 = vsub.f32 %v6685, %v6214
    %v9444 = vsub.f32 %v6686, %v6215
    %v9445 = vsub.f32 %v6687, %v6216
    %v9446 = vsub.f32 %v6688, %v6217
    %v9447 = vsub.f32 %v6689, %v6218
    %v9448 = vmul.f32 %v9432, %v9432
    %v9449 = vmul.f32 %v9433, %v9433
    %v9450 = vmul.f32 %v9434, %v9434
    %v9451 = vmul.f32 %v9435, %v9435
    %v9452 = vmul.f32 %v9436, %v9436
    %v9453 = vmul.f32 %v9437, %v9437
    %v9454 = vmul.f32 %v9438, %v9438
    %v9455 = vmul.f32 %v9439, %v9439
    %v9456 = vmul.f32 %v9440, %v9440
    %v9457 = vmul.f32 %v9441, %v9441
    %v9458 = vmul.f32 %v9442, %v9442
    %v9459 = vmul.f32 %v9443, %v9443
    %v9460 = vmul.f32 %v9444, %v9444
    %v9461 = vmul.f32 %v9445, %v9445
    %v9462 = vmul.f32 %v9446, %v9446
    %v9463 = vmul.f32 %v9447, %v9447
    %v9464 = vrcp.pop %v9384
    %v9465 = vrcp.pop %v9385
    %v9466 = vrcp.pop %v9386
    %v9467 = vrcp.pop %v9387
    %v9468 = vrcp.pop %v9388
    %v9469 = vrcp.pop %v9389
    %v9470 = vrcp.pop %v9390
    %v9471 = vrcp.pop %v9391
    %v9472 = vrcp.pop %v9392
    %v9473 = vrcp.pop %v9393
    %v9474 = vrcp.pop %v9394
    %v9475 = vrcp.pop %v9395
    %v9476 = vrcp.pop %v9396
    %v9477 = vrcp.pop %v9397
    %v9478 = vrcp.pop %v9398
    %v9479 = vrcp.pop %v9399
    %v9480 = vmul.f32 %v9448, %v9464
    %v9481 = vmul.f32 %v9449, %v9465
    %v9482 = vmul.f32 %v9450, %v9466
    %v9483 = vmul.f32 %v9451, %v9467
    %v9484 = vmul.f32 %v9452, %v9468
    %v9485 = vmul.f32 %v9453, %v9469
    %v9486 = vmul.f32 %v9454, %v9470
    %v9487 = vmul.f32 %v9455, %v9471
    %v9488 = vmul.f32 %v9456, %v9472
    %v9489 = vmul.f32 %v9457, %v9473
    %v9490 = vmul.f32 %v9458, %v9474
    %v9491 = vmul.f32 %v9459, %v9475
    %v9492 = vmul.f32 %v9460, %v9476
    %v9493 = vmul.f32 %v9461, %v9477
    %v9494 = vmul.f32 %v9462, %v9478
    %v9495 = vmul.f32 %v9463, %v9479
    %v9496 = vadd.f32 %v9401, %v9480
    %v9497 = vadd.f32 %v9403, %v9481
    %v9498 = vadd.f32 %v9405, %v9482
    %v9499 = vadd.f32 %v9407, %v9483
    %v9500 = vadd.f32 %v9409, %v9484
    %v9501 = vadd.f32 %v9411, %v9485
    %v9502 = vadd.f32 %v9413, %v9486
    %v9503 = vadd.f32 %v9415, %v9487
    %v9504 = vadd.f32 %v9417, %v9488
    %v9505 = vadd.f32 %v9419, %v9489
    %v9506 = vadd.f32 %v9421, %v9490
    %v9507 = vadd.f32 %v9423, %v9491
    %v9508 = vadd.f32 %v9425, %v9492
    %v9509 = vadd.f32 %v9427, %v9493
    %v9510 = vadd.f32 %v9429, %v9494
    %v9511 = vadd.f32 %v9431, %v9495
    %v9512 = vsel %vm6732, %v9496, 0.0
    %9513 = vadd.xlane.f32.xlu0 %v9512
    %v9514 = vpop.xlane.xlu0 %9513
    %v9515 = vsel %vm6732, %v9497, 0.0
    %9516 = vadd.xlane.f32.xlu0 %v9515
    %v9517 = vpop.xlane.xlu0 %9516
    %v9518 = vsel %vm6732, %v9498, 0.0
    %9519 = vadd.xlane.f32.xlu0 %v9518
    %v9520 = vpop.xlane.xlu0 %9519
    %v9521 = vsel %vm6732, %v9499, 0.0
    %9522 = vadd.xlane.f32.xlu0 %v9521
    %v9523 = vpop.xlane.xlu0 %9522
    %v9524 = vsel %vm6732, %v9500, 0.0
    %9525 = vadd.xlane.f32.xlu0 %v9524
    %v9526 = vpop.xlane.xlu0 %9525
    %v9527 = vsel %vm6732, %v9501, 0.0
    %9528 = vadd.xlane.f32.xlu0 %v9527
    %v9529 = vpop.xlane.xlu0 %9528
    %v9530 = vsel %vm6732, %v9502, 0.0
    %9531 = vadd.xlane.f32.xlu0 %v9530
    %v9532 = vpop.xlane.xlu0 %9531
    %v9533 = vsel %vm6732, %v9503, 0.0
    %9534 = vadd.xlane.f32.xlu0 %v9533
    %v9535 = vpop.xlane.xlu0 %9534
    %v9536 = vsel %vm6732, %v9504, 0.0
    %9537 = vadd.xlane.f32.xlu0 %v9536
    %v9538 = vpop.xlane.xlu0 %9537
    %v9539 = vsel %vm6732, %v9505, 0.0
    %9540 = vadd.xlane.f32.xlu0 %v9539
    %v9541 = vpop.xlane.xlu0 %9540
    %v9542 = vsel %vm6732, %v9506, 0.0
    %9543 = vadd.xlane.f32.xlu0 %v9542
    %v9544 = vpop.xlane.xlu0 %9543
    %v9545 = vsel %vm6732, %v9507, 0.0
    %9546 = vadd.xlane.f32.xlu0 %v9545
    %v9547 = vpop.xlane.xlu0 %9546
    %v9548 = vsel %vm6732, %v9508, 0.0
    %9549 = vadd.xlane.f32.xlu0 %v9548
    %v9550 = vpop.xlane.xlu0 %9549
    %v9551 = vsel %vm6732, %v9509, 0.0
    %9552 = vadd.xlane.f32.xlu0 %v9551
    %v9553 = vpop.xlane.xlu0 %9552
    %v9554 = vsel %vm6732, %v9510, 0.0
    %9555 = vadd.xlane.f32.xlu0 %v9554
    %v9556 = vpop.xlane.xlu0 %9555
    %v9557 = vsel %vm6732, %v9511, 0.0
    %9558 = vadd.xlane.f32.xlu0 %v9557
    %v9559 = vpop.xlane.xlu0 %9558
    %v9560 = vmul.f32 %v9514, -0.5
    %v9561 = vmul.f32 %v9517, -0.5
    %v9562 = vmul.f32 %v9520, -0.5
    %v9563 = vmul.f32 %v9523, -0.5
    %v9564 = vmul.f32 %v9526, -0.5
    %v9565 = vmul.f32 %v9529, -0.5
    %v9566 = vmul.f32 %v9532, -0.5
    %v9567 = vmul.f32 %v9535, -0.5
    %v9568 = vmul.f32 %v9538, -0.5
    %v9569 = vmul.f32 %v9541, -0.5
    %v9570 = vmul.f32 %v9544, -0.5
    %v9571 = vmul.f32 %v9547, -0.5
    %v9572 = vmul.f32 %v9550, -0.5
    %v9573 = vmul.f32 %v9553, -0.5
    %v9574 = vmul.f32 %v9556, -0.5
    %v9575 = vmul.f32 %v9559, -0.5
    %v9576 = vadd.f32 %v4071, 1e-08
    %v9577 = vadd.f32 %v4072, 1e-08
    %v9578 = vadd.f32 %v4073, 1e-08
    %v9579 = vadd.f32 %v4074, 1e-08
    %v9580 = vadd.f32 %v4075, 1e-08
    %v9581 = vadd.f32 %v4076, 1e-08
    %v9582 = vadd.f32 %v4077, 1e-08
    %v9583 = vadd.f32 %v4078, 1e-08
    %v9584 = vadd.f32 %v4079, 1e-08
    %v9585 = vadd.f32 %v4080, 1e-08
    %v9586 = vadd.f32 %v4081, 1e-08
    %v9587 = vadd.f32 %v4082, 1e-08
    %v9588 = vadd.f32 %v4083, 1e-08
    %v9589 = vadd.f32 %v4084, 1e-08
    %v9590 = vadd.f32 %v4085, 1e-08
    %v9591 = vadd.f32 %v4086, 1e-08
    %v9592 = vlog2.pop %v9576
    %v9593 = vmul.f32 %v9592, 0.6931472
    %v9594 = vlog2.pop %v9577
    %v9595 = vmul.f32 %v9594, 0.6931472
    %v9596 = vlog2.pop %v9578
    %v9597 = vmul.f32 %v9596, 0.6931472
    %v9598 = vlog2.pop %v9579
    %v9599 = vmul.f32 %v9598, 0.6931472
    %v9600 = vlog2.pop %v9580
    %v9601 = vmul.f32 %v9600, 0.6931472
    %v9602 = vlog2.pop %v9581
    %v9603 = vmul.f32 %v9602, 0.6931472
    %v9604 = vlog2.pop %v9582
    %v9605 = vmul.f32 %v9604, 0.6931472
    %v9606 = vlog2.pop %v9583
    %v9607 = vmul.f32 %v9606, 0.6931472
    %v9608 = vlog2.pop %v9584
    %v9609 = vmul.f32 %v9608, 0.6931472
    %v9610 = vlog2.pop %v9585
    %v9611 = vmul.f32 %v9610, 0.6931472
    %v9612 = vlog2.pop %v9586
    %v9613 = vmul.f32 %v9612, 0.6931472
    %v9614 = vlog2.pop %v9587
    %v9615 = vmul.f32 %v9614, 0.6931472
    %v9616 = vlog2.pop %v9588
    %v9617 = vmul.f32 %v9616, 0.6931472
    %v9618 = vlog2.pop %v9589
    %v9619 = vmul.f32 %v9618, 0.6931472
    %v9620 = vlog2.pop %v9590
    %v9621 = vmul.f32 %v9620, 0.6931472
    %v9622 = vlog2.pop %v9591
    %v9623 = vmul.f32 %v9622, 0.6931472
    %v9624 = vsub.f32 %v6674, %v3760
    %v9625 = vsub.f32 %v6675, %v3761
    %v9626 = vsub.f32 %v6676, %v3762
    %v9627 = vsub.f32 %v6677, %v3763
    %v9628 = vsub.f32 %v6678, %v3764
    %v9629 = vsub.f32 %v6679, %v3765
    %v9630 = vsub.f32 %v6680, %v3766
    %v9631 = vsub.f32 %v6681, %v3767
    %v9632 = vsub.f32 %v6682, %v3768
    %v9633 = vsub.f32 %v6683, %v3769
    %v9634 = vsub.f32 %v6684, %v3770
    %v9635 = vsub.f32 %v6685, %v3771
    %v9636 = vsub.f32 %v6686, %v3772
    %v9637 = vsub.f32 %v6687, %v3773
    %v9638 = vsub.f32 %v6688, %v3774
    %v9639 = vsub.f32 %v6689, %v3775
    %v9640 = vmul.f32 %v9624, %v9624
    %v9641 = vmul.f32 %v9625, %v9625
    %v9642 = vmul.f32 %v9626, %v9626
    %v9643 = vmul.f32 %v9627, %v9627
    %v9644 = vmul.f32 %v9628, %v9628
    %v9645 = vmul.f32 %v9629, %v9629
    %v9646 = vmul.f32 %v9630, %v9630
    %v9647 = vmul.f32 %v9631, %v9631
    %v9648 = vmul.f32 %v9632, %v9632
    %v9649 = vmul.f32 %v9633, %v9633
    %v9650 = vmul.f32 %v9634, %v9634
    %v9651 = vmul.f32 %v9635, %v9635
    %v9652 = vmul.f32 %v9636, %v9636
    %v9653 = vmul.f32 %v9637, %v9637
    %v9654 = vmul.f32 %v9638, %v9638
    %v9655 = vmul.f32 %v9639, %v9639
    %v9656 = vrcp.pop %v9576
    %v9657 = vrcp.pop %v9577
    %v9658 = vrcp.pop %v9578
    %v9659 = vrcp.pop %v9579
    %v9660 = vrcp.pop %v9580
    %v9661 = vrcp.pop %v9581
    %v9662 = vrcp.pop %v9582
    %v9663 = vrcp.pop %v9583
    %v9664 = vrcp.pop %v9584
    %v9665 = vrcp.pop %v9585
    %v9666 = vrcp.pop %v9586
    %v9667 = vrcp.pop %v9587
    %v9668 = vrcp.pop %v9588
    %v9669 = vrcp.pop %v9589
    %v9670 = vrcp.pop %v9590
    %v9671 = vrcp.pop %v9591
    %v9672 = vmul.f32 %v9640, %v9656
    %v9673 = vmul.f32 %v9641, %v9657
    %v9674 = vmul.f32 %v9642, %v9658
    %v9675 = vmul.f32 %v9643, %v9659
    %v9676 = vmul.f32 %v9644, %v9660
    %v9677 = vmul.f32 %v9645, %v9661
    %v9678 = vmul.f32 %v9646, %v9662
    %v9679 = vmul.f32 %v9647, %v9663
    %v9680 = vmul.f32 %v9648, %v9664
    %v9681 = vmul.f32 %v9649, %v9665
    %v9682 = vmul.f32 %v9650, %v9666
    %v9683 = vmul.f32 %v9651, %v9667
    %v9684 = vmul.f32 %v9652, %v9668
    %v9685 = vmul.f32 %v9653, %v9669
    %v9686 = vmul.f32 %v9654, %v9670
    %v9687 = vmul.f32 %v9655, %v9671
    %v9688 = vadd.f32 %v9593, %v9672
    %v9689 = vadd.f32 %v9595, %v9673
    %v9690 = vadd.f32 %v9597, %v9674
    %v9691 = vadd.f32 %v9599, %v9675
    %v9692 = vadd.f32 %v9601, %v9676
    %v9693 = vadd.f32 %v9603, %v9677
    %v9694 = vadd.f32 %v9605, %v9678
    %v9695 = vadd.f32 %v9607, %v9679
    %v9696 = vadd.f32 %v9609, %v9680
    %v9697 = vadd.f32 %v9611, %v9681
    %v9698 = vadd.f32 %v9613, %v9682
    %v9699 = vadd.f32 %v9615, %v9683
    %v9700 = vadd.f32 %v9617, %v9684
    %v9701 = vadd.f32 %v9619, %v9685
    %v9702 = vadd.f32 %v9621, %v9686
    %v9703 = vadd.f32 %v9623, %v9687
    %v9704 = vsel %vm6732, %v9688, 0.0
    %9705 = vadd.xlane.f32.xlu0 %v9704
    %v9706 = vpop.xlane.xlu0 %9705
    %v9707 = vsel %vm6732, %v9689, 0.0
    %9708 = vadd.xlane.f32.xlu0 %v9707
    %v9709 = vpop.xlane.xlu0 %9708
    %v9710 = vsel %vm6732, %v9690, 0.0
    %9711 = vadd.xlane.f32.xlu0 %v9710
    %v9712 = vpop.xlane.xlu0 %9711
    %v9713 = vsel %vm6732, %v9691, 0.0
    %9714 = vadd.xlane.f32.xlu0 %v9713
    %v9715 = vpop.xlane.xlu0 %9714
    %v9716 = vsel %vm6732, %v9692, 0.0
    %9717 = vadd.xlane.f32.xlu0 %v9716
    %v9718 = vpop.xlane.xlu0 %9717
    %v9719 = vsel %vm6732, %v9693, 0.0
    %9720 = vadd.xlane.f32.xlu0 %v9719
    %v9721 = vpop.xlane.xlu0 %9720
    %v9722 = vsel %vm6732, %v9694, 0.0
    %9723 = vadd.xlane.f32.xlu0 %v9722
    %v9724 = vpop.xlane.xlu0 %9723
    %v9725 = vsel %vm6732, %v9695, 0.0
    %9726 = vadd.xlane.f32.xlu0 %v9725
    %v9727 = vpop.xlane.xlu0 %9726
    %v9728 = vsel %vm6732, %v9696, 0.0
    %9729 = vadd.xlane.f32.xlu0 %v9728
    %v9730 = vpop.xlane.xlu0 %9729
    %v9731 = vsel %vm6732, %v9697, 0.0
    %9732 = vadd.xlane.f32.xlu0 %v9731
    %v9733 = vpop.xlane.xlu0 %9732
    %v9734 = vsel %vm6732, %v9698, 0.0
    %9735 = vadd.xlane.f32.xlu0 %v9734
    %v9736 = vpop.xlane.xlu0 %9735
    %v9737 = vsel %vm6732, %v9699, 0.0
    %9738 = vadd.xlane.f32.xlu0 %v9737
    %v9739 = vpop.xlane.xlu0 %9738
    %v9740 = vsel %vm6732, %v9700, 0.0
    %9741 = vadd.xlane.f32.xlu0 %v9740
    %v9742 = vpop.xlane.xlu0 %9741
    %v9743 = vsel %vm6732, %v9701, 0.0
    %9744 = vadd.xlane.f32.xlu0 %v9743
    %v9745 = vpop.xlane.xlu0 %9744
    %v9746 = vsel %vm6732, %v9702, 0.0
    %9747 = vadd.xlane.f32.xlu0 %v9746
    %v9748 = vpop.xlane.xlu0 %9747
    %v9749 = vsel %vm6732, %v9703, 0.0
    %9750 = vadd.xlane.f32.xlu0 %v9749
    %v9751 = vpop.xlane.xlu0 %9750
    %v9752 = vmul.f32 %v9706, -0.5
    %v9753 = vmul.f32 %v9709, -0.5
    %v9754 = vmul.f32 %v9712, -0.5
    %v9755 = vmul.f32 %v9715, -0.5
    %v9756 = vmul.f32 %v9718, -0.5
    %v9757 = vmul.f32 %v9721, -0.5
    %v9758 = vmul.f32 %v9724, -0.5
    %v9759 = vmul.f32 %v9727, -0.5
    %v9760 = vmul.f32 %v9730, -0.5
    %v9761 = vmul.f32 %v9733, -0.5
    %v9762 = vmul.f32 %v9736, -0.5
    %v9763 = vmul.f32 %v9739, -0.5
    %v9764 = vmul.f32 %v9742, -0.5
    %v9765 = vmul.f32 %v9745, -0.5
    %v9766 = vmul.f32 %v9748, -0.5
    %v9767 = vmul.f32 %v9751, -0.5
    %v9768 = vsub.f32 %v9560, %v9752
    %v9769 = vsub.f32 %v9561, %v9753
    %v9770 = vsub.f32 %v9562, %v9754
    %v9771 = vsub.f32 %v9563, %v9755
    %v9772 = vsub.f32 %v9564, %v9756
    %v9773 = vsub.f32 %v9565, %v9757
    %v9774 = vsub.f32 %v9566, %v9758
    %v9775 = vsub.f32 %v9567, %v9759
    %v9776 = vsub.f32 %v9568, %v9760
    %v9777 = vsub.f32 %v9569, %v9761
    %v9778 = vsub.f32 %v9570, %v9762
    %v9779 = vsub.f32 %v9571, %v9763
    %v9780 = vsub.f32 %v9572, %v9764
    %v9781 = vsub.f32 %v9573, %v9765
    %v9782 = vsub.f32 %v9574, %v9766
    %v9783 = vsub.f32 %v9575, %v9767
    %v9784 = vmul.f32 %v2949, %v2997
    %v9785 = vmul.f32 %v2950, %v2998
    %v9786 = vmul.f32 %v2951, %v2999
    %v9787 = vmul.f32 %v2952, %v3000
    %v9788 = vmul.f32 %v2953, %v3001
    %v9789 = vmul.f32 %v2954, %v3002
    %v9790 = vmul.f32 %v2955, %v3003
    %v9791 = vmul.f32 %v2956, %v3004
    %v9792 = vmul.f32 %v2957, %v3005
    %v9793 = vmul.f32 %v2958, %v3006
    %v9794 = vmul.f32 %v2959, %v3007
    %v9795 = vmul.f32 %v2960, %v3008
    %v9796 = vmul.f32 %v2961, %v3009
    %v9797 = vmul.f32 %v2962, %v3010
    %v9798 = vmul.f32 %v2963, %v3011
    %v9799 = vmul.f32 %v2964, %v3012
    %v9800 = vsel %vm2788, %v9784, 0.0
    %9801 = vadd.xlane.f32.xlu0 %v9800
    %v9802 = vpop.xlane.xlu0 %9801
    %v9803 = vsel %vm2788, %v9785, 0.0
    %9804 = vadd.xlane.f32.xlu0 %v9803
    %v9805 = vpop.xlane.xlu0 %9804
    %v9806 = vsel %vm2788, %v9786, 0.0
    %9807 = vadd.xlane.f32.xlu0 %v9806
    %v9808 = vpop.xlane.xlu0 %9807
    %v9809 = vsel %vm2788, %v9787, 0.0
    %9810 = vadd.xlane.f32.xlu0 %v9809
    %v9811 = vpop.xlane.xlu0 %9810
    %v9812 = vsel %vm2788, %v9788, 0.0
    %9813 = vadd.xlane.f32.xlu0 %v9812
    %v9814 = vpop.xlane.xlu0 %9813
    %v9815 = vsel %vm2788, %v9789, 0.0
    %9816 = vadd.xlane.f32.xlu0 %v9815
    %v9817 = vpop.xlane.xlu0 %9816
    %v9818 = vsel %vm2788, %v9790, 0.0
    %9819 = vadd.xlane.f32.xlu0 %v9818
    %v9820 = vpop.xlane.xlu0 %9819
    %v9821 = vsel %vm2788, %v9791, 0.0
    %9822 = vadd.xlane.f32.xlu0 %v9821
    %v9823 = vpop.xlane.xlu0 %9822
    %v9824 = vsel %vm2788, %v9792, 0.0
    %9825 = vadd.xlane.f32.xlu0 %v9824
    %v9826 = vpop.xlane.xlu0 %9825
    %v9827 = vsel %vm2788, %v9793, 0.0
    %9828 = vadd.xlane.f32.xlu0 %v9827
    %v9829 = vpop.xlane.xlu0 %9828
    %v9830 = vsel %vm2788, %v9794, 0.0
    %9831 = vadd.xlane.f32.xlu0 %v9830
    %v9832 = vpop.xlane.xlu0 %9831
    %v9833 = vsel %vm2788, %v9795, 0.0
    %9834 = vadd.xlane.f32.xlu0 %v9833
    %v9835 = vpop.xlane.xlu0 %9834
    %v9836 = vsel %vm2788, %v9796, 0.0
    %9837 = vadd.xlane.f32.xlu0 %v9836
    %v9838 = vpop.xlane.xlu0 %9837
    %v9839 = vsel %vm2788, %v9797, 0.0
    %9840 = vadd.xlane.f32.xlu0 %v9839
    %v9841 = vpop.xlane.xlu0 %9840
    %v9842 = vsel %vm2788, %v9798, 0.0
    %9843 = vadd.xlane.f32.xlu0 %v9842
    %v9844 = vpop.xlane.xlu0 %9843
    %v9845 = vsel %vm2788, %v9799, 0.0
    %9846 = vadd.xlane.f32.xlu0 %v9845
    %v9847 = vpop.xlane.xlu0 %9846
    %v9848 = vsub.f32 0.0, %v9802
    %v9849 = vsub.f32 0.0, %v9805
    %v9850 = vsub.f32 0.0, %v9808
    %v9851 = vsub.f32 0.0, %v9811
    %v9852 = vsub.f32 0.0, %v9814
    %v9853 = vsub.f32 0.0, %v9817
    %v9854 = vsub.f32 0.0, %v9820
    %v9855 = vsub.f32 0.0, %v9823
    %v9856 = vsub.f32 0.0, %v9826
    %v9857 = vsub.f32 0.0, %v9829
    %v9858 = vsub.f32 0.0, %v9832
    %v9859 = vsub.f32 0.0, %v9835
    %v9860 = vsub.f32 0.0, %v9838
    %v9861 = vsub.f32 0.0, %v9841
    %v9862 = vsub.f32 0.0, %v9844
    %v9863 = vsub.f32 0.0, %v9847
    %s9864 = smul.u32 0, 128
    %v9865 = vlaneseq
    %v9866 = vshrl.u32 %v9865, 7
    %v9867 = vadd.s32 %v9866, 8
    %v9868 = vadd.s32 %v9866, 16
    %v9869 = vadd.s32 %v9866, 24
    %v9870 = vadd.s32 %v9866, 32
    %v9871 = vadd.s32 %v9866, 40
    %v9872 = vadd.s32 %v9866, 48
    %v9873 = vadd.s32 %v9866, 56
    %v9874 = vadd.s32 %v9866, 64
    %v9875 = vadd.s32 %v9866, 72
    %v9876 = vadd.s32 %v9866, 80
    %v9877 = vadd.s32 %v9866, 88
    %v9878 = vadd.s32 %v9866, 96
    %v9879 = vadd.s32 %v9866, 104
    %v9880 = vadd.s32 %v9866, 112
    %v9881 = vadd.s32 %v9866, 120
    %v9882 = vstv %s9864
    %v9883 = vadd.s32 %v9882, %v9866
    %v9884 = vadd.s32 %v9882, %v9867
    %v9885 = vadd.s32 %v9882, %v9868
    %v9886 = vadd.s32 %v9882, %v9869
    %v9887 = vadd.s32 %v9882, %v9870
    %v9888 = vadd.s32 %v9882, %v9871
    %v9889 = vadd.s32 %v9882, %v9872
    %v9890 = vadd.s32 %v9882, %v9873
    %v9891 = vadd.s32 %v9882, %v9874
    %v9892 = vadd.s32 %v9882, %v9875
    %v9893 = vadd.s32 %v9882, %v9876
    %v9894 = vadd.s32 %v9882, %v9877
    %v9895 = vadd.s32 %v9882, %v9878
    %v9896 = vadd.s32 %v9882, %v9879
    %v9897 = vadd.s32 %v9882, %v9880
    %v9898 = vadd.s32 %v9882, %v9881
    %vm9899 = vcmp.lt.s32.totalorder %v9883, 16
    %vm9900 = vcmp.lt.s32.totalorder %v9884, 16
    %vm9901 = vcmp.lt.s32.totalorder %v9885, 16
    %vm9902 = vcmp.lt.s32.totalorder %v9886, 16
    %vm9903 = vcmp.lt.s32.totalorder %v9887, 16
    %vm9904 = vcmp.lt.s32.totalorder %v9888, 16
    %vm9905 = vcmp.lt.s32.totalorder %v9889, 16
    %vm9906 = vcmp.lt.s32.totalorder %v9890, 16
    %vm9907 = vcmp.lt.s32.totalorder %v9891, 16
    %vm9908 = vcmp.lt.s32.totalorder %v9892, 16
    %vm9909 = vcmp.lt.s32.totalorder %v9893, 16
    %vm9910 = vcmp.lt.s32.totalorder %v9894, 16
    %vm9911 = vcmp.lt.s32.totalorder %v9895, 16
    %vm9912 = vcmp.lt.s32.totalorder %v9896, 16
    %vm9913 = vcmp.lt.s32.totalorder %v9897, 16
    %vm9914 = vcmp.lt.s32.totalorder %v9898, 16
    %v9915 = vsel %vm9899, %v9368, 0.0
    %v9916 = vsel %vm9900, %v9369, 0.0
    %v9917 = vsel %vm9901, %v9370, 0.0
    %v9918 = vsel %vm9902, %v9371, 0.0
    %v9919 = vsel %vm9903, %v9372, 0.0
    %v9920 = vsel %vm9904, %v9373, 0.0
    %v9921 = vsel %vm9905, %v9374, 0.0
    %v9922 = vsel %vm9906, %v9375, 0.0
    %v9923 = vsel %vm9907, %v9376, 0.0
    %v9924 = vsel %vm9908, %v9377, 0.0
    %v9925 = vsel %vm9909, %v9378, 0.0
    %v9926 = vsel %vm9910, %v9379, 0.0
    %v9927 = vsel %vm9911, %v9380, 0.0
    %v9928 = vsel %vm9912, %v9381, 0.0
    %v9929 = vsel %vm9913, %v9382, 0.0
    %v9930 = vsel %vm9914, %v9383, 0.0
    %vm9931 = vcmask 7168
    %v9932 = vsel %vm9931, %v9915, 0.0
    %v9933 = vsel %vm9931, %v9916, 0.0
    %v9934 = vadd.f32 %v9932, %v9933
    %v9935 = vsel %vm9931, %v9917, 0.0
    %v9936 = vadd.f32 %v9934, %v9935
    %v9937 = vsel %vm9931, %v9918, 0.0
    %v9938 = vadd.f32 %v9936, %v9937
    %v9939 = vsel %vm9931, %v9919, 0.0
    %v9940 = vadd.f32 %v9938, %v9939
    %v9941 = vsel %vm9931, %v9920, 0.0
    %v9942 = vadd.f32 %v9940, %v9941
    %v9943 = vsel %vm9931, %v9921, 0.0
    %v9944 = vadd.f32 %v9942, %v9943
    %v9945 = vsel %vm9931, %v9922, 0.0
    %v9946 = vadd.f32 %v9944, %v9945
    %v9947 = vsel %vm9931, %v9923, 0.0
    %v9948 = vadd.f32 %v9946, %v9947
    %v9949 = vsel %vm9931, %v9924, 0.0
    %v9950 = vadd.f32 %v9948, %v9949
    %v9951 = vsel %vm9931, %v9925, 0.0
    %v9952 = vadd.f32 %v9950, %v9951
    %v9953 = vsel %vm9931, %v9926, 0.0
    %v9954 = vadd.f32 %v9952, %v9953
    %v9955 = vsel %vm9931, %v9927, 0.0
    %v9956 = vadd.f32 %v9954, %v9955
    %v9957 = vsel %vm9931, %v9928, 0.0
    %v9958 = vadd.f32 %v9956, %v9957
    %v9959 = vsel %vm9931, %v9929, 0.0
    %v9960 = vadd.f32 %v9958, %v9959
    %v9961 = vsel %vm9931, %v9930, 0.0
    %v9962 = vadd.f32 %v9960, %v9961
    %9963 = vadd.xlane.f32.xlu0 %v9962
    %v9964 = vpop.xlane.xlu0 %9963
    %v9965 = vrot.slane %v9964, 4
    %v9966 = vadd.f32 %v9964, %v9965
    %v9967 = vrot.slane %v9966, 2
    %v9968 = vadd.f32 %v9966, %v9967
    %v9969 = vrot.slane %v9968, 1
    %v9970 = vadd.f32 %v9968, %v9969
    %s9971 = vtos %v9970
    %v9972 = vsel %vm9899, %v9768, 0.0
    %v9973 = vsel %vm9900, %v9769, 0.0
    %v9974 = vsel %vm9901, %v9770, 0.0
    %v9975 = vsel %vm9902, %v9771, 0.0
    %v9976 = vsel %vm9903, %v9772, 0.0
    %v9977 = vsel %vm9904, %v9773, 0.0
    %v9978 = vsel %vm9905, %v9774, 0.0
    %v9979 = vsel %vm9906, %v9775, 0.0
    %v9980 = vsel %vm9907, %v9776, 0.0
    %v9981 = vsel %vm9908, %v9777, 0.0
    %v9982 = vsel %vm9909, %v9778, 0.0
    %v9983 = vsel %vm9910, %v9779, 0.0
    %v9984 = vsel %vm9911, %v9780, 0.0
    %v9985 = vsel %vm9912, %v9781, 0.0
    %v9986 = vsel %vm9913, %v9782, 0.0
    %v9987 = vsel %vm9914, %v9783, 0.0
    %v9988 = vsel %vm9931, %v9972, 0.0
    %v9989 = vsel %vm9931, %v9973, 0.0
    %v9990 = vadd.f32 %v9988, %v9989
    %v9991 = vsel %vm9931, %v9974, 0.0
    %v9992 = vadd.f32 %v9990, %v9991
    %v9993 = vsel %vm9931, %v9975, 0.0
    %v9994 = vadd.f32 %v9992, %v9993
    %v9995 = vsel %vm9931, %v9976, 0.0
    %v9996 = vadd.f32 %v9994, %v9995
    %v9997 = vsel %vm9931, %v9977, 0.0
    %v9998 = vadd.f32 %v9996, %v9997
    %v9999 = vsel %vm9931, %v9978, 0.0
    %v10000 = vadd.f32 %v9998, %v9999
    %v10001 = vsel %vm9931, %v9979, 0.0
    %v10002 = vadd.f32 %v10000, %v10001
    %v10003 = vsel %vm9931, %v9980, 0.0
    %v10004 = vadd.f32 %v10002, %v10003
    %v10005 = vsel %vm9931, %v9981, 0.0
    %v10006 = vadd.f32 %v10004, %v10005
    %v10007 = vsel %vm9931, %v9982, 0.0
    %v10008 = vadd.f32 %v10006, %v10007
    %v10009 = vsel %vm9931, %v9983, 0.0
    %v10010 = vadd.f32 %v10008, %v10009
    %v10011 = vsel %vm9931, %v9984, 0.0
    %v10012 = vadd.f32 %v10010, %v10011
    %v10013 = vsel %vm9931, %v9985, 0.0
    %v10014 = vadd.f32 %v10012, %v10013
    %v10015 = vsel %vm9931, %v9986, 0.0
    %v10016 = vadd.f32 %v10014, %v10015
    %v10017 = vsel %vm9931, %v9987, 0.0
    %v10018 = vadd.f32 %v10016, %v10017
    %10019 = vadd.xlane.f32.xlu0 %v10018
    %v10020 = vpop.xlane.xlu0 %10019
    %v10021 = vrot.slane %v10020, 4
    %v10022 = vadd.f32 %v10020, %v10021
    %v10023 = vrot.slane %v10022, 2
    %v10024 = vadd.f32 %v10022, %v10023
    %v10025 = vrot.slane %v10024, 1
    %v10026 = vadd.f32 %v10024, %v10025
    %s10027 = vtos %v10026
    %v10028 = vsel %vm9899, %v9848, 0.0
    %v10029 = vsel %vm9900, %v9849, 0.0
    %v10030 = vsel %vm9901, %v9850, 0.0
    %v10031 = vsel %vm9902, %v9851, 0.0
    %v10032 = vsel %vm9903, %v9852, 0.0
    %v10033 = vsel %vm9904, %v9853, 0.0
    %v10034 = vsel %vm9905, %v9854, 0.0
    %v10035 = vsel %vm9906, %v9855, 0.0
    %v10036 = vsel %vm9907, %v9856, 0.0
    %v10037 = vsel %vm9908, %v9857, 0.0
    %v10038 = vsel %vm9909, %v9858, 0.0
    %v10039 = vsel %vm9910, %v9859, 0.0
    %v10040 = vsel %vm9911, %v9860, 0.0
    %v10041 = vsel %vm9912, %v9861, 0.0
    %v10042 = vsel %vm9913, %v9862, 0.0
    %v10043 = vsel %vm9914, %v9863, 0.0
    %v10044 = vsel %vm9931, %v10028, 0.0
    %v10045 = vsel %vm9931, %v10029, 0.0
    %v10046 = vadd.f32 %v10044, %v10045
    %v10047 = vsel %vm9931, %v10030, 0.0
    %v10048 = vadd.f32 %v10046, %v10047
    %v10049 = vsel %vm9931, %v10031, 0.0
    %v10050 = vadd.f32 %v10048, %v10049
    %v10051 = vsel %vm9931, %v10032, 0.0
    %v10052 = vadd.f32 %v10050, %v10051
    %v10053 = vsel %vm9931, %v10033, 0.0
    %v10054 = vadd.f32 %v10052, %v10053
    %v10055 = vsel %vm9931, %v10034, 0.0
    %v10056 = vadd.f32 %v10054, %v10055
    %v10057 = vsel %vm9931, %v10035, 0.0
    %v10058 = vadd.f32 %v10056, %v10057
    %v10059 = vsel %vm9931, %v10036, 0.0
    %v10060 = vadd.f32 %v10058, %v10059
    %v10061 = vsel %vm9931, %v10037, 0.0
    %v10062 = vadd.f32 %v10060, %v10061
    %v10063 = vsel %vm9931, %v10038, 0.0
    %v10064 = vadd.f32 %v10062, %v10063
    %v10065 = vsel %vm9931, %v10039, 0.0
    %v10066 = vadd.f32 %v10064, %v10065
    %v10067 = vsel %vm9931, %v10040, 0.0
    %v10068 = vadd.f32 %v10066, %v10067
    %v10069 = vsel %vm9931, %v10041, 0.0
    %v10070 = vadd.f32 %v10068, %v10069
    %v10071 = vsel %vm9931, %v10042, 0.0
    %v10072 = vadd.f32 %v10070, %v10071
    %v10073 = vsel %vm9931, %v10043, 0.0
    %v10074 = vadd.f32 %v10072, %v10073
    %10075 = vadd.xlane.f32.xlu0 %v10074
    %v10076 = vpop.xlane.xlu0 %10075
    %v10077 = vrot.slane %v10076, 4
    %v10078 = vadd.f32 %v10076, %v10077
    %v10079 = vrot.slane %v10078, 2
    %v10080 = vadd.f32 %v10078, %v10079
    %v10081 = vrot.slane %v10080, 1
    %v10082 = vadd.f32 %v10080, %v10081
    %s10083 = vtos %v10082
    %v10084 = vlaneseq
    %v10085 = vand.u32 %v10084, 127
    %vm10086 = vcmp.eq.s32.totalorder %v10085, 0
    %v10087 = vstv %s9971
    %v10088 = vsel %vm10086, %v10087, 0.0
    %vm10089 = vcmp.eq.s32.totalorder %v10085, 1
    %v10090 = vstv %s10027
    %v10091 = vsel %vm10089, %v10090, 0.0
    %v10092 = vadd.f32 %v10088, %v10091
    %vm10093 = vcmp.eq.s32.totalorder %v10085, 2
    %v10094 = vstv %s10083
    %v10095 = vsel %vm10093, %v10094, 0.0
    %v10096 = vadd.f32 %v10092, %v10095
    %10097 = vst [vmem:[#allocation14] sm:$0xff] %v10096
    %vm10098 = vcmp.eq.f32.partialorder %v2726, %v2791
    %vm10099 = vcmp.eq.f32.partialorder %v2729, %v2794
    %vm10100 = vcmp.eq.f32.partialorder %v2734, %v2797
    %vm10101 = vcmp.eq.f32.partialorder %v2737, %v2800
    %vm10102 = vcmp.eq.f32.partialorder %v2742, %v2803
    %vm10103 = vcmp.eq.f32.partialorder %v2745, %v2806
    %vm10104 = vcmp.eq.f32.partialorder %v2750, %v2809
    %vm10105 = vcmp.eq.f32.partialorder %v2753, %v2812
    %vm10106 = vcmp.eq.f32.partialorder %v2758, %v2815
    %vm10107 = vcmp.eq.f32.partialorder %v2761, %v2818
    %vm10108 = vcmp.eq.f32.partialorder %v2766, %v2821
    %vm10109 = vcmp.eq.f32.partialorder %v2769, %v2824
    %vm10110 = vcmp.eq.f32.partialorder %v2774, %v2827
    %vm10111 = vcmp.eq.f32.partialorder %v2777, %v2830
    %vm10112 = vcmp.eq.f32.partialorder %v2782, %v2833
    %vm10113 = vcmp.eq.f32.partialorder %v2785, %v2836
    %v10114 = vsel %vm10098, %v10085, 10
    %v10115 = vsel %vm10099, %v10085, 10
    %v10116 = vsel %vm10100, %v10085, 10
    %v10117 = vsel %vm10101, %v10085, 10
    %v10118 = vsel %vm10102, %v10085, 10
    %v10119 = vsel %vm10103, %v10085, 10
    %v10120 = vsel %vm10104, %v10085, 10
    %v10121 = vsel %vm10105, %v10085, 10
    %v10122 = vsel %vm10106, %v10085, 10
    %v10123 = vsel %vm10107, %v10085, 10
    %v10124 = vsel %vm10108, %v10085, 10
    %v10125 = vsel %vm10109, %v10085, 10
    %v10126 = vsel %vm10110, %v10085, 10
    %v10127 = vsel %vm10111, %v10085, 10
    %v10128 = vsel %vm10112, %v10085, 10
    %v10129 = vsel %vm10113, %v10085, 10
    %v10130 = vsel %vm2788, %v10114, 2147483647
    %v10131 = vand.u32 %v10130, 65535
    %v10132 = vshra.s32 %v10130, 16
    %v10133 = vcvt.s32.f32 %v10131
    %v10134 = vcvt.s32.f32 %v10132
    %10135 = vmin.xlane.f32.xlu0 %v10134
    %v10136 = vpop.xlane.xlu0 %10135
    %vm10137 = vcmp.eq.f32.partialorder %v10134, %v10136
    %v10138 = vsel %vm10137, %v10133, inf
    %10139 = vmin.xlane.f32.xlu0 %v10138
    %v10140 = vpop.xlane.xlu0 %10139
    %v10141 = vcvt.f32.s32 %v10140
    %v10142 = vcvt.f32.s32 %v10136
    %v10143 = vshll.u32 %v10142, 16
    %v10144 = vadd.s32 %v10143, %v10141
    %v10145 = vsel %vm2788, %v10115, 2147483647
    %v10146 = vand.u32 %v10145, 65535
    %v10147 = vshra.s32 %v10145, 16
    %v10148 = vcvt.s32.f32 %v10146
    %v10149 = vcvt.s32.f32 %v10147
    %10150 = vmin.xlane.f32.xlu0 %v10149
    %v10151 = vpop.xlane.xlu0 %10150
    %vm10152 = vcmp.eq.f32.partialorder %v10149, %v10151
    %v10153 = vsel %vm10152, %v10148, inf
    %10154 = vmin.xlane.f32.xlu0 %v10153
    %v10155 = vpop.xlane.xlu0 %10154
    %v10156 = vcvt.f32.s32 %v10155
    %v10157 = vcvt.f32.s32 %v10151
    %v10158 = vshll.u32 %v10157, 16
    %v10159 = vadd.s32 %v10158, %v10156
    %v10160 = vsel %vm2788, %v10116, 2147483647
    %v10161 = vand.u32 %v10160, 65535
    %v10162 = vshra.s32 %v10160, 16
    %v10163 = vcvt.s32.f32 %v10161
    %v10164 = vcvt.s32.f32 %v10162
    %10165 = vmin.xlane.f32.xlu0 %v10164
    %v10166 = vpop.xlane.xlu0 %10165
    %vm10167 = vcmp.eq.f32.partialorder %v10164, %v10166
    %v10168 = vsel %vm10167, %v10163, inf
    %10169 = vmin.xlane.f32.xlu0 %v10168
    %v10170 = vpop.xlane.xlu0 %10169
    %v10171 = vcvt.f32.s32 %v10170
    %v10172 = vcvt.f32.s32 %v10166
    %v10173 = vshll.u32 %v10172, 16
    %v10174 = vadd.s32 %v10173, %v10171
    %v10175 = vsel %vm2788, %v10117, 2147483647
    %v10176 = vand.u32 %v10175, 65535
    %v10177 = vshra.s32 %v10175, 16
    %v10178 = vcvt.s32.f32 %v10176
    %v10179 = vcvt.s32.f32 %v10177
    %10180 = vmin.xlane.f32.xlu0 %v10179
    %v10181 = vpop.xlane.xlu0 %10180
    %vm10182 = vcmp.eq.f32.partialorder %v10179, %v10181
    %v10183 = vsel %vm10182, %v10178, inf
    %10184 = vmin.xlane.f32.xlu0 %v10183
    %v10185 = vpop.xlane.xlu0 %10184
    %v10186 = vcvt.f32.s32 %v10185
    %v10187 = vcvt.f32.s32 %v10181
    %v10188 = vshll.u32 %v10187, 16
    %v10189 = vadd.s32 %v10188, %v10186
    %v10190 = vsel %vm2788, %v10118, 2147483647
    %v10191 = vand.u32 %v10190, 65535
    %v10192 = vshra.s32 %v10190, 16
    %v10193 = vcvt.s32.f32 %v10191
    %v10194 = vcvt.s32.f32 %v10192
    %10195 = vmin.xlane.f32.xlu0 %v10194
    %v10196 = vpop.xlane.xlu0 %10195
    %vm10197 = vcmp.eq.f32.partialorder %v10194, %v10196
    %v10198 = vsel %vm10197, %v10193, inf
    %10199 = vmin.xlane.f32.xlu0 %v10198
    %v10200 = vpop.xlane.xlu0 %10199
    %v10201 = vcvt.f32.s32 %v10200
    %v10202 = vcvt.f32.s32 %v10196
    %v10203 = vshll.u32 %v10202, 16
    %v10204 = vadd.s32 %v10203, %v10201
    %v10205 = vsel %vm2788, %v10119, 2147483647
    %v10206 = vand.u32 %v10205, 65535
    %v10207 = vshra.s32 %v10205, 16
    %v10208 = vcvt.s32.f32 %v10206
    %v10209 = vcvt.s32.f32 %v10207
    %10210 = vmin.xlane.f32.xlu0 %v10209
    %v10211 = vpop.xlane.xlu0 %10210
    %vm10212 = vcmp.eq.f32.partialorder %v10209, %v10211
    %v10213 = vsel %vm10212, %v10208, inf
    %10214 = vmin.xlane.f32.xlu0 %v10213
    %v10215 = vpop.xlane.xlu0 %10214
    %v10216 = vcvt.f32.s32 %v10215
    %v10217 = vcvt.f32.s32 %v10211
    %v10218 = vshll.u32 %v10217, 16
    %v10219 = vadd.s32 %v10218, %v10216
    %v10220 = vsel %vm2788, %v10120, 2147483647
    %v10221 = vand.u32 %v10220, 65535
    %v10222 = vshra.s32 %v10220, 16
    %v10223 = vcvt.s32.f32 %v10221
    %v10224 = vcvt.s32.f32 %v10222
    %10225 = vmin.xlane.f32.xlu0 %v10224
    %v10226 = vpop.xlane.xlu0 %10225
    %vm10227 = vcmp.eq.f32.partialorder %v10224, %v10226
    %v10228 = vsel %vm10227, %v10223, inf
    %10229 = vmin.xlane.f32.xlu0 %v10228
    %v10230 = vpop.xlane.xlu0 %10229
    %v10231 = vcvt.f32.s32 %v10230
    %v10232 = vcvt.f32.s32 %v10226
    %v10233 = vshll.u32 %v10232, 16
    %v10234 = vadd.s32 %v10233, %v10231
    %v10235 = vsel %vm2788, %v10121, 2147483647
    %v10236 = vand.u32 %v10235, 65535
    %v10237 = vshra.s32 %v10235, 16
    %v10238 = vcvt.s32.f32 %v10236
    %v10239 = vcvt.s32.f32 %v10237
    %10240 = vmin.xlane.f32.xlu0 %v10239
    %v10241 = vpop.xlane.xlu0 %10240
    %vm10242 = vcmp.eq.f32.partialorder %v10239, %v10241
    %v10243 = vsel %vm10242, %v10238, inf
    %10244 = vmin.xlane.f32.xlu0 %v10243
    %v10245 = vpop.xlane.xlu0 %10244
    %v10246 = vcvt.f32.s32 %v10245
    %v10247 = vcvt.f32.s32 %v10241
    %v10248 = vshll.u32 %v10247, 16
    %v10249 = vadd.s32 %v10248, %v10246
    %v10250 = vsel %vm2788, %v10122, 2147483647
    %v10251 = vand.u32 %v10250, 65535
    %v10252 = vshra.s32 %v10250, 16
    %v10253 = vcvt.s32.f32 %v10251
    %v10254 = vcvt.s32.f32 %v10252
    %10255 = vmin.xlane.f32.xlu0 %v10254
    %v10256 = vpop.xlane.xlu0 %10255
    %vm10257 = vcmp.eq.f32.partialorder %v10254, %v10256
    %v10258 = vsel %vm10257, %v10253, inf
    %10259 = vmin.xlane.f32.xlu0 %v10258
    %v10260 = vpop.xlane.xlu0 %10259
    %v10261 = vcvt.f32.s32 %v10260
    %v10262 = vcvt.f32.s32 %v10256
    %v10263 = vshll.u32 %v10262, 16
    %v10264 = vadd.s32 %v10263, %v10261
    %v10265 = vsel %vm2788, %v10123, 2147483647
    %v10266 = vand.u32 %v10265, 65535
    %v10267 = vshra.s32 %v10265, 16
    %v10268 = vcvt.s32.f32 %v10266
    %v10269 = vcvt.s32.f32 %v10267
    %10270 = vmin.xlane.f32.xlu0 %v10269
    %v10271 = vpop.xlane.xlu0 %10270
    %vm10272 = vcmp.eq.f32.partialorder %v10269, %v10271
    %v10273 = vsel %vm10272, %v10268, inf
    %10274 = vmin.xlane.f32.xlu0 %v10273
    %v10275 = vpop.xlane.xlu0 %10274
    %v10276 = vcvt.f32.s32 %v10275
    %v10277 = vcvt.f32.s32 %v10271
    %v10278 = vshll.u32 %v10277, 16
    %v10279 = vadd.s32 %v10278, %v10276
    %v10280 = vsel %vm2788, %v10124, 2147483647
    %v10281 = vand.u32 %v10280, 65535
    %v10282 = vshra.s32 %v10280, 16
    %v10283 = vcvt.s32.f32 %v10281
    %v10284 = vcvt.s32.f32 %v10282
    %10285 = vmin.xlane.f32.xlu0 %v10284
    %v10286 = vpop.xlane.xlu0 %10285
    %vm10287 = vcmp.eq.f32.partialorder %v10284, %v10286
    %v10288 = vsel %vm10287, %v10283, inf
    %10289 = vmin.xlane.f32.xlu0 %v10288
    %v10290 = vpop.xlane.xlu0 %10289
    %v10291 = vcvt.f32.s32 %v10290
    %v10292 = vcvt.f32.s32 %v10286
    %v10293 = vshll.u32 %v10292, 16
    %v10294 = vadd.s32 %v10293, %v10291
    %v10295 = vsel %vm2788, %v10125, 2147483647
    %v10296 = vand.u32 %v10295, 65535
    %v10297 = vshra.s32 %v10295, 16
    %v10298 = vcvt.s32.f32 %v10296
    %v10299 = vcvt.s32.f32 %v10297
    %10300 = vmin.xlane.f32.xlu0 %v10299
    %v10301 = vpop.xlane.xlu0 %10300
    %vm10302 = vcmp.eq.f32.partialorder %v10299, %v10301
    %v10303 = vsel %vm10302, %v10298, inf
    %10304 = vmin.xlane.f32.xlu0 %v10303
    %v10305 = vpop.xlane.xlu0 %10304
    %v10306 = vcvt.f32.s32 %v10305
    %v10307 = vcvt.f32.s32 %v10301
    %v10308 = vshll.u32 %v10307, 16
    %v10309 = vadd.s32 %v10308, %v10306
    %v10310 = vsel %vm2788, %v10126, 2147483647
    %v10311 = vand.u32 %v10310, 65535
    %v10312 = vshra.s32 %v10310, 16
    %v10313 = vcvt.s32.f32 %v10311
    %v10314 = vcvt.s32.f32 %v10312
    %10315 = vmin.xlane.f32.xlu0 %v10314
    %v10316 = vpop.xlane.xlu0 %10315
    %vm10317 = vcmp.eq.f32.partialorder %v10314, %v10316
    %v10318 = vsel %vm10317, %v10313, inf
    %10319 = vmin.xlane.f32.xlu0 %v10318
    %v10320 = vpop.xlane.xlu0 %10319
    %v10321 = vcvt.f32.s32 %v10320
    %v10322 = vcvt.f32.s32 %v10316
    %v10323 = vshll.u32 %v10322, 16
    %v10324 = vadd.s32 %v10323, %v10321
    %v10325 = vsel %vm2788, %v10127, 2147483647
    %v10326 = vand.u32 %v10325, 65535
    %v10327 = vshra.s32 %v10325, 16
    %v10328 = vcvt.s32.f32 %v10326
    %v10329 = vcvt.s32.f32 %v10327
    %10330 = vmin.xlane.f32.xlu0 %v10329
    %v10331 = vpop.xlane.xlu0 %10330
    %vm10332 = vcmp.eq.f32.partialorder %v10329, %v10331
    %v10333 = vsel %vm10332, %v10328, inf
    %10334 = vmin.xlane.f32.xlu0 %v10333
    %v10335 = vpop.xlane.xlu0 %10334
    %v10336 = vcvt.f32.s32 %v10335
    %v10337 = vcvt.f32.s32 %v10331
    %v10338 = vshll.u32 %v10337, 16
    %v10339 = vadd.s32 %v10338, %v10336
    %v10340 = vsel %vm2788, %v10128, 2147483647
    %v10341 = vand.u32 %v10340, 65535
    %v10342 = vshra.s32 %v10340, 16
    %v10343 = vcvt.s32.f32 %v10341
    %v10344 = vcvt.s32.f32 %v10342
    %10345 = vmin.xlane.f32.xlu0 %v10344
    %v10346 = vpop.xlane.xlu0 %10345
    %vm10347 = vcmp.eq.f32.partialorder %v10344, %v10346
    %v10348 = vsel %vm10347, %v10343, inf
    %10349 = vmin.xlane.f32.xlu0 %v10348
    %v10350 = vpop.xlane.xlu0 %10349
    %v10351 = vcvt.f32.s32 %v10350
    %v10352 = vcvt.f32.s32 %v10346
    %v10353 = vshll.u32 %v10352, 16
    %v10354 = vadd.s32 %v10353, %v10351
    %v10355 = vsel %vm2788, %v10129, 2147483647
    %v10356 = vand.u32 %v10355, 65535
    %v10357 = vshra.s32 %v10355, 16
    %v10358 = vcvt.s32.f32 %v10356
    %v10359 = vcvt.s32.f32 %v10357
    %10360 = vmin.xlane.f32.xlu0 %v10359
    %v10361 = vpop.xlane.xlu0 %10360
    %vm10362 = vcmp.eq.f32.partialorder %v10359, %v10361
    %v10363 = vsel %vm10362, %v10358, inf
    %10364 = vmin.xlane.f32.xlu0 %v10363
    %v10365 = vpop.xlane.xlu0 %10364
    %v10366 = vcvt.f32.s32 %v10365
    %v10367 = vcvt.f32.s32 %v10361
    %v10368 = vshll.u32 %v10367, 16
    %v10369 = vadd.s32 %v10368, %v10366
    %10370 = vst.msk [vmem:[%s10] sm:$0xff] %vm9931, %v10144
    %10371 = vst.msk [vmem:[%s10 + $0x8] sm:$0xff] %vm9931, %v10159
    %10372 = vst.msk [vmem:[%s10 + $0x10] sm:$0xff] %vm9931, %v10174
    %10373 = vst.msk [vmem:[%s10 + $0x18] sm:$0xff] %vm9931, %v10189
    %10374 = vst.msk [vmem:[%s10 + $0x20] sm:$0xff] %vm9931, %v10204
    %10375 = vst.msk [vmem:[%s10 + $0x28] sm:$0xff] %vm9931, %v10219
    %10376 = vst.msk [vmem:[%s10 + $0x30] sm:$0xff] %vm9931, %v10234
    %10377 = vst.msk [vmem:[%s10 + $0x38] sm:$0xff] %vm9931, %v10249
    %10378 = vst.msk [vmem:[%s10 + $0x40] sm:$0xff] %vm9931, %v10264
    %10379 = vst.msk [vmem:[%s10 + $0x48] sm:$0xff] %vm9931, %v10279
    %10380 = vst.msk [vmem:[%s10 + $0x50] sm:$0xff] %vm9931, %v10294
    %10381 = vst.msk [vmem:[%s10 + $0x58] sm:$0xff] %vm9931, %v10309
    %10382 = vst.msk [vmem:[%s10 + $0x60] sm:$0xff] %vm9931, %v10324
    %10383 = vst.msk [vmem:[%s10 + $0x68] sm:$0xff] %vm9931, %v10339
    %10384 = vst.msk [vmem:[%s10 + $0x70] sm:$0xff] %vm9931, %v10354
    %10385 = vst.msk [vmem:[%s10 + $0x78] sm:$0xff] %vm9931, %v10369
    // Predicated region
    $region66: #{tpu_custom_call.1} parent=1 // pred_check
      _
    $region67: #{tpu_custom_call.1} parent=1 // pred_check_branch
      %10387 = sbr.rel (0) target = $region69
    $region68: #{tpu_custom_call.1} parent=1 // pred_region
      %s10389 = ssub.s32 128, 128
      %10390 = vsyncadd [#allocation4], %s10389
      %s10392 = sshll.u32 [#allocation14], 4
      %s10393 = int_to_ptr.vmem [resolvable:$true] %s10392
      %10395 = dma.vmem_to_hbm [thread:$0]  %s10393, 128, %s9, [#allocation4]
    $region69: #{tpu_custom_call.1} parent=1 // pred_fallthru
      _
    // Predicated region
    $region70: #{tpu_custom_call.1} parent=1 // pred_check
      _
    $region71: #{tpu_custom_call.1} parent=1 // pred_check_branch
      %10397 = sbr.rel (0) target = $region73
    $region72: #{tpu_custom_call.1} parent=1 // pred_region
      _
    $region73: #{tpu_custom_call.1} parent=1 // pred_fallthru
      _
    // Predicated region
    $region74: #{tpu_custom_call.1} parent=1 // pred_check
      _
    $region75: #{tpu_custom_call.1} parent=1 // pred_check_branch
      %10399 = sbr.rel (0) target = $region77
    $region76: #{tpu_custom_call.1} parent=1 // pred_region
      %10400 = dma.done [#allocation4], 128
    $region77: #{tpu_custom_call.1} parent=1 // pred_fallthru
      _
    // Predicated region
    $region78: #{tpu_custom_call.1} parent=1 // pred_check
      _
    $region79: #{tpu_custom_call.1} parent=1 // pred_check_branch
      %10402 = sbr.rel (0) target = $region81
    $region80: #{tpu_custom_call.1} parent=1 // pred_region
      _
    $region81: #{tpu_custom_call.1} parent=1 // pred_fallthru
      _
    %10403 = vsyncpa [#allocation3], 1
    %10404 = vsyncpa [#allocation6], 1
    %10405 = vsyncpa [#allocation9], 1
    %10406 = vsyncpa [#allocation12], 1
    %10407 = vsyncpa [#allocation4], 1

</llo_original>
